<compile_context>
chip_gen: v5e
topology: v5e:2x2
jax: 0.10.0
libtpu: 0.0.40
codegen_flags: <defaults>
</compile_context>

<pallas_src>
import functools
import math

import jax
import jax.numpy as jnp
from jax.experimental import pallas as pl
from jax.experimental.pallas import tpu as pltpu

BN_EPS = 1e-5


def _round_up(x, m):
    return -(-x // m) * m


# ----------------------------- Pallas kernels ------------------------------


def _conv3x3_stats_kernel(x_ref, w_ref, mask_ref, y_ref, s_ref, q_ref, acc_ref, *, H, W):
    """Fused 3x3 conv (shift-and-matmul over 9 taps) + masked BN batch stats.

    x_ref:    (1, RP_IN, Cin)  f32  zero-padded image, row-flattened (+ tail pad)
    w_ref:    (9, Cin, Cout)   bf16 tap-major conv weights
    mask_ref: (R_OUT, 1)       f32  1.0 on real output pixels, 0.0 on garbage cols
    y_ref:    (1, R_OUT, Cout) f32  pre-BN conv output (row space H x (W+2))
    s_ref:    (1, 1, Cout)     f32  per-block masked column sum
    q_ref:    (1, 1, Cout)     f32  per-block masked column sum of squares
    acc_ref:  (R_OUT, Cout)    f32  VMEM accumulator
    """
    R = H * (W + 2)
    acc_ref[...] = jnp.zeros_like(acc_ref)
    for t in range(9):
        dy, dx = divmod(t, 3)
        off = dy * (W + 2) + dx
        a = x_ref[0, pl.ds(off, R), :].astype(jnp.bfloat16)
        acc_ref[...] += jnp.dot(a, w_ref[t], preferred_element_type=jnp.float32)
    y = acc_ref[...]
    y_ref[0] = y
    ym = y * mask_ref[...]
    s_ref[0] = jnp.sum(ym, axis=0, keepdims=True)
    q_ref[0] = jnp.sum(ym * ym, axis=0, keepdims=True)


def _affine_relu_kernel(y_ref, s_ref, b_ref, o_ref):
    """Fused BatchNorm affine + ReLU: o = max(y * scale + shift, 0)."""
    o_ref[0] = jnp.maximum(y_ref[0] * s_ref[...] + b_ref[...], 0.0)


def _conv1x1_bias_kernel(a_ref, w_ref, b_ref, o_ref):
    """1x1 conv as matmul with the bias add fused into the epilogue."""
    o_ref[0] = (
        jnp.dot(a_ref[0].astype(jnp.bfloat16), w_ref[...],
                preferred_element_type=jnp.float32)
        + b_ref[...]
    )


# ----------------------------- Pallas wrappers ------------------------------


def conv3x3_bn_stats(x_rows, w, mask, *, H, W):
    """Run the fused conv+stats kernel over the batch (parallel grid)."""
    N, RP_IN, Cin = x_rows.shape
    Cout = w.shape[-1]
    R_OUT = H * (W + 2)
    kernel = functools.partial(_conv3x3_stats_kernel, H=H, W=W)
    return pl.pallas_call(
        kernel,
        out_shape=(
            jax.ShapeDtypeStruct((N, R_OUT, Cout), jnp.float32),
            jax.ShapeDtypeStruct((N, 1, Cout), jnp.float32),
            jax.ShapeDtypeStruct((N, 1, Cout), jnp.float32),
        ),
        grid_spec=pltpu.PrefetchScalarGridSpec(
            num_scalar_prefetch=0,
            grid=(N,),
            in_specs=[
                pl.BlockSpec((1, RP_IN, Cin), lambda b: (b, 0, 0)),
                pl.BlockSpec((9, Cin, Cout), lambda b: (0, 0, 0)),
                pl.BlockSpec((R_OUT, 1), lambda b: (0, 0)),
            ],
            out_specs=(
                pl.BlockSpec((1, R_OUT, Cout), lambda b: (b, 0, 0)),
                pl.BlockSpec((1, 1, Cout), lambda b: (b, 0, 0)),
                pl.BlockSpec((1, 1, Cout), lambda b: (b, 0, 0)),
            ),
            scratch_shapes=[pltpu.VMEM((R_OUT, Cout), jnp.float32)],
        ),
        compiler_params=pltpu.CompilerParams(dimension_semantics=("parallel",)),
    )(x_rows, w, mask)


def bn_affine_relu(y, scale, shift):
    N, R, C = y.shape
    return pl.pallas_call(
        _affine_relu_kernel,
        out_shape=jax.ShapeDtypeStruct((N, R, C), jnp.float32),
        grid_spec=pltpu.PrefetchScalarGridSpec(
            num_scalar_prefetch=0,
            grid=(N,),
            in_specs=[
                pl.BlockSpec((1, R, C), lambda b: (b, 0, 0)),
                pl.BlockSpec((1, C), lambda b: (0, 0)),
                pl.BlockSpec((1, C), lambda b: (0, 0)),
            ],
            out_specs=pl.BlockSpec((1, R, C), lambda b: (b, 0, 0)),
        ),
        compiler_params=pltpu.CompilerParams(dimension_semantics=("parallel",)),
    )(y, scale, shift)


def conv1x1_bias(a, w, bias):
    N, R, Cin = a.shape
    Cout = w.shape[-1]
    return pl.pallas_call(
        _conv1x1_bias_kernel,
        out_shape=jax.ShapeDtypeStruct((N, R, Cout), jnp.float32),
        grid_spec=pltpu.PrefetchScalarGridSpec(
            num_scalar_prefetch=0,
            grid=(N,),
            in_specs=[
                pl.BlockSpec((1, R, Cin), lambda b: (b, 0, 0)),
                pl.BlockSpec((Cin, Cout), lambda b: (0, 0)),
                pl.BlockSpec((1, Cout), lambda b: (0, 0)),
            ],
            out_specs=pl.BlockSpec((1, R, Cout), lambda b: (b, 0, 0)),
        ),
        compiler_params=pltpu.CompilerParams(dimension_semantics=("parallel",)),
    )(a, w, bias)


# ----------------------------- model glue (plain JAX) ------------------------------


def _flatten_padded_rows(img, rp_in):
    """NHWC image -> zero-padded (+1 border), row-flattened (N, rp_in, C)."""
    N, H, W, C = img.shape
    xp = jnp.pad(img, ((0, 0), (1, 1), (1, 1), (0, 0)))
    rows = xp.reshape(N, (H + 2) * (W + 2), C)
    return jnp.pad(rows, ((0, 0), (0, rp_in - (H + 2) * (W + 2)), (0, 0)))


def _rows_to_image(rows, H, W):
    """(N, H*(W+2), C) row space -> (N, H, W, C), dropping garbage columns."""
    N, _, C = rows.shape
    return rows.reshape(N, H, W + 2, C)[:, :, :W, :]


def conv_bn_relu_block(img, w, gamma, beta, mask, rp_in):
    """Conv2d(3x3, pad=1, bias=False) -> BatchNorm2d (batch stats) -> ReLU."""
    N, H, W, _ = img.shape
    x_rows = _flatten_padded_rows(img, rp_in)
    y, s, q = conv3x3_bn_stats(x_rows, w, mask, H=H, W=W)
    cnt = float(N * H * W)
    s_tot = jnp.sum(s, axis=0)              # (1, Cout)
    q_tot = jnp.sum(q, axis=0)              # (1, Cout)
    mean = s_tot / cnt
    var = q_tot / cnt - mean * mean         # biased variance (torch training-mode BN)
    scale = gamma.reshape(1, -1) * jax.lax.rsqrt(var + BN_EPS)
    shift = beta.reshape(1, -1) - mean * scale
    return bn_affine_relu(y, scale, shift)  # (N, H*(W+2), Cout); cols >= W are junk


def basenet_forward(params, x_nchw):
    x = jnp.transpose(x_nchw, (0, 2, 3, 1)).astype(jnp.float32)  # NCHW -> NHWC
    N, H, W, _ = x.shape
    r_out = H * (W + 2)
    rp_in = _round_up((H + 2) * (W + 2) + 2, 8)
    mask = (jnp.arange(r_out) % (W + 2) < W).astype(jnp.float32).reshape(r_out, 1)

    p = params
    # DoubleConv
    a1 = conv_bn_relu_block(x, p["w1"], p["g1"], p["b1"], mask, rp_in)
    a1_img = _rows_to_image(a1, H, W)
    a2 = conv_bn_relu_block(a1_img, p["w2"], p["g2"], p["b2"], mask, rp_in)
    # OutConv (1x1 + bias) runs directly in row space; junk columns are sliced off after.
    logits_rows = conv1x1_bias(a2, p["wo"], p["bo"])
    logits = _rows_to_image(logits_rows, H, W)                   # (N, H, W, n_classes)
    return jnp.transpose(logits, (0, 3, 1, 2))                   # NHWC -> NCHW


# ----------------------------- parameter init ------------------------------


def init_basenet_params(key, n_channels, n_classes):
    k1, k2, k3, k4 = jax.random.split(key, 4)

    def conv_w(k, cin, cout):
        w = jax.random.normal(k, (3, 3, cin, cout), jnp.float32) / math.sqrt(9 * cin)
        # tap-major (9, Cin, Cout), stored in bf16 once (MXU-native operands).
        return w.reshape(9, cin, cout).astype(jnp.bfloat16)

    return {
        "w1": conv_w(k1, n_channels, 64),
        "g1": jnp.ones((64,), jnp.float32),
        "b1": jnp.zeros((64,), jnp.float32),
        "w2": conv_w(k2, 64, 64),
        "g2": jnp.ones((64,), jnp.float32),
        "b2": jnp.zeros((64,), jnp.float32),
        "wo": (jax.random.normal(k3, (64, n_classes), jnp.float32)
               / math.sqrt(64)).astype(jnp.bfloat16),
        "bo": jax.random.normal(k4, (1, n_classes), jnp.float32) * 0.01,
    }


# ----------------------------- main ------------------------------

if __name__ == "__main__":
    key = jax.random.PRNGKey(0)
    pkey, xkey = jax.random.split(key)
    n_channels, n_classes = 4, 2
    N, H, W = 2, 16, 16
    x = jax.random.normal(xkey, (N, n_channels, H, W), jnp.float32)
    params = init_basenet_params(pkey, n_channels, n_classes)

    fwd = jax.jit(basenet_forward)
    out = fwd(params, x)
    jax.block_until_ready(out)

    assert out.shape == (N, n_classes, H, W), out.shape
    assert bool(jnp.all(jnp.isfinite(out)))
    print("KERNEL_OK")
</pallas_src>

<mosaic_0001>
module attributes {stable_mosaic.version = 11 : i64} {
  func.func @_affine_relu_kernel(%arg0: i32, %arg1: memref<1x288x64xf32, #tpu.memory_space<vmem>>, %arg2: memref<1x64xf32, #tpu.memory_space<vmem>>, %arg3: memref<1x64xf32, #tpu.memory_space<vmem>>, %arg4: memref<1x288x64xf32, #tpu.memory_space<vmem>>) attributes {dimension_semantics = [#tpu.dimension_semantics<parallel>], iteration_bounds = array<i64: 2>, scalar_prefetch = 0 : i64, scratch_operands = 0 : i64, tpu.core_type = #tpu.core_type<tc>, window_params = [{transform_indices = @transform_0, window_bounds = array<i64: 1, 288, 64>}, {pipeline_mode = #tpu.pipeline_mode<synchronous>, transform_indices = @transform_1, window_bounds = array<i64: 1, 64>}, {pipeline_mode = #tpu.pipeline_mode<synchronous>, transform_indices = @transform_2, window_bounds = array<i64: 1, 64>}, {transform_indices = @transform_3, window_bounds = array<i64: 1, 288, 64>}]} {
    %c0 = arith.constant 0 : index
    %c0_0 = arith.constant 0 : index
    %c0_1 = arith.constant 0 : index
    %0 = vector.load %arg1[%c0, %c0_0, %c0_1] : memref<1x288x64xf32, #tpu.memory_space<vmem>>, vector<1x288x64xf32>
    %1 = vector.shape_cast %0 : vector<1x288x64xf32> to vector<288x64xf32>
    %c0_2 = arith.constant 0 : index
    %c0_3 = arith.constant 0 : index
    %2 = vector.load %arg2[%c0_2, %c0_3] : memref<1x64xf32, #tpu.memory_space<vmem>>, vector<1x64xf32>
    %3 = vector.broadcast %2 : vector<1x64xf32> to vector<288x64xf32>
    %4 = arith.mulf %1, %3 : vector<288x64xf32>
    %c0_4 = arith.constant 0 : index
    %c0_5 = arith.constant 0 : index
    %5 = vector.load %arg3[%c0_4, %c0_5] : memref<1x64xf32, #tpu.memory_space<vmem>>, vector<1x64xf32>
    %6 = vector.broadcast %5 : vector<1x64xf32> to vector<288x64xf32>
    %7 = arith.addf %4, %6 : vector<288x64xf32>
    %cst = arith.constant 0.000000e+00 : f32
    %8 = vector.broadcast %cst : f32 to vector<288x64xf32>
    %9 = arith.maximumf %7, %8 : vector<288x64xf32>
    %c0_6 = arith.constant 0 : index
    %c0_7 = arith.constant 0 : index
    %c0_8 = arith.constant 0 : index
    %10 = vector.load %arg4[%c0_6, %c0_7, %c0_8] : memref<1x288x64xf32, #tpu.memory_space<vmem>>, vector<1x288x64xf32>
    %11 = vector.shape_cast %10 : vector<1x288x64xf32> to vector<288x64xf32>
    %12 = vector.shape_cast %9 : vector<288x64xf32> to vector<1x288x64xf32>
    tpu.vector_store %arg4[%c0_6, %c0_7, %c0_8], %12 {strides = array<i32>} : memref<1x288x64xf32, #tpu.memory_space<vmem>>, vector<1x288x64xf32>,
    return
  }
  func.func @transform_0(%arg0: i32) -> (i32, i32, i32) {
    %c0_i32 = arith.constant 0 : i32
    %c0_i32_0 = arith.constant 0 : i32
    %c0_i32_1 = arith.constant 0 : i32
    return %arg0, %c0_i32, %c0_i32_0 : i32, i32, i32
  }
  func.func @transform_1(%arg0: i32) -> (i32, i32) {
    %c0_i32 = arith.constant 0 : i32
    %c0_i32_0 = arith.constant 0 : i32
    %c0_i32_1 = arith.constant 0 : i32
    return %c0_i32, %c0_i32_0 : i32, i32
  }
  func.func @transform_2(%arg0: i32) -> (i32, i32) {
    %c0_i32 = arith.constant 0 : i32
    %c0_i32_0 = arith.constant 0 : i32
    %c0_i32_1 = arith.constant 0 : i32
    return %c0_i32, %c0_i32_0 : i32, i32
  }
  func.func @transform_3(%arg0: i32) -> (i32, i32, i32) {
    %c0_i32 = arith.constant 0 : i32
    %c0_i32_0 = arith.constant 0 : i32
    %c0_i32_1 = arith.constant 0 : i32
    return %arg0, %c0_i32, %c0_i32_0 : i32, i32, i32
  }
}

module attributes {stable_mosaic.version = 11 : i64} {
  func.func @_conv3x3_stats_kernel(%arg0: i32, %arg1: memref<1x328x4xf32, #tpu.memory_space<vmem>>, %arg2: memref<9x4x64xbf16, #tpu.memory_space<vmem>>, %arg3: memref<288x1xf32, #tpu.memory_space<vmem>>, %arg4: memref<1x288x64xf32, #tpu.memory_space<vmem>>, %arg5: memref<1x1x64xf32, #tpu.memory_space<vmem>>, %arg6: memref<1x1x64xf32, #tpu.memory_space<vmem>>, %arg7: memref<288x64xf32, #tpu.memory_space<vmem>>) attributes {dimension_semantics = [#tpu.dimension_semantics<parallel>], iteration_bounds = array<i64: 2>, scalar_prefetch = 0 : i64, scratch_operands = 1 : i64, tpu.core_type = #tpu.core_type<tc>, window_params = [{transform_indices = @transform_0, window_bounds = array<i64: 1, 328, 4>}, {pipeline_mode = #tpu.pipeline_mode<synchronous>, transform_indices = @transform_1, window_bounds = array<i64: 9, 4, 64>}, {pipeline_mode = #tpu.pipeline_mode<synchronous>, transform_indices = @transform_2, window_bounds = array<i64: 288, 1>}, {transform_indices = @transform_3, window_bounds = array<i64: 1, 288, 64>}, {transform_indices = @transform_4, window_bounds = array<i64: 1, 1, 64>}, {transform_indices = @transform_5, window_bounds = array<i64: 1, 1, 64>}]} {
    %cst = arith.constant 0.000000e+00 : f32
    %0 = vector.broadcast %cst : f32 to vector<288x64xf32>
    %c0 = arith.constant 0 : index
    %c0_0 = arith.constant 0 : index
    %1 = vector.load %arg7[%c0, %c0_0] : memref<288x64xf32, #tpu.memory_space<vmem>>, vector<288x64xf32>
    tpu.vector_store %arg7[%c0, %c0_0], %0 {strides = array<i32>} : memref<288x64xf32, #tpu.memory_space<vmem>>, vector<288x64xf32>,
    %c0_1 = arith.constant 0 : index
    %c0_2 = arith.constant 0 : index
    %c0_3 = arith.constant 0 : index
    %2 = vector.load %arg1[%c0_1, %c0_2, %c0_3] : memref<1x328x4xf32, #tpu.memory_space<vmem>>, vector<1x288x4xf32>
    %3 = vector.shape_cast %2 : vector<1x288x4xf32> to vector<288x4xf32>
    %4 = arith.truncf %3 : vector<288x4xf32> to vector<288x4xbf16>
    %c0_4 = arith.constant 0 : index
    %c0_5 = arith.constant 0 : index
    %5 = vector.load %arg7[%c0_4, %c0_5] : memref<288x64xf32, #tpu.memory_space<vmem>>, vector<288x64xf32>
    %c0_6 = arith.constant 0 : index
    %c0_7 = arith.constant 0 : index
    %c0_8 = arith.constant 0 : index
    %6 = vector.load %arg2[%c0_6, %c0_7, %c0_8] : memref<9x4x64xbf16, #tpu.memory_space<vmem>>, vector<1x4x64xbf16>
    %7 = vector.shape_cast %6 : vector<1x4x64xbf16> to vector<4x64xbf16>
    %cst_9 = arith.constant dense<0.000000e+00> : vector<288x64xf32>
    %8 = tpu.matmul %4, %7, %cst_9 {dimension_numbers = #tpu.dot_dimension_numbers<[1], [0], [0], [1], [0, 0, 1, 1], [], []>} : vector<288x4xbf16>, vector<4x64xbf16>, vector<288x64xf32> -> vector<288x64xf32>
    %9 = arith.addf %5, %8 : vector<288x64xf32>
    %c0_10 = arith.constant 0 : index
    %c0_11 = arith.constant 0 : index
    %10 = vector.load %arg7[%c0_10, %c0_11] : memref<288x64xf32, #tpu.memory_space<vmem>>, vector<288x64xf32>
    tpu.vector_store %arg7[%c0_10, %c0_11], %9 {strides = array<i32>} : memref<288x64xf32, #tpu.memory_space<vmem>>, vector<288x64xf32>,
    %c0_12 = arith.constant 0 : index
    %c1 = arith.constant 1 : index
    %c0_13 = arith.constant 0 : index
    %11 = vector.load %arg1[%c0_12, %c1, %c0_13] : memref<1x328x4xf32, #tpu.memory_space<vmem>>, vector<1x288x4xf32>
    %12 = vector.shape_cast %11 : vector<1x288x4xf32> to vector<288x4xf32>
    %13 = arith.truncf %12 : vector<288x4xf32> to vector<288x4xbf16>
    %c0_14 = arith.constant 0 : index
    %c0_15 = arith.constant 0 : index
    %14 = vector.load %arg7[%c0_14, %c0_15] : memref<288x64xf32, #tpu.memory_space<vmem>>, vector<288x64xf32>
    %c1_16 = arith.constant 1 : index
    %c0_17 = arith.constant 0 : index
    %c0_18 = arith.constant 0 : index
    %15 = vector.load %arg2[%c1_16, %c0_17, %c0_18] : memref<9x4x64xbf16, #tpu.memory_space<vmem>>, vector<1x4x64xbf16>
    %16 = vector.shape_cast %15 : vector<1x4x64xbf16> to vector<4x64xbf16>
    %cst_19 = arith.constant dense<0.000000e+00> : vector<288x64xf32>
    %17 = tpu.matmul %13, %16, %cst_19 {dimension_numbers = #tpu.dot_dimension_numbers<[1], [0], [0], [1], [0, 0, 1, 1], [], []>} : vector<288x4xbf16>, vector<4x64xbf16>, vector<288x64xf32> -> vector<288x64xf32>
    %18 = arith.addf %14, %17 : vector<288x64xf32>
    %c0_20 = arith.constant 0 : index
    %c0_21 = arith.constant 0 : index
    %19 = vector.load %arg7[%c0_20, %c0_21] : memref<288x64xf32, #tpu.memory_space<vmem>>, vector<288x64xf32>
    tpu.vector_store %arg7[%c0_20, %c0_21], %18 {strides = array<i32>} : memref<288x64xf32, #tpu.memory_space<vmem>>, vector<288x64xf32>,
    %c0_22 = arith.constant 0 : index
    %c2 = arith.constant 2 : index
    %c0_23 = arith.constant 0 : index
    %20 = vector.load %arg1[%c0_22, %c2, %c0_23] : memref<1x328x4xf32, #tpu.memory_space<vmem>>, vector<1x288x4xf32>
    %21 = vector.shape_cast %20 : vector<1x288x4xf32> to vector<288x4xf32>
    %22 = arith.truncf %21 : vector<288x4xf32> to vector<288x4xbf16>
    %c0_24 = arith.constant 0 : index
    %c0_25 = arith.constant 0 : index
    %23 = vector.load %arg7[%c0_24, %c0_25] : memref<288x64xf32, #tpu.memory_space<vmem>>, vector<288x64xf32>
    %c2_26 = arith.constant 2 : index
    %c0_27 = arith.constant 0 : index
    %c0_28 = arith.constant 0 : index
    %24 = vector.load %arg2[%c2_26, %c0_27, %c0_28] : memref<9x4x64xbf16, #tpu.memory_space<vmem>>, vector<1x4x64xbf16>
    %25 = vector.shape_cast %24 : vector<1x4x64xbf16> to vector<4x64xbf16>
    %cst_29 = arith.constant dense<0.000000e+00> : vector<288x64xf32>
    %26 = tpu.matmul %22, %25, %cst_29 {dimension_numbers = #tpu.dot_dimension_numbers<[1], [0], [0], [1], [0, 0, 1, 1], [], []>} : vector<288x4xbf16>, vector<4x64xbf16>, vector<288x64xf32> -> vector<288x64xf32>
    %27 = arith.addf %23, %26 : vector<288x64xf32>
    %c0_30 = arith.constant 0 : index
    %c0_31 = arith.constant 0 : index
    %28 = vector.load %arg7[%c0_30, %c0_31] : memref<288x64xf32, #tpu.memory_space<vmem>>, vector<288x64xf32>
    tpu.vector_store %arg7[%c0_30, %c0_31], %27 {strides = array<i32>} : memref<288x64xf32, #tpu.memory_space<vmem>>, vector<288x64xf32>,
    %c0_32 = arith.constant 0 : index
    %c18 = arith.constant 18 : index
    %c0_33 = arith.constant 0 : index
    %29 = vector.load %arg1[%c0_32, %c18, %c0_33] : memref<1x328x4xf32, #tpu.memory_space<vmem>>, vector<1x288x4xf32>
    %30 = vector.shape_cast %29 : vector<1x288x4xf32> to vector<288x4xf32>
    %31 = arith.truncf %30 : vector<288x4xf32> to vector<288x4xbf16>
    %c0_34 = arith.constant 0 : index
    %c0_35 = arith.constant 0 : index
    %32 = vector.load %arg7[%c0_34, %c0_35] : memref<288x64xf32, #tpu.memory_space<vmem>>, vector<288x64xf32>
    %c3 = arith.constant 3 : index
    %c0_36 = arith.constant 0 : index
    %c0_37 = arith.constant 0 : index
    %33 = vector.load %arg2[%c3, %c0_36, %c0_37] : memref<9x4x64xbf16, #tpu.memory_space<vmem>>, vector<1x4x64xbf16>
    %34 = vector.shape_cast %33 : vector<1x4x64xbf16> to vector<4x64xbf16>
    %cst_38 = arith.constant dense<0.000000e+00> : vector<288x64xf32>
    %35 = tpu.matmul %31, %34, %cst_38 {dimension_numbers = #tpu.dot_dimension_numbers<[1], [0], [0], [1], [0, 0, 1, 1], [], []>} : vector<288x4xbf16>, vector<4x64xbf16>, vector<288x64xf32> -> vector<288x64xf32>
    %36 = arith.addf %32, %35 : vector<288x64xf32>
    %c0_39 = arith.constant 0 : index
    %c0_40 = arith.constant 0 : index
    %37 = vector.load %arg7[%c0_39, %c0_40] : memref<288x64xf32, #tpu.memory_space<vmem>>, vector<288x64xf32>
    tpu.vector_store %arg7[%c0_39, %c0_40], %36 {strides = array<i32>} : memref<288x64xf32, #tpu.memory_space<vmem>>, vector<288x64xf32>,
    %c0_41 = arith.constant 0 : index
    %c19 = arith.constant 19 : index
    %c0_42 = arith.constant 0 : index
    %38 = vector.load %arg1[%c0_41, %c19, %c0_42] : memref<1x328x4xf32, #tpu.memory_space<vmem>>, vector<1x288x4xf32>
    %39 = vector.shape_cast %38 : vector<1x288x4xf32> to vector<288x4xf32>
    %40 = arith.truncf %39 : vector<288x4xf32> to vector<288x4xbf16>
    %c0_43 = arith.constant 0 : index
    %c0_44 = arith.constant 0 : index
    %41 = vector.load %arg7[%c0_43, %c0_44] : memref<288x64xf32, #tpu.memory_space<vmem>>, vector<288x64xf32>
    %c4 = arith.constant 4 : index
    %c0_45 = arith.constant 0 : index
    %c0_46 = arith.constant 0 : index
    %42 = vector.load %arg2[%c4, %c0_45, %c0_46] : memref<9x4x64xbf16, #tpu.memory_space<vmem>>, vector<1x4x64xbf16>
    %43 = vector.shape_cast %42 : vector<1x4x64xbf16> to vector<4x64xbf16>
    %cst_47 = arith.constant dense<0.000000e+00> : vector<288x64xf32>
    %44 = tpu.matmul %40, %43, %cst_47 {dimension_numbers = #tpu.dot_dimension_numbers<[1], [0], [0], [1], [0, 0, 1, 1], [], []>} : vector<288x4xbf16>, vector<4x64xbf16>, vector<288x64xf32> -> vector<288x64xf32>
    %45 = arith.addf %41, %44 : vector<288x64xf32>
    %c0_48 = arith.constant 0 : index
    %c0_49 = arith.constant 0 : index
    %46 = vector.load %arg7[%c0_48, %c0_49] : memref<288x64xf32, #tpu.memory_space<vmem>>, vector<288x64xf32>
    tpu.vector_store %arg7[%c0_48, %c0_49], %45 {strides = array<i32>} : memref<288x64xf32, #tpu.memory_space<vmem>>, vector<288x64xf32>,
    %c0_50 = arith.constant 0 : index
    %c20 = arith.constant 20 : index
    %c0_51 = arith.constant 0 : index
    %47 = vector.load %arg1[%c0_50, %c20, %c0_51] : memref<1x328x4xf32, #tpu.memory_space<vmem>>, vector<1x288x4xf32>
    %48 = vector.shape_cast %47 : vector<1x288x4xf32> to vector<288x4xf32>
    %49 = arith.truncf %48 : vector<288x4xf32> to vector<288x4xbf16>
    %c0_52 = arith.constant 0 : index
    %c0_53 = arith.constant 0 : index
    %50 = vector.load %arg7[%c0_52, %c0_53] : memref<288x64xf32, #tpu.memory_space<vmem>>, vector<288x64xf32>
    %c5 = arith.constant 5 : index
    %c0_54 = arith.constant 0 : index
    %c0_55 = arith.constant 0 : index
    %51 = vector.load %arg2[%c5, %c0_54, %c0_55] : memref<9x4x64xbf16, #tpu.memory_space<vmem>>, vector<1x4x64xbf16>
    %52 = vector.shape_cast %51 : vector<1x4x64xbf16> to vector<4x64xbf16>
    %cst_56 = arith.constant dense<0.000000e+00> : vector<288x64xf32>
    %53 = tpu.matmul %49, %52, %cst_56 {dimension_numbers = #tpu.dot_dimension_numbers<[1], [0], [0], [1], [0, 0, 1, 1], [], []>} : vector<288x4xbf16>, vector<4x64xbf16>, vector<288x64xf32> -> vector<288x64xf32>
    %54 = arith.addf %50, %53 : vector<288x64xf32>
    %c0_57 = arith.constant 0 : index
    %c0_58 = arith.constant 0 : index
    %55 = vector.load %arg7[%c0_57, %c0_58] : memref<288x64xf32, #tpu.memory_space<vmem>>, vector<288x64xf32>
    tpu.vector_store %arg7[%c0_57, %c0_58], %54 {strides = array<i32>} : memref<288x64xf32, #tpu.memory_space<vmem>>, vector<288x64xf32>,
    %c0_59 = arith.constant 0 : index
    %c36 = arith.constant 36 : index
    %c0_60 = arith.constant 0 : index
    %56 = vector.load %arg1[%c0_59, %c36, %c0_60] : memref<1x328x4xf32, #tpu.memory_space<vmem>>, vector<1x288x4xf32>
    %57 = vector.shape_cast %56 : vector<1x288x4xf32> to vector<288x4xf32>
    %58 = arith.truncf %57 : vector<288x4xf32> to vector<288x4xbf16>
    %c0_61 = arith.constant 0 : index
    %c0_62 = arith.constant 0 : index
    %59 = vector.load %arg7[%c0_61, %c0_62] : memref<288x64xf32, #tpu.memory_space<vmem>>, vector<288x64xf32>
    %c6 = arith.constant 6 : index
    %c0_63 = arith.constant 0 : index
    %c0_64 = arith.constant 0 : index
    %60 = vector.load %arg2[%c6, %c0_63, %c0_64] : memref<9x4x64xbf16, #tpu.memory_space<vmem>>, vector<1x4x64xbf16>
    %61 = vector.shape_cast %60 : vector<1x4x64xbf16> to vector<4x64xbf16>
    %cst_65 = arith.constant dense<0.000000e+00> : vector<288x64xf32>
    %62 = tpu.matmul %58, %61, %cst_65 {dimension_numbers = #tpu.dot_dimension_numbers<[1], [0], [0], [1], [0, 0, 1, 1], [], []>} : vector<288x4xbf16>, vector<4x64xbf16>, vector<288x64xf32> -> vector<288x64xf32>
    %63 = arith.addf %59, %62 : vector<288x64xf32>
    %c0_66 = arith.constant 0 : index
    %c0_67 = arith.constant 0 : index
    %64 = vector.load %arg7[%c0_66, %c0_67] : memref<288x64xf32, #tpu.memory_space<vmem>>, vector<288x64xf32>
    tpu.vector_store %arg7[%c0_66, %c0_67], %63 {strides = array<i32>} : memref<288x64xf32, #tpu.memory_space<vmem>>, vector<288x64xf32>,
    %c0_68 = arith.constant 0 : index
    %c37 = arith.constant 37 : index
    %c0_69 = arith.constant 0 : index
    %65 = vector.load %arg1[%c0_68, %c37, %c0_69] : memref<1x328x4xf32, #tpu.memory_space<vmem>>, vector<1x288x4xf32>
    %66 = vector.shape_cast %65 : vector<1x288x4xf32> to vector<288x4xf32>
    %67 = arith.truncf %66 : vector<288x4xf32> to vector<288x4xbf16>
    %c0_70 = arith.constant 0 : index
    %c0_71 = arith.constant 0 : index
    %68 = vector.load %arg7[%c0_70, %c0_71] : memref<288x64xf32, #tpu.memory_space<vmem>>, vector<288x64xf32>
    %c7 = arith.constant 7 : index
    %c0_72 = arith.constant 0 : index
    %c0_73 = arith.constant 0 : index
    %69 = vector.load %arg2[%c7, %c0_72, %c0_73] : memref<9x4x64xbf16, #tpu.memory_space<vmem>>, vector<1x4x64xbf16>
    %70 = vector.shape_cast %69 : vector<1x4x64xbf16> to vector<4x64xbf16>
    %cst_74 = arith.constant dense<0.000000e+00> : vector<288x64xf32>
    %71 = tpu.matmul %67, %70, %cst_74 {dimension_numbers = #tpu.dot_dimension_numbers<[1], [0], [0], [1], [0, 0, 1, 1], [], []>} : vector<288x4xbf16>, vector<4x64xbf16>, vector<288x64xf32> -> vector<288x64xf32>
    %72 = arith.addf %68, %71 : vector<288x64xf32>
    %c0_75 = arith.constant 0 : index
    %c0_76 = arith.constant 0 : index
    %73 = vector.load %arg7[%c0_75, %c0_76] : memref<288x64xf32, #tpu.memory_space<vmem>>, vector<288x64xf32>
    tpu.vector_store %arg7[%c0_75, %c0_76], %72 {strides = array<i32>} : memref<288x64xf32, #tpu.memory_space<vmem>>, vector<288x64xf32>,
    %c0_77 = arith.constant 0 : index
    %c38 = arith.constant 38 : index
    %c0_78 = arith.constant 0 : index
    %74 = vector.load %arg1[%c0_77, %c38, %c0_78] : memref<1x328x4xf32, #tpu.memory_space<vmem>>, vector<1x288x4xf32>
    %75 = vector.shape_cast %74 : vector<1x288x4xf32> to vector<288x4xf32>
    %76 = arith.truncf %75 : vector<288x4xf32> to vector<288x4xbf16>
    %c0_79 = arith.constant 0 : index
    %c0_80 = arith.constant 0 : index
    %77 = vector.load %arg7[%c0_79, %c0_80] : memref<288x64xf32, #tpu.memory_space<vmem>>, vector<288x64xf32>
    %c8 = arith.constant 8 : index
    %c0_81 = arith.constant 0 : index
    %c0_82 = arith.constant 0 : index
    %78 = vector.load %arg2[%c8, %c0_81, %c0_82] : memref<9x4x64xbf16, #tpu.memory_space<vmem>>, vector<1x4x64xbf16>
    %79 = vector.shape_cast %78 : vector<1x4x64xbf16> to vector<4x64xbf16>
    %cst_83 = arith.constant dense<0.000000e+00> : vector<288x64xf32>
    %80 = tpu.matmul %76, %79, %cst_83 {dimension_numbers = #tpu.dot_dimension_numbers<[1], [0], [0], [1], [0, 0, 1, 1], [], []>} : vector<288x4xbf16>, vector<4x64xbf16>, vector<288x64xf32> -> vector<288x64xf32>
    %81 = arith.addf %77, %80 : vector<288x64xf32>
    %c0_84 = arith.constant 0 : index
    %c0_85 = arith.constant 0 : index
    %82 = vector.load %arg7[%c0_84, %c0_85] : memref<288x64xf32, #tpu.memory_space<vmem>>, vector<288x64xf32>
    tpu.vector_store %arg7[%c0_84, %c0_85], %81 {strides = array<i32>} : memref<288x64xf32, #tpu.memory_space<vmem>>, vector<288x64xf32>,
    %c0_86 = arith.constant 0 : index
    %c0_87 = arith.constant 0 : index
    %83 = vector.load %arg7[%c0_86, %c0_87] : memref<288x64xf32, #tpu.memory_space<vmem>>, vector<288x64xf32>
    %c0_88 = arith.constant 0 : index
    %c0_89 = arith.constant 0 : index
    %c0_90 = arith.constant 0 : index
    %84 = vector.load %arg4[%c0_88, %c0_89, %c0_90] : memref<1x288x64xf32, #tpu.memory_space<vmem>>, vector<1x288x64xf32>
    %85 = vector.shape_cast %84 : vector<1x288x64xf32> to vector<288x64xf32>
    %86 = vector.shape_cast %83 : vector<288x64xf32> to vector<1x288x64xf32>
    tpu.vector_store %arg4[%c0_88, %c0_89, %c0_90], %86 {strides = array<i32>} : memref<1x288x64xf32, #tpu.memory_space<vmem>>, vector<1x288x64xf32>,
    %c0_91 = arith.constant 0 : index
    %c0_92 = arith.constant 0 : index
    %87 = vector.load %arg3[%c0_91, %c0_92] : memref<288x1xf32, #tpu.memory_space<vmem>>, vector<288x1xf32>
    %88 = vector.broadcast %87 : vector<288x1xf32> to vector<288x64xf32>
    %89 = arith.mulf %83, %88 : vector<288x64xf32>
    %cst_93 = arith.constant dense<0.000000e+00> : vector<64xf32>
    %90 = vector.multi_reduction <add>, %89, %cst_93 [0] : vector<288x64xf32> to vector<64xf32>
    %91 = vector.shape_cast %90 : vector<64xf32> to vector<1x64xf32>
    %c0_94 = arith.constant 0 : index
    %c0_95 = arith.constant 0 : index
    %c0_96 = arith.constant 0 : index
    %92 = vector.load %arg5[%c0_94, %c0_95, %c0_96] : memref<1x1x64xf32, #tpu.memory_space<vmem>>, vector<1x1x64xf32>
    %93 = vector.shape_cast %92 : vector<1x1x64xf32> to vector<1x64xf32>
    %94 = vector.shape_cast %91 : vector<1x64xf32> to vector<1x1x64xf32>
    tpu.vector_store %arg5[%c0_94, %c0_95, %c0_96], %94 {strides = array<i32>} : memref<1x1x64xf32, #tpu.memory_space<vmem>>, vector<1x1x64xf32>,
    %95 = arith.mulf %89, %89 : vector<288x64xf32>
    %cst_97 = arith.constant dense<0.000000e+00> : vector<64xf32>
    %96 = vector.multi_reduction <add>, %95, %cst_97 [0] : vector<288x64xf32> to vector<64xf32>
    %97 = vector.shape_cast %96 : vector<64xf32> to vector<1x64xf32>
    %c0_98 = arith.constant 0 : index
    %c0_99 = arith.constant 0 : index
    %c0_100 = arith.constant 0 : index
    %98 = vector.load %arg6[%c0_98, %c0_99, %c0_100] : memref<1x1x64xf32, #tpu.memory_space<vmem>>, vector<1x1x64xf32>
    %99 = vector.shape_cast %98 : vector<1x1x64xf32> to vector<1x64xf32>
    %100 = vector.shape_cast %97 : vector<1x64xf32> to vector<1x1x64xf32>
    tpu.vector_store %arg6[%c0_98, %c0_99, %c0_100], %100 {strides = array<i32>} : memref<1x1x64xf32, #tpu.memory_space<vmem>>, vector<1x1x64xf32>,
    return
  }
  func.func @transform_0(%arg0: i32) -> (i32, i32, i32) {
    %c0_i32 = arith.constant 0 : i32
    %c0_i32_0 = arith.constant 0 : i32
    %c0_i32_1 = arith.constant 0 : i32
    return %arg0, %c0_i32, %c0_i32_0 : i32, i32, i32
  }
  func.func @transform_1(%arg0: i32) -> (i32, i32, i32) {
    %c0_i32 = arith.constant 0 : i32
    %c0_i32_0 = arith.constant 0 : i32
    %c0_i32_1 = arith.constant 0 : i32
    %c0_i32_2 = arith.constant 0 : i32
    return %c0_i32, %c0_i32_0, %c0_i32_1 : i32, i32, i32
  }
  func.func @transform_2(%arg0: i32) -> (i32, i32) {
    %c0_i32 = arith.constant 0 : i32
    %c0_i32_0 = arith.constant 0 : i32
    %c0_i32_1 = arith.constant 0 : i32
    return %c0_i32, %c0_i32_0 : i32, i32
  }
  func.func @transform_3(%arg0: i32) -> (i32, i32, i32) {
    %c0_i32 = arith.constant 0 : i32
    %c0_i32_0 = arith.constant 0 : i32
    %c0_i32_1 = arith.constant 0 : i32
    return %arg0, %c0_i32, %c0_i32_0 : i32, i32, i32
  }
  func.func @transform_4(%arg0: i32) -> (i32, i32, i32) {
    %c0_i32 = arith.constant 0 : i32
    %c0_i32_0 = arith.constant 0 : i32
    %c0_i32_1 = arith.constant 0 : i32
    return %arg0, %c0_i32, %c0_i32_0 : i32, i32, i32
  }
  func.func @transform_5(%arg0: i32) -> (i32, i32, i32) {
    %c0_i32 = arith.constant 0 : i32
    %c0_i32_0 = arith.constant 0 : i32
    %c0_i32_1 = arith.constant 0 : i32
    return %arg0, %c0_i32, %c0_i32_0 : i32, i32, i32
  }
}

module attributes {stable_mosaic.version = 11 : i64} {
  func.func @_conv3x3_stats_kernel(%arg0: i32, %arg1: memref<1x328x64xf32, #tpu.memory_space<vmem>>, %arg2: memref<9x64x64xbf16, #tpu.memory_space<vmem>>, %arg3: memref<288x1xf32, #tpu.memory_space<vmem>>, %arg4: memref<1x288x64xf32, #tpu.memory_space<vmem>>, %arg5: memref<1x1x64xf32, #tpu.memory_space<vmem>>, %arg6: memref<1x1x64xf32, #tpu.memory_space<vmem>>, %arg7: memref<288x64xf32, #tpu.memory_space<vmem>>) attributes {dimension_semantics = [#tpu.dimension_semantics<parallel>], iteration_bounds = array<i64: 2>, scalar_prefetch = 0 : i64, scratch_operands = 1 : i64, tpu.core_type = #tpu.core_type<tc>, window_params = [{transform_indices = @transform_0, window_bounds = array<i64: 1, 328, 64>}, {pipeline_mode = #tpu.pipeline_mode<synchronous>, transform_indices = @transform_1, window_bounds = array<i64: 9, 64, 64>}, {pipeline_mode = #tpu.pipeline_mode<synchronous>, transform_indices = @transform_2, window_bounds = array<i64: 288, 1>}, {transform_indices = @transform_3, window_bounds = array<i64: 1, 288, 64>}, {transform_indices = @transform_4, window_bounds = array<i64: 1, 1, 64>}, {transform_indices = @transform_5, window_bounds = array<i64: 1, 1, 64>}]} {
    %cst = arith.constant 0.000000e+00 : f32
    %0 = vector.broadcast %cst : f32 to vector<288x64xf32>
    %c0 = arith.constant 0 : index
    %c0_0 = arith.constant 0 : index
    %1 = vector.load %arg7[%c0, %c0_0] : memref<288x64xf32, #tpu.memory_space<vmem>>, vector<288x64xf32>
    tpu.vector_store %arg7[%c0, %c0_0], %0 {strides = array<i32>} : memref<288x64xf32, #tpu.memory_space<vmem>>, vector<288x64xf32>,
    %c0_1 = arith.constant 0 : index
    %c0_2 = arith.constant 0 : index
    %c0_3 = arith.constant 0 : index
    %2 = vector.load %arg1[%c0_1, %c0_2, %c0_3] : memref<1x328x64xf32, #tpu.memory_space<vmem>>, vector<1x288x64xf32>
    %3 = vector.shape_cast %2 : vector<1x288x64xf32> to vector<288x64xf32>
    %4 = arith.truncf %3 : vector<288x64xf32> to vector<288x64xbf16>
    %c0_4 = arith.constant 0 : index
    %c0_5 = arith.constant 0 : index
    %5 = vector.load %arg7[%c0_4, %c0_5] : memref<288x64xf32, #tpu.memory_space<vmem>>, vector<288x64xf32>
    %c0_6 = arith.constant 0 : index
    %c0_7 = arith.constant 0 : index
    %c0_8 = arith.constant 0 : index
    %6 = vector.load %arg2[%c0_6, %c0_7, %c0_8] : memref<9x64x64xbf16, #tpu.memory_space<vmem>>, vector<1x64x64xbf16>
    %7 = vector.shape_cast %6 : vector<1x64x64xbf16> to vector<64x64xbf16>
    %cst_9 = arith.constant dense<0.000000e+00> : vector<288x64xf32>
    %8 = tpu.matmul %4, %7, %cst_9 {dimension_numbers = #tpu.dot_dimension_numbers<[1], [0], [0], [1], [0, 0, 1, 1], [], []>} : vector<288x64xbf16>, vector<64x64xbf16>, vector<288x64xf32> -> vector<288x64xf32>
    %9 = arith.addf %5, %8 : vector<288x64xf32>
    %c0_10 = arith.constant 0 : index
    %c0_11 = arith.constant 0 : index
    %10 = vector.load %arg7[%c0_10, %c0_11] : memref<288x64xf32, #tpu.memory_space<vmem>>, vector<288x64xf32>
    tpu.vector_store %arg7[%c0_10, %c0_11], %9 {strides = array<i32>} : memref<288x64xf32, #tpu.memory_space<vmem>>, vector<288x64xf32>,
    %c0_12 = arith.constant 0 : index
    %c1 = arith.constant 1 : index
    %c0_13 = arith.constant 0 : index
    %11 = vector.load %arg1[%c0_12, %c1, %c0_13] : memref<1x328x64xf32, #tpu.memory_space<vmem>>, vector<1x288x64xf32>
    %12 = vector.shape_cast %11 : vector<1x288x64xf32> to vector<288x64xf32>
    %13 = arith.truncf %12 : vector<288x64xf32> to vector<288x64xbf16>
    %c0_14 = arith.constant 0 : index
    %c0_15 = arith.constant 0 : index
    %14 = vector.load %arg7[%c0_14, %c0_15] : memref<288x64xf32, #tpu.memory_space<vmem>>, vector<288x64xf32>
    %c1_16 = arith.constant 1 : index
    %c0_17 = arith.constant 0 : index
    %c0_18 = arith.constant 0 : index
    %15 = vector.load %arg2[%c1_16, %c0_17, %c0_18] : memref<9x64x64xbf16, #tpu.memory_space<vmem>>, vector<1x64x64xbf16>
    %16 = vector.shape_cast %15 : vector<1x64x64xbf16> to vector<64x64xbf16>
    %cst_19 = arith.constant dense<0.000000e+00> : vector<288x64xf32>
    %17 = tpu.matmul %13, %16, %cst_19 {dimension_numbers = #tpu.dot_dimension_numbers<[1], [0], [0], [1], [0, 0, 1, 1], [], []>} : vector<288x64xbf16>, vector<64x64xbf16>, vector<288x64xf32> -> vector<288x64xf32>
    %18 = arith.addf %14, %17 : vector<288x64xf32>
    %c0_20 = arith.constant 0 : index
    %c0_21 = arith.constant 0 : index
    %19 = vector.load %arg7[%c0_20, %c0_21] : memref<288x64xf32, #tpu.memory_space<vmem>>, vector<288x64xf32>
    tpu.vector_store %arg7[%c0_20, %c0_21], %18 {strides = array<i32>} : memref<288x64xf32, #tpu.memory_space<vmem>>, vector<288x64xf32>,
    %c0_22 = arith.constant 0 : index
    %c2 = arith.constant 2 : index
    %c0_23 = arith.constant 0 : index
    %20 = vector.load %arg1[%c0_22, %c2, %c0_23] : memref<1x328x64xf32, #tpu.memory_space<vmem>>, vector<1x288x64xf32>
    %21 = vector.shape_cast %20 : vector<1x288x64xf32> to vector<288x64xf32>
    %22 = arith.truncf %21 : vector<288x64xf32> to vector<288x64xbf16>
    %c0_24 = arith.constant 0 : index
    %c0_25 = arith.constant 0 : index
    %23 = vector.load %arg7[%c0_24, %c0_25] : memref<288x64xf32, #tpu.memory_space<vmem>>, vector<288x64xf32>
    %c2_26 = arith.constant 2 : index
    %c0_27 = arith.constant 0 : index
    %c0_28 = arith.constant 0 : index
    %24 = vector.load %arg2[%c2_26, %c0_27, %c0_28] : memref<9x64x64xbf16, #tpu.memory_space<vmem>>, vector<1x64x64xbf16>
    %25 = vector.shape_cast %24 : vector<1x64x64xbf16> to vector<64x64xbf16>
    %cst_29 = arith.constant dense<0.000000e+00> : vector<288x64xf32>
    %26 = tpu.matmul %22, %25, %cst_29 {dimension_numbers = #tpu.dot_dimension_numbers<[1], [0], [0], [1], [0, 0, 1, 1], [], []>} : vector<288x64xbf16>, vector<64x64xbf16>, vector<288x64xf32> -> vector<288x64xf32>
    %27 = arith.addf %23, %26 : vector<288x64xf32>
    %c0_30 = arith.constant 0 : index
    %c0_31 = arith.constant 0 : index
    %28 = vector.load %arg7[%c0_30, %c0_31] : memref<288x64xf32, #tpu.memory_space<vmem>>, vector<288x64xf32>
    tpu.vector_store %arg7[%c0_30, %c0_31], %27 {strides = array<i32>} : memref<288x64xf32, #tpu.memory_space<vmem>>, vector<288x64xf32>,
    %c0_32 = arith.constant 0 : index
    %c18 = arith.constant 18 : index
    %c0_33 = arith.constant 0 : index
    %29 = vector.load %arg1[%c0_32, %c18, %c0_33] : memref<1x328x64xf32, #tpu.memory_space<vmem>>, vector<1x288x64xf32>
    %30 = vector.shape_cast %29 : vector<1x288x64xf32> to vector<288x64xf32>
    %31 = arith.truncf %30 : vector<288x64xf32> to vector<288x64xbf16>
    %c0_34 = arith.constant 0 : index
    %c0_35 = arith.constant 0 : index
    %32 = vector.load %arg7[%c0_34, %c0_35] : memref<288x64xf32, #tpu.memory_space<vmem>>, vector<288x64xf32>
    %c3 = arith.constant 3 : index
    %c0_36 = arith.constant 0 : index
    %c0_37 = arith.constant 0 : index
    %33 = vector.load %arg2[%c3, %c0_36, %c0_37] : memref<9x64x64xbf16, #tpu.memory_space<vmem>>, vector<1x64x64xbf16>
    %34 = vector.shape_cast %33 : vector<1x64x64xbf16> to vector<64x64xbf16>
    %cst_38 = arith.constant dense<0.000000e+00> : vector<288x64xf32>
    %35 = tpu.matmul %31, %34, %cst_38 {dimension_numbers = #tpu.dot_dimension_numbers<[1], [0], [0], [1], [0, 0, 1, 1], [], []>} : vector<288x64xbf16>, vector<64x64xbf16>, vector<288x64xf32> -> vector<288x64xf32>
    %36 = arith.addf %32, %35 : vector<288x64xf32>
    %c0_39 = arith.constant 0 : index
    %c0_40 = arith.constant 0 : index
    %37 = vector.load %arg7[%c0_39, %c0_40] : memref<288x64xf32, #tpu.memory_space<vmem>>, vector<288x64xf32>
    tpu.vector_store %arg7[%c0_39, %c0_40], %36 {strides = array<i32>} : memref<288x64xf32, #tpu.memory_space<vmem>>, vector<288x64xf32>,
    %c0_41 = arith.constant 0 : index
    %c19 = arith.constant 19 : index
    %c0_42 = arith.constant 0 : index
    %38 = vector.load %arg1[%c0_41, %c19, %c0_42] : memref<1x328x64xf32, #tpu.memory_space<vmem>>, vector<1x288x64xf32>
    %39 = vector.shape_cast %38 : vector<1x288x64xf32> to vector<288x64xf32>
    %40 = arith.truncf %39 : vector<288x64xf32> to vector<288x64xbf16>
    %c0_43 = arith.constant 0 : index
    %c0_44 = arith.constant 0 : index
    %41 = vector.load %arg7[%c0_43, %c0_44] : memref<288x64xf32, #tpu.memory_space<vmem>>, vector<288x64xf32>
    %c4 = arith.constant 4 : index
    %c0_45 = arith.constant 0 : index
    %c0_46 = arith.constant 0 : index
    %42 = vector.load %arg2[%c4, %c0_45, %c0_46] : memref<9x64x64xbf16, #tpu.memory_space<vmem>>, vector<1x64x64xbf16>
    %43 = vector.shape_cast %42 : vector<1x64x64xbf16> to vector<64x64xbf16>
    %cst_47 = arith.constant dense<0.000000e+00> : vector<288x64xf32>
    %44 = tpu.matmul %40, %43, %cst_47 {dimension_numbers = #tpu.dot_dimension_numbers<[1], [0], [0], [1], [0, 0, 1, 1], [], []>} : vector<288x64xbf16>, vector<64x64xbf16>, vector<288x64xf32> -> vector<288x64xf32>
    %45 = arith.addf %41, %44 : vector<288x64xf32>
    %c0_48 = arith.constant 0 : index
    %c0_49 = arith.constant 0 : index
    %46 = vector.load %arg7[%c0_48, %c0_49] : memref<288x64xf32, #tpu.memory_space<vmem>>, vector<288x64xf32>
    tpu.vector_store %arg7[%c0_48, %c0_49], %45 {strides = array<i32>} : memref<288x64xf32, #tpu.memory_space<vmem>>, vector<288x64xf32>,
    %c0_50 = arith.constant 0 : index
    %c20 = arith.constant 20 : index
    %c0_51 = arith.constant 0 : index
    %47 = vector.load %arg1[%c0_50, %c20, %c0_51] : memref<1x328x64xf32, #tpu.memory_space<vmem>>, vector<1x288x64xf32>
    %48 = vector.shape_cast %47 : vector<1x288x64xf32> to vector<288x64xf32>
    %49 = arith.truncf %48 : vector<288x64xf32> to vector<288x64xbf16>
    %c0_52 = arith.constant 0 : index
    %c0_53 = arith.constant 0 : index
    %50 = vector.load %arg7[%c0_52, %c0_53] : memref<288x64xf32, #tpu.memory_space<vmem>>, vector<288x64xf32>
    %c5 = arith.constant 5 : index
    %c0_54 = arith.constant 0 : index
    %c0_55 = arith.constant 0 : index
    %51 = vector.load %arg2[%c5, %c0_54, %c0_55] : memref<9x64x64xbf16, #tpu.memory_space<vmem>>, vector<1x64x64xbf16>
    %52 = vector.shape_cast %51 : vector<1x64x64xbf16> to vector<64x64xbf16>
    %cst_56 = arith.constant dense<0.000000e+00> : vector<288x64xf32>
    %53 = tpu.matmul %49, %52, %cst_56 {dimension_numbers = #tpu.dot_dimension_numbers<[1], [0], [0], [1], [0, 0, 1, 1], [], []>} : vector<288x64xbf16>, vector<64x64xbf16>, vector<288x64xf32> -> vector<288x64xf32>
    %54 = arith.addf %50, %53 : vector<288x64xf32>
    %c0_57 = arith.constant 0 : index
    %c0_58 = arith.constant 0 : index
    %55 = vector.load %arg7[%c0_57, %c0_58] : memref<288x64xf32, #tpu.memory_space<vmem>>, vector<288x64xf32>
    tpu.vector_store %arg7[%c0_57, %c0_58], %54 {strides = array<i32>} : memref<288x64xf32, #tpu.memory_space<vmem>>, vector<288x64xf32>,
    %c0_59 = arith.constant 0 : index
    %c36 = arith.constant 36 : index
    %c0_60 = arith.constant 0 : index
    %56 = vector.load %arg1[%c0_59, %c36, %c0_60] : memref<1x328x64xf32, #tpu.memory_space<vmem>>, vector<1x288x64xf32>
    %57 = vector.shape_cast %56 : vector<1x288x64xf32> to vector<288x64xf32>
    %58 = arith.truncf %57 : vector<288x64xf32> to vector<288x64xbf16>
    %c0_61 = arith.constant 0 : index
    %c0_62 = arith.constant 0 : index
    %59 = vector.load %arg7[%c0_61, %c0_62] : memref<288x64xf32, #tpu.memory_space<vmem>>, vector<288x64xf32>
    %c6 = arith.constant 6 : index
    %c0_63 = arith.constant 0 : index
    %c0_64 = arith.constant 0 : index
    %60 = vector.load %arg2[%c6, %c0_63, %c0_64] : memref<9x64x64xbf16, #tpu.memory_space<vmem>>, vector<1x64x64xbf16>
    %61 = vector.shape_cast %60 : vector<1x64x64xbf16> to vector<64x64xbf16>
    %cst_65 = arith.constant dense<0.000000e+00> : vector<288x64xf32>
    %62 = tpu.matmul %58, %61, %cst_65 {dimension_numbers = #tpu.dot_dimension_numbers<[1], [0], [0], [1], [0, 0, 1, 1], [], []>} : vector<288x64xbf16>, vector<64x64xbf16>, vector<288x64xf32> -> vector<288x64xf32>
    %63 = arith.addf %59, %62 : vector<288x64xf32>
    %c0_66 = arith.constant 0 : index
    %c0_67 = arith.constant 0 : index
    %64 = vector.load %arg7[%c0_66, %c0_67] : memref<288x64xf32, #tpu.memory_space<vmem>>, vector<288x64xf32>
    tpu.vector_store %arg7[%c0_66, %c0_67], %63 {strides = array<i32>} : memref<288x64xf32, #tpu.memory_space<vmem>>, vector<288x64xf32>,
    %c0_68 = arith.constant 0 : index
    %c37 = arith.constant 37 : index
    %c0_69 = arith.constant 0 : index
    %65 = vector.load %arg1[%c0_68, %c37, %c0_69] : memref<1x328x64xf32, #tpu.memory_space<vmem>>, vector<1x288x64xf32>
    %66 = vector.shape_cast %65 : vector<1x288x64xf32> to vector<288x64xf32>
    %67 = arith.truncf %66 : vector<288x64xf32> to vector<288x64xbf16>
    %c0_70 = arith.constant 0 : index
    %c0_71 = arith.constant 0 : index
    %68 = vector.load %arg7[%c0_70, %c0_71] : memref<288x64xf32, #tpu.memory_space<vmem>>, vector<288x64xf32>
    %c7 = arith.constant 7 : index
    %c0_72 = arith.constant 0 : index
    %c0_73 = arith.constant 0 : index
    %69 = vector.load %arg2[%c7, %c0_72, %c0_73] : memref<9x64x64xbf16, #tpu.memory_space<vmem>>, vector<1x64x64xbf16>
    %70 = vector.shape_cast %69 : vector<1x64x64xbf16> to vector<64x64xbf16>
    %cst_74 = arith.constant dense<0.000000e+00> : vector<288x64xf32>
    %71 = tpu.matmul %67, %70, %cst_74 {dimension_numbers = #tpu.dot_dimension_numbers<[1], [0], [0], [1], [0, 0, 1, 1], [], []>} : vector<288x64xbf16>, vector<64x64xbf16>, vector<288x64xf32> -> vector<288x64xf32>
    %72 = arith.addf %68, %71 : vector<288x64xf32>
    %c0_75 = arith.constant 0 : index
    %c0_76 = arith.constant 0 : index
    %73 = vector.load %arg7[%c0_75, %c0_76] : memref<288x64xf32, #tpu.memory_space<vmem>>, vector<288x64xf32>
    tpu.vector_store %arg7[%c0_75, %c0_76], %72 {strides = array<i32>} : memref<288x64xf32, #tpu.memory_space<vmem>>, vector<288x64xf32>,
    %c0_77 = arith.constant 0 : index
    %c38 = arith.constant 38 : index
    %c0_78 = arith.constant 0 : index
    %74 = vector.load %arg1[%c0_77, %c38, %c0_78] : memref<1x328x64xf32, #tpu.memory_space<vmem>>, vector<1x288x64xf32>
    %75 = vector.shape_cast %74 : vector<1x288x64xf32> to vector<288x64xf32>
    %76 = arith.truncf %75 : vector<288x64xf32> to vector<288x64xbf16>
    %c0_79 = arith.constant 0 : index
    %c0_80 = arith.constant 0 : index
    %77 = vector.load %arg7[%c0_79, %c0_80] : memref<288x64xf32, #tpu.memory_space<vmem>>, vector<288x64xf32>
    %c8 = arith.constant 8 : index
    %c0_81 = arith.constant 0 : index
    %c0_82 = arith.constant 0 : index
    %78 = vector.load %arg2[%c8, %c0_81, %c0_82] : memref<9x64x64xbf16, #tpu.memory_space<vmem>>, vector<1x64x64xbf16>
    %79 = vector.shape_cast %78 : vector<1x64x64xbf16> to vector<64x64xbf16>
    %cst_83 = arith.constant dense<0.000000e+00> : vector<288x64xf32>
    %80 = tpu.matmul %76, %79, %cst_83 {dimension_numbers = #tpu.dot_dimension_numbers<[1], [0], [0], [1], [0, 0, 1, 1], [], []>} : vector<288x64xbf16>, vector<64x64xbf16>, vector<288x64xf32> -> vector<288x64xf32>
    %81 = arith.addf %77, %80 : vector<288x64xf32>
    %c0_84 = arith.constant 0 : index
    %c0_85 = arith.constant 0 : index
    %82 = vector.load %arg7[%c0_84, %c0_85] : memref<288x64xf32, #tpu.memory_space<vmem>>, vector<288x64xf32>
    tpu.vector_store %arg7[%c0_84, %c0_85], %81 {strides = array<i32>} : memref<288x64xf32, #tpu.memory_space<vmem>>, vector<288x64xf32>,
    %c0_86 = arith.constant 0 : index
    %c0_87 = arith.constant 0 : index
    %83 = vector.load %arg7[%c0_86, %c0_87] : memref<288x64xf32, #tpu.memory_space<vmem>>, vector<288x64xf32>
    %c0_88 = arith.constant 0 : index
    %c0_89 = arith.constant 0 : index
    %c0_90 = arith.constant 0 : index
    %84 = vector.load %arg4[%c0_88, %c0_89, %c0_90] : memref<1x288x64xf32, #tpu.memory_space<vmem>>, vector<1x288x64xf32>
    %85 = vector.shape_cast %84 : vector<1x288x64xf32> to vector<288x64xf32>
    %86 = vector.shape_cast %83 : vector<288x64xf32> to vector<1x288x64xf32>
    tpu.vector_store %arg4[%c0_88, %c0_89, %c0_90], %86 {strides = array<i32>} : memref<1x288x64xf32, #tpu.memory_space<vmem>>, vector<1x288x64xf32>,
    %c0_91 = arith.constant 0 : index
    %c0_92 = arith.constant 0 : index
    %87 = vector.load %arg3[%c0_91, %c0_92] : memref<288x1xf32, #tpu.memory_space<vmem>>, vector<288x1xf32>
    %88 = vector.broadcast %87 : vector<288x1xf32> to vector<288x64xf32>
    %89 = arith.mulf %83, %88 : vector<288x64xf32>
    %cst_93 = arith.constant dense<0.000000e+00> : vector<64xf32>
    %90 = vector.multi_reduction <add>, %89, %cst_93 [0] : vector<288x64xf32> to vector<64xf32>
    %91 = vector.shape_cast %90 : vector<64xf32> to vector<1x64xf32>
    %c0_94 = arith.constant 0 : index
    %c0_95 = arith.constant 0 : index
    %c0_96 = arith.constant 0 : index
    %92 = vector.load %arg5[%c0_94, %c0_95, %c0_96] : memref<1x1x64xf32, #tpu.memory_space<vmem>>, vector<1x1x64xf32>
    %93 = vector.shape_cast %92 : vector<1x1x64xf32> to vector<1x64xf32>
    %94 = vector.shape_cast %91 : vector<1x64xf32> to vector<1x1x64xf32>
    tpu.vector_store %arg5[%c0_94, %c0_95, %c0_96], %94 {strides = array<i32>} : memref<1x1x64xf32, #tpu.memory_space<vmem>>, vector<1x1x64xf32>,
    %95 = arith.mulf %89, %89 : vector<288x64xf32>
    %cst_97 = arith.constant dense<0.000000e+00> : vector<64xf32>
    %96 = vector.multi_reduction <add>, %95, %cst_97 [0] : vector<288x64xf32> to vector<64xf32>
    %97 = vector.shape_cast %96 : vector<64xf32> to vector<1x64xf32>
    %c0_98 = arith.constant 0 : index
    %c0_99 = arith.constant 0 : index
    %c0_100 = arith.constant 0 : index
    %98 = vector.load %arg6[%c0_98, %c0_99, %c0_100] : memref<1x1x64xf32, #tpu.memory_space<vmem>>, vector<1x1x64xf32>
    %99 = vector.shape_cast %98 : vector<1x1x64xf32> to vector<1x64xf32>
    %100 = vector.shape_cast %97 : vector<1x64xf32> to vector<1x1x64xf32>
    tpu.vector_store %arg6[%c0_98, %c0_99, %c0_100], %100 {strides = array<i32>} : memref<1x1x64xf32, #tpu.memory_space<vmem>>, vector<1x1x64xf32>,
    return
  }
  func.func @transform_0(%arg0: i32) -> (i32, i32, i32) {
    %c0_i32 = arith.constant 0 : i32
    %c0_i32_0 = arith.constant 0 : i32
    %c0_i32_1 = arith.constant 0 : i32
    return %arg0, %c0_i32, %c0_i32_0 : i32, i32, i32
  }
  func.func @transform_1(%arg0: i32) -> (i32, i32, i32) {
    %c0_i32 = arith.constant 0 : i32
    %c0_i32_0 = arith.constant 0 : i32
    %c0_i32_1 = arith.constant 0 : i32
    %c0_i32_2 = arith.constant 0 : i32
    return %c0_i32, %c0_i32_0, %c0_i32_1 : i32, i32, i32
  }
  func.func @transform_2(%arg0: i32) -> (i32, i32) {
    %c0_i32 = arith.constant 0 : i32
    %c0_i32_0 = arith.constant 0 : i32
    %c0_i32_1 = arith.constant 0 : i32
    return %c0_i32, %c0_i32_0 : i32, i32
  }
  func.func @transform_3(%arg0: i32) -> (i32, i32, i32) {
    %c0_i32 = arith.constant 0 : i32
    %c0_i32_0 = arith.constant 0 : i32
    %c0_i32_1 = arith.constant 0 : i32
    return %arg0, %c0_i32, %c0_i32_0 : i32, i32, i32
  }
  func.func @transform_4(%arg0: i32) -> (i32, i32, i32) {
    %c0_i32 = arith.constant 0 : i32
    %c0_i32_0 = arith.constant 0 : i32
    %c0_i32_1 = arith.constant 0 : i32
    return %arg0, %c0_i32, %c0_i32_0 : i32, i32, i32
  }
  func.func @transform_5(%arg0: i32) -> (i32, i32, i32) {
    %c0_i32 = arith.constant 0 : i32
    %c0_i32_0 = arith.constant 0 : i32
    %c0_i32_1 = arith.constant 0 : i32
    return %arg0, %c0_i32, %c0_i32_0 : i32, i32, i32
  }
}

module attributes {stable_mosaic.version = 11 : i64} {
  func.func @_conv1x1_bias_kernel(%arg0: i32, %arg1: memref<1x288x64xf32, #tpu.memory_space<vmem>>, %arg2: memref<64x2xbf16, #tpu.memory_space<vmem>>, %arg3: memref<1x2xf32, #tpu.memory_space<vmem>>, %arg4: memref<1x288x2xf32, #tpu.memory_space<vmem>>) attributes {dimension_semantics = [#tpu.dimension_semantics<parallel>], iteration_bounds = array<i64: 2>, scalar_prefetch = 0 : i64, scratch_operands = 0 : i64, tpu.core_type = #tpu.core_type<tc>, window_params = [{transform_indices = @transform_0, window_bounds = array<i64: 1, 288, 64>}, {pipeline_mode = #tpu.pipeline_mode<synchronous>, transform_indices = @transform_1, window_bounds = array<i64: 64, 2>}, {pipeline_mode = #tpu.pipeline_mode<synchronous>, transform_indices = @transform_2, window_bounds = array<i64: 1, 2>}, {transform_indices = @transform_3, window_bounds = array<i64: 1, 288, 2>}]} {
    %c0 = arith.constant 0 : index
    %c0_0 = arith.constant 0 : index
    %c0_1 = arith.constant 0 : index
    %0 = vector.load %arg1[%c0, %c0_0, %c0_1] : memref<1x288x64xf32, #tpu.memory_space<vmem>>, vector<1x288x64xf32>
    %1 = vector.shape_cast %0 : vector<1x288x64xf32> to vector<288x64xf32>
    %2 = arith.truncf %1 : vector<288x64xf32> to vector<288x64xbf16>
    %c0_2 = arith.constant 0 : index
    %c0_3 = arith.constant 0 : index
    %3 = vector.load %arg2[%c0_2, %c0_3] : memref<64x2xbf16, #tpu.memory_space<vmem>>, vector<64x2xbf16>
    %cst = arith.constant dense<0.000000e+00> : vector<288x2xf32>
    %4 = tpu.matmul %2, %3, %cst {dimension_numbers = #tpu.dot_dimension_numbers<[1], [0], [0], [1], [0, 0, 1, 1], [], []>} : vector<288x64xbf16>, vector<64x2xbf16>, vector<288x2xf32> -> vector<288x2xf32>
    %c0_4 = arith.constant 0 : index
    %c0_5 = arith.constant 0 : index
    %5 = vector.load %arg3[%c0_4, %c0_5] : memref<1x2xf32, #tpu.memory_space<vmem>>, vector<1x2xf32>
    %6 = vector.broadcast %5 : vector<1x2xf32> to vector<288x2xf32>
    %7 = arith.addf %4, %6 : vector<288x2xf32>
    %c0_6 = arith.constant 0 : index
    %c0_7 = arith.constant 0 : index
    %c0_8 = arith.constant 0 : index
    %8 = vector.load %arg4[%c0_6, %c0_7, %c0_8] : memref<1x288x2xf32, #tpu.memory_space<vmem>>, vector<1x288x2xf32>
    %9 = vector.shape_cast %8 : vector<1x288x2xf32> to vector<288x2xf32>
    %10 = vector.shape_cast %7 : vector<288x2xf32> to vector<1x288x2xf32>
    tpu.vector_store %arg4[%c0_6, %c0_7, %c0_8], %10 {strides = array<i32>} : memref<1x288x2xf32, #tpu.memory_space<vmem>>, vector<1x288x2xf32>,
    return
  }
  func.func @transform_0(%arg0: i32) -> (i32, i32, i32) {
    %c0_i32 = arith.constant 0 : i32
    %c0_i32_0 = arith.constant 0 : i32
    %c0_i32_1 = arith.constant 0 : i32
    return %arg0, %c0_i32, %c0_i32_0 : i32, i32, i32
  }
  func.func @transform_1(%arg0: i32) -> (i32, i32) {
    %c0_i32 = arith.constant 0 : i32
    %c0_i32_0 = arith.constant 0 : i32
    %c0_i32_1 = arith.constant 0 : i32
    return %c0_i32, %c0_i32_0 : i32, i32
  }
  func.func @transform_2(%arg0: i32) -> (i32, i32) {
    %c0_i32 = arith.constant 0 : i32
    %c0_i32_0 = arith.constant 0 : i32
    %c0_i32_1 = arith.constant 0 : i32
    return %c0_i32, %c0_i32_0 : i32, i32
  }
  func.func @transform_3(%arg0: i32) -> (i32, i32, i32) {
    %c0_i32 = arith.constant 0 : i32
    %c0_i32_0 = arith.constant 0 : i32
    %c0_i32_1 = arith.constant 0 : i32
    return %arg0, %c0_i32, %c0_i32_0 : i32, i32, i32
  }
}

</mosaic_0001>

<llo_original>
// kernel: basenet_forward.6
$region0: #{basenet_forward.6}
  #allocation0 [shape = 'u32[]', space=smem, size = 0x4, offset = 0x4, fixed_abs, tag = 'smem constant byte address 0x4 - core index']
  #allocation1 [shape = 'u32[72,128]{1,0:T(1,128)}', space=vmem, size = 0x9000, scoped, tag = 'internal scratch']
  %s0 = inlined_call_operand.vmem [shape: f32[2,288,64], index: 0, kind: input, shape index: {}]
  %s1 = inlined_call_operand.vmem [shape: f32[1,64], index: 1, kind: input, shape index: {}]
  %s2 = inlined_call_operand.vmem [shape: f32[1,64], index: 2, kind: input, shape index: {}]
  %s3 = inlined_call_operand.vmem [shape: f32[2,288,64], index: 3, kind: output, shape index: {}]
  %s4 = sld [smem:[#allocation0]]
  $region45: #{basenet_forward.6} parent=0
    _
  %s6 = ssub.s32 1, %s4
  %s7 = scalar_select 0, %s6, %s4
  loop: start=0, step=1, limit=4
  $region2: #{basenet_forward.6} parent=0 // loop_pre_header
    _
  $region3: #{basenet_forward.6} parent=0 // loop_header
    %s9 = sphi 0, %s13
    %p10 = scmp.ge.s32.totalorder %s9, 4
    %s19 = sphi 0, %s21
    %s22 = sphi 0, %s19
    %s23 = sphi 0, %s22
    %s39 = sphi 0, %s23
    %s43 = sphi 0, %s43
    %s45 = sphi 0, %s43
    %s46 = sphi 0, %s45
    %s60 = sphi 0, %s46
    %s64 = sphi 0, %s64
    %s66 = sphi 0, %s64
    %s67 = sphi 0, %s66
    %s81 = sphi 0, %s67
    %s87 = sphi 0, %s89
    %s90 = sphi 0, %s87
    %s91 = sphi 0, %s90
    %s107 = sphi 0, %s91
  $region4: #{basenet_forward.6} parent=0 // loop_header_branch
    %12 = sbr.rel (%p10) target = $region8
  $region5: #{basenet_forward.6} parent=0 // loop_body
    %s14 = ssub.s32 %s9, 1
    %s15 = ssub.s32 %s9, 2
    %s16 = sadd.s32 %s9, 1
    %s17 = ssub.s32 %s9, %s16
    %p18 = scmp.eq.s32.totalorder %s17, 0
    %s20 = sadd.s32 %s19, 1
    %s21 = scalar_select %p18, %s19, %s20
    %p24 = pneg %p18
    %p25 = scmp.eq.s32.totalorder %s9, 1
    %p26 = por %p24, %p25
    %p27 = scmp.ne.s32.totalorder %s19, %s22
    %p28 = scmp.eq.s32.totalorder %s9, 0
    %p29 = por %p27, %p28
    %p30 = scmp.ne.s32.totalorder %s19, %s22
    %p31 = scmp.eq.s32.totalorder %s14, 1
    %p32 = por %p30, %p31
    %p33 = scmp.ne.s32.totalorder %s22, %s23
    %p34 = scmp.eq.s32.totalorder %s14, 0
    %p35 = por %p33, %p34
    %p36 = scmp.ne.s32.totalorder %s22, %s23
    %p37 = scmp.eq.s32.totalorder %s15, 1
    %p38 = por %p36, %p37
    %p40 = scmp.ne.s32.totalorder %s23, %s39
    %p41 = scmp.eq.s32.totalorder %s15, 0
    %p42 = por %p40, %p41
    %s44 = sadd.s32 %s43, 1
    %p47 = scmp.eq.s32.totalorder %s9, 1
    %p48 = scmp.ne.s32.totalorder %s43, %s45
    %p49 = scmp.eq.s32.totalorder %s9, 0
    %p50 = por %p48, %p49
    %p51 = scmp.ne.s32.totalorder %s43, %s45
    %p52 = scmp.eq.s32.totalorder %s14, 1
    %p53 = por %p51, %p52
    %p54 = scmp.ne.s32.totalorder %s45, %s46
    %p55 = scmp.eq.s32.totalorder %s14, 0
    %p56 = por %p54, %p55
    %p57 = scmp.ne.s32.totalorder %s45, %s46
    %p58 = scmp.eq.s32.totalorder %s15, 1
    %p59 = por %p57, %p58
    %p61 = scmp.ne.s32.totalorder %s46, %s60
    %p62 = scmp.eq.s32.totalorder %s15, 0
    %p63 = por %p61, %p62
    %s65 = sadd.s32 %s64, 1
    %p68 = scmp.eq.s32.totalorder %s9, 1
    %p69 = scmp.ne.s32.totalorder %s64, %s66
    %p70 = scmp.eq.s32.totalorder %s9, 0
    %p71 = por %p69, %p70
    %p72 = scmp.ne.s32.totalorder %s64, %s66
    %p73 = scmp.eq.s32.totalorder %s14, 1
    %p74 = por %p72, %p73
    %p75 = scmp.ne.s32.totalorder %s66, %s67
    %p76 = scmp.eq.s32.totalorder %s14, 0
    %p77 = por %p75, %p76
    %p78 = scmp.ne.s32.totalorder %s66, %s67
    %p79 = scmp.eq.s32.totalorder %s15, 1
    %p80 = por %p78, %p79
    %p82 = scmp.ne.s32.totalorder %s67, %s81
    %p83 = scmp.eq.s32.totalorder %s15, 0
    %p84 = por %p82, %p83
    %s85 = ssub.s32 %s9, %s16
    %p86 = scmp.eq.s32.totalorder %s85, 0
    %s88 = sadd.s32 %s87, 1
    %s89 = scalar_select %p86, %s87, %s88
    %p92 = pneg %p86
    %p93 = scmp.eq.s32.totalorder %s9, 1
    %p94 = por %p92, %p93
    %p95 = scmp.ne.s32.totalorder %s87, %s90
    %p96 = scmp.eq.s32.totalorder %s9, 0
    %p97 = por %p95, %p96
    %p98 = scmp.ne.s32.totalorder %s87, %s90
    %p99 = scmp.eq.s32.totalorder %s14, 1
    %p100 = por %p98, %p99
    %p101 = scmp.ne.s32.totalorder %s90, %s91
    %p102 = scmp.eq.s32.totalorder %s14, 0
    %p103 = por %p101, %p102
    %p104 = scmp.ne.s32.totalorder %s90, %s91
    %p105 = scmp.eq.s32.totalorder %s15, 1
    %p106 = por %p104, %p105
    %p108 = scmp.ne.s32.totalorder %s91, %s107
    %p109 = scmp.eq.s32.totalorder %s15, 0
    %p110 = por %p108, %p109
    %p111 = scmp.le.s32.totalorder 1, %s9
    %p112 = scmp.lt.s32.totalorder %s9, 3
    %p113 = pnand %p111, %p112
    %p114 = pneg %p113
    // Predicated region
    $region9: #{basenet_forward.6} parent=5 // pred_check
      _
    $region10: #{basenet_forward.6} parent=5 // pred_check_branch
      %116 = sbr.rel (%p113) target = $region12
    $region11: #{basenet_forward.6} parent=5 // pred_region
      %s117 = ssub.s32 %s9, 1
      // Predicated region
      $region13: #{basenet_forward.6} parent=11 // pred_check
        %p118 = pneg %p56
      $region14: #{basenet_forward.6} parent=11 // pred_check_branch
        %120 = sbr.rel (%p118) target = $region16
      $region15: #{basenet_forward.6} parent=11 // pred_region
        _
      $region16: #{basenet_forward.6} parent=11 // pred_fallthru
        _
      // Predicated region
      $region17: #{basenet_forward.6} parent=11 // pred_check
        %p121 = pneg %p77
      $region18: #{basenet_forward.6} parent=11 // pred_check_branch
        %123 = sbr.rel (%p121) target = $region20
      $region19: #{basenet_forward.6} parent=11 // pred_region
        _
      $region20: #{basenet_forward.6} parent=11 // pred_fallthru
        _
    $region12: #{basenet_forward.6} parent=5 // pred_fallthru
      _
    %p124 = scmp.lt.s32.totalorder %s9, 2
    // Predicated region
    $region21: #{basenet_forward.6} parent=5 // pred_check
      %p125 = pneg %p124
    $region22: #{basenet_forward.6} parent=5 // pred_check_branch
      %127 = sbr.rel (%p125) target = $region24
    $region23: #{basenet_forward.6} parent=5 // pred_region
      // Predicated region
      $region25: #{basenet_forward.6} parent=23 // pred_check
        %p128 = pneg %p29
      $region26: #{basenet_forward.6} parent=23 // pred_check_branch
        %130 = sbr.rel (%p128) target = $region28
      $region27: #{basenet_forward.6} parent=23 // pred_region
        %p131 = scmp.lt.s32.totalorder %s9, 1
        %s132 = scalar_select %p131, %s9, 1
        %s133 = smul.addr %s132, 36
        %s134 = smul.addr %s133, 8
        %s135 = scalar_lea.vmem %s0, %s134
      $region28: #{basenet_forward.6} parent=23 // pred_fallthru
        _
    $region24: #{basenet_forward.6} parent=5 // pred_fallthru
      _
    %p136 = scmp.le.s32.totalorder 1, %s9
    %p137 = scmp.lt.s32.totalorder %s9, 3
    %p138 = pnand %p136, %p137
    %p139 = pneg %p138
    // Predicated region
    $region29: #{basenet_forward.6} parent=5 // pred_check
      _
    $region30: #{basenet_forward.6} parent=5 // pred_check_branch
      %141 = sbr.rel (%p138) target = $region32
    $region31: #{basenet_forward.6} parent=5 // pred_region
      %s142 = ssub.s32 %s9, 1
      %p143 = scmp.lt.s32.totalorder %s14, 1
      %s144 = scalar_select %p143, %s14, 1
      %s145 = smul.addr %s144, 36
      %s146 = smul.addr %s145, 8
      %s147 = scalar_lea.vmem %s0, %s146
      %p148 = pneg %p35
      %p149 = pneg %p32
      %p150 = pneg %p56
      %p151 = pneg %p53
      %p152 = pneg %p77
      %p153 = pneg %p74
      %p154 = pneg %p103
      %p155 = pneg %p100
      %p156 = scmp.lt.s32.totalorder %s14, 1
      %s157 = scalar_select %p156, %s14, 1
      %s158 = smul.addr %s157, 36
      %s159 = smul.addr %s158, 8
      %s160 = scalar_lea.vmem %s3, %s159
      %p161 = scmp.lt.s32.totalorder %s14, 1
      %s162 = scalar_select %p161, %s14, 1
      %s163 = smul.addr %s162, 36
      %s164 = smul.addr %s163, 8
      %s165 = scalar_lea.vmem %s0, %s164
      %p166 = scmp.lt.s32.totalorder %s14, 1
      %s167 = scalar_select %p166, %s14, 1
      %s168 = smul.addr %s167, 36
      %s169 = smul.addr %s168, 8
      %s170 = scalar_lea.vmem %s3, %s169
      %v171 = vld [vmem:[%s165] sm:$0xff]
      %v172 = vld [vmem:[%s165 + $0x8] sm:$0xff]
      %v173 = vld [vmem:[%s165 + $0x10] sm:$0xff]
      %v174 = vld [vmem:[%s165 + $0x18] sm:$0xff]
      %v175 = vld [vmem:[%s165 + $0x20] sm:$0xff]
      %v176 = vld [vmem:[%s165 + $0x28] sm:$0xff]
      %v177 = vld [vmem:[%s165 + $0x30] sm:$0xff]
      %v178 = vld [vmem:[%s165 + $0x38] sm:$0xff]
      %v179 = vld [vmem:[%s165 + $0x40] sm:$0xff]
      %v180 = vld [vmem:[%s165 + $0x48] sm:$0xff]
      %v181 = vld [vmem:[%s165 + $0x50] sm:$0xff]
      %v182 = vld [vmem:[%s165 + $0x58] sm:$0xff]
      %v183 = vld [vmem:[%s165 + $0x60] sm:$0xff]
      %v184 = vld [vmem:[%s165 + $0x68] sm:$0xff]
      %v185 = vld [vmem:[%s165 + $0x70] sm:$0xff]
      %v186 = vld [vmem:[%s165 + $0x78] sm:$0xff]
      %v187 = vld [vmem:[%s165 + $0x80] sm:$0xff]
      %v188 = vld [vmem:[%s165 + $0x88] sm:$0xff]
      %v189 = vld [vmem:[%s165 + $0x90] sm:$0xff]
      %v190 = vld [vmem:[%s165 + $0x98] sm:$0xff]
      %v191 = vld [vmem:[%s165 + $0xa0] sm:$0xff]
      %v192 = vld [vmem:[%s165 + $0xa8] sm:$0xff]
      %v193 = vld [vmem:[%s165 + $0xb0] sm:$0xff]
      %v194 = vld [vmem:[%s165 + $0xb8] sm:$0xff]
      %v195 = vld [vmem:[%s165 + $0xc0] sm:$0xff]
      %v196 = vld [vmem:[%s165 + $0xc8] sm:$0xff]
      %v197 = vld [vmem:[%s165 + $0xd0] sm:$0xff]
      %v198 = vld [vmem:[%s165 + $0xd8] sm:$0xff]
      %v199 = vld [vmem:[%s165 + $0xe0] sm:$0xff]
      %v200 = vld [vmem:[%s165 + $0xe8] sm:$0xff]
      %v201 = vld [vmem:[%s165 + $0xf0] sm:$0xff]
      %v202 = vld [vmem:[%s165 + $0xf8] sm:$0xff]
      %v203 = vld [vmem:[%s165 + $0x100] sm:$0xff]
      %v204 = vld [vmem:[%s165 + $0x108] sm:$0xff]
      %v205 = vld [vmem:[%s165 + $0x110] sm:$0xff]
      %v206 = vld [vmem:[%s165 + $0x118] sm:$0xff]
      %v207 = vld [vmem:[%s1] sm:$0x1]
      %v209 = vperm.slane %v207, 0
      %v211 = vmul.f32 %v171, %v209
      %v212 = vmul.f32 %v172, %v209
      %v213 = vmul.f32 %v173, %v209
      %v214 = vmul.f32 %v174, %v209
      %v215 = vmul.f32 %v175, %v209
      %v216 = vmul.f32 %v176, %v209
      %v217 = vmul.f32 %v177, %v209
      %v218 = vmul.f32 %v178, %v209
      %v219 = vmul.f32 %v179, %v209
      %v220 = vmul.f32 %v180, %v209
      %v221 = vmul.f32 %v181, %v209
      %v222 = vmul.f32 %v182, %v209
      %v223 = vmul.f32 %v183, %v209
      %v224 = vmul.f32 %v184, %v209
      %v225 = vmul.f32 %v185, %v209
      %v226 = vmul.f32 %v186, %v209
      %v227 = vmul.f32 %v187, %v209
      %v228 = vmul.f32 %v188, %v209
      %v229 = vmul.f32 %v189, %v209
      %v230 = vmul.f32 %v190, %v209
      %v231 = vmul.f32 %v191, %v209
      %v232 = vmul.f32 %v192, %v209
      %v233 = vmul.f32 %v193, %v209
      %v234 = vmul.f32 %v194, %v209
      %v235 = vmul.f32 %v195, %v209
      %v236 = vmul.f32 %v196, %v209
      %v237 = vmul.f32 %v197, %v209
      %v238 = vmul.f32 %v198, %v209
      %v239 = vmul.f32 %v199, %v209
      %v240 = vmul.f32 %v200, %v209
      %v241 = vmul.f32 %v201, %v209
      %v242 = vmul.f32 %v202, %v209
      %v243 = vmul.f32 %v203, %v209
      %v244 = vmul.f32 %v204, %v209
      %v245 = vmul.f32 %v205, %v209
      %v246 = vmul.f32 %v206, %v209
      %v247 = vld [vmem:[%s2] sm:$0x1]
      %v249 = vperm.slane %v247, 0
      %v251 = vadd.f32 %v211, %v249
      %v252 = vadd.f32 %v212, %v249
      %v253 = vadd.f32 %v213, %v249
      %v254 = vadd.f32 %v214, %v249
      %v255 = vadd.f32 %v215, %v249
      %v256 = vadd.f32 %v216, %v249
      %v257 = vadd.f32 %v217, %v249
      %v258 = vadd.f32 %v218, %v249
      %v259 = vadd.f32 %v219, %v249
      %v260 = vadd.f32 %v220, %v249
      %v261 = vadd.f32 %v221, %v249
      %v262 = vadd.f32 %v222, %v249
      %v263 = vadd.f32 %v223, %v249
      %v264 = vadd.f32 %v224, %v249
      %v265 = vadd.f32 %v225, %v249
      %v266 = vadd.f32 %v226, %v249
      %v267 = vadd.f32 %v227, %v249
      %v268 = vadd.f32 %v228, %v249
      %v269 = vadd.f32 %v229, %v249
      %v270 = vadd.f32 %v230, %v249
      %v271 = vadd.f32 %v231, %v249
      %v272 = vadd.f32 %v232, %v249
      %v273 = vadd.f32 %v233, %v249
      %v274 = vadd.f32 %v234, %v249
      %v275 = vadd.f32 %v235, %v249
      %v276 = vadd.f32 %v236, %v249
      %v277 = vadd.f32 %v237, %v249
      %v278 = vadd.f32 %v238, %v249
      %v279 = vadd.f32 %v239, %v249
      %v280 = vadd.f32 %v240, %v249
      %v281 = vadd.f32 %v241, %v249
      %v282 = vadd.f32 %v242, %v249
      %v283 = vadd.f32 %v243, %v249
      %v284 = vadd.f32 %v244, %v249
      %v285 = vadd.f32 %v245, %v249
      %v286 = vadd.f32 %v246, %v249
      %v287 = vmax.f32 %v251, 0.0
      %v288 = vmax.f32 %v252, 0.0
      %v289 = vmax.f32 %v253, 0.0
      %v290 = vmax.f32 %v254, 0.0
      %v291 = vmax.f32 %v255, 0.0
      %v292 = vmax.f32 %v256, 0.0
      %v293 = vmax.f32 %v257, 0.0
      %v294 = vmax.f32 %v258, 0.0
      %v295 = vmax.f32 %v259, 0.0
      %v296 = vmax.f32 %v260, 0.0
      %v297 = vmax.f32 %v261, 0.0
      %v298 = vmax.f32 %v262, 0.0
      %v299 = vmax.f32 %v263, 0.0
      %v300 = vmax.f32 %v264, 0.0
      %v301 = vmax.f32 %v265, 0.0
      %v302 = vmax.f32 %v266, 0.0
      %v303 = vmax.f32 %v267, 0.0
      %v304 = vmax.f32 %v268, 0.0
      %v305 = vmax.f32 %v269, 0.0
      %v306 = vmax.f32 %v270, 0.0
      %v307 = vmax.f32 %v271, 0.0
      %v308 = vmax.f32 %v272, 0.0
      %v309 = vmax.f32 %v273, 0.0
      %v310 = vmax.f32 %v274, 0.0
      %v311 = vmax.f32 %v275, 0.0
      %v312 = vmax.f32 %v276, 0.0
      %v313 = vmax.f32 %v277, 0.0
      %v314 = vmax.f32 %v278, 0.0
      %v315 = vmax.f32 %v279, 0.0
      %v316 = vmax.f32 %v280, 0.0
      %v317 = vmax.f32 %v281, 0.0
      %v318 = vmax.f32 %v282, 0.0
      %v319 = vmax.f32 %v283, 0.0
      %v320 = vmax.f32 %v284, 0.0
      %v321 = vmax.f32 %v285, 0.0
      %v322 = vmax.f32 %v286, 0.0
      %vm323 = vcmask 523264
      %324 = vst.msk [vmem:[%s170] sm:$0xff] %vm323, %v287
      %325 = vst.msk [vmem:[%s170 + $0x8] sm:$0xff] %vm323, %v288
      %326 = vst.msk [vmem:[%s170 + $0x10] sm:$0xff] %vm323, %v289
      %327 = vst.msk [vmem:[%s170 + $0x18] sm:$0xff] %vm323, %v290
      %328 = vst.msk [vmem:[%s170 + $0x20] sm:$0xff] %vm323, %v291
      %329 = vst.msk [vmem:[%s170 + $0x28] sm:$0xff] %vm323, %v292
      %330 = vst.msk [vmem:[%s170 + $0x30] sm:$0xff] %vm323, %v293
      %331 = vst.msk [vmem:[%s170 + $0x38] sm:$0xff] %vm323, %v294
      %332 = vst.msk [vmem:[%s170 + $0x40] sm:$0xff] %vm323, %v295
      %333 = vst.msk [vmem:[%s170 + $0x48] sm:$0xff] %vm323, %v296
      %334 = vst.msk [vmem:[%s170 + $0x50] sm:$0xff] %vm323, %v297
      %335 = vst.msk [vmem:[%s170 + $0x58] sm:$0xff] %vm323, %v298
      %336 = vst.msk [vmem:[%s170 + $0x60] sm:$0xff] %vm323, %v299
      %337 = vst.msk [vmem:[%s170 + $0x68] sm:$0xff] %vm323, %v300
      %338 = vst.msk [vmem:[%s170 + $0x70] sm:$0xff] %vm323, %v301
      %339 = vst.msk [vmem:[%s170 + $0x78] sm:$0xff] %vm323, %v302
      %340 = vst.msk [vmem:[%s170 + $0x80] sm:$0xff] %vm323, %v303
      %341 = vst.msk [vmem:[%s170 + $0x88] sm:$0xff] %vm323, %v304
      %342 = vst.msk [vmem:[%s170 + $0x90] sm:$0xff] %vm323, %v305
      %343 = vst.msk [vmem:[%s170 + $0x98] sm:$0xff] %vm323, %v306
      %344 = vst.msk [vmem:[%s170 + $0xa0] sm:$0xff] %vm323, %v307
      %345 = vst.msk [vmem:[%s170 + $0xa8] sm:$0xff] %vm323, %v308
      %346 = vst.msk [vmem:[%s170 + $0xb0] sm:$0xff] %vm323, %v309
      %347 = vst.msk [vmem:[%s170 + $0xb8] sm:$0xff] %vm323, %v310
      %348 = vst.msk [vmem:[%s170 + $0xc0] sm:$0xff] %vm323, %v311
      %349 = vst.msk [vmem:[%s170 + $0xc8] sm:$0xff] %vm323, %v312
      %350 = vst.msk [vmem:[%s170 + $0xd0] sm:$0xff] %vm323, %v313
      %351 = vst.msk [vmem:[%s170 + $0xd8] sm:$0xff] %vm323, %v314
      %352 = vst.msk [vmem:[%s170 + $0xe0] sm:$0xff] %vm323, %v315
      %353 = vst.msk [vmem:[%s170 + $0xe8] sm:$0xff] %vm323, %v316
      %354 = vst.msk [vmem:[%s170 + $0xf0] sm:$0xff] %vm323, %v317
      %355 = vst.msk [vmem:[%s170 + $0xf8] sm:$0xff] %vm323, %v318
      %356 = vst.msk [vmem:[%s170 + $0x100] sm:$0xff] %vm323, %v319
      %357 = vst.msk [vmem:[%s170 + $0x108] sm:$0xff] %vm323, %v320
      %358 = vst.msk [vmem:[%s170 + $0x110] sm:$0xff] %vm323, %v321
      %359 = vst.msk [vmem:[%s170 + $0x118] sm:$0xff] %vm323, %v322
      %p360 = scmp.lt.s32.totalorder %s14, 1
      %s361 = scalar_select %p360, %s14, 1
      %s362 = smul.addr %s361, 36
      %s363 = smul.addr %s362, 8
      %s364 = scalar_lea.vmem %s3, %s363
      // Predicated region
      $region33: #{basenet_forward.6} parent=31 // pred_check
        %p365 = pneg %p100
      $region34: #{basenet_forward.6} parent=31 // pred_check_branch
        %367 = sbr.rel (%p365) target = $region36
      $region35: #{basenet_forward.6} parent=31 // pred_region
        _
      $region36: #{basenet_forward.6} parent=31 // pred_fallthru
        _
    $region32: #{basenet_forward.6} parent=5 // pred_fallthru
      _
    %p368 = scmp.le.s32.totalorder 2, %s9
    // Predicated region
    $region37: #{basenet_forward.6} parent=5 // pred_check
      %p369 = pneg %p368
    $region38: #{basenet_forward.6} parent=5 // pred_check_branch
      %371 = sbr.rel (%p369) target = $region40
    $region39: #{basenet_forward.6} parent=5 // pred_region
      %s372 = ssub.s32 %s9, 2
      // Predicated region
      $region41: #{basenet_forward.6} parent=39 // pred_check
        %p373 = pneg %p106
      $region42: #{basenet_forward.6} parent=39 // pred_check_branch
        %375 = sbr.rel (%p373) target = $region44
      $region43: #{basenet_forward.6} parent=39 // pred_region
        %p376 = scmp.lt.s32.totalorder %s15, 1
        %s377 = scalar_select %p376, %s15, 1
        %s378 = smul.addr %s377, 36
        %s379 = smul.addr %s378, 8
        %s380 = scalar_lea.vmem %s3, %s379
      $region44: #{basenet_forward.6} parent=39 // pred_fallthru
        _
    $region40: #{basenet_forward.6} parent=5 // pred_fallthru
      _
  $region6: #{basenet_forward.6} parent=0 // loop_footer
    %s13 = sadd.s32 1, %s9
  $region7: #{basenet_forward.6} parent=0 // loop_footer_branch
    %8 = sbr.rel target = $region3
  $region8: #{basenet_forward.6} parent=0 // loop_exit
    _

// kernel: basenet_forward.9
$region0: #{basenet_forward.9}
  #allocation0 [shape = 'u32[]', space=smem, size = 0x4, offset = 0x4, fixed_abs, tag = 'smem constant byte address 0x4 - core index']
  #allocation1 [shape = 'u32[72,128]{1,0:T(1,128)}', space=vmem, size = 0x9000, scoped, tag = 'internal scratch']
  %s0 = inlined_call_operand.vmem [shape: f32[2,288,64], index: 0, kind: input, shape index: {}]
  %s1 = inlined_call_operand.vmem [shape: bf16[64,2], index: 1, kind: input, shape index: {}]
  %s2 = inlined_call_operand.vmem [shape: f32[1,2], index: 2, kind: input, shape index: {}]
  %s3 = inlined_call_operand.vmem [shape: f32[2,288,2], index: 3, kind: output, shape index: {}]
  %s4 = sld [smem:[#allocation0]]
  $region45: #{basenet_forward.9} parent=0
    _
  %s6 = ssub.s32 1, %s4
  %s7 = scalar_select 0, %s6, %s4
  loop: start=0, step=1, limit=4
  $region2: #{basenet_forward.9} parent=0 // loop_pre_header
    _
  $region3: #{basenet_forward.9} parent=0 // loop_header
    %s9 = sphi 0, %s13
    %p10 = scmp.ge.s32.totalorder %s9, 4
    %s19 = sphi 0, %s21
    %s22 = sphi 0, %s19
    %s23 = sphi 0, %s22
    %s39 = sphi 0, %s23
    %s43 = sphi 0, %s43
    %s45 = sphi 0, %s43
    %s46 = sphi 0, %s45
    %s60 = sphi 0, %s46
    %s64 = sphi 0, %s64
    %s66 = sphi 0, %s64
    %s67 = sphi 0, %s66
    %s81 = sphi 0, %s67
    %s87 = sphi 0, %s89
    %s90 = sphi 0, %s87
    %s91 = sphi 0, %s90
    %s107 = sphi 0, %s91
  $region4: #{basenet_forward.9} parent=0 // loop_header_branch
    %12 = sbr.rel (%p10) target = $region8
  $region5: #{basenet_forward.9} parent=0 // loop_body
    %s14 = ssub.s32 %s9, 1
    %s15 = ssub.s32 %s9, 2
    %s16 = sadd.s32 %s9, 1
    %s17 = ssub.s32 %s9, %s16
    %p18 = scmp.eq.s32.totalorder %s17, 0
    %s20 = sadd.s32 %s19, 1
    %s21 = scalar_select %p18, %s19, %s20
    %p24 = pneg %p18
    %p25 = scmp.eq.s32.totalorder %s9, 1
    %p26 = por %p24, %p25
    %p27 = scmp.ne.s32.totalorder %s19, %s22
    %p28 = scmp.eq.s32.totalorder %s9, 0
    %p29 = por %p27, %p28
    %p30 = scmp.ne.s32.totalorder %s19, %s22
    %p31 = scmp.eq.s32.totalorder %s14, 1
    %p32 = por %p30, %p31
    %p33 = scmp.ne.s32.totalorder %s22, %s23
    %p34 = scmp.eq.s32.totalorder %s14, 0
    %p35 = por %p33, %p34
    %p36 = scmp.ne.s32.totalorder %s22, %s23
    %p37 = scmp.eq.s32.totalorder %s15, 1
    %p38 = por %p36, %p37
    %p40 = scmp.ne.s32.totalorder %s23, %s39
    %p41 = scmp.eq.s32.totalorder %s15, 0
    %p42 = por %p40, %p41
    %s44 = sadd.s32 %s43, 1
    %p47 = scmp.eq.s32.totalorder %s9, 1
    %p48 = scmp.ne.s32.totalorder %s43, %s45
    %p49 = scmp.eq.s32.totalorder %s9, 0
    %p50 = por %p48, %p49
    %p51 = scmp.ne.s32.totalorder %s43, %s45
    %p52 = scmp.eq.s32.totalorder %s14, 1
    %p53 = por %p51, %p52
    %p54 = scmp.ne.s32.totalorder %s45, %s46
    %p55 = scmp.eq.s32.totalorder %s14, 0
    %p56 = por %p54, %p55
    %p57 = scmp.ne.s32.totalorder %s45, %s46
    %p58 = scmp.eq.s32.totalorder %s15, 1
    %p59 = por %p57, %p58
    %p61 = scmp.ne.s32.totalorder %s46, %s60
    %p62 = scmp.eq.s32.totalorder %s15, 0
    %p63 = por %p61, %p62
    %s65 = sadd.s32 %s64, 1
    %p68 = scmp.eq.s32.totalorder %s9, 1
    %p69 = scmp.ne.s32.totalorder %s64, %s66
    %p70 = scmp.eq.s32.totalorder %s9, 0
    %p71 = por %p69, %p70
    %p72 = scmp.ne.s32.totalorder %s64, %s66
    %p73 = scmp.eq.s32.totalorder %s14, 1
    %p74 = por %p72, %p73
    %p75 = scmp.ne.s32.totalorder %s66, %s67
    %p76 = scmp.eq.s32.totalorder %s14, 0
    %p77 = por %p75, %p76
    %p78 = scmp.ne.s32.totalorder %s66, %s67
    %p79 = scmp.eq.s32.totalorder %s15, 1
    %p80 = por %p78, %p79
    %p82 = scmp.ne.s32.totalorder %s67, %s81
    %p83 = scmp.eq.s32.totalorder %s15, 0
    %p84 = por %p82, %p83
    %s85 = ssub.s32 %s9, %s16
    %p86 = scmp.eq.s32.totalorder %s85, 0
    %s88 = sadd.s32 %s87, 1
    %s89 = scalar_select %p86, %s87, %s88
    %p92 = pneg %p86
    %p93 = scmp.eq.s32.totalorder %s9, 1
    %p94 = por %p92, %p93
    %p95 = scmp.ne.s32.totalorder %s87, %s90
    %p96 = scmp.eq.s32.totalorder %s9, 0
    %p97 = por %p95, %p96
    %p98 = scmp.ne.s32.totalorder %s87, %s90
    %p99 = scmp.eq.s32.totalorder %s14, 1
    %p100 = por %p98, %p99
    %p101 = scmp.ne.s32.totalorder %s90, %s91
    %p102 = scmp.eq.s32.totalorder %s14, 0
    %p103 = por %p101, %p102
    %p104 = scmp.ne.s32.totalorder %s90, %s91
    %p105 = scmp.eq.s32.totalorder %s15, 1
    %p106 = por %p104, %p105
    %p108 = scmp.ne.s32.totalorder %s91, %s107
    %p109 = scmp.eq.s32.totalorder %s15, 0
    %p110 = por %p108, %p109
    %p111 = scmp.le.s32.totalorder 1, %s9
    %p112 = scmp.lt.s32.totalorder %s9, 3
    %p113 = pnand %p111, %p112
    %p114 = pneg %p113
    // Predicated region
    $region9: #{basenet_forward.9} parent=5 // pred_check
      _
    $region10: #{basenet_forward.9} parent=5 // pred_check_branch
      %116 = sbr.rel (%p113) target = $region12
    $region11: #{basenet_forward.9} parent=5 // pred_region
      %s117 = ssub.s32 %s9, 1
      // Predicated region
      $region13: #{basenet_forward.9} parent=11 // pred_check
        %p118 = pneg %p56
      $region14: #{basenet_forward.9} parent=11 // pred_check_branch
        %120 = sbr.rel (%p118) target = $region16
      $region15: #{basenet_forward.9} parent=11 // pred_region
        _
      $region16: #{basenet_forward.9} parent=11 // pred_fallthru
        _
      // Predicated region
      $region17: #{basenet_forward.9} parent=11 // pred_check
        %p121 = pneg %p77
      $region18: #{basenet_forward.9} parent=11 // pred_check_branch
        %123 = sbr.rel (%p121) target = $region20
      $region19: #{basenet_forward.9} parent=11 // pred_region
        _
      $region20: #{basenet_forward.9} parent=11 // pred_fallthru
        _
    $region12: #{basenet_forward.9} parent=5 // pred_fallthru
      _
    %p124 = scmp.lt.s32.totalorder %s9, 2
    // Predicated region
    $region21: #{basenet_forward.9} parent=5 // pred_check
      %p125 = pneg %p124
    $region22: #{basenet_forward.9} parent=5 // pred_check_branch
      %127 = sbr.rel (%p125) target = $region24
    $region23: #{basenet_forward.9} parent=5 // pred_region
      // Predicated region
      $region25: #{basenet_forward.9} parent=23 // pred_check
        %p128 = pneg %p29
      $region26: #{basenet_forward.9} parent=23 // pred_check_branch
        %130 = sbr.rel (%p128) target = $region28
      $region27: #{basenet_forward.9} parent=23 // pred_region
        %p131 = scmp.lt.s32.totalorder %s9, 1
        %s132 = scalar_select %p131, %s9, 1
        %s133 = smul.addr %s132, 36
        %s134 = smul.addr %s133, 8
        %s135 = scalar_lea.vmem %s0, %s134
      $region28: #{basenet_forward.9} parent=23 // pred_fallthru
        _
    $region24: #{basenet_forward.9} parent=5 // pred_fallthru
      _
    %p136 = scmp.le.s32.totalorder 1, %s9
    %p137 = scmp.lt.s32.totalorder %s9, 3
    %p138 = pnand %p136, %p137
    %p139 = pneg %p138
    // Predicated region
    $region29: #{basenet_forward.9} parent=5 // pred_check
      _
    $region30: #{basenet_forward.9} parent=5 // pred_check_branch
      %141 = sbr.rel (%p138) target = $region32
    $region31: #{basenet_forward.9} parent=5 // pred_region
      %s142 = ssub.s32 %s9, 1
      %p143 = scmp.lt.s32.totalorder %s14, 1
      %s144 = scalar_select %p143, %s14, 1
      %s145 = smul.addr %s144, 36
      %s146 = smul.addr %s145, 8
      %s147 = scalar_lea.vmem %s0, %s146
      %p148 = pneg %p35
      %p149 = pneg %p32
      %p150 = pneg %p56
      %p151 = pneg %p53
      %p152 = pneg %p77
      %p153 = pneg %p74
      %p154 = pneg %p103
      %p155 = pneg %p100
      %p156 = scmp.lt.s32.totalorder %s14, 1
      %s157 = scalar_select %p156, %s14, 1
      %s158 = smul.addr %s157, 36
      %s159 = smul.addr %s158, 8
      %s160 = scalar_lea.vmem %s3, %s159
      %p161 = scmp.lt.s32.totalorder %s14, 1
      %s162 = scalar_select %p161, %s14, 1
      %s163 = smul.addr %s162, 36
      %s164 = smul.addr %s163, 8
      %s165 = scalar_lea.vmem %s0, %s164
      %p166 = scmp.lt.s32.totalorder %s14, 1
      %s167 = scalar_select %p166, %s14, 1
      %s168 = smul.addr %s167, 36
      %s169 = smul.addr %s168, 8
      %s170 = scalar_lea.vmem %s3, %s169
      %v172 = vld [vmem:[%s165] sm:$0xff]
      %v173 = vld [vmem:[%s165 + $0x8] sm:$0xff]
      %v174 = vld [vmem:[%s165 + $0x10] sm:$0xff]
      %v175 = vld [vmem:[%s165 + $0x18] sm:$0xff]
      %v176 = vld [vmem:[%s165 + $0x20] sm:$0xff]
      %v177 = vld [vmem:[%s165 + $0x28] sm:$0xff]
      %v178 = vld [vmem:[%s165 + $0x30] sm:$0xff]
      %v179 = vld [vmem:[%s165 + $0x38] sm:$0xff]
      %v180 = vld [vmem:[%s165 + $0x40] sm:$0xff]
      %v181 = vld [vmem:[%s165 + $0x48] sm:$0xff]
      %v182 = vld [vmem:[%s165 + $0x50] sm:$0xff]
      %v183 = vld [vmem:[%s165 + $0x58] sm:$0xff]
      %v184 = vld [vmem:[%s165 + $0x60] sm:$0xff]
      %v185 = vld [vmem:[%s165 + $0x68] sm:$0xff]
      %v186 = vld [vmem:[%s165 + $0x70] sm:$0xff]
      %v187 = vld [vmem:[%s165 + $0x78] sm:$0xff]
      %v188 = vld [vmem:[%s165 + $0x80] sm:$0xff]
      %v189 = vld [vmem:[%s165 + $0x88] sm:$0xff]
      %v190 = vld [vmem:[%s165 + $0x90] sm:$0xff]
      %v191 = vld [vmem:[%s165 + $0x98] sm:$0xff]
      %v192 = vld [vmem:[%s165 + $0xa0] sm:$0xff]
      %v193 = vld [vmem:[%s165 + $0xa8] sm:$0xff]
      %v194 = vld [vmem:[%s165 + $0xb0] sm:$0xff]
      %v195 = vld [vmem:[%s165 + $0xb8] sm:$0xff]
      %v196 = vld [vmem:[%s165 + $0xc0] sm:$0xff]
      %v197 = vld [vmem:[%s165 + $0xc8] sm:$0xff]
      %v198 = vld [vmem:[%s165 + $0xd0] sm:$0xff]
      %v199 = vld [vmem:[%s165 + $0xd8] sm:$0xff]
      %v200 = vld [vmem:[%s165 + $0xe0] sm:$0xff]
      %v201 = vld [vmem:[%s165 + $0xe8] sm:$0xff]
      %v202 = vld [vmem:[%s165 + $0xf0] sm:$0xff]
      %v203 = vld [vmem:[%s165 + $0xf8] sm:$0xff]
      %v204 = vld [vmem:[%s165 + $0x100] sm:$0xff]
      %v205 = vld [vmem:[%s165 + $0x108] sm:$0xff]
      %v206 = vld [vmem:[%s165 + $0x110] sm:$0xff]
      %v207 = vld [vmem:[%s165 + $0x118] sm:$0xff]
      %v208 = vpack.c.bf16 %v173, %v172
      %v209 = vpack.c.bf16 %v175, %v174
      %v210 = vpack.c.bf16 %v177, %v176
      %v211 = vpack.c.bf16 %v179, %v178
      %v212 = vpack.c.bf16 %v181, %v180
      %v213 = vpack.c.bf16 %v183, %v182
      %v214 = vpack.c.bf16 %v185, %v184
      %v215 = vpack.c.bf16 %v187, %v186
      %v216 = vpack.c.bf16 %v189, %v188
      %v217 = vpack.c.bf16 %v191, %v190
      %v218 = vpack.c.bf16 %v193, %v192
      %v219 = vpack.c.bf16 %v195, %v194
      %v220 = vpack.c.bf16 %v197, %v196
      %v221 = vpack.c.bf16 %v199, %v198
      %v222 = vpack.c.bf16 %v201, %v200
      %v223 = vpack.c.bf16 %v203, %v202
      %v224 = vpack.c.bf16 %v205, %v204
      %v225 = vpack.c.bf16 %v207, %v206
      %v226 = vld [vmem:[%s1] sm:$0xf]
      %v227 = vld [vmem:[%s1 + $0x4] sm:$0xf]
      %v228 = vld [vmem:[%s1 + $0x8] sm:$0xf]
      %v229 = vld [vmem:[%s1 + $0xc] sm:$0xf]
      %v230 = vld [vmem:[%s1 + $0x10] sm:$0xf]
      %v231 = vld [vmem:[%s1 + $0x14] sm:$0xf]
      %v232 = vld [vmem:[%s1 + $0x18] sm:$0xf]
      %v233 = vld [vmem:[%s1 + $0x1c] sm:$0xf]
      %v234 = vld [vmem:[%s2] sm:$0x1]
      %v236 = vperm.slane %v234, 0
      %v246 = vunpack.c.l.b16 %v226
      %v247 = vunpack.c.l.b16 %v227
      %v248 = vunpack.c.l.b16 %v228
      %v249 = vunpack.c.l.b16 %v229
      %v250 = vunpack.c.l.b16 %v230
      %v251 = vunpack.c.l.b16 %v231
      %v252 = vunpack.c.l.b16 %v232
      %v253 = vunpack.c.l.b16 %v233
      %v254 = vpack.c.b16 %v247, %v246
      %v255 = vpack.c.b16 %v249, %v248
      %v256 = vpack.c.b16 %v251, %v250
      %v257 = vpack.c.b16 %v253, %v252
      %vm262 = vcmask 523264
      %v264 = vsel %vm262, %v208, 0
      %v267 = vsel %vm262, %v209, 0
      %v270 = vsel %vm262, %v210, 0
      %v273 = vsel %vm262, %v211, 0
      %v276 = vsel %vm262, %v212, 0
      %v279 = vsel %vm262, %v213, 0
      %v282 = vsel %vm262, %v214, 0
      %v285 = vsel %vm262, %v215, 0
      %v288 = vsel %vm262, %v216, 0
      %v291 = vsel %vm262, %v217, 0
      %v294 = vsel %vm262, %v218, 0
      %v297 = vsel %vm262, %v219, 0
      %v300 = vsel %vm262, %v220, 0
      %v303 = vsel %vm262, %v221, 0
      %v306 = vsel %vm262, %v222, 0
      %v309 = vsel %vm262, %v223, 0
      %v312 = vsel %vm262, %v224, 0
      %v315 = vsel %vm262, %v225, 0
      %317 = vmatpush.bf16.msra.mxu0 0
      %318 = vmatpush.bf16.msra.mxu0 0
      %319 = vmatpush.bf16.msra.mxu0 0
      %320 = vmatpush.bf16.msra.mxu0 0
      %321 = vmatpush.bf16.msra.mxu0 %v257
      %322 = vmatpush.bf16.msra.mxu0 %v256
      %323 = vmatpush.bf16.msra.mxu0 %v255
      %324 = vmatpush.bf16.msra.mxu0 %v254
      %325 = vmatmul.bf16.gmra.mxu0 %v264
      %v326 = vpop.f32.mrf.mxu0
      %v327 = vadd.f32 %v236, %v326
      %v328 = vpop.f32.mrf.mxu0
      %v329 = vadd.f32 %v236, %v328
      %330 = vmatmul.bf16.gmra.mxu0 %v267
      %v331 = vpop.f32.mrf.mxu0
      %v332 = vadd.f32 %v236, %v331
      %v333 = vpop.f32.mrf.mxu0
      %v334 = vadd.f32 %v236, %v333
      %335 = vmatmul.bf16.gmra.mxu0 %v270
      %v336 = vpop.f32.mrf.mxu0
      %v337 = vadd.f32 %v236, %v336
      %v338 = vpop.f32.mrf.mxu0
      %v339 = vadd.f32 %v236, %v338
      %340 = vmatmul.bf16.gmra.mxu0 %v273
      %v341 = vpop.f32.mrf.mxu0
      %v342 = vadd.f32 %v236, %v341
      %v343 = vpop.f32.mrf.mxu0
      %v344 = vadd.f32 %v236, %v343
      %345 = vmatmul.bf16.gmra.mxu0 %v276
      %v346 = vpop.f32.mrf.mxu0
      %v347 = vadd.f32 %v236, %v346
      %v348 = vpop.f32.mrf.mxu0
      %v349 = vadd.f32 %v236, %v348
      %350 = vmatmul.bf16.gmra.mxu0 %v279
      %v351 = vpop.f32.mrf.mxu0
      %v352 = vadd.f32 %v236, %v351
      %v353 = vpop.f32.mrf.mxu0
      %v354 = vadd.f32 %v236, %v353
      %355 = vmatmul.bf16.gmra.mxu0 %v282
      %v356 = vpop.f32.mrf.mxu0
      %v357 = vadd.f32 %v236, %v356
      %v358 = vpop.f32.mrf.mxu0
      %v359 = vadd.f32 %v236, %v358
      %360 = vmatmul.bf16.gmra.mxu0 %v285
      %v361 = vpop.f32.mrf.mxu0
      %v362 = vadd.f32 %v236, %v361
      %v363 = vpop.f32.mrf.mxu0
      %v364 = vadd.f32 %v236, %v363
      %365 = vmatmul.bf16.gmra.mxu0 %v288
      %v366 = vpop.f32.mrf.mxu0
      %v367 = vadd.f32 %v236, %v366
      %v368 = vpop.f32.mrf.mxu0
      %v369 = vadd.f32 %v236, %v368
      %370 = vmatmul.bf16.gmra.mxu0 %v291
      %v371 = vpop.f32.mrf.mxu0
      %v372 = vadd.f32 %v236, %v371
      %v373 = vpop.f32.mrf.mxu0
      %v374 = vadd.f32 %v236, %v373
      %375 = vmatmul.bf16.gmra.mxu0 %v294
      %v376 = vpop.f32.mrf.mxu0
      %v377 = vadd.f32 %v236, %v376
      %v378 = vpop.f32.mrf.mxu0
      %v379 = vadd.f32 %v236, %v378
      %380 = vmatmul.bf16.gmra.mxu0 %v297
      %v381 = vpop.f32.mrf.mxu0
      %v382 = vadd.f32 %v236, %v381
      %v383 = vpop.f32.mrf.mxu0
      %v384 = vadd.f32 %v236, %v383
      %385 = vmatmul.bf16.gmra.mxu0 %v300
      %v386 = vpop.f32.mrf.mxu0
      %v387 = vadd.f32 %v236, %v386
      %v388 = vpop.f32.mrf.mxu0
      %v389 = vadd.f32 %v236, %v388
      %390 = vmatmul.bf16.gmra.mxu0 %v303
      %v391 = vpop.f32.mrf.mxu0
      %v392 = vadd.f32 %v236, %v391
      %v393 = vpop.f32.mrf.mxu0
      %v394 = vadd.f32 %v236, %v393
      %395 = vmatmul.bf16.gmra.mxu0 %v306
      %v396 = vpop.f32.mrf.mxu0
      %v397 = vadd.f32 %v236, %v396
      %v398 = vpop.f32.mrf.mxu0
      %v399 = vadd.f32 %v236, %v398
      %400 = vmatmul.bf16.gmra.mxu0 %v309
      %v401 = vpop.f32.mrf.mxu0
      %v402 = vadd.f32 %v236, %v401
      %v403 = vpop.f32.mrf.mxu0
      %v404 = vadd.f32 %v236, %v403
      %405 = vmatmul.bf16.gmra.mxu0 %v312
      %v406 = vpop.f32.mrf.mxu0
      %v407 = vadd.f32 %v236, %v406
      %v408 = vpop.f32.mrf.mxu0
      %v409 = vadd.f32 %v236, %v408
      %410 = vmatmul.bf16.gmra.mxu0 %v315
      %v411 = vpop.f32.mrf.mxu0
      %v412 = vadd.f32 %v236, %v411
      %v413 = vpop.f32.mrf.mxu0
      %v414 = vadd.f32 %v236, %v413
      %415 = vdwg.mxu0
      %vm416 = vcmask 15360
      %417 = vst.msk [vmem:[%s170] sm:$0xff] %vm416, %v327
      %418 = vst.msk [vmem:[%s170 + $0x8] sm:$0xff] %vm416, %v329
      %419 = vst.msk [vmem:[%s170 + $0x10] sm:$0xff] %vm416, %v332
      %420 = vst.msk [vmem:[%s170 + $0x18] sm:$0xff] %vm416, %v334
      %421 = vst.msk [vmem:[%s170 + $0x20] sm:$0xff] %vm416, %v337
      %422 = vst.msk [vmem:[%s170 + $0x28] sm:$0xff] %vm416, %v339
      %423 = vst.msk [vmem:[%s170 + $0x30] sm:$0xff] %vm416, %v342
      %424 = vst.msk [vmem:[%s170 + $0x38] sm:$0xff] %vm416, %v344
      %425 = vst.msk [vmem:[%s170 + $0x40] sm:$0xff] %vm416, %v347
      %426 = vst.msk [vmem:[%s170 + $0x48] sm:$0xff] %vm416, %v349
      %427 = vst.msk [vmem:[%s170 + $0x50] sm:$0xff] %vm416, %v352
      %428 = vst.msk [vmem:[%s170 + $0x58] sm:$0xff] %vm416, %v354
      %429 = vst.msk [vmem:[%s170 + $0x60] sm:$0xff] %vm416, %v357
      %430 = vst.msk [vmem:[%s170 + $0x68] sm:$0xff] %vm416, %v359
      %431 = vst.msk [vmem:[%s170 + $0x70] sm:$0xff] %vm416, %v362
      %432 = vst.msk [vmem:[%s170 + $0x78] sm:$0xff] %vm416, %v364
      %433 = vst.msk [vmem:[%s170 + $0x80] sm:$0xff] %vm416, %v367
      %434 = vst.msk [vmem:[%s170 + $0x88] sm:$0xff] %vm416, %v369
      %435 = vst.msk [vmem:[%s170 + $0x90] sm:$0xff] %vm416, %v372
      %436 = vst.msk [vmem:[%s170 + $0x98] sm:$0xff] %vm416, %v374
      %437 = vst.msk [vmem:[%s170 + $0xa0] sm:$0xff] %vm416, %v377
      %438 = vst.msk [vmem:[%s170 + $0xa8] sm:$0xff] %vm416, %v379
      %439 = vst.msk [vmem:[%s170 + $0xb0] sm:$0xff] %vm416, %v382
      %440 = vst.msk [vmem:[%s170 + $0xb8] sm:$0xff] %vm416, %v384
      %441 = vst.msk [vmem:[%s170 + $0xc0] sm:$0xff] %vm416, %v387
      %442 = vst.msk [vmem:[%s170 + $0xc8] sm:$0xff] %vm416, %v389
      %443 = vst.msk [vmem:[%s170 + $0xd0] sm:$0xff] %vm416, %v392
      %444 = vst.msk [vmem:[%s170 + $0xd8] sm:$0xff] %vm416, %v394
      %445 = vst.msk [vmem:[%s170 + $0xe0] sm:$0xff] %vm416, %v397
      %446 = vst.msk [vmem:[%s170 + $0xe8] sm:$0xff] %vm416, %v399
      %447 = vst.msk [vmem:[%s170 + $0xf0] sm:$0xff] %vm416, %v402
      %448 = vst.msk [vmem:[%s170 + $0xf8] sm:$0xff] %vm416, %v404
      %449 = vst.msk [vmem:[%s170 + $0x100] sm:$0xff] %vm416, %v407
      %450 = vst.msk [vmem:[%s170 + $0x108] sm:$0xff] %vm416, %v409
      %451 = vst.msk [vmem:[%s170 + $0x110] sm:$0xff] %vm416, %v412
      %452 = vst.msk [vmem:[%s170 + $0x118] sm:$0xff] %vm416, %v414
      %p453 = scmp.lt.s32.totalorder %s14, 1
      %s454 = scalar_select %p453, %s14, 1
      %s455 = smul.addr %s454, 36
      %s456 = smul.addr %s455, 8
      %s457 = scalar_lea.vmem %s3, %s456
      // Predicated region
      $region33: #{basenet_forward.9} parent=31 // pred_check
        %p458 = pneg %p100
      $region34: #{basenet_forward.9} parent=31 // pred_check_branch
        %460 = sbr.rel (%p458) target = $region36
      $region35: #{basenet_forward.9} parent=31 // pred_region
        _
      $region36: #{basenet_forward.9} parent=31 // pred_fallthru
        _
    $region32: #{basenet_forward.9} parent=5 // pred_fallthru
      _
    %p461 = scmp.le.s32.totalorder 2, %s9
    // Predicated region
    $region37: #{basenet_forward.9} parent=5 // pred_check
      %p462 = pneg %p461
    $region38: #{basenet_forward.9} parent=5 // pred_check_branch
      %464 = sbr.rel (%p462) target = $region40
    $region39: #{basenet_forward.9} parent=5 // pred_region
      %s465 = ssub.s32 %s9, 2
      // Predicated region
      $region41: #{basenet_forward.9} parent=39 // pred_check
        %p466 = pneg %p106
      $region42: #{basenet_forward.9} parent=39 // pred_check_branch
        %468 = sbr.rel (%p466) target = $region44
      $region43: #{basenet_forward.9} parent=39 // pred_region
        %p469 = scmp.lt.s32.totalorder %s15, 1
        %s470 = scalar_select %p469, %s15, 1
        %s471 = smul.addr %s470, 36
        %s472 = smul.addr %s471, 8
        %s473 = scalar_lea.vmem %s3, %s472
      $region44: #{basenet_forward.9} parent=39 // pred_fallthru
        _
    $region40: #{basenet_forward.9} parent=5 // pred_fallthru
      _
  $region6: #{basenet_forward.9} parent=0 // loop_footer
    %s13 = sadd.s32 1, %s9
  $region7: #{basenet_forward.9} parent=0 // loop_footer_branch
    %8 = sbr.rel target = $region3
  $region8: #{basenet_forward.9} parent=0 // loop_exit
    _

// kernel: basenet_forward.5
$region0: #{basenet_forward.5}
  #allocation0 [shape = 'u32[]', space=smem, size = 0x4, offset = 0x4, fixed_abs, tag = 'smem constant byte address 0x4 - core index']
  #allocation1 [shape = 'u32[72,128]{1,0:T(1,128)}', space=vmem, size = 0x9000, scoped, tag = 'internal scratch']
  #allocation2 [shape = 'f32[288,64]{1,0:T(8,128)}', space=vmem, size = 0x24000, scoped, tag = 'scratch operand']
  %s0 = inlined_call_operand.vmem [shape: f32[2,328,4], index: 0, kind: input, shape index: {}]
  %s1 = inlined_call_operand.vmem [shape: bf16[9,4,64], index: 1, kind: input, shape index: {}]
  %s2 = inlined_call_operand.vmem [shape: f32[288,1], index: 2, kind: input, shape index: {}]
  %s3 = inlined_call_operand.vmem [shape: f32[2,288,64], index: 3, kind: output, shape index: {0}]
  %s4 = inlined_call_operand.vmem [shape: f32[2,1,64], index: 4, kind: output, shape index: {1}]
  %s5 = inlined_call_operand.vmem [shape: f32[2,1,64], index: 5, kind: output, shape index: {2}]
  %6 = xla_tuple %s3, %s4, %s5
  %s7 = sld [smem:[#allocation0]]
  $region61: #{basenet_forward.5} parent=0
    _
  %s9 = ssub.s32 1, %s7
  %s10 = scalar_select 0, %s9, %s7
  loop: start=0, step=1, limit=4
  $region2: #{basenet_forward.5} parent=0 // loop_pre_header
    _
  $region3: #{basenet_forward.5} parent=0 // loop_header
    %s12 = sphi 0, %s16
    %p13 = scmp.ge.s32.totalorder %s12, 4
    %s22 = sphi 0, %s24
    %s25 = sphi 0, %s22
    %s26 = sphi 0, %s25
    %s42 = sphi 0, %s26
    %s46 = sphi 0, %s46
    %s48 = sphi 0, %s46
    %s49 = sphi 0, %s48
    %s63 = sphi 0, %s49
    %s67 = sphi 0, %s67
    %s69 = sphi 0, %s67
    %s70 = sphi 0, %s69
    %s84 = sphi 0, %s70
    %s90 = sphi 0, %s92
    %s93 = sphi 0, %s90
    %s94 = sphi 0, %s93
    %s110 = sphi 0, %s94
    %s116 = sphi 0, %s118
    %s119 = sphi 0, %s116
    %s120 = sphi 0, %s119
    %s136 = sphi 0, %s120
    %s142 = sphi 0, %s144
    %s145 = sphi 0, %s142
    %s146 = sphi 0, %s145
    %s162 = sphi 0, %s146
  $region4: #{basenet_forward.5} parent=0 // loop_header_branch
    %15 = sbr.rel (%p13) target = $region8
  $region5: #{basenet_forward.5} parent=0 // loop_body
    %s17 = ssub.s32 %s12, 1
    %s18 = ssub.s32 %s12, 2
    %s19 = sadd.s32 %s12, 1
    %s20 = ssub.s32 %s12, %s19
    %p21 = scmp.eq.s32.totalorder %s20, 0
    %s23 = sadd.s32 %s22, 1
    %s24 = scalar_select %p21, %s22, %s23
    %p27 = pneg %p21
    %p28 = scmp.eq.s32.totalorder %s12, 1
    %p29 = por %p27, %p28
    %p30 = scmp.ne.s32.totalorder %s22, %s25
    %p31 = scmp.eq.s32.totalorder %s12, 0
    %p32 = por %p30, %p31
    %p33 = scmp.ne.s32.totalorder %s22, %s25
    %p34 = scmp.eq.s32.totalorder %s17, 1
    %p35 = por %p33, %p34
    %p36 = scmp.ne.s32.totalorder %s25, %s26
    %p37 = scmp.eq.s32.totalorder %s17, 0
    %p38 = por %p36, %p37
    %p39 = scmp.ne.s32.totalorder %s25, %s26
    %p40 = scmp.eq.s32.totalorder %s18, 1
    %p41 = por %p39, %p40
    %p43 = scmp.ne.s32.totalorder %s26, %s42
    %p44 = scmp.eq.s32.totalorder %s18, 0
    %p45 = por %p43, %p44
    %s47 = sadd.s32 %s46, 1
    %p50 = scmp.eq.s32.totalorder %s12, 1
    %p51 = scmp.ne.s32.totalorder %s46, %s48
    %p52 = scmp.eq.s32.totalorder %s12, 0
    %p53 = por %p51, %p52
    %p54 = scmp.ne.s32.totalorder %s46, %s48
    %p55 = scmp.eq.s32.totalorder %s17, 1
    %p56 = por %p54, %p55
    %p57 = scmp.ne.s32.totalorder %s48, %s49
    %p58 = scmp.eq.s32.totalorder %s17, 0
    %p59 = por %p57, %p58
    %p60 = scmp.ne.s32.totalorder %s48, %s49
    %p61 = scmp.eq.s32.totalorder %s18, 1
    %p62 = por %p60, %p61
    %p64 = scmp.ne.s32.totalorder %s49, %s63
    %p65 = scmp.eq.s32.totalorder %s18, 0
    %p66 = por %p64, %p65
    %s68 = sadd.s32 %s67, 1
    %p71 = scmp.eq.s32.totalorder %s12, 1
    %p72 = scmp.ne.s32.totalorder %s67, %s69
    %p73 = scmp.eq.s32.totalorder %s12, 0
    %p74 = por %p72, %p73
    %p75 = scmp.ne.s32.totalorder %s67, %s69
    %p76 = scmp.eq.s32.totalorder %s17, 1
    %p77 = por %p75, %p76
    %p78 = scmp.ne.s32.totalorder %s69, %s70
    %p79 = scmp.eq.s32.totalorder %s17, 0
    %p80 = por %p78, %p79
    %p81 = scmp.ne.s32.totalorder %s69, %s70
    %p82 = scmp.eq.s32.totalorder %s18, 1
    %p83 = por %p81, %p82
    %p85 = scmp.ne.s32.totalorder %s70, %s84
    %p86 = scmp.eq.s32.totalorder %s18, 0
    %p87 = por %p85, %p86
    %s88 = ssub.s32 %s12, %s19
    %p89 = scmp.eq.s32.totalorder %s88, 0
    %s91 = sadd.s32 %s90, 1
    %s92 = scalar_select %p89, %s90, %s91
    %p95 = pneg %p89
    %p96 = scmp.eq.s32.totalorder %s12, 1
    %p97 = por %p95, %p96
    %p98 = scmp.ne.s32.totalorder %s90, %s93
    %p99 = scmp.eq.s32.totalorder %s12, 0
    %p100 = por %p98, %p99
    %p101 = scmp.ne.s32.totalorder %s90, %s93
    %p102 = scmp.eq.s32.totalorder %s17, 1
    %p103 = por %p101, %p102
    %p104 = scmp.ne.s32.totalorder %s93, %s94
    %p105 = scmp.eq.s32.totalorder %s17, 0
    %p106 = por %p104, %p105
    %p107 = scmp.ne.s32.totalorder %s93, %s94
    %p108 = scmp.eq.s32.totalorder %s18, 1
    %p109 = por %p107, %p108
    %p111 = scmp.ne.s32.totalorder %s94, %s110
    %p112 = scmp.eq.s32.totalorder %s18, 0
    %p113 = por %p111, %p112
    %s114 = ssub.s32 %s12, %s19
    %p115 = scmp.eq.s32.totalorder %s114, 0
    %s117 = sadd.s32 %s116, 1
    %s118 = scalar_select %p115, %s116, %s117
    %p121 = pneg %p115
    %p122 = scmp.eq.s32.totalorder %s12, 1
    %p123 = por %p121, %p122
    %p124 = scmp.ne.s32.totalorder %s116, %s119
    %p125 = scmp.eq.s32.totalorder %s12, 0
    %p126 = por %p124, %p125
    %p127 = scmp.ne.s32.totalorder %s116, %s119
    %p128 = scmp.eq.s32.totalorder %s17, 1
    %p129 = por %p127, %p128
    %p130 = scmp.ne.s32.totalorder %s119, %s120
    %p131 = scmp.eq.s32.totalorder %s17, 0
    %p132 = por %p130, %p131
    %p133 = scmp.ne.s32.totalorder %s119, %s120
    %p134 = scmp.eq.s32.totalorder %s18, 1
    %p135 = por %p133, %p134
    %p137 = scmp.ne.s32.totalorder %s120, %s136
    %p138 = scmp.eq.s32.totalorder %s18, 0
    %p139 = por %p137, %p138
    %s140 = ssub.s32 %s12, %s19
    %p141 = scmp.eq.s32.totalorder %s140, 0
    %s143 = sadd.s32 %s142, 1
    %s144 = scalar_select %p141, %s142, %s143
    %p147 = pneg %p141
    %p148 = scmp.eq.s32.totalorder %s12, 1
    %p149 = por %p147, %p148
    %p150 = scmp.ne.s32.totalorder %s142, %s145
    %p151 = scmp.eq.s32.totalorder %s12, 0
    %p152 = por %p150, %p151
    %p153 = scmp.ne.s32.totalorder %s142, %s145
    %p154 = scmp.eq.s32.totalorder %s17, 1
    %p155 = por %p153, %p154
    %p156 = scmp.ne.s32.totalorder %s145, %s146
    %p157 = scmp.eq.s32.totalorder %s17, 0
    %p158 = por %p156, %p157
    %p159 = scmp.ne.s32.totalorder %s145, %s146
    %p160 = scmp.eq.s32.totalorder %s18, 1
    %p161 = por %p159, %p160
    %p163 = scmp.ne.s32.totalorder %s146, %s162
    %p164 = scmp.eq.s32.totalorder %s18, 0
    %p165 = por %p163, %p164
    %p166 = scmp.le.s32.totalorder 1, %s12
    %p167 = scmp.lt.s32.totalorder %s12, 3
    %p168 = pnand %p166, %p167
    %p169 = pneg %p168
    // Predicated region
    $region9: #{basenet_forward.5} parent=5 // pred_check
      _
    $region10: #{basenet_forward.5} parent=5 // pred_check_branch
      %171 = sbr.rel (%p168) target = $region12
    $region11: #{basenet_forward.5} parent=5 // pred_region
      %s172 = ssub.s32 %s12, 1
      // Predicated region
      $region13: #{basenet_forward.5} parent=11 // pred_check
        %p173 = pneg %p59
      $region14: #{basenet_forward.5} parent=11 // pred_check_branch
        %175 = sbr.rel (%p173) target = $region16
      $region15: #{basenet_forward.5} parent=11 // pred_region
        _
      $region16: #{basenet_forward.5} parent=11 // pred_fallthru
        _
      // Predicated region
      $region17: #{basenet_forward.5} parent=11 // pred_check
        %p176 = pneg %p80
      $region18: #{basenet_forward.5} parent=11 // pred_check_branch
        %178 = sbr.rel (%p176) target = $region20
      $region19: #{basenet_forward.5} parent=11 // pred_region
        _
      $region20: #{basenet_forward.5} parent=11 // pred_fallthru
        _
    $region12: #{basenet_forward.5} parent=5 // pred_fallthru
      _
    %p179 = scmp.lt.s32.totalorder %s12, 2
    // Predicated region
    $region21: #{basenet_forward.5} parent=5 // pred_check
      %p180 = pneg %p179
    $region22: #{basenet_forward.5} parent=5 // pred_check_branch
      %182 = sbr.rel (%p180) target = $region24
    $region23: #{basenet_forward.5} parent=5 // pred_region
      // Predicated region
      $region25: #{basenet_forward.5} parent=23 // pred_check
        %p183 = pneg %p32
      $region26: #{basenet_forward.5} parent=23 // pred_check_branch
        %185 = sbr.rel (%p183) target = $region28
      $region27: #{basenet_forward.5} parent=23 // pred_region
        %p186 = scmp.lt.s32.totalorder %s12, 1
        %s187 = scalar_select %p186, %s12, 1
        %s188 = smul.addr %s187, 41
        %s189 = smul.addr %s188, 8
        %s190 = scalar_lea.vmem %s0, %s189
      $region28: #{basenet_forward.5} parent=23 // pred_fallthru
        _
    $region24: #{basenet_forward.5} parent=5 // pred_fallthru
      _
    %p191 = scmp.le.s32.totalorder 1, %s12
    %p192 = scmp.lt.s32.totalorder %s12, 3
    %p193 = pnand %p191, %p192
    %p194 = pneg %p193
    // Predicated region
    $region29: #{basenet_forward.5} parent=5 // pred_check
      _
    $region30: #{basenet_forward.5} parent=5 // pred_check_branch
      %196 = sbr.rel (%p193) target = $region32
    $region31: #{basenet_forward.5} parent=5 // pred_region
      %s197 = ssub.s32 %s12, 1
      %p198 = scmp.lt.s32.totalorder %s17, 1
      %s199 = scalar_select %p198, %s17, 1
      %s200 = smul.addr %s199, 41
      %s201 = smul.addr %s200, 8
      %s202 = scalar_lea.vmem %s0, %s201
      %p203 = pneg %p38
      %p204 = pneg %p35
      %p205 = pneg %p59
      %p206 = pneg %p56
      %p207 = pneg %p80
      %p208 = pneg %p77
      %p209 = pneg %p106
      %p210 = pneg %p103
      %p211 = scmp.lt.s32.totalorder %s17, 1
      %s212 = scalar_select %p211, %s17, 1
      %s213 = smul.addr %s212, 36
      %s214 = smul.addr %s213, 8
      %s215 = scalar_lea.vmem %s3, %s214
      %p216 = pneg %p132
      %p217 = pneg %p129
      %p218 = scmp.lt.s32.totalorder %s17, 1
      %s219 = scalar_select %p218, %s17, 1
      %s220 = scalar_lea.vmem %s4, %s219
      %p221 = pneg %p158
      %p222 = pneg %p155
      %p223 = scmp.lt.s32.totalorder %s17, 1
      %s224 = scalar_select %p223, %s17, 1
      %s225 = scalar_lea.vmem %s5, %s224
      %p226 = scmp.lt.s32.totalorder %s17, 1
      %s227 = scalar_select %p226, %s17, 1
      %s228 = smul.addr %s227, 41
      %s229 = smul.addr %s228, 8
      %s230 = scalar_lea.vmem %s0, %s229
      %p231 = scmp.lt.s32.totalorder %s17, 1
      %s232 = scalar_select %p231, %s17, 1
      %s233 = smul.addr %s232, 36
      %s234 = smul.addr %s233, 8
      %s235 = scalar_lea.vmem %s3, %s234
      %p236 = scmp.lt.s32.totalorder %s17, 1
      %s237 = scalar_select %p236, %s17, 1
      %s238 = scalar_lea.vmem %s4, %s237
      %p239 = scmp.lt.s32.totalorder %s17, 1
      %s240 = scalar_select %p239, %s17, 1
      %s241 = scalar_lea.vmem %s5, %s240
      %vm243 = vcmask 523264
      %244 = vst.msk [vmem:[#allocation2] sm:$0xff] %vm243, 0.0
      %245 = vst.msk [vmem:[#allocation2 + $0x8] sm:$0xff] %vm243, 0.0
      %246 = vst.msk [vmem:[#allocation2 + $0x10] sm:$0xff] %vm243, 0.0
      %247 = vst.msk [vmem:[#allocation2 + $0x18] sm:$0xff] %vm243, 0.0
      %248 = vst.msk [vmem:[#allocation2 + $0x20] sm:$0xff] %vm243, 0.0
      %249 = vst.msk [vmem:[#allocation2 + $0x28] sm:$0xff] %vm243, 0.0
      %250 = vst.msk [vmem:[#allocation2 + $0x30] sm:$0xff] %vm243, 0.0
      %251 = vst.msk [vmem:[#allocation2 + $0x38] sm:$0xff] %vm243, 0.0
      %252 = vst.msk [vmem:[#allocation2 + $0x40] sm:$0xff] %vm243, 0.0
      %253 = vst.msk [vmem:[#allocation2 + $0x48] sm:$0xff] %vm243, 0.0
      %254 = vst.msk [vmem:[#allocation2 + $0x50] sm:$0xff] %vm243, 0.0
      %255 = vst.msk [vmem:[#allocation2 + $0x58] sm:$0xff] %vm243, 0.0
      %256 = vst.msk [vmem:[#allocation2 + $0x60] sm:$0xff] %vm243, 0.0
      %257 = vst.msk [vmem:[#allocation2 + $0x68] sm:$0xff] %vm243, 0.0
      %258 = vst.msk [vmem:[#allocation2 + $0x70] sm:$0xff] %vm243, 0.0
      %259 = vst.msk [vmem:[#allocation2 + $0x78] sm:$0xff] %vm243, 0.0
      %260 = vst.msk [vmem:[#allocation2 + $0x80] sm:$0xff] %vm243, 0.0
      %261 = vst.msk [vmem:[#allocation2 + $0x88] sm:$0xff] %vm243, 0.0
      %262 = vst.msk [vmem:[#allocation2 + $0x90] sm:$0xff] %vm243, 0.0
      %263 = vst.msk [vmem:[#allocation2 + $0x98] sm:$0xff] %vm243, 0.0
      %264 = vst.msk [vmem:[#allocation2 + $0xa0] sm:$0xff] %vm243, 0.0
      %265 = vst.msk [vmem:[#allocation2 + $0xa8] sm:$0xff] %vm243, 0.0
      %266 = vst.msk [vmem:[#allocation2 + $0xb0] sm:$0xff] %vm243, 0.0
      %267 = vst.msk [vmem:[#allocation2 + $0xb8] sm:$0xff] %vm243, 0.0
      %268 = vst.msk [vmem:[#allocation2 + $0xc0] sm:$0xff] %vm243, 0.0
      %269 = vst.msk [vmem:[#allocation2 + $0xc8] sm:$0xff] %vm243, 0.0
      %270 = vst.msk [vmem:[#allocation2 + $0xd0] sm:$0xff] %vm243, 0.0
      %271 = vst.msk [vmem:[#allocation2 + $0xd8] sm:$0xff] %vm243, 0.0
      %272 = vst.msk [vmem:[#allocation2 + $0xe0] sm:$0xff] %vm243, 0.0
      %273 = vst.msk [vmem:[#allocation2 + $0xe8] sm:$0xff] %vm243, 0.0
      %274 = vst.msk [vmem:[#allocation2 + $0xf0] sm:$0xff] %vm243, 0.0
      %275 = vst.msk [vmem:[#allocation2 + $0xf8] sm:$0xff] %vm243, 0.0
      %276 = vst.msk [vmem:[#allocation2 + $0x100] sm:$0xff] %vm243, 0.0
      %277 = vst.msk [vmem:[#allocation2 + $0x108] sm:$0xff] %vm243, 0.0
      %278 = vst.msk [vmem:[#allocation2 + $0x110] sm:$0xff] %vm243, 0.0
      %279 = vst.msk [vmem:[#allocation2 + $0x118] sm:$0xff] %vm243, 0.0
      %v280 = vld [vmem:[%s230] sm:$0xff]
      %v281 = vld [vmem:[%s230 + $0x8] sm:$0xff]
      %v282 = vld [vmem:[%s230 + $0x10] sm:$0xff]
      %v283 = vld [vmem:[%s230 + $0x18] sm:$0xff]
      %v284 = vld [vmem:[%s230 + $0x20] sm:$0xff]
      %v285 = vld [vmem:[%s230 + $0x28] sm:$0xff]
      %v286 = vld [vmem:[%s230 + $0x30] sm:$0xff]
      %v287 = vld [vmem:[%s230 + $0x38] sm:$0xff]
      %v288 = vld [vmem:[%s230 + $0x40] sm:$0xff]
      %v289 = vld [vmem:[%s230 + $0x48] sm:$0xff]
      %v290 = vld [vmem:[%s230 + $0x50] sm:$0xff]
      %v291 = vld [vmem:[%s230 + $0x58] sm:$0xff]
      %v292 = vld [vmem:[%s230 + $0x60] sm:$0xff]
      %v293 = vld [vmem:[%s230 + $0x68] sm:$0xff]
      %v294 = vld [vmem:[%s230 + $0x70] sm:$0xff]
      %v295 = vld [vmem:[%s230 + $0x78] sm:$0xff]
      %v296 = vld [vmem:[%s230 + $0x80] sm:$0xff]
      %v297 = vld [vmem:[%s230 + $0x88] sm:$0xff]
      %v298 = vld [vmem:[%s230 + $0x90] sm:$0xff]
      %v299 = vld [vmem:[%s230 + $0x98] sm:$0xff]
      %v300 = vld [vmem:[%s230 + $0xa0] sm:$0xff]
      %v301 = vld [vmem:[%s230 + $0xa8] sm:$0xff]
      %v302 = vld [vmem:[%s230 + $0xb0] sm:$0xff]
      %v303 = vld [vmem:[%s230 + $0xb8] sm:$0xff]
      %v304 = vld [vmem:[%s230 + $0xc0] sm:$0xff]
      %v305 = vld [vmem:[%s230 + $0xc8] sm:$0xff]
      %v306 = vld [vmem:[%s230 + $0xd0] sm:$0xff]
      %v307 = vld [vmem:[%s230 + $0xd8] sm:$0xff]
      %v308 = vld [vmem:[%s230 + $0xe0] sm:$0xff]
      %v309 = vld [vmem:[%s230 + $0xe8] sm:$0xff]
      %v310 = vld [vmem:[%s230 + $0xf0] sm:$0xff]
      %v311 = vld [vmem:[%s230 + $0xf8] sm:$0xff]
      %v312 = vld [vmem:[%s230 + $0x100] sm:$0xff]
      %v313 = vld [vmem:[%s230 + $0x108] sm:$0xff]
      %v314 = vld [vmem:[%s230 + $0x110] sm:$0xff]
      %v315 = vld [vmem:[%s230 + $0x118] sm:$0xff]
      %v316 = vpack.c.bf16 %v281, %v280
      %v317 = vpack.c.bf16 %v283, %v282
      %v318 = vpack.c.bf16 %v285, %v284
      %v319 = vpack.c.bf16 %v287, %v286
      %v320 = vpack.c.bf16 %v289, %v288
      %v321 = vpack.c.bf16 %v291, %v290
      %v322 = vpack.c.bf16 %v293, %v292
      %v323 = vpack.c.bf16 %v295, %v294
      %v324 = vpack.c.bf16 %v297, %v296
      %v325 = vpack.c.bf16 %v299, %v298
      %v326 = vpack.c.bf16 %v301, %v300
      %v327 = vpack.c.bf16 %v303, %v302
      %v328 = vpack.c.bf16 %v305, %v304
      %v329 = vpack.c.bf16 %v307, %v306
      %v330 = vpack.c.bf16 %v309, %v308
      %v331 = vpack.c.bf16 %v311, %v310
      %v332 = vpack.c.bf16 %v313, %v312
      %v333 = vpack.c.bf16 %v315, %v314
      %v334 = vld [vmem:[#allocation2] sm:$0xff]
      %v335 = vld [vmem:[#allocation2 + $0x8] sm:$0xff]
      %v336 = vld [vmem:[#allocation2 + $0x10] sm:$0xff]
      %v337 = vld [vmem:[#allocation2 + $0x18] sm:$0xff]
      %v338 = vld [vmem:[#allocation2 + $0x20] sm:$0xff]
      %v339 = vld [vmem:[#allocation2 + $0x28] sm:$0xff]
      %v340 = vld [vmem:[#allocation2 + $0x30] sm:$0xff]
      %v341 = vld [vmem:[#allocation2 + $0x38] sm:$0xff]
      %v342 = vld [vmem:[#allocation2 + $0x40] sm:$0xff]
      %v343 = vld [vmem:[#allocation2 + $0x48] sm:$0xff]
      %v344 = vld [vmem:[#allocation2 + $0x50] sm:$0xff]
      %v345 = vld [vmem:[#allocation2 + $0x58] sm:$0xff]
      %v346 = vld [vmem:[#allocation2 + $0x60] sm:$0xff]
      %v347 = vld [vmem:[#allocation2 + $0x68] sm:$0xff]
      %v348 = vld [vmem:[#allocation2 + $0x70] sm:$0xff]
      %v349 = vld [vmem:[#allocation2 + $0x78] sm:$0xff]
      %v350 = vld [vmem:[#allocation2 + $0x80] sm:$0xff]
      %v351 = vld [vmem:[#allocation2 + $0x88] sm:$0xff]
      %v352 = vld [vmem:[#allocation2 + $0x90] sm:$0xff]
      %v353 = vld [vmem:[#allocation2 + $0x98] sm:$0xff]
      %v354 = vld [vmem:[#allocation2 + $0xa0] sm:$0xff]
      %v355 = vld [vmem:[#allocation2 + $0xa8] sm:$0xff]
      %v356 = vld [vmem:[#allocation2 + $0xb0] sm:$0xff]
      %v357 = vld [vmem:[#allocation2 + $0xb8] sm:$0xff]
      %v358 = vld [vmem:[#allocation2 + $0xc0] sm:$0xff]
      %v359 = vld [vmem:[#allocation2 + $0xc8] sm:$0xff]
      %v360 = vld [vmem:[#allocation2 + $0xd0] sm:$0xff]
      %v361 = vld [vmem:[#allocation2 + $0xd8] sm:$0xff]
      %v362 = vld [vmem:[#allocation2 + $0xe0] sm:$0xff]
      %v363 = vld [vmem:[#allocation2 + $0xe8] sm:$0xff]
      %v364 = vld [vmem:[#allocation2 + $0xf0] sm:$0xff]
      %v365 = vld [vmem:[#allocation2 + $0xf8] sm:$0xff]
      %v366 = vld [vmem:[#allocation2 + $0x100] sm:$0xff]
      %v367 = vld [vmem:[#allocation2 + $0x108] sm:$0xff]
      %v368 = vld [vmem:[#allocation2 + $0x110] sm:$0xff]
      %v369 = vld [vmem:[#allocation2 + $0x118] sm:$0xff]
      %v370 = vld [vmem:[%s1] sm:$0x3]
      %vm371 = vcmask 31744
      %v373 = vsel %vm371, %v316, 0
      %v376 = vsel %vm371, %v317, 0
      %v379 = vsel %vm371, %v318, 0
      %v382 = vsel %vm371, %v319, 0
      %v385 = vsel %vm371, %v320, 0
      %v388 = vsel %vm371, %v321, 0
      %v391 = vsel %vm371, %v322, 0
      %v394 = vsel %vm371, %v323, 0
      %v397 = vsel %vm371, %v324, 0
      %v400 = vsel %vm371, %v325, 0
      %v403 = vsel %vm371, %v326, 0
      %v406 = vsel %vm371, %v327, 0
      %v409 = vsel %vm371, %v328, 0
      %v412 = vsel %vm371, %v329, 0
      %v415 = vsel %vm371, %v330, 0
      %v418 = vsel %vm371, %v331, 0
      %v421 = vsel %vm371, %v332, 0
      %v424 = vsel %vm371, %v333, 0
      %vm426 = vcmask 1041408
      %v428 = vsel %vm426, %v370, 0
      %430 = vmatpush.bf16.msra.mxu0 0
      %431 = vmatpush.bf16.msra.mxu0 0
      %432 = vmatpush.bf16.msra.mxu0 0
      %433 = vmatpush.bf16.msra.mxu0 0
      %434 = vmatpush.bf16.msra.mxu0 0
      %435 = vmatpush.bf16.msra.mxu0 0
      %436 = vmatpush.bf16.msra.mxu0 0
      %437 = vmatpush.bf16.msra.mxu0 %v428
      %438 = vmatmul.bf16.gmra.mxu0 %v373
      %v439 = vpop.f32.mrf.mxu0
      %v440 = vadd.f32 0.0, %v439
      %v441 = vpop.f32.mrf.mxu0
      %v442 = vadd.f32 0.0, %v441
      %443 = vmatmul.bf16.gmra.mxu0 %v376
      %v444 = vpop.f32.mrf.mxu0
      %v445 = vadd.f32 0.0, %v444
      %v446 = vpop.f32.mrf.mxu0
      %v447 = vadd.f32 0.0, %v446
      %448 = vmatmul.bf16.gmra.mxu0 %v379
      %v449 = vpop.f32.mrf.mxu0
      %v450 = vadd.f32 0.0, %v449
      %v451 = vpop.f32.mrf.mxu0
      %v452 = vadd.f32 0.0, %v451
      %453 = vmatmul.bf16.gmra.mxu0 %v382
      %v454 = vpop.f32.mrf.mxu0
      %v455 = vadd.f32 0.0, %v454
      %v456 = vpop.f32.mrf.mxu0
      %v457 = vadd.f32 0.0, %v456
      %458 = vmatmul.bf16.gmra.mxu0 %v385
      %v459 = vpop.f32.mrf.mxu0
      %v460 = vadd.f32 0.0, %v459
      %v461 = vpop.f32.mrf.mxu0
      %v462 = vadd.f32 0.0, %v461
      %463 = vmatmul.bf16.gmra.mxu0 %v388
      %v464 = vpop.f32.mrf.mxu0
      %v465 = vadd.f32 0.0, %v464
      %v466 = vpop.f32.mrf.mxu0
      %v467 = vadd.f32 0.0, %v466
      %468 = vmatmul.bf16.gmra.mxu0 %v391
      %v469 = vpop.f32.mrf.mxu0
      %v470 = vadd.f32 0.0, %v469
      %v471 = vpop.f32.mrf.mxu0
      %v472 = vadd.f32 0.0, %v471
      %473 = vmatmul.bf16.gmra.mxu0 %v394
      %v474 = vpop.f32.mrf.mxu0
      %v475 = vadd.f32 0.0, %v474
      %v476 = vpop.f32.mrf.mxu0
      %v477 = vadd.f32 0.0, %v476
      %478 = vmatmul.bf16.gmra.mxu0 %v397
      %v479 = vpop.f32.mrf.mxu0
      %v480 = vadd.f32 0.0, %v479
      %v481 = vpop.f32.mrf.mxu0
      %v482 = vadd.f32 0.0, %v481
      %483 = vmatmul.bf16.gmra.mxu0 %v400
      %v484 = vpop.f32.mrf.mxu0
      %v485 = vadd.f32 0.0, %v484
      %v486 = vpop.f32.mrf.mxu0
      %v487 = vadd.f32 0.0, %v486
      %488 = vmatmul.bf16.gmra.mxu0 %v403
      %v489 = vpop.f32.mrf.mxu0
      %v490 = vadd.f32 0.0, %v489
      %v491 = vpop.f32.mrf.mxu0
      %v492 = vadd.f32 0.0, %v491
      %493 = vmatmul.bf16.gmra.mxu0 %v406
      %v494 = vpop.f32.mrf.mxu0
      %v495 = vadd.f32 0.0, %v494
      %v496 = vpop.f32.mrf.mxu0
      %v497 = vadd.f32 0.0, %v496
      %498 = vmatmul.bf16.gmra.mxu0 %v409
      %v499 = vpop.f32.mrf.mxu0
      %v500 = vadd.f32 0.0, %v499
      %v501 = vpop.f32.mrf.mxu0
      %v502 = vadd.f32 0.0, %v501
      %503 = vmatmul.bf16.gmra.mxu0 %v412
      %v504 = vpop.f32.mrf.mxu0
      %v505 = vadd.f32 0.0, %v504
      %v506 = vpop.f32.mrf.mxu0
      %v507 = vadd.f32 0.0, %v506
      %508 = vmatmul.bf16.gmra.mxu0 %v415
      %v509 = vpop.f32.mrf.mxu0
      %v510 = vadd.f32 0.0, %v509
      %v511 = vpop.f32.mrf.mxu0
      %v512 = vadd.f32 0.0, %v511
      %513 = vmatmul.bf16.gmra.mxu0 %v418
      %v514 = vpop.f32.mrf.mxu0
      %v515 = vadd.f32 0.0, %v514
      %v516 = vpop.f32.mrf.mxu0
      %v517 = vadd.f32 0.0, %v516
      %518 = vmatmul.bf16.gmra.mxu0 %v421
      %v519 = vpop.f32.mrf.mxu0
      %v520 = vadd.f32 0.0, %v519
      %v521 = vpop.f32.mrf.mxu0
      %v522 = vadd.f32 0.0, %v521
      %523 = vmatmul.bf16.gmra.mxu0 %v424
      %v524 = vpop.f32.mrf.mxu0
      %v525 = vadd.f32 0.0, %v524
      %v526 = vpop.f32.mrf.mxu0
      %v527 = vadd.f32 0.0, %v526
      %528 = vdwg.mxu0
      %v529 = vadd.f32 %v334, %v440
      %v530 = vadd.f32 %v335, %v442
      %v531 = vadd.f32 %v336, %v445
      %v532 = vadd.f32 %v337, %v447
      %v533 = vadd.f32 %v338, %v450
      %v534 = vadd.f32 %v339, %v452
      %v535 = vadd.f32 %v340, %v455
      %v536 = vadd.f32 %v341, %v457
      %v537 = vadd.f32 %v342, %v460
      %v538 = vadd.f32 %v343, %v462
      %v539 = vadd.f32 %v344, %v465
      %v540 = vadd.f32 %v345, %v467
      %v541 = vadd.f32 %v346, %v470
      %v542 = vadd.f32 %v347, %v472
      %v543 = vadd.f32 %v348, %v475
      %v544 = vadd.f32 %v349, %v477
      %v545 = vadd.f32 %v350, %v480
      %v546 = vadd.f32 %v351, %v482
      %v547 = vadd.f32 %v352, %v485
      %v548 = vadd.f32 %v353, %v487
      %v549 = vadd.f32 %v354, %v490
      %v550 = vadd.f32 %v355, %v492
      %v551 = vadd.f32 %v356, %v495
      %v552 = vadd.f32 %v357, %v497
      %v553 = vadd.f32 %v358, %v500
      %v554 = vadd.f32 %v359, %v502
      %v555 = vadd.f32 %v360, %v505
      %v556 = vadd.f32 %v361, %v507
      %v557 = vadd.f32 %v362, %v510
      %v558 = vadd.f32 %v363, %v512
      %v559 = vadd.f32 %v364, %v515
      %v560 = vadd.f32 %v365, %v517
      %v561 = vadd.f32 %v366, %v520
      %v562 = vadd.f32 %v367, %v522
      %v563 = vadd.f32 %v368, %v525
      %v564 = vadd.f32 %v369, %v527
      %565 = vst.msk [vmem:[#allocation2] sm:$0xff] %vm243, %v529
      %566 = vst.msk [vmem:[#allocation2 + $0x8] sm:$0xff] %vm243, %v530
      %567 = vst.msk [vmem:[#allocation2 + $0x10] sm:$0xff] %vm243, %v531
      %568 = vst.msk [vmem:[#allocation2 + $0x18] sm:$0xff] %vm243, %v532
      %569 = vst.msk [vmem:[#allocation2 + $0x20] sm:$0xff] %vm243, %v533
      %570 = vst.msk [vmem:[#allocation2 + $0x28] sm:$0xff] %vm243, %v534
      %571 = vst.msk [vmem:[#allocation2 + $0x30] sm:$0xff] %vm243, %v535
      %572 = vst.msk [vmem:[#allocation2 + $0x38] sm:$0xff] %vm243, %v536
      %573 = vst.msk [vmem:[#allocation2 + $0x40] sm:$0xff] %vm243, %v537
      %574 = vst.msk [vmem:[#allocation2 + $0x48] sm:$0xff] %vm243, %v538
      %575 = vst.msk [vmem:[#allocation2 + $0x50] sm:$0xff] %vm243, %v539
      %576 = vst.msk [vmem:[#allocation2 + $0x58] sm:$0xff] %vm243, %v540
      %577 = vst.msk [vmem:[#allocation2 + $0x60] sm:$0xff] %vm243, %v541
      %578 = vst.msk [vmem:[#allocation2 + $0x68] sm:$0xff] %vm243, %v542
      %579 = vst.msk [vmem:[#allocation2 + $0x70] sm:$0xff] %vm243, %v543
      %580 = vst.msk [vmem:[#allocation2 + $0x78] sm:$0xff] %vm243, %v544
      %581 = vst.msk [vmem:[#allocation2 + $0x80] sm:$0xff] %vm243, %v545
      %582 = vst.msk [vmem:[#allocation2 + $0x88] sm:$0xff] %vm243, %v546
      %583 = vst.msk [vmem:[#allocation2 + $0x90] sm:$0xff] %vm243, %v547
      %584 = vst.msk [vmem:[#allocation2 + $0x98] sm:$0xff] %vm243, %v548
      %585 = vst.msk [vmem:[#allocation2 + $0xa0] sm:$0xff] %vm243, %v549
      %586 = vst.msk [vmem:[#allocation2 + $0xa8] sm:$0xff] %vm243, %v550
      %587 = vst.msk [vmem:[#allocation2 + $0xb0] sm:$0xff] %vm243, %v551
      %588 = vst.msk [vmem:[#allocation2 + $0xb8] sm:$0xff] %vm243, %v552
      %589 = vst.msk [vmem:[#allocation2 + $0xc0] sm:$0xff] %vm243, %v553
      %590 = vst.msk [vmem:[#allocation2 + $0xc8] sm:$0xff] %vm243, %v554
      %591 = vst.msk [vmem:[#allocation2 + $0xd0] sm:$0xff] %vm243, %v555
      %592 = vst.msk [vmem:[#allocation2 + $0xd8] sm:$0xff] %vm243, %v556
      %593 = vst.msk [vmem:[#allocation2 + $0xe0] sm:$0xff] %vm243, %v557
      %594 = vst.msk [vmem:[#allocation2 + $0xe8] sm:$0xff] %vm243, %v558
      %595 = vst.msk [vmem:[#allocation2 + $0xf0] sm:$0xff] %vm243, %v559
      %596 = vst.msk [vmem:[#allocation2 + $0xf8] sm:$0xff] %vm243, %v560
      %597 = vst.msk [vmem:[#allocation2 + $0x100] sm:$0xff] %vm243, %v561
      %598 = vst.msk [vmem:[#allocation2 + $0x108] sm:$0xff] %vm243, %v562
      %599 = vst.msk [vmem:[#allocation2 + $0x110] sm:$0xff] %vm243, %v563
      %600 = vst.msk [vmem:[#allocation2 + $0x118] sm:$0xff] %vm243, %v564
      %v601 = vld [vmem:[%s230 + $0x1] sm:$0xff]
      %v602 = vld [vmem:[%s230 + $0x9] sm:$0xff]
      %v603 = vld [vmem:[%s230 + $0x11] sm:$0xff]
      %v604 = vld [vmem:[%s230 + $0x19] sm:$0xff]
      %v605 = vld [vmem:[%s230 + $0x21] sm:$0xff]
      %v606 = vld [vmem:[%s230 + $0x29] sm:$0xff]
      %v607 = vld [vmem:[%s230 + $0x31] sm:$0xff]
      %v608 = vld [vmem:[%s230 + $0x39] sm:$0xff]
      %v609 = vld [vmem:[%s230 + $0x41] sm:$0xff]
      %v610 = vld [vmem:[%s230 + $0x49] sm:$0xff]
      %v611 = vld [vmem:[%s230 + $0x51] sm:$0xff]
      %v612 = vld [vmem:[%s230 + $0x59] sm:$0xff]
      %v613 = vld [vmem:[%s230 + $0x61] sm:$0xff]
      %v614 = vld [vmem:[%s230 + $0x69] sm:$0xff]
      %v615 = vld [vmem:[%s230 + $0x71] sm:$0xff]
      %v616 = vld [vmem:[%s230 + $0x79] sm:$0xff]
      %v617 = vld [vmem:[%s230 + $0x81] sm:$0xff]
      %v618 = vld [vmem:[%s230 + $0x89] sm:$0xff]
      %v619 = vld [vmem:[%s230 + $0x91] sm:$0xff]
      %v620 = vld [vmem:[%s230 + $0x99] sm:$0xff]
      %v621 = vld [vmem:[%s230 + $0xa1] sm:$0xff]
      %v622 = vld [vmem:[%s230 + $0xa9] sm:$0xff]
      %v623 = vld [vmem:[%s230 + $0xb1] sm:$0xff]
      %v624 = vld [vmem:[%s230 + $0xb9] sm:$0xff]
      %v625 = vld [vmem:[%s230 + $0xc1] sm:$0xff]
      %v626 = vld [vmem:[%s230 + $0xc9] sm:$0xff]
      %v627 = vld [vmem:[%s230 + $0xd1] sm:$0xff]
      %v628 = vld [vmem:[%s230 + $0xd9] sm:$0xff]
      %v629 = vld [vmem:[%s230 + $0xe1] sm:$0xff]
      %v630 = vld [vmem:[%s230 + $0xe9] sm:$0xff]
      %v631 = vld [vmem:[%s230 + $0xf1] sm:$0xff]
      %v632 = vld [vmem:[%s230 + $0xf9] sm:$0xff]
      %v633 = vld [vmem:[%s230 + $0x101] sm:$0xff]
      %v634 = vld [vmem:[%s230 + $0x109] sm:$0xff]
      %v635 = vld [vmem:[%s230 + $0x111] sm:$0xff]
      %v636 = vld [vmem:[%s230 + $0x119] sm:$0xff]
      %v637 = vpack.c.bf16 %v602, %v601
      %v638 = vpack.c.bf16 %v604, %v603
      %v639 = vpack.c.bf16 %v606, %v605
      %v640 = vpack.c.bf16 %v608, %v607
      %v641 = vpack.c.bf16 %v610, %v609
      %v642 = vpack.c.bf16 %v612, %v611
      %v643 = vpack.c.bf16 %v614, %v613
      %v644 = vpack.c.bf16 %v616, %v615
      %v645 = vpack.c.bf16 %v618, %v617
      %v646 = vpack.c.bf16 %v620, %v619
      %v647 = vpack.c.bf16 %v622, %v621
      %v648 = vpack.c.bf16 %v624, %v623
      %v649 = vpack.c.bf16 %v626, %v625
      %v650 = vpack.c.bf16 %v628, %v627
      %v651 = vpack.c.bf16 %v630, %v629
      %v652 = vpack.c.bf16 %v632, %v631
      %v653 = vpack.c.bf16 %v634, %v633
      %v654 = vpack.c.bf16 %v636, %v635
      %v655 = vld [vmem:[#allocation2] sm:$0xff]
      %v656 = vld [vmem:[#allocation2 + $0x8] sm:$0xff]
      %v657 = vld [vmem:[#allocation2 + $0x10] sm:$0xff]
      %v658 = vld [vmem:[#allocation2 + $0x18] sm:$0xff]
      %v659 = vld [vmem:[#allocation2 + $0x20] sm:$0xff]
      %v660 = vld [vmem:[#allocation2 + $0x28] sm:$0xff]
      %v661 = vld [vmem:[#allocation2 + $0x30] sm:$0xff]
      %v662 = vld [vmem:[#allocation2 + $0x38] sm:$0xff]
      %v663 = vld [vmem:[#allocation2 + $0x40] sm:$0xff]
      %v664 = vld [vmem:[#allocation2 + $0x48] sm:$0xff]
      %v665 = vld [vmem:[#allocation2 + $0x50] sm:$0xff]
      %v666 = vld [vmem:[#allocation2 + $0x58] sm:$0xff]
      %v667 = vld [vmem:[#allocation2 + $0x60] sm:$0xff]
      %v668 = vld [vmem:[#allocation2 + $0x68] sm:$0xff]
      %v669 = vld [vmem:[#allocation2 + $0x70] sm:$0xff]
      %v670 = vld [vmem:[#allocation2 + $0x78] sm:$0xff]
      %v671 = vld [vmem:[#allocation2 + $0x80] sm:$0xff]
      %v672 = vld [vmem:[#allocation2 + $0x88] sm:$0xff]
      %v673 = vld [vmem:[#allocation2 + $0x90] sm:$0xff]
      %v674 = vld [vmem:[#allocation2 + $0x98] sm:$0xff]
      %v675 = vld [vmem:[#allocation2 + $0xa0] sm:$0xff]
      %v676 = vld [vmem:[#allocation2 + $0xa8] sm:$0xff]
      %v677 = vld [vmem:[#allocation2 + $0xb0] sm:$0xff]
      %v678 = vld [vmem:[#allocation2 + $0xb8] sm:$0xff]
      %v679 = vld [vmem:[#allocation2 + $0xc0] sm:$0xff]
      %v680 = vld [vmem:[#allocation2 + $0xc8] sm:$0xff]
      %v681 = vld [vmem:[#allocation2 + $0xd0] sm:$0xff]
      %v682 = vld [vmem:[#allocation2 + $0xd8] sm:$0xff]
      %v683 = vld [vmem:[#allocation2 + $0xe0] sm:$0xff]
      %v684 = vld [vmem:[#allocation2 + $0xe8] sm:$0xff]
      %v685 = vld [vmem:[#allocation2 + $0xf0] sm:$0xff]
      %v686 = vld [vmem:[#allocation2 + $0xf8] sm:$0xff]
      %v687 = vld [vmem:[#allocation2 + $0x100] sm:$0xff]
      %v688 = vld [vmem:[#allocation2 + $0x108] sm:$0xff]
      %v689 = vld [vmem:[#allocation2 + $0x110] sm:$0xff]
      %v690 = vld [vmem:[#allocation2 + $0x118] sm:$0xff]
      %s691 = scalar_lea.vmem %s1, 2
      %v692 = vld [vmem:[%s691] sm:$0x3]
      %v694 = vsel %vm371, %v637, 0
      %v697 = vsel %vm371, %v638, 0
      %v700 = vsel %vm371, %v639, 0
      %v703 = vsel %vm371, %v640, 0
      %v706 = vsel %vm371, %v641, 0
      %v709 = vsel %vm371, %v642, 0
      %v712 = vsel %vm371, %v643, 0
      %v715 = vsel %vm371, %v644, 0
      %v718 = vsel %vm371, %v645, 0
      %v721 = vsel %vm371, %v646, 0
      %v724 = vsel %vm371, %v647, 0
      %v727 = vsel %vm371, %v648, 0
      %v730 = vsel %vm371, %v649, 0
      %v733 = vsel %vm371, %v650, 0
      %v736 = vsel %vm371, %v651, 0
      %v739 = vsel %vm371, %v652, 0
      %v742 = vsel %vm371, %v653, 0
      %v745 = vsel %vm371, %v654, 0
      %v748 = vsel %vm426, %v692, 0
      %750 = vmatpush.bf16.msra.mxu0 0
      %751 = vmatpush.bf16.msra.mxu0 0
      %752 = vmatpush.bf16.msra.mxu0 0
      %753 = vmatpush.bf16.msra.mxu0 0
      %754 = vmatpush.bf16.msra.mxu0 0
      %755 = vmatpush.bf16.msra.mxu0 0
      %756 = vmatpush.bf16.msra.mxu0 0
      %757 = vmatpush.bf16.msra.mxu0 %v748
      %758 = vmatmul.bf16.gmra.mxu0 %v694
      %v759 = vpop.f32.mrf.mxu0
      %v760 = vadd.f32 0.0, %v759
      %v761 = vpop.f32.mrf.mxu0
      %v762 = vadd.f32 0.0, %v761
      %763 = vmatmul.bf16.gmra.mxu0 %v697
      %v764 = vpop.f32.mrf.mxu0
      %v765 = vadd.f32 0.0, %v764
      %v766 = vpop.f32.mrf.mxu0
      %v767 = vadd.f32 0.0, %v766
      %768 = vmatmul.bf16.gmra.mxu0 %v700
      %v769 = vpop.f32.mrf.mxu0
      %v770 = vadd.f32 0.0, %v769
      %v771 = vpop.f32.mrf.mxu0
      %v772 = vadd.f32 0.0, %v771
      %773 = vmatmul.bf16.gmra.mxu0 %v703
      %v774 = vpop.f32.mrf.mxu0
      %v775 = vadd.f32 0.0, %v774
      %v776 = vpop.f32.mrf.mxu0
      %v777 = vadd.f32 0.0, %v776
      %778 = vmatmul.bf16.gmra.mxu0 %v706
      %v779 = vpop.f32.mrf.mxu0
      %v780 = vadd.f32 0.0, %v779
      %v781 = vpop.f32.mrf.mxu0
      %v782 = vadd.f32 0.0, %v781
      %783 = vmatmul.bf16.gmra.mxu0 %v709
      %v784 = vpop.f32.mrf.mxu0
      %v785 = vadd.f32 0.0, %v784
      %v786 = vpop.f32.mrf.mxu0
      %v787 = vadd.f32 0.0, %v786
      %788 = vmatmul.bf16.gmra.mxu0 %v712
      %v789 = vpop.f32.mrf.mxu0
      %v790 = vadd.f32 0.0, %v789
      %v791 = vpop.f32.mrf.mxu0
      %v792 = vadd.f32 0.0, %v791
      %793 = vmatmul.bf16.gmra.mxu0 %v715
      %v794 = vpop.f32.mrf.mxu0
      %v795 = vadd.f32 0.0, %v794
      %v796 = vpop.f32.mrf.mxu0
      %v797 = vadd.f32 0.0, %v796
      %798 = vmatmul.bf16.gmra.mxu0 %v718
      %v799 = vpop.f32.mrf.mxu0
      %v800 = vadd.f32 0.0, %v799
      %v801 = vpop.f32.mrf.mxu0
      %v802 = vadd.f32 0.0, %v801
      %803 = vmatmul.bf16.gmra.mxu0 %v721
      %v804 = vpop.f32.mrf.mxu0
      %v805 = vadd.f32 0.0, %v804
      %v806 = vpop.f32.mrf.mxu0
      %v807 = vadd.f32 0.0, %v806
      %808 = vmatmul.bf16.gmra.mxu0 %v724
      %v809 = vpop.f32.mrf.mxu0
      %v810 = vadd.f32 0.0, %v809
      %v811 = vpop.f32.mrf.mxu0
      %v812 = vadd.f32 0.0, %v811
      %813 = vmatmul.bf16.gmra.mxu0 %v727
      %v814 = vpop.f32.mrf.mxu0
      %v815 = vadd.f32 0.0, %v814
      %v816 = vpop.f32.mrf.mxu0
      %v817 = vadd.f32 0.0, %v816
      %818 = vmatmul.bf16.gmra.mxu0 %v730
      %v819 = vpop.f32.mrf.mxu0
      %v820 = vadd.f32 0.0, %v819
      %v821 = vpop.f32.mrf.mxu0
      %v822 = vadd.f32 0.0, %v821
      %823 = vmatmul.bf16.gmra.mxu0 %v733
      %v824 = vpop.f32.mrf.mxu0
      %v825 = vadd.f32 0.0, %v824
      %v826 = vpop.f32.mrf.mxu0
      %v827 = vadd.f32 0.0, %v826
      %828 = vmatmul.bf16.gmra.mxu0 %v736
      %v829 = vpop.f32.mrf.mxu0
      %v830 = vadd.f32 0.0, %v829
      %v831 = vpop.f32.mrf.mxu0
      %v832 = vadd.f32 0.0, %v831
      %833 = vmatmul.bf16.gmra.mxu0 %v739
      %v834 = vpop.f32.mrf.mxu0
      %v835 = vadd.f32 0.0, %v834
      %v836 = vpop.f32.mrf.mxu0
      %v837 = vadd.f32 0.0, %v836
      %838 = vmatmul.bf16.gmra.mxu0 %v742
      %v839 = vpop.f32.mrf.mxu0
      %v840 = vadd.f32 0.0, %v839
      %v841 = vpop.f32.mrf.mxu0
      %v842 = vadd.f32 0.0, %v841
      %843 = vmatmul.bf16.gmra.mxu0 %v745
      %v844 = vpop.f32.mrf.mxu0
      %v845 = vadd.f32 0.0, %v844
      %v846 = vpop.f32.mrf.mxu0
      %v847 = vadd.f32 0.0, %v846
      %848 = vdwg.mxu0
      %v849 = vadd.f32 %v655, %v760
      %v850 = vadd.f32 %v656, %v762
      %v851 = vadd.f32 %v657, %v765
      %v852 = vadd.f32 %v658, %v767
      %v853 = vadd.f32 %v659, %v770
      %v854 = vadd.f32 %v660, %v772
      %v855 = vadd.f32 %v661, %v775
      %v856 = vadd.f32 %v662, %v777
      %v857 = vadd.f32 %v663, %v780
      %v858 = vadd.f32 %v664, %v782
      %v859 = vadd.f32 %v665, %v785
      %v860 = vadd.f32 %v666, %v787
      %v861 = vadd.f32 %v667, %v790
      %v862 = vadd.f32 %v668, %v792
      %v863 = vadd.f32 %v669, %v795
      %v864 = vadd.f32 %v670, %v797
      %v865 = vadd.f32 %v671, %v800
      %v866 = vadd.f32 %v672, %v802
      %v867 = vadd.f32 %v673, %v805
      %v868 = vadd.f32 %v674, %v807
      %v869 = vadd.f32 %v675, %v810
      %v870 = vadd.f32 %v676, %v812
      %v871 = vadd.f32 %v677, %v815
      %v872 = vadd.f32 %v678, %v817
      %v873 = vadd.f32 %v679, %v820
      %v874 = vadd.f32 %v680, %v822
      %v875 = vadd.f32 %v681, %v825
      %v876 = vadd.f32 %v682, %v827
      %v877 = vadd.f32 %v683, %v830
      %v878 = vadd.f32 %v684, %v832
      %v879 = vadd.f32 %v685, %v835
      %v880 = vadd.f32 %v686, %v837
      %v881 = vadd.f32 %v687, %v840
      %v882 = vadd.f32 %v688, %v842
      %v883 = vadd.f32 %v689, %v845
      %v884 = vadd.f32 %v690, %v847
      %885 = vst.msk [vmem:[#allocation2] sm:$0xff] %vm243, %v849
      %886 = vst.msk [vmem:[#allocation2 + $0x8] sm:$0xff] %vm243, %v850
      %887 = vst.msk [vmem:[#allocation2 + $0x10] sm:$0xff] %vm243, %v851
      %888 = vst.msk [vmem:[#allocation2 + $0x18] sm:$0xff] %vm243, %v852
      %889 = vst.msk [vmem:[#allocation2 + $0x20] sm:$0xff] %vm243, %v853
      %890 = vst.msk [vmem:[#allocation2 + $0x28] sm:$0xff] %vm243, %v854
      %891 = vst.msk [vmem:[#allocation2 + $0x30] sm:$0xff] %vm243, %v855
      %892 = vst.msk [vmem:[#allocation2 + $0x38] sm:$0xff] %vm243, %v856
      %893 = vst.msk [vmem:[#allocation2 + $0x40] sm:$0xff] %vm243, %v857
      %894 = vst.msk [vmem:[#allocation2 + $0x48] sm:$0xff] %vm243, %v858
      %895 = vst.msk [vmem:[#allocation2 + $0x50] sm:$0xff] %vm243, %v859
      %896 = vst.msk [vmem:[#allocation2 + $0x58] sm:$0xff] %vm243, %v860
      %897 = vst.msk [vmem:[#allocation2 + $0x60] sm:$0xff] %vm243, %v861
      %898 = vst.msk [vmem:[#allocation2 + $0x68] sm:$0xff] %vm243, %v862
      %899 = vst.msk [vmem:[#allocation2 + $0x70] sm:$0xff] %vm243, %v863
      %900 = vst.msk [vmem:[#allocation2 + $0x78] sm:$0xff] %vm243, %v864
      %901 = vst.msk [vmem:[#allocation2 + $0x80] sm:$0xff] %vm243, %v865
      %902 = vst.msk [vmem:[#allocation2 + $0x88] sm:$0xff] %vm243, %v866
      %903 = vst.msk [vmem:[#allocation2 + $0x90] sm:$0xff] %vm243, %v867
      %904 = vst.msk [vmem:[#allocation2 + $0x98] sm:$0xff] %vm243, %v868
      %905 = vst.msk [vmem:[#allocation2 + $0xa0] sm:$0xff] %vm243, %v869
      %906 = vst.msk [vmem:[#allocation2 + $0xa8] sm:$0xff] %vm243, %v870
      %907 = vst.msk [vmem:[#allocation2 + $0xb0] sm:$0xff] %vm243, %v871
      %908 = vst.msk [vmem:[#allocation2 + $0xb8] sm:$0xff] %vm243, %v872
      %909 = vst.msk [vmem:[#allocation2 + $0xc0] sm:$0xff] %vm243, %v873
      %910 = vst.msk [vmem:[#allocation2 + $0xc8] sm:$0xff] %vm243, %v874
      %911 = vst.msk [vmem:[#allocation2 + $0xd0] sm:$0xff] %vm243, %v875
      %912 = vst.msk [vmem:[#allocation2 + $0xd8] sm:$0xff] %vm243, %v876
      %913 = vst.msk [vmem:[#allocation2 + $0xe0] sm:$0xff] %vm243, %v877
      %914 = vst.msk [vmem:[#allocation2 + $0xe8] sm:$0xff] %vm243, %v878
      %915 = vst.msk [vmem:[#allocation2 + $0xf0] sm:$0xff] %vm243, %v879
      %916 = vst.msk [vmem:[#allocation2 + $0xf8] sm:$0xff] %vm243, %v880
      %917 = vst.msk [vmem:[#allocation2 + $0x100] sm:$0xff] %vm243, %v881
      %918 = vst.msk [vmem:[#allocation2 + $0x108] sm:$0xff] %vm243, %v882
      %919 = vst.msk [vmem:[#allocation2 + $0x110] sm:$0xff] %vm243, %v883
      %920 = vst.msk [vmem:[#allocation2 + $0x118] sm:$0xff] %vm243, %v884
      %v921 = vld [vmem:[%s230 + $0x2] sm:$0xff]
      %v922 = vld [vmem:[%s230 + $0xa] sm:$0xff]
      %v923 = vld [vmem:[%s230 + $0x12] sm:$0xff]
      %v924 = vld [vmem:[%s230 + $0x1a] sm:$0xff]
      %v925 = vld [vmem:[%s230 + $0x22] sm:$0xff]
      %v926 = vld [vmem:[%s230 + $0x2a] sm:$0xff]
      %v927 = vld [vmem:[%s230 + $0x32] sm:$0xff]
      %v928 = vld [vmem:[%s230 + $0x3a] sm:$0xff]
      %v929 = vld [vmem:[%s230 + $0x42] sm:$0xff]
      %v930 = vld [vmem:[%s230 + $0x4a] sm:$0xff]
      %v931 = vld [vmem:[%s230 + $0x52] sm:$0xff]
      %v932 = vld [vmem:[%s230 + $0x5a] sm:$0xff]
      %v933 = vld [vmem:[%s230 + $0x62] sm:$0xff]
      %v934 = vld [vmem:[%s230 + $0x6a] sm:$0xff]
      %v935 = vld [vmem:[%s230 + $0x72] sm:$0xff]
      %v936 = vld [vmem:[%s230 + $0x7a] sm:$0xff]
      %v937 = vld [vmem:[%s230 + $0x82] sm:$0xff]
      %v938 = vld [vmem:[%s230 + $0x8a] sm:$0xff]
      %v939 = vld [vmem:[%s230 + $0x92] sm:$0xff]
      %v940 = vld [vmem:[%s230 + $0x9a] sm:$0xff]
      %v941 = vld [vmem:[%s230 + $0xa2] sm:$0xff]
      %v942 = vld [vmem:[%s230 + $0xaa] sm:$0xff]
      %v943 = vld [vmem:[%s230 + $0xb2] sm:$0xff]
      %v944 = vld [vmem:[%s230 + $0xba] sm:$0xff]
      %v945 = vld [vmem:[%s230 + $0xc2] sm:$0xff]
      %v946 = vld [vmem:[%s230 + $0xca] sm:$0xff]
      %v947 = vld [vmem:[%s230 + $0xd2] sm:$0xff]
      %v948 = vld [vmem:[%s230 + $0xda] sm:$0xff]
      %v949 = vld [vmem:[%s230 + $0xe2] sm:$0xff]
      %v950 = vld [vmem:[%s230 + $0xea] sm:$0xff]
      %v951 = vld [vmem:[%s230 + $0xf2] sm:$0xff]
      %v952 = vld [vmem:[%s230 + $0xfa] sm:$0xff]
      %v953 = vld [vmem:[%s230 + $0x102] sm:$0xff]
      %v954 = vld [vmem:[%s230 + $0x10a] sm:$0xff]
      %v955 = vld [vmem:[%s230 + $0x112] sm:$0xff]
      %v956 = vld [vmem:[%s230 + $0x11a] sm:$0xff]
      %v957 = vpack.c.bf16 %v922, %v921
      %v958 = vpack.c.bf16 %v924, %v923
      %v959 = vpack.c.bf16 %v926, %v925
      %v960 = vpack.c.bf16 %v928, %v927
      %v961 = vpack.c.bf16 %v930, %v929
      %v962 = vpack.c.bf16 %v932, %v931
      %v963 = vpack.c.bf16 %v934, %v933
      %v964 = vpack.c.bf16 %v936, %v935
      %v965 = vpack.c.bf16 %v938, %v937
      %v966 = vpack.c.bf16 %v940, %v939
      %v967 = vpack.c.bf16 %v942, %v941
      %v968 = vpack.c.bf16 %v944, %v943
      %v969 = vpack.c.bf16 %v946, %v945
      %v970 = vpack.c.bf16 %v948, %v947
      %v971 = vpack.c.bf16 %v950, %v949
      %v972 = vpack.c.bf16 %v952, %v951
      %v973 = vpack.c.bf16 %v954, %v953
      %v974 = vpack.c.bf16 %v956, %v955
      %v975 = vld [vmem:[#allocation2] sm:$0xff]
      %v976 = vld [vmem:[#allocation2 + $0x8] sm:$0xff]
      %v977 = vld [vmem:[#allocation2 + $0x10] sm:$0xff]
      %v978 = vld [vmem:[#allocation2 + $0x18] sm:$0xff]
      %v979 = vld [vmem:[#allocation2 + $0x20] sm:$0xff]
      %v980 = vld [vmem:[#allocation2 + $0x28] sm:$0xff]
      %v981 = vld [vmem:[#allocation2 + $0x30] sm:$0xff]
      %v982 = vld [vmem:[#allocation2 + $0x38] sm:$0xff]
      %v983 = vld [vmem:[#allocation2 + $0x40] sm:$0xff]
      %v984 = vld [vmem:[#allocation2 + $0x48] sm:$0xff]
      %v985 = vld [vmem:[#allocation2 + $0x50] sm:$0xff]
      %v986 = vld [vmem:[#allocation2 + $0x58] sm:$0xff]
      %v987 = vld [vmem:[#allocation2 + $0x60] sm:$0xff]
      %v988 = vld [vmem:[#allocation2 + $0x68] sm:$0xff]
      %v989 = vld [vmem:[#allocation2 + $0x70] sm:$0xff]
      %v990 = vld [vmem:[#allocation2 + $0x78] sm:$0xff]
      %v991 = vld [vmem:[#allocation2 + $0x80] sm:$0xff]
      %v992 = vld [vmem:[#allocation2 + $0x88] sm:$0xff]
      %v993 = vld [vmem:[#allocation2 + $0x90] sm:$0xff]
      %v994 = vld [vmem:[#allocation2 + $0x98] sm:$0xff]
      %v995 = vld [vmem:[#allocation2 + $0xa0] sm:$0xff]
      %v996 = vld [vmem:[#allocation2 + $0xa8] sm:$0xff]
      %v997 = vld [vmem:[#allocation2 + $0xb0] sm:$0xff]
      %v998 = vld [vmem:[#allocation2 + $0xb8] sm:$0xff]
      %v999 = vld [vmem:[#allocation2 + $0xc0] sm:$0xff]
      %v1000 = vld [vmem:[#allocation2 + $0xc8] sm:$0xff]
      %v1001 = vld [vmem:[#allocation2 + $0xd0] sm:$0xff]
      %v1002 = vld [vmem:[#allocation2 + $0xd8] sm:$0xff]
      %v1003 = vld [vmem:[#allocation2 + $0xe0] sm:$0xff]
      %v1004 = vld [vmem:[#allocation2 + $0xe8] sm:$0xff]
      %v1005 = vld [vmem:[#allocation2 + $0xf0] sm:$0xff]
      %v1006 = vld [vmem:[#allocation2 + $0xf8] sm:$0xff]
      %v1007 = vld [vmem:[#allocation2 + $0x100] sm:$0xff]
      %v1008 = vld [vmem:[#allocation2 + $0x108] sm:$0xff]
      %v1009 = vld [vmem:[#allocation2 + $0x110] sm:$0xff]
      %v1010 = vld [vmem:[#allocation2 + $0x118] sm:$0xff]
      %s1011 = scalar_lea.vmem %s1, 4
      %v1012 = vld [vmem:[%s1011] sm:$0x3]
      %v1014 = vsel %vm371, %v957, 0
      %v1017 = vsel %vm371, %v958, 0
      %v1020 = vsel %vm371, %v959, 0
      %v1023 = vsel %vm371, %v960, 0
      %v1026 = vsel %vm371, %v961, 0
      %v1029 = vsel %vm371, %v962, 0
      %v1032 = vsel %vm371, %v963, 0
      %v1035 = vsel %vm371, %v964, 0
      %v1038 = vsel %vm371, %v965, 0
      %v1041 = vsel %vm371, %v966, 0
      %v1044 = vsel %vm371, %v967, 0
      %v1047 = vsel %vm371, %v968, 0
      %v1050 = vsel %vm371, %v969, 0
      %v1053 = vsel %vm371, %v970, 0
      %v1056 = vsel %vm371, %v971, 0
      %v1059 = vsel %vm371, %v972, 0
      %v1062 = vsel %vm371, %v973, 0
      %v1065 = vsel %vm371, %v974, 0
      %v1068 = vsel %vm426, %v1012, 0
      %1070 = vmatpush.bf16.msra.mxu0 0
      %1071 = vmatpush.bf16.msra.mxu0 0
      %1072 = vmatpush.bf16.msra.mxu0 0
      %1073 = vmatpush.bf16.msra.mxu0 0
      %1074 = vmatpush.bf16.msra.mxu0 0
      %1075 = vmatpush.bf16.msra.mxu0 0
      %1076 = vmatpush.bf16.msra.mxu0 0
      %1077 = vmatpush.bf16.msra.mxu0 %v1068
      %1078 = vmatmul.bf16.gmra.mxu0 %v1014
      %v1079 = vpop.f32.mrf.mxu0
      %v1080 = vadd.f32 0.0, %v1079
      %v1081 = vpop.f32.mrf.mxu0
      %v1082 = vadd.f32 0.0, %v1081
      %1083 = vmatmul.bf16.gmra.mxu0 %v1017
      %v1084 = vpop.f32.mrf.mxu0
      %v1085 = vadd.f32 0.0, %v1084
      %v1086 = vpop.f32.mrf.mxu0
      %v1087 = vadd.f32 0.0, %v1086
      %1088 = vmatmul.bf16.gmra.mxu0 %v1020
      %v1089 = vpop.f32.mrf.mxu0
      %v1090 = vadd.f32 0.0, %v1089
      %v1091 = vpop.f32.mrf.mxu0
      %v1092 = vadd.f32 0.0, %v1091
      %1093 = vmatmul.bf16.gmra.mxu0 %v1023
      %v1094 = vpop.f32.mrf.mxu0
      %v1095 = vadd.f32 0.0, %v1094
      %v1096 = vpop.f32.mrf.mxu0
      %v1097 = vadd.f32 0.0, %v1096
      %1098 = vmatmul.bf16.gmra.mxu0 %v1026
      %v1099 = vpop.f32.mrf.mxu0
      %v1100 = vadd.f32 0.0, %v1099
      %v1101 = vpop.f32.mrf.mxu0
      %v1102 = vadd.f32 0.0, %v1101
      %1103 = vmatmul.bf16.gmra.mxu0 %v1029
      %v1104 = vpop.f32.mrf.mxu0
      %v1105 = vadd.f32 0.0, %v1104
      %v1106 = vpop.f32.mrf.mxu0
      %v1107 = vadd.f32 0.0, %v1106
      %1108 = vmatmul.bf16.gmra.mxu0 %v1032
      %v1109 = vpop.f32.mrf.mxu0
      %v1110 = vadd.f32 0.0, %v1109
      %v1111 = vpop.f32.mrf.mxu0
      %v1112 = vadd.f32 0.0, %v1111
      %1113 = vmatmul.bf16.gmra.mxu0 %v1035
      %v1114 = vpop.f32.mrf.mxu0
      %v1115 = vadd.f32 0.0, %v1114
      %v1116 = vpop.f32.mrf.mxu0
      %v1117 = vadd.f32 0.0, %v1116
      %1118 = vmatmul.bf16.gmra.mxu0 %v1038
      %v1119 = vpop.f32.mrf.mxu0
      %v1120 = vadd.f32 0.0, %v1119
      %v1121 = vpop.f32.mrf.mxu0
      %v1122 = vadd.f32 0.0, %v1121
      %1123 = vmatmul.bf16.gmra.mxu0 %v1041
      %v1124 = vpop.f32.mrf.mxu0
      %v1125 = vadd.f32 0.0, %v1124
      %v1126 = vpop.f32.mrf.mxu0
      %v1127 = vadd.f32 0.0, %v1126
      %1128 = vmatmul.bf16.gmra.mxu0 %v1044
      %v1129 = vpop.f32.mrf.mxu0
      %v1130 = vadd.f32 0.0, %v1129
      %v1131 = vpop.f32.mrf.mxu0
      %v1132 = vadd.f32 0.0, %v1131
      %1133 = vmatmul.bf16.gmra.mxu0 %v1047
      %v1134 = vpop.f32.mrf.mxu0
      %v1135 = vadd.f32 0.0, %v1134
      %v1136 = vpop.f32.mrf.mxu0
      %v1137 = vadd.f32 0.0, %v1136
      %1138 = vmatmul.bf16.gmra.mxu0 %v1050
      %v1139 = vpop.f32.mrf.mxu0
      %v1140 = vadd.f32 0.0, %v1139
      %v1141 = vpop.f32.mrf.mxu0
      %v1142 = vadd.f32 0.0, %v1141
      %1143 = vmatmul.bf16.gmra.mxu0 %v1053
      %v1144 = vpop.f32.mrf.mxu0
      %v1145 = vadd.f32 0.0, %v1144
      %v1146 = vpop.f32.mrf.mxu0
      %v1147 = vadd.f32 0.0, %v1146
      %1148 = vmatmul.bf16.gmra.mxu0 %v1056
      %v1149 = vpop.f32.mrf.mxu0
      %v1150 = vadd.f32 0.0, %v1149
      %v1151 = vpop.f32.mrf.mxu0
      %v1152 = vadd.f32 0.0, %v1151
      %1153 = vmatmul.bf16.gmra.mxu0 %v1059
      %v1154 = vpop.f32.mrf.mxu0
      %v1155 = vadd.f32 0.0, %v1154
      %v1156 = vpop.f32.mrf.mxu0
      %v1157 = vadd.f32 0.0, %v1156
      %1158 = vmatmul.bf16.gmra.mxu0 %v1062
      %v1159 = vpop.f32.mrf.mxu0
      %v1160 = vadd.f32 0.0, %v1159
      %v1161 = vpop.f32.mrf.mxu0
      %v1162 = vadd.f32 0.0, %v1161
      %1163 = vmatmul.bf16.gmra.mxu0 %v1065
      %v1164 = vpop.f32.mrf.mxu0
      %v1165 = vadd.f32 0.0, %v1164
      %v1166 = vpop.f32.mrf.mxu0
      %v1167 = vadd.f32 0.0, %v1166
      %1168 = vdwg.mxu0
      %v1169 = vadd.f32 %v975, %v1080
      %v1170 = vadd.f32 %v976, %v1082
      %v1171 = vadd.f32 %v977, %v1085
      %v1172 = vadd.f32 %v978, %v1087
      %v1173 = vadd.f32 %v979, %v1090
      %v1174 = vadd.f32 %v980, %v1092
      %v1175 = vadd.f32 %v981, %v1095
      %v1176 = vadd.f32 %v982, %v1097
      %v1177 = vadd.f32 %v983, %v1100
      %v1178 = vadd.f32 %v984, %v1102
      %v1179 = vadd.f32 %v985, %v1105
      %v1180 = vadd.f32 %v986, %v1107
      %v1181 = vadd.f32 %v987, %v1110
      %v1182 = vadd.f32 %v988, %v1112
      %v1183 = vadd.f32 %v989, %v1115
      %v1184 = vadd.f32 %v990, %v1117
      %v1185 = vadd.f32 %v991, %v1120
      %v1186 = vadd.f32 %v992, %v1122
      %v1187 = vadd.f32 %v993, %v1125
      %v1188 = vadd.f32 %v994, %v1127
      %v1189 = vadd.f32 %v995, %v1130
      %v1190 = vadd.f32 %v996, %v1132
      %v1191 = vadd.f32 %v997, %v1135
      %v1192 = vadd.f32 %v998, %v1137
      %v1193 = vadd.f32 %v999, %v1140
      %v1194 = vadd.f32 %v1000, %v1142
      %v1195 = vadd.f32 %v1001, %v1145
      %v1196 = vadd.f32 %v1002, %v1147
      %v1197 = vadd.f32 %v1003, %v1150
      %v1198 = vadd.f32 %v1004, %v1152
      %v1199 = vadd.f32 %v1005, %v1155
      %v1200 = vadd.f32 %v1006, %v1157
      %v1201 = vadd.f32 %v1007, %v1160
      %v1202 = vadd.f32 %v1008, %v1162
      %v1203 = vadd.f32 %v1009, %v1165
      %v1204 = vadd.f32 %v1010, %v1167
      %1205 = vst.msk [vmem:[#allocation2] sm:$0xff] %vm243, %v1169
      %1206 = vst.msk [vmem:[#allocation2 + $0x8] sm:$0xff] %vm243, %v1170
      %1207 = vst.msk [vmem:[#allocation2 + $0x10] sm:$0xff] %vm243, %v1171
      %1208 = vst.msk [vmem:[#allocation2 + $0x18] sm:$0xff] %vm243, %v1172
      %1209 = vst.msk [vmem:[#allocation2 + $0x20] sm:$0xff] %vm243, %v1173
      %1210 = vst.msk [vmem:[#allocation2 + $0x28] sm:$0xff] %vm243, %v1174
      %1211 = vst.msk [vmem:[#allocation2 + $0x30] sm:$0xff] %vm243, %v1175
      %1212 = vst.msk [vmem:[#allocation2 + $0x38] sm:$0xff] %vm243, %v1176
      %1213 = vst.msk [vmem:[#allocation2 + $0x40] sm:$0xff] %vm243, %v1177
      %1214 = vst.msk [vmem:[#allocation2 + $0x48] sm:$0xff] %vm243, %v1178
      %1215 = vst.msk [vmem:[#allocation2 + $0x50] sm:$0xff] %vm243, %v1179
      %1216 = vst.msk [vmem:[#allocation2 + $0x58] sm:$0xff] %vm243, %v1180
      %1217 = vst.msk [vmem:[#allocation2 + $0x60] sm:$0xff] %vm243, %v1181
      %1218 = vst.msk [vmem:[#allocation2 + $0x68] sm:$0xff] %vm243, %v1182
      %1219 = vst.msk [vmem:[#allocation2 + $0x70] sm:$0xff] %vm243, %v1183
      %1220 = vst.msk [vmem:[#allocation2 + $0x78] sm:$0xff] %vm243, %v1184
      %1221 = vst.msk [vmem:[#allocation2 + $0x80] sm:$0xff] %vm243, %v1185
      %1222 = vst.msk [vmem:[#allocation2 + $0x88] sm:$0xff] %vm243, %v1186
      %1223 = vst.msk [vmem:[#allocation2 + $0x90] sm:$0xff] %vm243, %v1187
      %1224 = vst.msk [vmem:[#allocation2 + $0x98] sm:$0xff] %vm243, %v1188
      %1225 = vst.msk [vmem:[#allocation2 + $0xa0] sm:$0xff] %vm243, %v1189
      %1226 = vst.msk [vmem:[#allocation2 + $0xa8] sm:$0xff] %vm243, %v1190
      %1227 = vst.msk [vmem:[#allocation2 + $0xb0] sm:$0xff] %vm243, %v1191
      %1228 = vst.msk [vmem:[#allocation2 + $0xb8] sm:$0xff] %vm243, %v1192
      %1229 = vst.msk [vmem:[#allocation2 + $0xc0] sm:$0xff] %vm243, %v1193
      %1230 = vst.msk [vmem:[#allocation2 + $0xc8] sm:$0xff] %vm243, %v1194
      %1231 = vst.msk [vmem:[#allocation2 + $0xd0] sm:$0xff] %vm243, %v1195
      %1232 = vst.msk [vmem:[#allocation2 + $0xd8] sm:$0xff] %vm243, %v1196
      %1233 = vst.msk [vmem:[#allocation2 + $0xe0] sm:$0xff] %vm243, %v1197
      %1234 = vst.msk [vmem:[#allocation2 + $0xe8] sm:$0xff] %vm243, %v1198
      %1235 = vst.msk [vmem:[#allocation2 + $0xf0] sm:$0xff] %vm243, %v1199
      %1236 = vst.msk [vmem:[#allocation2 + $0xf8] sm:$0xff] %vm243, %v1200
      %1237 = vst.msk [vmem:[#allocation2 + $0x100] sm:$0xff] %vm243, %v1201
      %1238 = vst.msk [vmem:[#allocation2 + $0x108] sm:$0xff] %vm243, %v1202
      %1239 = vst.msk [vmem:[#allocation2 + $0x110] sm:$0xff] %vm243, %v1203
      %1240 = vst.msk [vmem:[#allocation2 + $0x118] sm:$0xff] %vm243, %v1204
      %v1241 = vld [vmem:[%s230 + $0x12] sm:$0xff]
      %v1242 = vld [vmem:[%s230 + $0x1a] sm:$0xff]
      %v1243 = vld [vmem:[%s230 + $0x22] sm:$0xff]
      %v1244 = vld [vmem:[%s230 + $0x2a] sm:$0xff]
      %v1245 = vld [vmem:[%s230 + $0x32] sm:$0xff]
      %v1246 = vld [vmem:[%s230 + $0x3a] sm:$0xff]
      %v1247 = vld [vmem:[%s230 + $0x42] sm:$0xff]
      %v1248 = vld [vmem:[%s230 + $0x4a] sm:$0xff]
      %v1249 = vld [vmem:[%s230 + $0x52] sm:$0xff]
      %v1250 = vld [vmem:[%s230 + $0x5a] sm:$0xff]
      %v1251 = vld [vmem:[%s230 + $0x62] sm:$0xff]
      %v1252 = vld [vmem:[%s230 + $0x6a] sm:$0xff]
      %v1253 = vld [vmem:[%s230 + $0x72] sm:$0xff]
      %v1254 = vld [vmem:[%s230 + $0x7a] sm:$0xff]
      %v1255 = vld [vmem:[%s230 + $0x82] sm:$0xff]
      %v1256 = vld [vmem:[%s230 + $0x8a] sm:$0xff]
      %v1257 = vld [vmem:[%s230 + $0x92] sm:$0xff]
      %v1258 = vld [vmem:[%s230 + $0x9a] sm:$0xff]
      %v1259 = vld [vmem:[%s230 + $0xa2] sm:$0xff]
      %v1260 = vld [vmem:[%s230 + $0xaa] sm:$0xff]
      %v1261 = vld [vmem:[%s230 + $0xb2] sm:$0xff]
      %v1262 = vld [vmem:[%s230 + $0xba] sm:$0xff]
      %v1263 = vld [vmem:[%s230 + $0xc2] sm:$0xff]
      %v1264 = vld [vmem:[%s230 + $0xca] sm:$0xff]
      %v1265 = vld [vmem:[%s230 + $0xd2] sm:$0xff]
      %v1266 = vld [vmem:[%s230 + $0xda] sm:$0xff]
      %v1267 = vld [vmem:[%s230 + $0xe2] sm:$0xff]
      %v1268 = vld [vmem:[%s230 + $0xea] sm:$0xff]
      %v1269 = vld [vmem:[%s230 + $0xf2] sm:$0xff]
      %v1270 = vld [vmem:[%s230 + $0xfa] sm:$0xff]
      %v1271 = vld [vmem:[%s230 + $0x102] sm:$0xff]
      %v1272 = vld [vmem:[%s230 + $0x10a] sm:$0xff]
      %v1273 = vld [vmem:[%s230 + $0x112] sm:$0xff]
      %v1274 = vld [vmem:[%s230 + $0x11a] sm:$0xff]
      %v1275 = vld [vmem:[%s230 + $0x122] sm:$0xff]
      %v1276 = vld [vmem:[%s230 + $0x12a] sm:$0xff]
      %v1277 = vpack.c.bf16 %v1242, %v1241
      %v1278 = vpack.c.bf16 %v1244, %v1243
      %v1279 = vpack.c.bf16 %v1246, %v1245
      %v1280 = vpack.c.bf16 %v1248, %v1247
      %v1281 = vpack.c.bf16 %v1250, %v1249
      %v1282 = vpack.c.bf16 %v1252, %v1251
      %v1283 = vpack.c.bf16 %v1254, %v1253
      %v1284 = vpack.c.bf16 %v1256, %v1255
      %v1285 = vpack.c.bf16 %v1258, %v1257
      %v1286 = vpack.c.bf16 %v1260, %v1259
      %v1287 = vpack.c.bf16 %v1262, %v1261
      %v1288 = vpack.c.bf16 %v1264, %v1263
      %v1289 = vpack.c.bf16 %v1266, %v1265
      %v1290 = vpack.c.bf16 %v1268, %v1267
      %v1291 = vpack.c.bf16 %v1270, %v1269
      %v1292 = vpack.c.bf16 %v1272, %v1271
      %v1293 = vpack.c.bf16 %v1274, %v1273
      %v1294 = vpack.c.bf16 %v1276, %v1275
      %v1295 = vld [vmem:[#allocation2] sm:$0xff]
      %v1296 = vld [vmem:[#allocation2 + $0x8] sm:$0xff]
      %v1297 = vld [vmem:[#allocation2 + $0x10] sm:$0xff]
      %v1298 = vld [vmem:[#allocation2 + $0x18] sm:$0xff]
      %v1299 = vld [vmem:[#allocation2 + $0x20] sm:$0xff]
      %v1300 = vld [vmem:[#allocation2 + $0x28] sm:$0xff]
      %v1301 = vld [vmem:[#allocation2 + $0x30] sm:$0xff]
      %v1302 = vld [vmem:[#allocation2 + $0x38] sm:$0xff]
      %v1303 = vld [vmem:[#allocation2 + $0x40] sm:$0xff]
      %v1304 = vld [vmem:[#allocation2 + $0x48] sm:$0xff]
      %v1305 = vld [vmem:[#allocation2 + $0x50] sm:$0xff]
      %v1306 = vld [vmem:[#allocation2 + $0x58] sm:$0xff]
      %v1307 = vld [vmem:[#allocation2 + $0x60] sm:$0xff]
      %v1308 = vld [vmem:[#allocation2 + $0x68] sm:$0xff]
      %v1309 = vld [vmem:[#allocation2 + $0x70] sm:$0xff]
      %v1310 = vld [vmem:[#allocation2 + $0x78] sm:$0xff]
      %v1311 = vld [vmem:[#allocation2 + $0x80] sm:$0xff]
      %v1312 = vld [vmem:[#allocation2 + $0x88] sm:$0xff]
      %v1313 = vld [vmem:[#allocation2 + $0x90] sm:$0xff]
      %v1314 = vld [vmem:[#allocation2 + $0x98] sm:$0xff]
      %v1315 = vld [vmem:[#allocation2 + $0xa0] sm:$0xff]
      %v1316 = vld [vmem:[#allocation2 + $0xa8] sm:$0xff]
      %v1317 = vld [vmem:[#allocation2 + $0xb0] sm:$0xff]
      %v1318 = vld [vmem:[#allocation2 + $0xb8] sm:$0xff]
      %v1319 = vld [vmem:[#allocation2 + $0xc0] sm:$0xff]
      %v1320 = vld [vmem:[#allocation2 + $0xc8] sm:$0xff]
      %v1321 = vld [vmem:[#allocation2 + $0xd0] sm:$0xff]
      %v1322 = vld [vmem:[#allocation2 + $0xd8] sm:$0xff]
      %v1323 = vld [vmem:[#allocation2 + $0xe0] sm:$0xff]
      %v1324 = vld [vmem:[#allocation2 + $0xe8] sm:$0xff]
      %v1325 = vld [vmem:[#allocation2 + $0xf0] sm:$0xff]
      %v1326 = vld [vmem:[#allocation2 + $0xf8] sm:$0xff]
      %v1327 = vld [vmem:[#allocation2 + $0x100] sm:$0xff]
      %v1328 = vld [vmem:[#allocation2 + $0x108] sm:$0xff]
      %v1329 = vld [vmem:[#allocation2 + $0x110] sm:$0xff]
      %v1330 = vld [vmem:[#allocation2 + $0x118] sm:$0xff]
      %s1331 = scalar_lea.vmem %s1, 6
      %v1332 = vld [vmem:[%s1331] sm:$0x3]
      %v1334 = vsel %vm371, %v1277, 0
      %v1337 = vsel %vm371, %v1278, 0
      %v1340 = vsel %vm371, %v1279, 0
      %v1343 = vsel %vm371, %v1280, 0
      %v1346 = vsel %vm371, %v1281, 0
      %v1349 = vsel %vm371, %v1282, 0
      %v1352 = vsel %vm371, %v1283, 0
      %v1355 = vsel %vm371, %v1284, 0
      %v1358 = vsel %vm371, %v1285, 0
      %v1361 = vsel %vm371, %v1286, 0
      %v1364 = vsel %vm371, %v1287, 0
      %v1367 = vsel %vm371, %v1288, 0
      %v1370 = vsel %vm371, %v1289, 0
      %v1373 = vsel %vm371, %v1290, 0
      %v1376 = vsel %vm371, %v1291, 0
      %v1379 = vsel %vm371, %v1292, 0
      %v1382 = vsel %vm371, %v1293, 0
      %v1385 = vsel %vm371, %v1294, 0
      %v1388 = vsel %vm426, %v1332, 0
      %1390 = vmatpush.bf16.msra.mxu0 0
      %1391 = vmatpush.bf16.msra.mxu0 0
      %1392 = vmatpush.bf16.msra.mxu0 0
      %1393 = vmatpush.bf16.msra.mxu0 0
      %1394 = vmatpush.bf16.msra.mxu0 0
      %1395 = vmatpush.bf16.msra.mxu0 0
      %1396 = vmatpush.bf16.msra.mxu0 0
      %1397 = vmatpush.bf16.msra.mxu0 %v1388
      %1398 = vmatmul.bf16.gmra.mxu0 %v1334
      %v1399 = vpop.f32.mrf.mxu0
      %v1400 = vadd.f32 0.0, %v1399
      %v1401 = vpop.f32.mrf.mxu0
      %v1402 = vadd.f32 0.0, %v1401
      %1403 = vmatmul.bf16.gmra.mxu0 %v1337
      %v1404 = vpop.f32.mrf.mxu0
      %v1405 = vadd.f32 0.0, %v1404
      %v1406 = vpop.f32.mrf.mxu0
      %v1407 = vadd.f32 0.0, %v1406
      %1408 = vmatmul.bf16.gmra.mxu0 %v1340
      %v1409 = vpop.f32.mrf.mxu0
      %v1410 = vadd.f32 0.0, %v1409
      %v1411 = vpop.f32.mrf.mxu0
      %v1412 = vadd.f32 0.0, %v1411
      %1413 = vmatmul.bf16.gmra.mxu0 %v1343
      %v1414 = vpop.f32.mrf.mxu0
      %v1415 = vadd.f32 0.0, %v1414
      %v1416 = vpop.f32.mrf.mxu0
      %v1417 = vadd.f32 0.0, %v1416
      %1418 = vmatmul.bf16.gmra.mxu0 %v1346
      %v1419 = vpop.f32.mrf.mxu0
      %v1420 = vadd.f32 0.0, %v1419
      %v1421 = vpop.f32.mrf.mxu0
      %v1422 = vadd.f32 0.0, %v1421
      %1423 = vmatmul.bf16.gmra.mxu0 %v1349
      %v1424 = vpop.f32.mrf.mxu0
      %v1425 = vadd.f32 0.0, %v1424
      %v1426 = vpop.f32.mrf.mxu0
      %v1427 = vadd.f32 0.0, %v1426
      %1428 = vmatmul.bf16.gmra.mxu0 %v1352
      %v1429 = vpop.f32.mrf.mxu0
      %v1430 = vadd.f32 0.0, %v1429
      %v1431 = vpop.f32.mrf.mxu0
      %v1432 = vadd.f32 0.0, %v1431
      %1433 = vmatmul.bf16.gmra.mxu0 %v1355
      %v1434 = vpop.f32.mrf.mxu0
      %v1435 = vadd.f32 0.0, %v1434
      %v1436 = vpop.f32.mrf.mxu0
      %v1437 = vadd.f32 0.0, %v1436
      %1438 = vmatmul.bf16.gmra.mxu0 %v1358
      %v1439 = vpop.f32.mrf.mxu0
      %v1440 = vadd.f32 0.0, %v1439
      %v1441 = vpop.f32.mrf.mxu0
      %v1442 = vadd.f32 0.0, %v1441
      %1443 = vmatmul.bf16.gmra.mxu0 %v1361
      %v1444 = vpop.f32.mrf.mxu0
      %v1445 = vadd.f32 0.0, %v1444
      %v1446 = vpop.f32.mrf.mxu0
      %v1447 = vadd.f32 0.0, %v1446
      %1448 = vmatmul.bf16.gmra.mxu0 %v1364
      %v1449 = vpop.f32.mrf.mxu0
      %v1450 = vadd.f32 0.0, %v1449
      %v1451 = vpop.f32.mrf.mxu0
      %v1452 = vadd.f32 0.0, %v1451
      %1453 = vmatmul.bf16.gmra.mxu0 %v1367
      %v1454 = vpop.f32.mrf.mxu0
      %v1455 = vadd.f32 0.0, %v1454
      %v1456 = vpop.f32.mrf.mxu0
      %v1457 = vadd.f32 0.0, %v1456
      %1458 = vmatmul.bf16.gmra.mxu0 %v1370
      %v1459 = vpop.f32.mrf.mxu0
      %v1460 = vadd.f32 0.0, %v1459
      %v1461 = vpop.f32.mrf.mxu0
      %v1462 = vadd.f32 0.0, %v1461
      %1463 = vmatmul.bf16.gmra.mxu0 %v1373
      %v1464 = vpop.f32.mrf.mxu0
      %v1465 = vadd.f32 0.0, %v1464
      %v1466 = vpop.f32.mrf.mxu0
      %v1467 = vadd.f32 0.0, %v1466
      %1468 = vmatmul.bf16.gmra.mxu0 %v1376
      %v1469 = vpop.f32.mrf.mxu0
      %v1470 = vadd.f32 0.0, %v1469
      %v1471 = vpop.f32.mrf.mxu0
      %v1472 = vadd.f32 0.0, %v1471
      %1473 = vmatmul.bf16.gmra.mxu0 %v1379
      %v1474 = vpop.f32.mrf.mxu0
      %v1475 = vadd.f32 0.0, %v1474
      %v1476 = vpop.f32.mrf.mxu0
      %v1477 = vadd.f32 0.0, %v1476
      %1478 = vmatmul.bf16.gmra.mxu0 %v1382
      %v1479 = vpop.f32.mrf.mxu0
      %v1480 = vadd.f32 0.0, %v1479
      %v1481 = vpop.f32.mrf.mxu0
      %v1482 = vadd.f32 0.0, %v1481
      %1483 = vmatmul.bf16.gmra.mxu0 %v1385
      %v1484 = vpop.f32.mrf.mxu0
      %v1485 = vadd.f32 0.0, %v1484
      %v1486 = vpop.f32.mrf.mxu0
      %v1487 = vadd.f32 0.0, %v1486
      %1488 = vdwg.mxu0
      %v1489 = vadd.f32 %v1295, %v1400
      %v1490 = vadd.f32 %v1296, %v1402
      %v1491 = vadd.f32 %v1297, %v1405
      %v1492 = vadd.f32 %v1298, %v1407
      %v1493 = vadd.f32 %v1299, %v1410
      %v1494 = vadd.f32 %v1300, %v1412
      %v1495 = vadd.f32 %v1301, %v1415
      %v1496 = vadd.f32 %v1302, %v1417
      %v1497 = vadd.f32 %v1303, %v1420
      %v1498 = vadd.f32 %v1304, %v1422
      %v1499 = vadd.f32 %v1305, %v1425
      %v1500 = vadd.f32 %v1306, %v1427
      %v1501 = vadd.f32 %v1307, %v1430
      %v1502 = vadd.f32 %v1308, %v1432
      %v1503 = vadd.f32 %v1309, %v1435
      %v1504 = vadd.f32 %v1310, %v1437
      %v1505 = vadd.f32 %v1311, %v1440
      %v1506 = vadd.f32 %v1312, %v1442
      %v1507 = vadd.f32 %v1313, %v1445
      %v1508 = vadd.f32 %v1314, %v1447
      %v1509 = vadd.f32 %v1315, %v1450
      %v1510 = vadd.f32 %v1316, %v1452
      %v1511 = vadd.f32 %v1317, %v1455
      %v1512 = vadd.f32 %v1318, %v1457
      %v1513 = vadd.f32 %v1319, %v1460
      %v1514 = vadd.f32 %v1320, %v1462
      %v1515 = vadd.f32 %v1321, %v1465
      %v1516 = vadd.f32 %v1322, %v1467
      %v1517 = vadd.f32 %v1323, %v1470
      %v1518 = vadd.f32 %v1324, %v1472
      %v1519 = vadd.f32 %v1325, %v1475
      %v1520 = vadd.f32 %v1326, %v1477
      %v1521 = vadd.f32 %v1327, %v1480
      %v1522 = vadd.f32 %v1328, %v1482
      %v1523 = vadd.f32 %v1329, %v1485
      %v1524 = vadd.f32 %v1330, %v1487
      %1525 = vst.msk [vmem:[#allocation2] sm:$0xff] %vm243, %v1489
      %1526 = vst.msk [vmem:[#allocation2 + $0x8] sm:$0xff] %vm243, %v1490
      %1527 = vst.msk [vmem:[#allocation2 + $0x10] sm:$0xff] %vm243, %v1491
      %1528 = vst.msk [vmem:[#allocation2 + $0x18] sm:$0xff] %vm243, %v1492
      %1529 = vst.msk [vmem:[#allocation2 + $0x20] sm:$0xff] %vm243, %v1493
      %1530 = vst.msk [vmem:[#allocation2 + $0x28] sm:$0xff] %vm243, %v1494
      %1531 = vst.msk [vmem:[#allocation2 + $0x30] sm:$0xff] %vm243, %v1495
      %1532 = vst.msk [vmem:[#allocation2 + $0x38] sm:$0xff] %vm243, %v1496
      %1533 = vst.msk [vmem:[#allocation2 + $0x40] sm:$0xff] %vm243, %v1497
      %1534 = vst.msk [vmem:[#allocation2 + $0x48] sm:$0xff] %vm243, %v1498
      %1535 = vst.msk [vmem:[#allocation2 + $0x50] sm:$0xff] %vm243, %v1499
      %1536 = vst.msk [vmem:[#allocation2 + $0x58] sm:$0xff] %vm243, %v1500
      %1537 = vst.msk [vmem:[#allocation2 + $0x60] sm:$0xff] %vm243, %v1501
      %1538 = vst.msk [vmem:[#allocation2 + $0x68] sm:$0xff] %vm243, %v1502
      %1539 = vst.msk [vmem:[#allocation2 + $0x70] sm:$0xff] %vm243, %v1503
      %1540 = vst.msk [vmem:[#allocation2 + $0x78] sm:$0xff] %vm243, %v1504
      %1541 = vst.msk [vmem:[#allocation2 + $0x80] sm:$0xff] %vm243, %v1505
      %1542 = vst.msk [vmem:[#allocation2 + $0x88] sm:$0xff] %vm243, %v1506
      %1543 = vst.msk [vmem:[#allocation2 + $0x90] sm:$0xff] %vm243, %v1507
      %1544 = vst.msk [vmem:[#allocation2 + $0x98] sm:$0xff] %vm243, %v1508
      %1545 = vst.msk [vmem:[#allocation2 + $0xa0] sm:$0xff] %vm243, %v1509
      %1546 = vst.msk [vmem:[#allocation2 + $0xa8] sm:$0xff] %vm243, %v1510
      %1547 = vst.msk [vmem:[#allocation2 + $0xb0] sm:$0xff] %vm243, %v1511
      %1548 = vst.msk [vmem:[#allocation2 + $0xb8] sm:$0xff] %vm243, %v1512
      %1549 = vst.msk [vmem:[#allocation2 + $0xc0] sm:$0xff] %vm243, %v1513
      %1550 = vst.msk [vmem:[#allocation2 + $0xc8] sm:$0xff] %vm243, %v1514
      %1551 = vst.msk [vmem:[#allocation2 + $0xd0] sm:$0xff] %vm243, %v1515
      %1552 = vst.msk [vmem:[#allocation2 + $0xd8] sm:$0xff] %vm243, %v1516
      %1553 = vst.msk [vmem:[#allocation2 + $0xe0] sm:$0xff] %vm243, %v1517
      %1554 = vst.msk [vmem:[#allocation2 + $0xe8] sm:$0xff] %vm243, %v1518
      %1555 = vst.msk [vmem:[#allocation2 + $0xf0] sm:$0xff] %vm243, %v1519
      %1556 = vst.msk [vmem:[#allocation2 + $0xf8] sm:$0xff] %vm243, %v1520
      %1557 = vst.msk [vmem:[#allocation2 + $0x100] sm:$0xff] %vm243, %v1521
      %1558 = vst.msk [vmem:[#allocation2 + $0x108] sm:$0xff] %vm243, %v1522
      %1559 = vst.msk [vmem:[#allocation2 + $0x110] sm:$0xff] %vm243, %v1523
      %1560 = vst.msk [vmem:[#allocation2 + $0x118] sm:$0xff] %vm243, %v1524
      %v1561 = vld [vmem:[%s230 + $0x13] sm:$0xff]
      %v1562 = vld [vmem:[%s230 + $0x1b] sm:$0xff]
      %v1563 = vld [vmem:[%s230 + $0x23] sm:$0xff]
      %v1564 = vld [vmem:[%s230 + $0x2b] sm:$0xff]
      %v1565 = vld [vmem:[%s230 + $0x33] sm:$0xff]
      %v1566 = vld [vmem:[%s230 + $0x3b] sm:$0xff]
      %v1567 = vld [vmem:[%s230 + $0x43] sm:$0xff]
      %v1568 = vld [vmem:[%s230 + $0x4b] sm:$0xff]
      %v1569 = vld [vmem:[%s230 + $0x53] sm:$0xff]
      %v1570 = vld [vmem:[%s230 + $0x5b] sm:$0xff]
      %v1571 = vld [vmem:[%s230 + $0x63] sm:$0xff]
      %v1572 = vld [vmem:[%s230 + $0x6b] sm:$0xff]
      %v1573 = vld [vmem:[%s230 + $0x73] sm:$0xff]
      %v1574 = vld [vmem:[%s230 + $0x7b] sm:$0xff]
      %v1575 = vld [vmem:[%s230 + $0x83] sm:$0xff]
      %v1576 = vld [vmem:[%s230 + $0x8b] sm:$0xff]
      %v1577 = vld [vmem:[%s230 + $0x93] sm:$0xff]
      %v1578 = vld [vmem:[%s230 + $0x9b] sm:$0xff]
      %v1579 = vld [vmem:[%s230 + $0xa3] sm:$0xff]
      %v1580 = vld [vmem:[%s230 + $0xab] sm:$0xff]
      %v1581 = vld [vmem:[%s230 + $0xb3] sm:$0xff]
      %v1582 = vld [vmem:[%s230 + $0xbb] sm:$0xff]
      %v1583 = vld [vmem:[%s230 + $0xc3] sm:$0xff]
      %v1584 = vld [vmem:[%s230 + $0xcb] sm:$0xff]
      %v1585 = vld [vmem:[%s230 + $0xd3] sm:$0xff]
      %v1586 = vld [vmem:[%s230 + $0xdb] sm:$0xff]
      %v1587 = vld [vmem:[%s230 + $0xe3] sm:$0xff]
      %v1588 = vld [vmem:[%s230 + $0xeb] sm:$0xff]
      %v1589 = vld [vmem:[%s230 + $0xf3] sm:$0xff]
      %v1590 = vld [vmem:[%s230 + $0xfb] sm:$0xff]
      %v1591 = vld [vmem:[%s230 + $0x103] sm:$0xff]
      %v1592 = vld [vmem:[%s230 + $0x10b] sm:$0xff]
      %v1593 = vld [vmem:[%s230 + $0x113] sm:$0xff]
      %v1594 = vld [vmem:[%s230 + $0x11b] sm:$0xff]
      %v1595 = vld [vmem:[%s230 + $0x123] sm:$0xff]
      %v1596 = vld [vmem:[%s230 + $0x12b] sm:$0xff]
      %v1597 = vpack.c.bf16 %v1562, %v1561
      %v1598 = vpack.c.bf16 %v1564, %v1563
      %v1599 = vpack.c.bf16 %v1566, %v1565
      %v1600 = vpack.c.bf16 %v1568, %v1567
      %v1601 = vpack.c.bf16 %v1570, %v1569
      %v1602 = vpack.c.bf16 %v1572, %v1571
      %v1603 = vpack.c.bf16 %v1574, %v1573
      %v1604 = vpack.c.bf16 %v1576, %v1575
      %v1605 = vpack.c.bf16 %v1578, %v1577
      %v1606 = vpack.c.bf16 %v1580, %v1579
      %v1607 = vpack.c.bf16 %v1582, %v1581
      %v1608 = vpack.c.bf16 %v1584, %v1583
      %v1609 = vpack.c.bf16 %v1586, %v1585
      %v1610 = vpack.c.bf16 %v1588, %v1587
      %v1611 = vpack.c.bf16 %v1590, %v1589
      %v1612 = vpack.c.bf16 %v1592, %v1591
      %v1613 = vpack.c.bf16 %v1594, %v1593
      %v1614 = vpack.c.bf16 %v1596, %v1595
      %v1615 = vld [vmem:[#allocation2] sm:$0xff]
      %v1616 = vld [vmem:[#allocation2 + $0x8] sm:$0xff]
      %v1617 = vld [vmem:[#allocation2 + $0x10] sm:$0xff]
      %v1618 = vld [vmem:[#allocation2 + $0x18] sm:$0xff]
      %v1619 = vld [vmem:[#allocation2 + $0x20] sm:$0xff]
      %v1620 = vld [vmem:[#allocation2 + $0x28] sm:$0xff]
      %v1621 = vld [vmem:[#allocation2 + $0x30] sm:$0xff]
      %v1622 = vld [vmem:[#allocation2 + $0x38] sm:$0xff]
      %v1623 = vld [vmem:[#allocation2 + $0x40] sm:$0xff]
      %v1624 = vld [vmem:[#allocation2 + $0x48] sm:$0xff]
      %v1625 = vld [vmem:[#allocation2 + $0x50] sm:$0xff]
      %v1626 = vld [vmem:[#allocation2 + $0x58] sm:$0xff]
      %v1627 = vld [vmem:[#allocation2 + $0x60] sm:$0xff]
      %v1628 = vld [vmem:[#allocation2 + $0x68] sm:$0xff]
      %v1629 = vld [vmem:[#allocation2 + $0x70] sm:$0xff]
      %v1630 = vld [vmem:[#allocation2 + $0x78] sm:$0xff]
      %v1631 = vld [vmem:[#allocation2 + $0x80] sm:$0xff]
      %v1632 = vld [vmem:[#allocation2 + $0x88] sm:$0xff]
      %v1633 = vld [vmem:[#allocation2 + $0x90] sm:$0xff]
      %v1634 = vld [vmem:[#allocation2 + $0x98] sm:$0xff]
      %v1635 = vld [vmem:[#allocation2 + $0xa0] sm:$0xff]
      %v1636 = vld [vmem:[#allocation2 + $0xa8] sm:$0xff]
      %v1637 = vld [vmem:[#allocation2 + $0xb0] sm:$0xff]
      %v1638 = vld [vmem:[#allocation2 + $0xb8] sm:$0xff]
      %v1639 = vld [vmem:[#allocation2 + $0xc0] sm:$0xff]
      %v1640 = vld [vmem:[#allocation2 + $0xc8] sm:$0xff]
      %v1641 = vld [vmem:[#allocation2 + $0xd0] sm:$0xff]
      %v1642 = vld [vmem:[#allocation2 + $0xd8] sm:$0xff]
      %v1643 = vld [vmem:[#allocation2 + $0xe0] sm:$0xff]
      %v1644 = vld [vmem:[#allocation2 + $0xe8] sm:$0xff]
      %v1645 = vld [vmem:[#allocation2 + $0xf0] sm:$0xff]
      %v1646 = vld [vmem:[#allocation2 + $0xf8] sm:$0xff]
      %v1647 = vld [vmem:[#allocation2 + $0x100] sm:$0xff]
      %v1648 = vld [vmem:[#allocation2 + $0x108] sm:$0xff]
      %v1649 = vld [vmem:[#allocation2 + $0x110] sm:$0xff]
      %v1650 = vld [vmem:[#allocation2 + $0x118] sm:$0xff]
      %s1651 = scalar_lea.vmem %s1, 8
      %v1652 = vld [vmem:[%s1651] sm:$0x3]
      %v1654 = vsel %vm371, %v1597, 0
      %v1657 = vsel %vm371, %v1598, 0
      %v1660 = vsel %vm371, %v1599, 0
      %v1663 = vsel %vm371, %v1600, 0
      %v1666 = vsel %vm371, %v1601, 0
      %v1669 = vsel %vm371, %v1602, 0
      %v1672 = vsel %vm371, %v1603, 0
      %v1675 = vsel %vm371, %v1604, 0
      %v1678 = vsel %vm371, %v1605, 0
      %v1681 = vsel %vm371, %v1606, 0
      %v1684 = vsel %vm371, %v1607, 0
      %v1687 = vsel %vm371, %v1608, 0
      %v1690 = vsel %vm371, %v1609, 0
      %v1693 = vsel %vm371, %v1610, 0
      %v1696 = vsel %vm371, %v1611, 0
      %v1699 = vsel %vm371, %v1612, 0
      %v1702 = vsel %vm371, %v1613, 0
      %v1705 = vsel %vm371, %v1614, 0
      %v1708 = vsel %vm426, %v1652, 0
      %1710 = vmatpush.bf16.msra.mxu0 0
      %1711 = vmatpush.bf16.msra.mxu0 0
      %1712 = vmatpush.bf16.msra.mxu0 0
      %1713 = vmatpush.bf16.msra.mxu0 0
      %1714 = vmatpush.bf16.msra.mxu0 0
      %1715 = vmatpush.bf16.msra.mxu0 0
      %1716 = vmatpush.bf16.msra.mxu0 0
      %1717 = vmatpush.bf16.msra.mxu0 %v1708
      %1718 = vmatmul.bf16.gmra.mxu0 %v1654
      %v1719 = vpop.f32.mrf.mxu0
      %v1720 = vadd.f32 0.0, %v1719
      %v1721 = vpop.f32.mrf.mxu0
      %v1722 = vadd.f32 0.0, %v1721
      %1723 = vmatmul.bf16.gmra.mxu0 %v1657
      %v1724 = vpop.f32.mrf.mxu0
      %v1725 = vadd.f32 0.0, %v1724
      %v1726 = vpop.f32.mrf.mxu0
      %v1727 = vadd.f32 0.0, %v1726
      %1728 = vmatmul.bf16.gmra.mxu0 %v1660
      %v1729 = vpop.f32.mrf.mxu0
      %v1730 = vadd.f32 0.0, %v1729
      %v1731 = vpop.f32.mrf.mxu0
      %v1732 = vadd.f32 0.0, %v1731
      %1733 = vmatmul.bf16.gmra.mxu0 %v1663
      %v1734 = vpop.f32.mrf.mxu0
      %v1735 = vadd.f32 0.0, %v1734
      %v1736 = vpop.f32.mrf.mxu0
      %v1737 = vadd.f32 0.0, %v1736
      %1738 = vmatmul.bf16.gmra.mxu0 %v1666
      %v1739 = vpop.f32.mrf.mxu0
      %v1740 = vadd.f32 0.0, %v1739
      %v1741 = vpop.f32.mrf.mxu0
      %v1742 = vadd.f32 0.0, %v1741
      %1743 = vmatmul.bf16.gmra.mxu0 %v1669
      %v1744 = vpop.f32.mrf.mxu0
      %v1745 = vadd.f32 0.0, %v1744
      %v1746 = vpop.f32.mrf.mxu0
      %v1747 = vadd.f32 0.0, %v1746
      %1748 = vmatmul.bf16.gmra.mxu0 %v1672
      %v1749 = vpop.f32.mrf.mxu0
      %v1750 = vadd.f32 0.0, %v1749
      %v1751 = vpop.f32.mrf.mxu0
      %v1752 = vadd.f32 0.0, %v1751
      %1753 = vmatmul.bf16.gmra.mxu0 %v1675
      %v1754 = vpop.f32.mrf.mxu0
      %v1755 = vadd.f32 0.0, %v1754
      %v1756 = vpop.f32.mrf.mxu0
      %v1757 = vadd.f32 0.0, %v1756
      %1758 = vmatmul.bf16.gmra.mxu0 %v1678
      %v1759 = vpop.f32.mrf.mxu0
      %v1760 = vadd.f32 0.0, %v1759
      %v1761 = vpop.f32.mrf.mxu0
      %v1762 = vadd.f32 0.0, %v1761
      %1763 = vmatmul.bf16.gmra.mxu0 %v1681
      %v1764 = vpop.f32.mrf.mxu0
      %v1765 = vadd.f32 0.0, %v1764
      %v1766 = vpop.f32.mrf.mxu0
      %v1767 = vadd.f32 0.0, %v1766
      %1768 = vmatmul.bf16.gmra.mxu0 %v1684
      %v1769 = vpop.f32.mrf.mxu0
      %v1770 = vadd.f32 0.0, %v1769
      %v1771 = vpop.f32.mrf.mxu0
      %v1772 = vadd.f32 0.0, %v1771
      %1773 = vmatmul.bf16.gmra.mxu0 %v1687
      %v1774 = vpop.f32.mrf.mxu0
      %v1775 = vadd.f32 0.0, %v1774
      %v1776 = vpop.f32.mrf.mxu0
      %v1777 = vadd.f32 0.0, %v1776
      %1778 = vmatmul.bf16.gmra.mxu0 %v1690
      %v1779 = vpop.f32.mrf.mxu0
      %v1780 = vadd.f32 0.0, %v1779
      %v1781 = vpop.f32.mrf.mxu0
      %v1782 = vadd.f32 0.0, %v1781
      %1783 = vmatmul.bf16.gmra.mxu0 %v1693
      %v1784 = vpop.f32.mrf.mxu0
      %v1785 = vadd.f32 0.0, %v1784
      %v1786 = vpop.f32.mrf.mxu0
      %v1787 = vadd.f32 0.0, %v1786
      %1788 = vmatmul.bf16.gmra.mxu0 %v1696
      %v1789 = vpop.f32.mrf.mxu0
      %v1790 = vadd.f32 0.0, %v1789
      %v1791 = vpop.f32.mrf.mxu0
      %v1792 = vadd.f32 0.0, %v1791
      %1793 = vmatmul.bf16.gmra.mxu0 %v1699
      %v1794 = vpop.f32.mrf.mxu0
      %v1795 = vadd.f32 0.0, %v1794
      %v1796 = vpop.f32.mrf.mxu0
      %v1797 = vadd.f32 0.0, %v1796
      %1798 = vmatmul.bf16.gmra.mxu0 %v1702
      %v1799 = vpop.f32.mrf.mxu0
      %v1800 = vadd.f32 0.0, %v1799
      %v1801 = vpop.f32.mrf.mxu0
      %v1802 = vadd.f32 0.0, %v1801
      %1803 = vmatmul.bf16.gmra.mxu0 %v1705
      %v1804 = vpop.f32.mrf.mxu0
      %v1805 = vadd.f32 0.0, %v1804
      %v1806 = vpop.f32.mrf.mxu0
      %v1807 = vadd.f32 0.0, %v1806
      %1808 = vdwg.mxu0
      %v1809 = vadd.f32 %v1615, %v1720
      %v1810 = vadd.f32 %v1616, %v1722
      %v1811 = vadd.f32 %v1617, %v1725
      %v1812 = vadd.f32 %v1618, %v1727
      %v1813 = vadd.f32 %v1619, %v1730
      %v1814 = vadd.f32 %v1620, %v1732
      %v1815 = vadd.f32 %v1621, %v1735
      %v1816 = vadd.f32 %v1622, %v1737
      %v1817 = vadd.f32 %v1623, %v1740
      %v1818 = vadd.f32 %v1624, %v1742
      %v1819 = vadd.f32 %v1625, %v1745
      %v1820 = vadd.f32 %v1626, %v1747
      %v1821 = vadd.f32 %v1627, %v1750
      %v1822 = vadd.f32 %v1628, %v1752
      %v1823 = vadd.f32 %v1629, %v1755
      %v1824 = vadd.f32 %v1630, %v1757
      %v1825 = vadd.f32 %v1631, %v1760
      %v1826 = vadd.f32 %v1632, %v1762
      %v1827 = vadd.f32 %v1633, %v1765
      %v1828 = vadd.f32 %v1634, %v1767
      %v1829 = vadd.f32 %v1635, %v1770
      %v1830 = vadd.f32 %v1636, %v1772
      %v1831 = vadd.f32 %v1637, %v1775
      %v1832 = vadd.f32 %v1638, %v1777
      %v1833 = vadd.f32 %v1639, %v1780
      %v1834 = vadd.f32 %v1640, %v1782
      %v1835 = vadd.f32 %v1641, %v1785
      %v1836 = vadd.f32 %v1642, %v1787
      %v1837 = vadd.f32 %v1643, %v1790
      %v1838 = vadd.f32 %v1644, %v1792
      %v1839 = vadd.f32 %v1645, %v1795
      %v1840 = vadd.f32 %v1646, %v1797
      %v1841 = vadd.f32 %v1647, %v1800
      %v1842 = vadd.f32 %v1648, %v1802
      %v1843 = vadd.f32 %v1649, %v1805
      %v1844 = vadd.f32 %v1650, %v1807
      %1845 = vst.msk [vmem:[#allocation2] sm:$0xff] %vm243, %v1809
      %1846 = vst.msk [vmem:[#allocation2 + $0x8] sm:$0xff] %vm243, %v1810
      %1847 = vst.msk [vmem:[#allocation2 + $0x10] sm:$0xff] %vm243, %v1811
      %1848 = vst.msk [vmem:[#allocation2 + $0x18] sm:$0xff] %vm243, %v1812
      %1849 = vst.msk [vmem:[#allocation2 + $0x20] sm:$0xff] %vm243, %v1813
      %1850 = vst.msk [vmem:[#allocation2 + $0x28] sm:$0xff] %vm243, %v1814
      %1851 = vst.msk [vmem:[#allocation2 + $0x30] sm:$0xff] %vm243, %v1815
      %1852 = vst.msk [vmem:[#allocation2 + $0x38] sm:$0xff] %vm243, %v1816
      %1853 = vst.msk [vmem:[#allocation2 + $0x40] sm:$0xff] %vm243, %v1817
      %1854 = vst.msk [vmem:[#allocation2 + $0x48] sm:$0xff] %vm243, %v1818
      %1855 = vst.msk [vmem:[#allocation2 + $0x50] sm:$0xff] %vm243, %v1819
      %1856 = vst.msk [vmem:[#allocation2 + $0x58] sm:$0xff] %vm243, %v1820
      %1857 = vst.msk [vmem:[#allocation2 + $0x60] sm:$0xff] %vm243, %v1821
      %1858 = vst.msk [vmem:[#allocation2 + $0x68] sm:$0xff] %vm243, %v1822
      %1859 = vst.msk [vmem:[#allocation2 + $0x70] sm:$0xff] %vm243, %v1823
      %1860 = vst.msk [vmem:[#allocation2 + $0x78] sm:$0xff] %vm243, %v1824
      %1861 = vst.msk [vmem:[#allocation2 + $0x80] sm:$0xff] %vm243, %v1825
      %1862 = vst.msk [vmem:[#allocation2 + $0x88] sm:$0xff] %vm243, %v1826
      %1863 = vst.msk [vmem:[#allocation2 + $0x90] sm:$0xff] %vm243, %v1827
      %1864 = vst.msk [vmem:[#allocation2 + $0x98] sm:$0xff] %vm243, %v1828
      %1865 = vst.msk [vmem:[#allocation2 + $0xa0] sm:$0xff] %vm243, %v1829
      %1866 = vst.msk [vmem:[#allocation2 + $0xa8] sm:$0xff] %vm243, %v1830
      %1867 = vst.msk [vmem:[#allocation2 + $0xb0] sm:$0xff] %vm243, %v1831
      %1868 = vst.msk [vmem:[#allocation2 + $0xb8] sm:$0xff] %vm243, %v1832
      %1869 = vst.msk [vmem:[#allocation2 + $0xc0] sm:$0xff] %vm243, %v1833
      %1870 = vst.msk [vmem:[#allocation2 + $0xc8] sm:$0xff] %vm243, %v1834
      %1871 = vst.msk [vmem:[#allocation2 + $0xd0] sm:$0xff] %vm243, %v1835
      %1872 = vst.msk [vmem:[#allocation2 + $0xd8] sm:$0xff] %vm243, %v1836
      %1873 = vst.msk [vmem:[#allocation2 + $0xe0] sm:$0xff] %vm243, %v1837
      %1874 = vst.msk [vmem:[#allocation2 + $0xe8] sm:$0xff] %vm243, %v1838
      %1875 = vst.msk [vmem:[#allocation2 + $0xf0] sm:$0xff] %vm243, %v1839
      %1876 = vst.msk [vmem:[#allocation2 + $0xf8] sm:$0xff] %vm243, %v1840
      %1877 = vst.msk [vmem:[#allocation2 + $0x100] sm:$0xff] %vm243, %v1841
      %1878 = vst.msk [vmem:[#allocation2 + $0x108] sm:$0xff] %vm243, %v1842
      %1879 = vst.msk [vmem:[#allocation2 + $0x110] sm:$0xff] %vm243, %v1843
      %1880 = vst.msk [vmem:[#allocation2 + $0x118] sm:$0xff] %vm243, %v1844
      %v1881 = vld [vmem:[%s230 + $0x14] sm:$0xff]
      %v1882 = vld [vmem:[%s230 + $0x1c] sm:$0xff]
      %v1883 = vld [vmem:[%s230 + $0x24] sm:$0xff]
      %v1884 = vld [vmem:[%s230 + $0x2c] sm:$0xff]
      %v1885 = vld [vmem:[%s230 + $0x34] sm:$0xff]
      %v1886 = vld [vmem:[%s230 + $0x3c] sm:$0xff]
      %v1887 = vld [vmem:[%s230 + $0x44] sm:$0xff]
      %v1888 = vld [vmem:[%s230 + $0x4c] sm:$0xff]
      %v1889 = vld [vmem:[%s230 + $0x54] sm:$0xff]
      %v1890 = vld [vmem:[%s230 + $0x5c] sm:$0xff]
      %v1891 = vld [vmem:[%s230 + $0x64] sm:$0xff]
      %v1892 = vld [vmem:[%s230 + $0x6c] sm:$0xff]
      %v1893 = vld [vmem:[%s230 + $0x74] sm:$0xff]
      %v1894 = vld [vmem:[%s230 + $0x7c] sm:$0xff]
      %v1895 = vld [vmem:[%s230 + $0x84] sm:$0xff]
      %v1896 = vld [vmem:[%s230 + $0x8c] sm:$0xff]
      %v1897 = vld [vmem:[%s230 + $0x94] sm:$0xff]
      %v1898 = vld [vmem:[%s230 + $0x9c] sm:$0xff]
      %v1899 = vld [vmem:[%s230 + $0xa4] sm:$0xff]
      %v1900 = vld [vmem:[%s230 + $0xac] sm:$0xff]
      %v1901 = vld [vmem:[%s230 + $0xb4] sm:$0xff]
      %v1902 = vld [vmem:[%s230 + $0xbc] sm:$0xff]
      %v1903 = vld [vmem:[%s230 + $0xc4] sm:$0xff]
      %v1904 = vld [vmem:[%s230 + $0xcc] sm:$0xff]
      %v1905 = vld [vmem:[%s230 + $0xd4] sm:$0xff]
      %v1906 = vld [vmem:[%s230 + $0xdc] sm:$0xff]
      %v1907 = vld [vmem:[%s230 + $0xe4] sm:$0xff]
      %v1908 = vld [vmem:[%s230 + $0xec] sm:$0xff]
      %v1909 = vld [vmem:[%s230 + $0xf4] sm:$0xff]
      %v1910 = vld [vmem:[%s230 + $0xfc] sm:$0xff]
      %v1911 = vld [vmem:[%s230 + $0x104] sm:$0xff]
      %v1912 = vld [vmem:[%s230 + $0x10c] sm:$0xff]
      %v1913 = vld [vmem:[%s230 + $0x114] sm:$0xff]
      %v1914 = vld [vmem:[%s230 + $0x11c] sm:$0xff]
      %v1915 = vld [vmem:[%s230 + $0x124] sm:$0xff]
      %v1916 = vld [vmem:[%s230 + $0x12c] sm:$0xff]
      %v1917 = vpack.c.bf16 %v1882, %v1881
      %v1918 = vpack.c.bf16 %v1884, %v1883
      %v1919 = vpack.c.bf16 %v1886, %v1885
      %v1920 = vpack.c.bf16 %v1888, %v1887
      %v1921 = vpack.c.bf16 %v1890, %v1889
      %v1922 = vpack.c.bf16 %v1892, %v1891
      %v1923 = vpack.c.bf16 %v1894, %v1893
      %v1924 = vpack.c.bf16 %v1896, %v1895
      %v1925 = vpack.c.bf16 %v1898, %v1897
      %v1926 = vpack.c.bf16 %v1900, %v1899
      %v1927 = vpack.c.bf16 %v1902, %v1901
      %v1928 = vpack.c.bf16 %v1904, %v1903
      %v1929 = vpack.c.bf16 %v1906, %v1905
      %v1930 = vpack.c.bf16 %v1908, %v1907
      %v1931 = vpack.c.bf16 %v1910, %v1909
      %v1932 = vpack.c.bf16 %v1912, %v1911
      %v1933 = vpack.c.bf16 %v1914, %v1913
      %v1934 = vpack.c.bf16 %v1916, %v1915
      %v1935 = vld [vmem:[#allocation2] sm:$0xff]
      %v1936 = vld [vmem:[#allocation2 + $0x8] sm:$0xff]
      %v1937 = vld [vmem:[#allocation2 + $0x10] sm:$0xff]
      %v1938 = vld [vmem:[#allocation2 + $0x18] sm:$0xff]
      %v1939 = vld [vmem:[#allocation2 + $0x20] sm:$0xff]
      %v1940 = vld [vmem:[#allocation2 + $0x28] sm:$0xff]
      %v1941 = vld [vmem:[#allocation2 + $0x30] sm:$0xff]
      %v1942 = vld [vmem:[#allocation2 + $0x38] sm:$0xff]
      %v1943 = vld [vmem:[#allocation2 + $0x40] sm:$0xff]
      %v1944 = vld [vmem:[#allocation2 + $0x48] sm:$0xff]
      %v1945 = vld [vmem:[#allocation2 + $0x50] sm:$0xff]
      %v1946 = vld [vmem:[#allocation2 + $0x58] sm:$0xff]
      %v1947 = vld [vmem:[#allocation2 + $0x60] sm:$0xff]
      %v1948 = vld [vmem:[#allocation2 + $0x68] sm:$0xff]
      %v1949 = vld [vmem:[#allocation2 + $0x70] sm:$0xff]
      %v1950 = vld [vmem:[#allocation2 + $0x78] sm:$0xff]
      %v1951 = vld [vmem:[#allocation2 + $0x80] sm:$0xff]
      %v1952 = vld [vmem:[#allocation2 + $0x88] sm:$0xff]
      %v1953 = vld [vmem:[#allocation2 + $0x90] sm:$0xff]
      %v1954 = vld [vmem:[#allocation2 + $0x98] sm:$0xff]
      %v1955 = vld [vmem:[#allocation2 + $0xa0] sm:$0xff]
      %v1956 = vld [vmem:[#allocation2 + $0xa8] sm:$0xff]
      %v1957 = vld [vmem:[#allocation2 + $0xb0] sm:$0xff]
      %v1958 = vld [vmem:[#allocation2 + $0xb8] sm:$0xff]
      %v1959 = vld [vmem:[#allocation2 + $0xc0] sm:$0xff]
      %v1960 = vld [vmem:[#allocation2 + $0xc8] sm:$0xff]
      %v1961 = vld [vmem:[#allocation2 + $0xd0] sm:$0xff]
      %v1962 = vld [vmem:[#allocation2 + $0xd8] sm:$0xff]
      %v1963 = vld [vmem:[#allocation2 + $0xe0] sm:$0xff]
      %v1964 = vld [vmem:[#allocation2 + $0xe8] sm:$0xff]
      %v1965 = vld [vmem:[#allocation2 + $0xf0] sm:$0xff]
      %v1966 = vld [vmem:[#allocation2 + $0xf8] sm:$0xff]
      %v1967 = vld [vmem:[#allocation2 + $0x100] sm:$0xff]
      %v1968 = vld [vmem:[#allocation2 + $0x108] sm:$0xff]
      %v1969 = vld [vmem:[#allocation2 + $0x110] sm:$0xff]
      %v1970 = vld [vmem:[#allocation2 + $0x118] sm:$0xff]
      %s1971 = scalar_lea.vmem %s1, 10
      %v1972 = vld [vmem:[%s1971] sm:$0x3]
      %v1974 = vsel %vm371, %v1917, 0
      %v1977 = vsel %vm371, %v1918, 0
      %v1980 = vsel %vm371, %v1919, 0
      %v1983 = vsel %vm371, %v1920, 0
      %v1986 = vsel %vm371, %v1921, 0
      %v1989 = vsel %vm371, %v1922, 0
      %v1992 = vsel %vm371, %v1923, 0
      %v1995 = vsel %vm371, %v1924, 0
      %v1998 = vsel %vm371, %v1925, 0
      %v2001 = vsel %vm371, %v1926, 0
      %v2004 = vsel %vm371, %v1927, 0
      %v2007 = vsel %vm371, %v1928, 0
      %v2010 = vsel %vm371, %v1929, 0
      %v2013 = vsel %vm371, %v1930, 0
      %v2016 = vsel %vm371, %v1931, 0
      %v2019 = vsel %vm371, %v1932, 0
      %v2022 = vsel %vm371, %v1933, 0
      %v2025 = vsel %vm371, %v1934, 0
      %v2028 = vsel %vm426, %v1972, 0
      %2030 = vmatpush.bf16.msra.mxu0 0
      %2031 = vmatpush.bf16.msra.mxu0 0
      %2032 = vmatpush.bf16.msra.mxu0 0
      %2033 = vmatpush.bf16.msra.mxu0 0
      %2034 = vmatpush.bf16.msra.mxu0 0
      %2035 = vmatpush.bf16.msra.mxu0 0
      %2036 = vmatpush.bf16.msra.mxu0 0
      %2037 = vmatpush.bf16.msra.mxu0 %v2028
      %2038 = vmatmul.bf16.gmra.mxu0 %v1974
      %v2039 = vpop.f32.mrf.mxu0
      %v2040 = vadd.f32 0.0, %v2039
      %v2041 = vpop.f32.mrf.mxu0
      %v2042 = vadd.f32 0.0, %v2041
      %2043 = vmatmul.bf16.gmra.mxu0 %v1977
      %v2044 = vpop.f32.mrf.mxu0
      %v2045 = vadd.f32 0.0, %v2044
      %v2046 = vpop.f32.mrf.mxu0
      %v2047 = vadd.f32 0.0, %v2046
      %2048 = vmatmul.bf16.gmra.mxu0 %v1980
      %v2049 = vpop.f32.mrf.mxu0
      %v2050 = vadd.f32 0.0, %v2049
      %v2051 = vpop.f32.mrf.mxu0
      %v2052 = vadd.f32 0.0, %v2051
      %2053 = vmatmul.bf16.gmra.mxu0 %v1983
      %v2054 = vpop.f32.mrf.mxu0
      %v2055 = vadd.f32 0.0, %v2054
      %v2056 = vpop.f32.mrf.mxu0
      %v2057 = vadd.f32 0.0, %v2056
      %2058 = vmatmul.bf16.gmra.mxu0 %v1986
      %v2059 = vpop.f32.mrf.mxu0
      %v2060 = vadd.f32 0.0, %v2059
      %v2061 = vpop.f32.mrf.mxu0
      %v2062 = vadd.f32 0.0, %v2061
      %2063 = vmatmul.bf16.gmra.mxu0 %v1989
      %v2064 = vpop.f32.mrf.mxu0
      %v2065 = vadd.f32 0.0, %v2064
      %v2066 = vpop.f32.mrf.mxu0
      %v2067 = vadd.f32 0.0, %v2066
      %2068 = vmatmul.bf16.gmra.mxu0 %v1992
      %v2069 = vpop.f32.mrf.mxu0
      %v2070 = vadd.f32 0.0, %v2069
      %v2071 = vpop.f32.mrf.mxu0
      %v2072 = vadd.f32 0.0, %v2071
      %2073 = vmatmul.bf16.gmra.mxu0 %v1995
      %v2074 = vpop.f32.mrf.mxu0
      %v2075 = vadd.f32 0.0, %v2074
      %v2076 = vpop.f32.mrf.mxu0
      %v2077 = vadd.f32 0.0, %v2076
      %2078 = vmatmul.bf16.gmra.mxu0 %v1998
      %v2079 = vpop.f32.mrf.mxu0
      %v2080 = vadd.f32 0.0, %v2079
      %v2081 = vpop.f32.mrf.mxu0
      %v2082 = vadd.f32 0.0, %v2081
      %2083 = vmatmul.bf16.gmra.mxu0 %v2001
      %v2084 = vpop.f32.mrf.mxu0
      %v2085 = vadd.f32 0.0, %v2084
      %v2086 = vpop.f32.mrf.mxu0
      %v2087 = vadd.f32 0.0, %v2086
      %2088 = vmatmul.bf16.gmra.mxu0 %v2004
      %v2089 = vpop.f32.mrf.mxu0
      %v2090 = vadd.f32 0.0, %v2089
      %v2091 = vpop.f32.mrf.mxu0
      %v2092 = vadd.f32 0.0, %v2091
      %2093 = vmatmul.bf16.gmra.mxu0 %v2007
      %v2094 = vpop.f32.mrf.mxu0
      %v2095 = vadd.f32 0.0, %v2094
      %v2096 = vpop.f32.mrf.mxu0
      %v2097 = vadd.f32 0.0, %v2096
      %2098 = vmatmul.bf16.gmra.mxu0 %v2010
      %v2099 = vpop.f32.mrf.mxu0
      %v2100 = vadd.f32 0.0, %v2099
      %v2101 = vpop.f32.mrf.mxu0
      %v2102 = vadd.f32 0.0, %v2101
      %2103 = vmatmul.bf16.gmra.mxu0 %v2013
      %v2104 = vpop.f32.mrf.mxu0
      %v2105 = vadd.f32 0.0, %v2104
      %v2106 = vpop.f32.mrf.mxu0
      %v2107 = vadd.f32 0.0, %v2106
      %2108 = vmatmul.bf16.gmra.mxu0 %v2016
      %v2109 = vpop.f32.mrf.mxu0
      %v2110 = vadd.f32 0.0, %v2109
      %v2111 = vpop.f32.mrf.mxu0
      %v2112 = vadd.f32 0.0, %v2111
      %2113 = vmatmul.bf16.gmra.mxu0 %v2019
      %v2114 = vpop.f32.mrf.mxu0
      %v2115 = vadd.f32 0.0, %v2114
      %v2116 = vpop.f32.mrf.mxu0
      %v2117 = vadd.f32 0.0, %v2116
      %2118 = vmatmul.bf16.gmra.mxu0 %v2022
      %v2119 = vpop.f32.mrf.mxu0
      %v2120 = vadd.f32 0.0, %v2119
      %v2121 = vpop.f32.mrf.mxu0
      %v2122 = vadd.f32 0.0, %v2121
      %2123 = vmatmul.bf16.gmra.mxu0 %v2025
      %v2124 = vpop.f32.mrf.mxu0
      %v2125 = vadd.f32 0.0, %v2124
      %v2126 = vpop.f32.mrf.mxu0
      %v2127 = vadd.f32 0.0, %v2126
      %2128 = vdwg.mxu0
      %v2129 = vadd.f32 %v1935, %v2040
      %v2130 = vadd.f32 %v1936, %v2042
      %v2131 = vadd.f32 %v1937, %v2045
      %v2132 = vadd.f32 %v1938, %v2047
      %v2133 = vadd.f32 %v1939, %v2050
      %v2134 = vadd.f32 %v1940, %v2052
      %v2135 = vadd.f32 %v1941, %v2055
      %v2136 = vadd.f32 %v1942, %v2057
      %v2137 = vadd.f32 %v1943, %v2060
      %v2138 = vadd.f32 %v1944, %v2062
      %v2139 = vadd.f32 %v1945, %v2065
      %v2140 = vadd.f32 %v1946, %v2067
      %v2141 = vadd.f32 %v1947, %v2070
      %v2142 = vadd.f32 %v1948, %v2072
      %v2143 = vadd.f32 %v1949, %v2075
      %v2144 = vadd.f32 %v1950, %v2077
      %v2145 = vadd.f32 %v1951, %v2080
      %v2146 = vadd.f32 %v1952, %v2082
      %v2147 = vadd.f32 %v1953, %v2085
      %v2148 = vadd.f32 %v1954, %v2087
      %v2149 = vadd.f32 %v1955, %v2090
      %v2150 = vadd.f32 %v1956, %v2092
      %v2151 = vadd.f32 %v1957, %v2095
      %v2152 = vadd.f32 %v1958, %v2097
      %v2153 = vadd.f32 %v1959, %v2100
      %v2154 = vadd.f32 %v1960, %v2102
      %v2155 = vadd.f32 %v1961, %v2105
      %v2156 = vadd.f32 %v1962, %v2107
      %v2157 = vadd.f32 %v1963, %v2110
      %v2158 = vadd.f32 %v1964, %v2112
      %v2159 = vadd.f32 %v1965, %v2115
      %v2160 = vadd.f32 %v1966, %v2117
      %v2161 = vadd.f32 %v1967, %v2120
      %v2162 = vadd.f32 %v1968, %v2122
      %v2163 = vadd.f32 %v1969, %v2125
      %v2164 = vadd.f32 %v1970, %v2127
      %2165 = vst.msk [vmem:[#allocation2] sm:$0xff] %vm243, %v2129
      %2166 = vst.msk [vmem:[#allocation2 + $0x8] sm:$0xff] %vm243, %v2130
      %2167 = vst.msk [vmem:[#allocation2 + $0x10] sm:$0xff] %vm243, %v2131
      %2168 = vst.msk [vmem:[#allocation2 + $0x18] sm:$0xff] %vm243, %v2132
      %2169 = vst.msk [vmem:[#allocation2 + $0x20] sm:$0xff] %vm243, %v2133
      %2170 = vst.msk [vmem:[#allocation2 + $0x28] sm:$0xff] %vm243, %v2134
      %2171 = vst.msk [vmem:[#allocation2 + $0x30] sm:$0xff] %vm243, %v2135
      %2172 = vst.msk [vmem:[#allocation2 + $0x38] sm:$0xff] %vm243, %v2136
      %2173 = vst.msk [vmem:[#allocation2 + $0x40] sm:$0xff] %vm243, %v2137
      %2174 = vst.msk [vmem:[#allocation2 + $0x48] sm:$0xff] %vm243, %v2138
      %2175 = vst.msk [vmem:[#allocation2 + $0x50] sm:$0xff] %vm243, %v2139
      %2176 = vst.msk [vmem:[#allocation2 + $0x58] sm:$0xff] %vm243, %v2140
      %2177 = vst.msk [vmem:[#allocation2 + $0x60] sm:$0xff] %vm243, %v2141
      %2178 = vst.msk [vmem:[#allocation2 + $0x68] sm:$0xff] %vm243, %v2142
      %2179 = vst.msk [vmem:[#allocation2 + $0x70] sm:$0xff] %vm243, %v2143
      %2180 = vst.msk [vmem:[#allocation2 + $0x78] sm:$0xff] %vm243, %v2144
      %2181 = vst.msk [vmem:[#allocation2 + $0x80] sm:$0xff] %vm243, %v2145
      %2182 = vst.msk [vmem:[#allocation2 + $0x88] sm:$0xff] %vm243, %v2146
      %2183 = vst.msk [vmem:[#allocation2 + $0x90] sm:$0xff] %vm243, %v2147
      %2184 = vst.msk [vmem:[#allocation2 + $0x98] sm:$0xff] %vm243, %v2148
      %2185 = vst.msk [vmem:[#allocation2 + $0xa0] sm:$0xff] %vm243, %v2149
      %2186 = vst.msk [vmem:[#allocation2 + $0xa8] sm:$0xff] %vm243, %v2150
      %2187 = vst.msk [vmem:[#allocation2 + $0xb0] sm:$0xff] %vm243, %v2151
      %2188 = vst.msk [vmem:[#allocation2 + $0xb8] sm:$0xff] %vm243, %v2152
      %2189 = vst.msk [vmem:[#allocation2 + $0xc0] sm:$0xff] %vm243, %v2153
      %2190 = vst.msk [vmem:[#allocation2 + $0xc8] sm:$0xff] %vm243, %v2154
      %2191 = vst.msk [vmem:[#allocation2 + $0xd0] sm:$0xff] %vm243, %v2155
      %2192 = vst.msk [vmem:[#allocation2 + $0xd8] sm:$0xff] %vm243, %v2156
      %2193 = vst.msk [vmem:[#allocation2 + $0xe0] sm:$0xff] %vm243, %v2157
      %2194 = vst.msk [vmem:[#allocation2 + $0xe8] sm:$0xff] %vm243, %v2158
      %2195 = vst.msk [vmem:[#allocation2 + $0xf0] sm:$0xff] %vm243, %v2159
      %2196 = vst.msk [vmem:[#allocation2 + $0xf8] sm:$0xff] %vm243, %v2160
      %2197 = vst.msk [vmem:[#allocation2 + $0x100] sm:$0xff] %vm243, %v2161
      %2198 = vst.msk [vmem:[#allocation2 + $0x108] sm:$0xff] %vm243, %v2162
      %2199 = vst.msk [vmem:[#allocation2 + $0x110] sm:$0xff] %vm243, %v2163
      %2200 = vst.msk [vmem:[#allocation2 + $0x118] sm:$0xff] %vm243, %v2164
      %v2201 = vld [vmem:[%s230 + $0x24] sm:$0xff]
      %v2202 = vld [vmem:[%s230 + $0x2c] sm:$0xff]
      %v2203 = vld [vmem:[%s230 + $0x34] sm:$0xff]
      %v2204 = vld [vmem:[%s230 + $0x3c] sm:$0xff]
      %v2205 = vld [vmem:[%s230 + $0x44] sm:$0xff]
      %v2206 = vld [vmem:[%s230 + $0x4c] sm:$0xff]
      %v2207 = vld [vmem:[%s230 + $0x54] sm:$0xff]
      %v2208 = vld [vmem:[%s230 + $0x5c] sm:$0xff]
      %v2209 = vld [vmem:[%s230 + $0x64] sm:$0xff]
      %v2210 = vld [vmem:[%s230 + $0x6c] sm:$0xff]
      %v2211 = vld [vmem:[%s230 + $0x74] sm:$0xff]
      %v2212 = vld [vmem:[%s230 + $0x7c] sm:$0xff]
      %v2213 = vld [vmem:[%s230 + $0x84] sm:$0xff]
      %v2214 = vld [vmem:[%s230 + $0x8c] sm:$0xff]
      %v2215 = vld [vmem:[%s230 + $0x94] sm:$0xff]
      %v2216 = vld [vmem:[%s230 + $0x9c] sm:$0xff]
      %v2217 = vld [vmem:[%s230 + $0xa4] sm:$0xff]
      %v2218 = vld [vmem:[%s230 + $0xac] sm:$0xff]
      %v2219 = vld [vmem:[%s230 + $0xb4] sm:$0xff]
      %v2220 = vld [vmem:[%s230 + $0xbc] sm:$0xff]
      %v2221 = vld [vmem:[%s230 + $0xc4] sm:$0xff]
      %v2222 = vld [vmem:[%s230 + $0xcc] sm:$0xff]
      %v2223 = vld [vmem:[%s230 + $0xd4] sm:$0xff]
      %v2224 = vld [vmem:[%s230 + $0xdc] sm:$0xff]
      %v2225 = vld [vmem:[%s230 + $0xe4] sm:$0xff]
      %v2226 = vld [vmem:[%s230 + $0xec] sm:$0xff]
      %v2227 = vld [vmem:[%s230 + $0xf4] sm:$0xff]
      %v2228 = vld [vmem:[%s230 + $0xfc] sm:$0xff]
      %v2229 = vld [vmem:[%s230 + $0x104] sm:$0xff]
      %v2230 = vld [vmem:[%s230 + $0x10c] sm:$0xff]
      %v2231 = vld [vmem:[%s230 + $0x114] sm:$0xff]
      %v2232 = vld [vmem:[%s230 + $0x11c] sm:$0xff]
      %v2233 = vld [vmem:[%s230 + $0x124] sm:$0xff]
      %v2234 = vld [vmem:[%s230 + $0x12c] sm:$0xff]
      %v2235 = vld [vmem:[%s230 + $0x134] sm:$0xff]
      %v2236 = vld [vmem:[%s230 + $0x13c] sm:$0xff]
      %v2237 = vpack.c.bf16 %v2202, %v2201
      %v2238 = vpack.c.bf16 %v2204, %v2203
      %v2239 = vpack.c.bf16 %v2206, %v2205
      %v2240 = vpack.c.bf16 %v2208, %v2207
      %v2241 = vpack.c.bf16 %v2210, %v2209
      %v2242 = vpack.c.bf16 %v2212, %v2211
      %v2243 = vpack.c.bf16 %v2214, %v2213
      %v2244 = vpack.c.bf16 %v2216, %v2215
      %v2245 = vpack.c.bf16 %v2218, %v2217
      %v2246 = vpack.c.bf16 %v2220, %v2219
      %v2247 = vpack.c.bf16 %v2222, %v2221
      %v2248 = vpack.c.bf16 %v2224, %v2223
      %v2249 = vpack.c.bf16 %v2226, %v2225
      %v2250 = vpack.c.bf16 %v2228, %v2227
      %v2251 = vpack.c.bf16 %v2230, %v2229
      %v2252 = vpack.c.bf16 %v2232, %v2231
      %v2253 = vpack.c.bf16 %v2234, %v2233
      %v2254 = vpack.c.bf16 %v2236, %v2235
      %v2255 = vld [vmem:[#allocation2] sm:$0xff]
      %v2256 = vld [vmem:[#allocation2 + $0x8] sm:$0xff]
      %v2257 = vld [vmem:[#allocation2 + $0x10] sm:$0xff]
      %v2258 = vld [vmem:[#allocation2 + $0x18] sm:$0xff]
      %v2259 = vld [vmem:[#allocation2 + $0x20] sm:$0xff]
      %v2260 = vld [vmem:[#allocation2 + $0x28] sm:$0xff]
      %v2261 = vld [vmem:[#allocation2 + $0x30] sm:$0xff]
      %v2262 = vld [vmem:[#allocation2 + $0x38] sm:$0xff]
      %v2263 = vld [vmem:[#allocation2 + $0x40] sm:$0xff]
      %v2264 = vld [vmem:[#allocation2 + $0x48] sm:$0xff]
      %v2265 = vld [vmem:[#allocation2 + $0x50] sm:$0xff]
      %v2266 = vld [vmem:[#allocation2 + $0x58] sm:$0xff]
      %v2267 = vld [vmem:[#allocation2 + $0x60] sm:$0xff]
      %v2268 = vld [vmem:[#allocation2 + $0x68] sm:$0xff]
      %v2269 = vld [vmem:[#allocation2 + $0x70] sm:$0xff]
      %v2270 = vld [vmem:[#allocation2 + $0x78] sm:$0xff]
      %v2271 = vld [vmem:[#allocation2 + $0x80] sm:$0xff]
      %v2272 = vld [vmem:[#allocation2 + $0x88] sm:$0xff]
      %v2273 = vld [vmem:[#allocation2 + $0x90] sm:$0xff]
      %v2274 = vld [vmem:[#allocation2 + $0x98] sm:$0xff]
      %v2275 = vld [vmem:[#allocation2 + $0xa0] sm:$0xff]
      %v2276 = vld [vmem:[#allocation2 + $0xa8] sm:$0xff]
      %v2277 = vld [vmem:[#allocation2 + $0xb0] sm:$0xff]
      %v2278 = vld [vmem:[#allocation2 + $0xb8] sm:$0xff]
      %v2279 = vld [vmem:[#allocation2 + $0xc0] sm:$0xff]
      %v2280 = vld [vmem:[#allocation2 + $0xc8] sm:$0xff]
      %v2281 = vld [vmem:[#allocation2 + $0xd0] sm:$0xff]
      %v2282 = vld [vmem:[#allocation2 + $0xd8] sm:$0xff]
      %v2283 = vld [vmem:[#allocation2 + $0xe0] sm:$0xff]
      %v2284 = vld [vmem:[#allocation2 + $0xe8] sm:$0xff]
      %v2285 = vld [vmem:[#allocation2 + $0xf0] sm:$0xff]
      %v2286 = vld [vmem:[#allocation2 + $0xf8] sm:$0xff]
      %v2287 = vld [vmem:[#allocation2 + $0x100] sm:$0xff]
      %v2288 = vld [vmem:[#allocation2 + $0x108] sm:$0xff]
      %v2289 = vld [vmem:[#allocation2 + $0x110] sm:$0xff]
      %v2290 = vld [vmem:[#allocation2 + $0x118] sm:$0xff]
      %s2291 = scalar_lea.vmem %s1, 12
      %v2292 = vld [vmem:[%s2291] sm:$0x3]
      %v2294 = vsel %vm371, %v2237, 0
      %v2297 = vsel %vm371, %v2238, 0
      %v2300 = vsel %vm371, %v2239, 0
      %v2303 = vsel %vm371, %v2240, 0
      %v2306 = vsel %vm371, %v2241, 0
      %v2309 = vsel %vm371, %v2242, 0
      %v2312 = vsel %vm371, %v2243, 0
      %v2315 = vsel %vm371, %v2244, 0
      %v2318 = vsel %vm371, %v2245, 0
      %v2321 = vsel %vm371, %v2246, 0
      %v2324 = vsel %vm371, %v2247, 0
      %v2327 = vsel %vm371, %v2248, 0
      %v2330 = vsel %vm371, %v2249, 0
      %v2333 = vsel %vm371, %v2250, 0
      %v2336 = vsel %vm371, %v2251, 0
      %v2339 = vsel %vm371, %v2252, 0
      %v2342 = vsel %vm371, %v2253, 0
      %v2345 = vsel %vm371, %v2254, 0
      %v2348 = vsel %vm426, %v2292, 0
      %2350 = vmatpush.bf16.msra.mxu0 0
      %2351 = vmatpush.bf16.msra.mxu0 0
      %2352 = vmatpush.bf16.msra.mxu0 0
      %2353 = vmatpush.bf16.msra.mxu0 0
      %2354 = vmatpush.bf16.msra.mxu0 0
      %2355 = vmatpush.bf16.msra.mxu0 0
      %2356 = vmatpush.bf16.msra.mxu0 0
      %2357 = vmatpush.bf16.msra.mxu0 %v2348
      %2358 = vmatmul.bf16.gmra.mxu0 %v2294
      %v2359 = vpop.f32.mrf.mxu0
      %v2360 = vadd.f32 0.0, %v2359
      %v2361 = vpop.f32.mrf.mxu0
      %v2362 = vadd.f32 0.0, %v2361
      %2363 = vmatmul.bf16.gmra.mxu0 %v2297
      %v2364 = vpop.f32.mrf.mxu0
      %v2365 = vadd.f32 0.0, %v2364
      %v2366 = vpop.f32.mrf.mxu0
      %v2367 = vadd.f32 0.0, %v2366
      %2368 = vmatmul.bf16.gmra.mxu0 %v2300
      %v2369 = vpop.f32.mrf.mxu0
      %v2370 = vadd.f32 0.0, %v2369
      %v2371 = vpop.f32.mrf.mxu0
      %v2372 = vadd.f32 0.0, %v2371
      %2373 = vmatmul.bf16.gmra.mxu0 %v2303
      %v2374 = vpop.f32.mrf.mxu0
      %v2375 = vadd.f32 0.0, %v2374
      %v2376 = vpop.f32.mrf.mxu0
      %v2377 = vadd.f32 0.0, %v2376
      %2378 = vmatmul.bf16.gmra.mxu0 %v2306
      %v2379 = vpop.f32.mrf.mxu0
      %v2380 = vadd.f32 0.0, %v2379
      %v2381 = vpop.f32.mrf.mxu0
      %v2382 = vadd.f32 0.0, %v2381
      %2383 = vmatmul.bf16.gmra.mxu0 %v2309
      %v2384 = vpop.f32.mrf.mxu0
      %v2385 = vadd.f32 0.0, %v2384
      %v2386 = vpop.f32.mrf.mxu0
      %v2387 = vadd.f32 0.0, %v2386
      %2388 = vmatmul.bf16.gmra.mxu0 %v2312
      %v2389 = vpop.f32.mrf.mxu0
      %v2390 = vadd.f32 0.0, %v2389
      %v2391 = vpop.f32.mrf.mxu0
      %v2392 = vadd.f32 0.0, %v2391
      %2393 = vmatmul.bf16.gmra.mxu0 %v2315
      %v2394 = vpop.f32.mrf.mxu0
      %v2395 = vadd.f32 0.0, %v2394
      %v2396 = vpop.f32.mrf.mxu0
      %v2397 = vadd.f32 0.0, %v2396
      %2398 = vmatmul.bf16.gmra.mxu0 %v2318
      %v2399 = vpop.f32.mrf.mxu0
      %v2400 = vadd.f32 0.0, %v2399
      %v2401 = vpop.f32.mrf.mxu0
      %v2402 = vadd.f32 0.0, %v2401
      %2403 = vmatmul.bf16.gmra.mxu0 %v2321
      %v2404 = vpop.f32.mrf.mxu0
      %v2405 = vadd.f32 0.0, %v2404
      %v2406 = vpop.f32.mrf.mxu0
      %v2407 = vadd.f32 0.0, %v2406
      %2408 = vmatmul.bf16.gmra.mxu0 %v2324
      %v2409 = vpop.f32.mrf.mxu0
      %v2410 = vadd.f32 0.0, %v2409
      %v2411 = vpop.f32.mrf.mxu0
      %v2412 = vadd.f32 0.0, %v2411
      %2413 = vmatmul.bf16.gmra.mxu0 %v2327
      %v2414 = vpop.f32.mrf.mxu0
      %v2415 = vadd.f32 0.0, %v2414
      %v2416 = vpop.f32.mrf.mxu0
      %v2417 = vadd.f32 0.0, %v2416
      %2418 = vmatmul.bf16.gmra.mxu0 %v2330
      %v2419 = vpop.f32.mrf.mxu0
      %v2420 = vadd.f32 0.0, %v2419
      %v2421 = vpop.f32.mrf.mxu0
      %v2422 = vadd.f32 0.0, %v2421
      %2423 = vmatmul.bf16.gmra.mxu0 %v2333
      %v2424 = vpop.f32.mrf.mxu0
      %v2425 = vadd.f32 0.0, %v2424
      %v2426 = vpop.f32.mrf.mxu0
      %v2427 = vadd.f32 0.0, %v2426
      %2428 = vmatmul.bf16.gmra.mxu0 %v2336
      %v2429 = vpop.f32.mrf.mxu0
      %v2430 = vadd.f32 0.0, %v2429
      %v2431 = vpop.f32.mrf.mxu0
      %v2432 = vadd.f32 0.0, %v2431
      %2433 = vmatmul.bf16.gmra.mxu0 %v2339
      %v2434 = vpop.f32.mrf.mxu0
      %v2435 = vadd.f32 0.0, %v2434
      %v2436 = vpop.f32.mrf.mxu0
      %v2437 = vadd.f32 0.0, %v2436
      %2438 = vmatmul.bf16.gmra.mxu0 %v2342
      %v2439 = vpop.f32.mrf.mxu0
      %v2440 = vadd.f32 0.0, %v2439
      %v2441 = vpop.f32.mrf.mxu0
      %v2442 = vadd.f32 0.0, %v2441
      %2443 = vmatmul.bf16.gmra.mxu0 %v2345
      %v2444 = vpop.f32.mrf.mxu0
      %v2445 = vadd.f32 0.0, %v2444
      %v2446 = vpop.f32.mrf.mxu0
      %v2447 = vadd.f32 0.0, %v2446
      %2448 = vdwg.mxu0
      %v2449 = vadd.f32 %v2255, %v2360
      %v2450 = vadd.f32 %v2256, %v2362
      %v2451 = vadd.f32 %v2257, %v2365
      %v2452 = vadd.f32 %v2258, %v2367
      %v2453 = vadd.f32 %v2259, %v2370
      %v2454 = vadd.f32 %v2260, %v2372
      %v2455 = vadd.f32 %v2261, %v2375
      %v2456 = vadd.f32 %v2262, %v2377
      %v2457 = vadd.f32 %v2263, %v2380
      %v2458 = vadd.f32 %v2264, %v2382
      %v2459 = vadd.f32 %v2265, %v2385
      %v2460 = vadd.f32 %v2266, %v2387
      %v2461 = vadd.f32 %v2267, %v2390
      %v2462 = vadd.f32 %v2268, %v2392
      %v2463 = vadd.f32 %v2269, %v2395
      %v2464 = vadd.f32 %v2270, %v2397
      %v2465 = vadd.f32 %v2271, %v2400
      %v2466 = vadd.f32 %v2272, %v2402
      %v2467 = vadd.f32 %v2273, %v2405
      %v2468 = vadd.f32 %v2274, %v2407
      %v2469 = vadd.f32 %v2275, %v2410
      %v2470 = vadd.f32 %v2276, %v2412
      %v2471 = vadd.f32 %v2277, %v2415
      %v2472 = vadd.f32 %v2278, %v2417
      %v2473 = vadd.f32 %v2279, %v2420
      %v2474 = vadd.f32 %v2280, %v2422
      %v2475 = vadd.f32 %v2281, %v2425
      %v2476 = vadd.f32 %v2282, %v2427
      %v2477 = vadd.f32 %v2283, %v2430
      %v2478 = vadd.f32 %v2284, %v2432
      %v2479 = vadd.f32 %v2285, %v2435
      %v2480 = vadd.f32 %v2286, %v2437
      %v2481 = vadd.f32 %v2287, %v2440
      %v2482 = vadd.f32 %v2288, %v2442
      %v2483 = vadd.f32 %v2289, %v2445
      %v2484 = vadd.f32 %v2290, %v2447
      %2485 = vst.msk [vmem:[#allocation2] sm:$0xff] %vm243, %v2449
      %2486 = vst.msk [vmem:[#allocation2 + $0x8] sm:$0xff] %vm243, %v2450
      %2487 = vst.msk [vmem:[#allocation2 + $0x10] sm:$0xff] %vm243, %v2451
      %2488 = vst.msk [vmem:[#allocation2 + $0x18] sm:$0xff] %vm243, %v2452
      %2489 = vst.msk [vmem:[#allocation2 + $0x20] sm:$0xff] %vm243, %v2453
      %2490 = vst.msk [vmem:[#allocation2 + $0x28] sm:$0xff] %vm243, %v2454
      %2491 = vst.msk [vmem:[#allocation2 + $0x30] sm:$0xff] %vm243, %v2455
      %2492 = vst.msk [vmem:[#allocation2 + $0x38] sm:$0xff] %vm243, %v2456
      %2493 = vst.msk [vmem:[#allocation2 + $0x40] sm:$0xff] %vm243, %v2457
      %2494 = vst.msk [vmem:[#allocation2 + $0x48] sm:$0xff] %vm243, %v2458
      %2495 = vst.msk [vmem:[#allocation2 + $0x50] sm:$0xff] %vm243, %v2459
      %2496 = vst.msk [vmem:[#allocation2 + $0x58] sm:$0xff] %vm243, %v2460
      %2497 = vst.msk [vmem:[#allocation2 + $0x60] sm:$0xff] %vm243, %v2461
      %2498 = vst.msk [vmem:[#allocation2 + $0x68] sm:$0xff] %vm243, %v2462
      %2499 = vst.msk [vmem:[#allocation2 + $0x70] sm:$0xff] %vm243, %v2463
      %2500 = vst.msk [vmem:[#allocation2 + $0x78] sm:$0xff] %vm243, %v2464
      %2501 = vst.msk [vmem:[#allocation2 + $0x80] sm:$0xff] %vm243, %v2465
      %2502 = vst.msk [vmem:[#allocation2 + $0x88] sm:$0xff] %vm243, %v2466
      %2503 = vst.msk [vmem:[#allocation2 + $0x90] sm:$0xff] %vm243, %v2467
      %2504 = vst.msk [vmem:[#allocation2 + $0x98] sm:$0xff] %vm243, %v2468
      %2505 = vst.msk [vmem:[#allocation2 + $0xa0] sm:$0xff] %vm243, %v2469
      %2506 = vst.msk [vmem:[#allocation2 + $0xa8] sm:$0xff] %vm243, %v2470
      %2507 = vst.msk [vmem:[#allocation2 + $0xb0] sm:$0xff] %vm243, %v2471
      %2508 = vst.msk [vmem:[#allocation2 + $0xb8] sm:$0xff] %vm243, %v2472
      %2509 = vst.msk [vmem:[#allocation2 + $0xc0] sm:$0xff] %vm243, %v2473
      %2510 = vst.msk [vmem:[#allocation2 + $0xc8] sm:$0xff] %vm243, %v2474
      %2511 = vst.msk [vmem:[#allocation2 + $0xd0] sm:$0xff] %vm243, %v2475
      %2512 = vst.msk [vmem:[#allocation2 + $0xd8] sm:$0xff] %vm243, %v2476
      %2513 = vst.msk [vmem:[#allocation2 + $0xe0] sm:$0xff] %vm243, %v2477
      %2514 = vst.msk [vmem:[#allocation2 + $0xe8] sm:$0xff] %vm243, %v2478
      %2515 = vst.msk [vmem:[#allocation2 + $0xf0] sm:$0xff] %vm243, %v2479
      %2516 = vst.msk [vmem:[#allocation2 + $0xf8] sm:$0xff] %vm243, %v2480
      %2517 = vst.msk [vmem:[#allocation2 + $0x100] sm:$0xff] %vm243, %v2481
      %2518 = vst.msk [vmem:[#allocation2 + $0x108] sm:$0xff] %vm243, %v2482
      %2519 = vst.msk [vmem:[#allocation2 + $0x110] sm:$0xff] %vm243, %v2483
      %2520 = vst.msk [vmem:[#allocation2 + $0x118] sm:$0xff] %vm243, %v2484
      %v2521 = vld [vmem:[%s230 + $0x25] sm:$0xff]
      %v2522 = vld [vmem:[%s230 + $0x2d] sm:$0xff]
      %v2523 = vld [vmem:[%s230 + $0x35] sm:$0xff]
      %v2524 = vld [vmem:[%s230 + $0x3d] sm:$0xff]
      %v2525 = vld [vmem:[%s230 + $0x45] sm:$0xff]
      %v2526 = vld [vmem:[%s230 + $0x4d] sm:$0xff]
      %v2527 = vld [vmem:[%s230 + $0x55] sm:$0xff]
      %v2528 = vld [vmem:[%s230 + $0x5d] sm:$0xff]
      %v2529 = vld [vmem:[%s230 + $0x65] sm:$0xff]
      %v2530 = vld [vmem:[%s230 + $0x6d] sm:$0xff]
      %v2531 = vld [vmem:[%s230 + $0x75] sm:$0xff]
      %v2532 = vld [vmem:[%s230 + $0x7d] sm:$0xff]
      %v2533 = vld [vmem:[%s230 + $0x85] sm:$0xff]
      %v2534 = vld [vmem:[%s230 + $0x8d] sm:$0xff]
      %v2535 = vld [vmem:[%s230 + $0x95] sm:$0xff]
      %v2536 = vld [vmem:[%s230 + $0x9d] sm:$0xff]
      %v2537 = vld [vmem:[%s230 + $0xa5] sm:$0xff]
      %v2538 = vld [vmem:[%s230 + $0xad] sm:$0xff]
      %v2539 = vld [vmem:[%s230 + $0xb5] sm:$0xff]
      %v2540 = vld [vmem:[%s230 + $0xbd] sm:$0xff]
      %v2541 = vld [vmem:[%s230 + $0xc5] sm:$0xff]
      %v2542 = vld [vmem:[%s230 + $0xcd] sm:$0xff]
      %v2543 = vld [vmem:[%s230 + $0xd5] sm:$0xff]
      %v2544 = vld [vmem:[%s230 + $0xdd] sm:$0xff]
      %v2545 = vld [vmem:[%s230 + $0xe5] sm:$0xff]
      %v2546 = vld [vmem:[%s230 + $0xed] sm:$0xff]
      %v2547 = vld [vmem:[%s230 + $0xf5] sm:$0xff]
      %v2548 = vld [vmem:[%s230 + $0xfd] sm:$0xff]
      %v2549 = vld [vmem:[%s230 + $0x105] sm:$0xff]
      %v2550 = vld [vmem:[%s230 + $0x10d] sm:$0xff]
      %v2551 = vld [vmem:[%s230 + $0x115] sm:$0xff]
      %v2552 = vld [vmem:[%s230 + $0x11d] sm:$0xff]
      %v2553 = vld [vmem:[%s230 + $0x125] sm:$0xff]
      %v2554 = vld [vmem:[%s230 + $0x12d] sm:$0xff]
      %v2555 = vld [vmem:[%s230 + $0x135] sm:$0xff]
      %v2556 = vld [vmem:[%s230 + $0x13d] sm:$0xff]
      %v2557 = vpack.c.bf16 %v2522, %v2521
      %v2558 = vpack.c.bf16 %v2524, %v2523
      %v2559 = vpack.c.bf16 %v2526, %v2525
      %v2560 = vpack.c.bf16 %v2528, %v2527
      %v2561 = vpack.c.bf16 %v2530, %v2529
      %v2562 = vpack.c.bf16 %v2532, %v2531
      %v2563 = vpack.c.bf16 %v2534, %v2533
      %v2564 = vpack.c.bf16 %v2536, %v2535
      %v2565 = vpack.c.bf16 %v2538, %v2537
      %v2566 = vpack.c.bf16 %v2540, %v2539
      %v2567 = vpack.c.bf16 %v2542, %v2541
      %v2568 = vpack.c.bf16 %v2544, %v2543
      %v2569 = vpack.c.bf16 %v2546, %v2545
      %v2570 = vpack.c.bf16 %v2548, %v2547
      %v2571 = vpack.c.bf16 %v2550, %v2549
      %v2572 = vpack.c.bf16 %v2552, %v2551
      %v2573 = vpack.c.bf16 %v2554, %v2553
      %v2574 = vpack.c.bf16 %v2556, %v2555
      %v2575 = vld [vmem:[#allocation2] sm:$0xff]
      %v2576 = vld [vmem:[#allocation2 + $0x8] sm:$0xff]
      %v2577 = vld [vmem:[#allocation2 + $0x10] sm:$0xff]
      %v2578 = vld [vmem:[#allocation2 + $0x18] sm:$0xff]
      %v2579 = vld [vmem:[#allocation2 + $0x20] sm:$0xff]
      %v2580 = vld [vmem:[#allocation2 + $0x28] sm:$0xff]
      %v2581 = vld [vmem:[#allocation2 + $0x30] sm:$0xff]
      %v2582 = vld [vmem:[#allocation2 + $0x38] sm:$0xff]
      %v2583 = vld [vmem:[#allocation2 + $0x40] sm:$0xff]
      %v2584 = vld [vmem:[#allocation2 + $0x48] sm:$0xff]
      %v2585 = vld [vmem:[#allocation2 + $0x50] sm:$0xff]
      %v2586 = vld [vmem:[#allocation2 + $0x58] sm:$0xff]
      %v2587 = vld [vmem:[#allocation2 + $0x60] sm:$0xff]
      %v2588 = vld [vmem:[#allocation2 + $0x68] sm:$0xff]
      %v2589 = vld [vmem:[#allocation2 + $0x70] sm:$0xff]
      %v2590 = vld [vmem:[#allocation2 + $0x78] sm:$0xff]
      %v2591 = vld [vmem:[#allocation2 + $0x80] sm:$0xff]
      %v2592 = vld [vmem:[#allocation2 + $0x88] sm:$0xff]
      %v2593 = vld [vmem:[#allocation2 + $0x90] sm:$0xff]
      %v2594 = vld [vmem:[#allocation2 + $0x98] sm:$0xff]
      %v2595 = vld [vmem:[#allocation2 + $0xa0] sm:$0xff]
      %v2596 = vld [vmem:[#allocation2 + $0xa8] sm:$0xff]
      %v2597 = vld [vmem:[#allocation2 + $0xb0] sm:$0xff]
      %v2598 = vld [vmem:[#allocation2 + $0xb8] sm:$0xff]
      %v2599 = vld [vmem:[#allocation2 + $0xc0] sm:$0xff]
      %v2600 = vld [vmem:[#allocation2 + $0xc8] sm:$0xff]
      %v2601 = vld [vmem:[#allocation2 + $0xd0] sm:$0xff]
      %v2602 = vld [vmem:[#allocation2 + $0xd8] sm:$0xff]
      %v2603 = vld [vmem:[#allocation2 + $0xe0] sm:$0xff]
      %v2604 = vld [vmem:[#allocation2 + $0xe8] sm:$0xff]
      %v2605 = vld [vmem:[#allocation2 + $0xf0] sm:$0xff]
      %v2606 = vld [vmem:[#allocation2 + $0xf8] sm:$0xff]
      %v2607 = vld [vmem:[#allocation2 + $0x100] sm:$0xff]
      %v2608 = vld [vmem:[#allocation2 + $0x108] sm:$0xff]
      %v2609 = vld [vmem:[#allocation2 + $0x110] sm:$0xff]
      %v2610 = vld [vmem:[#allocation2 + $0x118] sm:$0xff]
      %s2611 = scalar_lea.vmem %s1, 14
      %v2612 = vld [vmem:[%s2611] sm:$0x3]
      %v2614 = vsel %vm371, %v2557, 0
      %v2617 = vsel %vm371, %v2558, 0
      %v2620 = vsel %vm371, %v2559, 0
      %v2623 = vsel %vm371, %v2560, 0
      %v2626 = vsel %vm371, %v2561, 0
      %v2629 = vsel %vm371, %v2562, 0
      %v2632 = vsel %vm371, %v2563, 0
      %v2635 = vsel %vm371, %v2564, 0
      %v2638 = vsel %vm371, %v2565, 0
      %v2641 = vsel %vm371, %v2566, 0
      %v2644 = vsel %vm371, %v2567, 0
      %v2647 = vsel %vm371, %v2568, 0
      %v2650 = vsel %vm371, %v2569, 0
      %v2653 = vsel %vm371, %v2570, 0
      %v2656 = vsel %vm371, %v2571, 0
      %v2659 = vsel %vm371, %v2572, 0
      %v2662 = vsel %vm371, %v2573, 0
      %v2665 = vsel %vm371, %v2574, 0
      %v2668 = vsel %vm426, %v2612, 0
      %2670 = vmatpush.bf16.msra.mxu0 0
      %2671 = vmatpush.bf16.msra.mxu0 0
      %2672 = vmatpush.bf16.msra.mxu0 0
      %2673 = vmatpush.bf16.msra.mxu0 0
      %2674 = vmatpush.bf16.msra.mxu0 0
      %2675 = vmatpush.bf16.msra.mxu0 0
      %2676 = vmatpush.bf16.msra.mxu0 0
      %2677 = vmatpush.bf16.msra.mxu0 %v2668
      %2678 = vmatmul.bf16.gmra.mxu0 %v2614
      %v2679 = vpop.f32.mrf.mxu0
      %v2680 = vadd.f32 0.0, %v2679
      %v2681 = vpop.f32.mrf.mxu0
      %v2682 = vadd.f32 0.0, %v2681
      %2683 = vmatmul.bf16.gmra.mxu0 %v2617
      %v2684 = vpop.f32.mrf.mxu0
      %v2685 = vadd.f32 0.0, %v2684
      %v2686 = vpop.f32.mrf.mxu0
      %v2687 = vadd.f32 0.0, %v2686
      %2688 = vmatmul.bf16.gmra.mxu0 %v2620
      %v2689 = vpop.f32.mrf.mxu0
      %v2690 = vadd.f32 0.0, %v2689
      %v2691 = vpop.f32.mrf.mxu0
      %v2692 = vadd.f32 0.0, %v2691
      %2693 = vmatmul.bf16.gmra.mxu0 %v2623
      %v2694 = vpop.f32.mrf.mxu0
      %v2695 = vadd.f32 0.0, %v2694
      %v2696 = vpop.f32.mrf.mxu0
      %v2697 = vadd.f32 0.0, %v2696
      %2698 = vmatmul.bf16.gmra.mxu0 %v2626
      %v2699 = vpop.f32.mrf.mxu0
      %v2700 = vadd.f32 0.0, %v2699
      %v2701 = vpop.f32.mrf.mxu0
      %v2702 = vadd.f32 0.0, %v2701
      %2703 = vmatmul.bf16.gmra.mxu0 %v2629
      %v2704 = vpop.f32.mrf.mxu0
      %v2705 = vadd.f32 0.0, %v2704
      %v2706 = vpop.f32.mrf.mxu0
      %v2707 = vadd.f32 0.0, %v2706
      %2708 = vmatmul.bf16.gmra.mxu0 %v2632
      %v2709 = vpop.f32.mrf.mxu0
      %v2710 = vadd.f32 0.0, %v2709
      %v2711 = vpop.f32.mrf.mxu0
      %v2712 = vadd.f32 0.0, %v2711
      %2713 = vmatmul.bf16.gmra.mxu0 %v2635
      %v2714 = vpop.f32.mrf.mxu0
      %v2715 = vadd.f32 0.0, %v2714
      %v2716 = vpop.f32.mrf.mxu0
      %v2717 = vadd.f32 0.0, %v2716
      %2718 = vmatmul.bf16.gmra.mxu0 %v2638
      %v2719 = vpop.f32.mrf.mxu0
      %v2720 = vadd.f32 0.0, %v2719
      %v2721 = vpop.f32.mrf.mxu0
      %v2722 = vadd.f32 0.0, %v2721
      %2723 = vmatmul.bf16.gmra.mxu0 %v2641
      %v2724 = vpop.f32.mrf.mxu0
      %v2725 = vadd.f32 0.0, %v2724
      %v2726 = vpop.f32.mrf.mxu0
      %v2727 = vadd.f32 0.0, %v2726
      %2728 = vmatmul.bf16.gmra.mxu0 %v2644
      %v2729 = vpop.f32.mrf.mxu0
      %v2730 = vadd.f32 0.0, %v2729
      %v2731 = vpop.f32.mrf.mxu0
      %v2732 = vadd.f32 0.0, %v2731
      %2733 = vmatmul.bf16.gmra.mxu0 %v2647
      %v2734 = vpop.f32.mrf.mxu0
      %v2735 = vadd.f32 0.0, %v2734
      %v2736 = vpop.f32.mrf.mxu0
      %v2737 = vadd.f32 0.0, %v2736
      %2738 = vmatmul.bf16.gmra.mxu0 %v2650
      %v2739 = vpop.f32.mrf.mxu0
      %v2740 = vadd.f32 0.0, %v2739
      %v2741 = vpop.f32.mrf.mxu0
      %v2742 = vadd.f32 0.0, %v2741
      %2743 = vmatmul.bf16.gmra.mxu0 %v2653
      %v2744 = vpop.f32.mrf.mxu0
      %v2745 = vadd.f32 0.0, %v2744
      %v2746 = vpop.f32.mrf.mxu0
      %v2747 = vadd.f32 0.0, %v2746
      %2748 = vmatmul.bf16.gmra.mxu0 %v2656
      %v2749 = vpop.f32.mrf.mxu0
      %v2750 = vadd.f32 0.0, %v2749
      %v2751 = vpop.f32.mrf.mxu0
      %v2752 = vadd.f32 0.0, %v2751
      %2753 = vmatmul.bf16.gmra.mxu0 %v2659
      %v2754 = vpop.f32.mrf.mxu0
      %v2755 = vadd.f32 0.0, %v2754
      %v2756 = vpop.f32.mrf.mxu0
      %v2757 = vadd.f32 0.0, %v2756
      %2758 = vmatmul.bf16.gmra.mxu0 %v2662
      %v2759 = vpop.f32.mrf.mxu0
      %v2760 = vadd.f32 0.0, %v2759
      %v2761 = vpop.f32.mrf.mxu0
      %v2762 = vadd.f32 0.0, %v2761
      %2763 = vmatmul.bf16.gmra.mxu0 %v2665
      %v2764 = vpop.f32.mrf.mxu0
      %v2765 = vadd.f32 0.0, %v2764
      %v2766 = vpop.f32.mrf.mxu0
      %v2767 = vadd.f32 0.0, %v2766
      %2768 = vdwg.mxu0
      %v2769 = vadd.f32 %v2575, %v2680
      %v2770 = vadd.f32 %v2576, %v2682
      %v2771 = vadd.f32 %v2577, %v2685
      %v2772 = vadd.f32 %v2578, %v2687
      %v2773 = vadd.f32 %v2579, %v2690
      %v2774 = vadd.f32 %v2580, %v2692
      %v2775 = vadd.f32 %v2581, %v2695
      %v2776 = vadd.f32 %v2582, %v2697
      %v2777 = vadd.f32 %v2583, %v2700
      %v2778 = vadd.f32 %v2584, %v2702
      %v2779 = vadd.f32 %v2585, %v2705
      %v2780 = vadd.f32 %v2586, %v2707
      %v2781 = vadd.f32 %v2587, %v2710
      %v2782 = vadd.f32 %v2588, %v2712
      %v2783 = vadd.f32 %v2589, %v2715
      %v2784 = vadd.f32 %v2590, %v2717
      %v2785 = vadd.f32 %v2591, %v2720
      %v2786 = vadd.f32 %v2592, %v2722
      %v2787 = vadd.f32 %v2593, %v2725
      %v2788 = vadd.f32 %v2594, %v2727
      %v2789 = vadd.f32 %v2595, %v2730
      %v2790 = vadd.f32 %v2596, %v2732
      %v2791 = vadd.f32 %v2597, %v2735
      %v2792 = vadd.f32 %v2598, %v2737
      %v2793 = vadd.f32 %v2599, %v2740
      %v2794 = vadd.f32 %v2600, %v2742
      %v2795 = vadd.f32 %v2601, %v2745
      %v2796 = vadd.f32 %v2602, %v2747
      %v2797 = vadd.f32 %v2603, %v2750
      %v2798 = vadd.f32 %v2604, %v2752
      %v2799 = vadd.f32 %v2605, %v2755
      %v2800 = vadd.f32 %v2606, %v2757
      %v2801 = vadd.f32 %v2607, %v2760
      %v2802 = vadd.f32 %v2608, %v2762
      %v2803 = vadd.f32 %v2609, %v2765
      %v2804 = vadd.f32 %v2610, %v2767
      %2805 = vst.msk [vmem:[#allocation2] sm:$0xff] %vm243, %v2769
      %2806 = vst.msk [vmem:[#allocation2 + $0x8] sm:$0xff] %vm243, %v2770
      %2807 = vst.msk [vmem:[#allocation2 + $0x10] sm:$0xff] %vm243, %v2771
      %2808 = vst.msk [vmem:[#allocation2 + $0x18] sm:$0xff] %vm243, %v2772
      %2809 = vst.msk [vmem:[#allocation2 + $0x20] sm:$0xff] %vm243, %v2773
      %2810 = vst.msk [vmem:[#allocation2 + $0x28] sm:$0xff] %vm243, %v2774
      %2811 = vst.msk [vmem:[#allocation2 + $0x30] sm:$0xff] %vm243, %v2775
      %2812 = vst.msk [vmem:[#allocation2 + $0x38] sm:$0xff] %vm243, %v2776
      %2813 = vst.msk [vmem:[#allocation2 + $0x40] sm:$0xff] %vm243, %v2777
      %2814 = vst.msk [vmem:[#allocation2 + $0x48] sm:$0xff] %vm243, %v2778
      %2815 = vst.msk [vmem:[#allocation2 + $0x50] sm:$0xff] %vm243, %v2779
      %2816 = vst.msk [vmem:[#allocation2 + $0x58] sm:$0xff] %vm243, %v2780
      %2817 = vst.msk [vmem:[#allocation2 + $0x60] sm:$0xff] %vm243, %v2781
      %2818 = vst.msk [vmem:[#allocation2 + $0x68] sm:$0xff] %vm243, %v2782
      %2819 = vst.msk [vmem:[#allocation2 + $0x70] sm:$0xff] %vm243, %v2783
      %2820 = vst.msk [vmem:[#allocation2 + $0x78] sm:$0xff] %vm243, %v2784
      %2821 = vst.msk [vmem:[#allocation2 + $0x80] sm:$0xff] %vm243, %v2785
      %2822 = vst.msk [vmem:[#allocation2 + $0x88] sm:$0xff] %vm243, %v2786
      %2823 = vst.msk [vmem:[#allocation2 + $0x90] sm:$0xff] %vm243, %v2787
      %2824 = vst.msk [vmem:[#allocation2 + $0x98] sm:$0xff] %vm243, %v2788
      %2825 = vst.msk [vmem:[#allocation2 + $0xa0] sm:$0xff] %vm243, %v2789
      %2826 = vst.msk [vmem:[#allocation2 + $0xa8] sm:$0xff] %vm243, %v2790
      %2827 = vst.msk [vmem:[#allocation2 + $0xb0] sm:$0xff] %vm243, %v2791
      %2828 = vst.msk [vmem:[#allocation2 + $0xb8] sm:$0xff] %vm243, %v2792
      %2829 = vst.msk [vmem:[#allocation2 + $0xc0] sm:$0xff] %vm243, %v2793
      %2830 = vst.msk [vmem:[#allocation2 + $0xc8] sm:$0xff] %vm243, %v2794
      %2831 = vst.msk [vmem:[#allocation2 + $0xd0] sm:$0xff] %vm243, %v2795
      %2832 = vst.msk [vmem:[#allocation2 + $0xd8] sm:$0xff] %vm243, %v2796
      %2833 = vst.msk [vmem:[#allocation2 + $0xe0] sm:$0xff] %vm243, %v2797
      %2834 = vst.msk [vmem:[#allocation2 + $0xe8] sm:$0xff] %vm243, %v2798
      %2835 = vst.msk [vmem:[#allocation2 + $0xf0] sm:$0xff] %vm243, %v2799
      %2836 = vst.msk [vmem:[#allocation2 + $0xf8] sm:$0xff] %vm243, %v2800
      %2837 = vst.msk [vmem:[#allocation2 + $0x100] sm:$0xff] %vm243, %v2801
      %2838 = vst.msk [vmem:[#allocation2 + $0x108] sm:$0xff] %vm243, %v2802
      %2839 = vst.msk [vmem:[#allocation2 + $0x110] sm:$0xff] %vm243, %v2803
      %2840 = vst.msk [vmem:[#allocation2 + $0x118] sm:$0xff] %vm243, %v2804
      %v2841 = vld [vmem:[%s230 + $0x26] sm:$0xff]
      %v2842 = vld [vmem:[%s230 + $0x2e] sm:$0xff]
      %v2843 = vld [vmem:[%s230 + $0x36] sm:$0xff]
      %v2844 = vld [vmem:[%s230 + $0x3e] sm:$0xff]
      %v2845 = vld [vmem:[%s230 + $0x46] sm:$0xff]
      %v2846 = vld [vmem:[%s230 + $0x4e] sm:$0xff]
      %v2847 = vld [vmem:[%s230 + $0x56] sm:$0xff]
      %v2848 = vld [vmem:[%s230 + $0x5e] sm:$0xff]
      %v2849 = vld [vmem:[%s230 + $0x66] sm:$0xff]
      %v2850 = vld [vmem:[%s230 + $0x6e] sm:$0xff]
      %v2851 = vld [vmem:[%s230 + $0x76] sm:$0xff]
      %v2852 = vld [vmem:[%s230 + $0x7e] sm:$0xff]
      %v2853 = vld [vmem:[%s230 + $0x86] sm:$0xff]
      %v2854 = vld [vmem:[%s230 + $0x8e] sm:$0xff]
      %v2855 = vld [vmem:[%s230 + $0x96] sm:$0xff]
      %v2856 = vld [vmem:[%s230 + $0x9e] sm:$0xff]
      %v2857 = vld [vmem:[%s230 + $0xa6] sm:$0xff]
      %v2858 = vld [vmem:[%s230 + $0xae] sm:$0xff]
      %v2859 = vld [vmem:[%s230 + $0xb6] sm:$0xff]
      %v2860 = vld [vmem:[%s230 + $0xbe] sm:$0xff]
      %v2861 = vld [vmem:[%s230 + $0xc6] sm:$0xff]
      %v2862 = vld [vmem:[%s230 + $0xce] sm:$0xff]
      %v2863 = vld [vmem:[%s230 + $0xd6] sm:$0xff]
      %v2864 = vld [vmem:[%s230 + $0xde] sm:$0xff]
      %v2865 = vld [vmem:[%s230 + $0xe6] sm:$0xff]
      %v2866 = vld [vmem:[%s230 + $0xee] sm:$0xff]
      %v2867 = vld [vmem:[%s230 + $0xf6] sm:$0xff]
      %v2868 = vld [vmem:[%s230 + $0xfe] sm:$0xff]
      %v2869 = vld [vmem:[%s230 + $0x106] sm:$0xff]
      %v2870 = vld [vmem:[%s230 + $0x10e] sm:$0xff]
      %v2871 = vld [vmem:[%s230 + $0x116] sm:$0xff]
      %v2872 = vld [vmem:[%s230 + $0x11e] sm:$0xff]
      %v2873 = vld [vmem:[%s230 + $0x126] sm:$0xff]
      %v2874 = vld [vmem:[%s230 + $0x12e] sm:$0xff]
      %v2875 = vld [vmem:[%s230 + $0x136] sm:$0xff]
      %v2876 = vld [vmem:[%s230 + $0x13e] sm:$0xff]
      %v2877 = vpack.c.bf16 %v2842, %v2841
      %v2878 = vpack.c.bf16 %v2844, %v2843
      %v2879 = vpack.c.bf16 %v2846, %v2845
      %v2880 = vpack.c.bf16 %v2848, %v2847
      %v2881 = vpack.c.bf16 %v2850, %v2849
      %v2882 = vpack.c.bf16 %v2852, %v2851
      %v2883 = vpack.c.bf16 %v2854, %v2853
      %v2884 = vpack.c.bf16 %v2856, %v2855
      %v2885 = vpack.c.bf16 %v2858, %v2857
      %v2886 = vpack.c.bf16 %v2860, %v2859
      %v2887 = vpack.c.bf16 %v2862, %v2861
      %v2888 = vpack.c.bf16 %v2864, %v2863
      %v2889 = vpack.c.bf16 %v2866, %v2865
      %v2890 = vpack.c.bf16 %v2868, %v2867
      %v2891 = vpack.c.bf16 %v2870, %v2869
      %v2892 = vpack.c.bf16 %v2872, %v2871
      %v2893 = vpack.c.bf16 %v2874, %v2873
      %v2894 = vpack.c.bf16 %v2876, %v2875
      %v2895 = vld [vmem:[#allocation2] sm:$0xff]
      %v2896 = vld [vmem:[#allocation2 + $0x8] sm:$0xff]
      %v2897 = vld [vmem:[#allocation2 + $0x10] sm:$0xff]
      %v2898 = vld [vmem:[#allocation2 + $0x18] sm:$0xff]
      %v2899 = vld [vmem:[#allocation2 + $0x20] sm:$0xff]
      %v2900 = vld [vmem:[#allocation2 + $0x28] sm:$0xff]
      %v2901 = vld [vmem:[#allocation2 + $0x30] sm:$0xff]
      %v2902 = vld [vmem:[#allocation2 + $0x38] sm:$0xff]
      %v2903 = vld [vmem:[#allocation2 + $0x40] sm:$0xff]
      %v2904 = vld [vmem:[#allocation2 + $0x48] sm:$0xff]
      %v2905 = vld [vmem:[#allocation2 + $0x50] sm:$0xff]
      %v2906 = vld [vmem:[#allocation2 + $0x58] sm:$0xff]
      %v2907 = vld [vmem:[#allocation2 + $0x60] sm:$0xff]
      %v2908 = vld [vmem:[#allocation2 + $0x68] sm:$0xff]
      %v2909 = vld [vmem:[#allocation2 + $0x70] sm:$0xff]
      %v2910 = vld [vmem:[#allocation2 + $0x78] sm:$0xff]
      %v2911 = vld [vmem:[#allocation2 + $0x80] sm:$0xff]
      %v2912 = vld [vmem:[#allocation2 + $0x88] sm:$0xff]
      %v2913 = vld [vmem:[#allocation2 + $0x90] sm:$0xff]
      %v2914 = vld [vmem:[#allocation2 + $0x98] sm:$0xff]
      %v2915 = vld [vmem:[#allocation2 + $0xa0] sm:$0xff]
      %v2916 = vld [vmem:[#allocation2 + $0xa8] sm:$0xff]
      %v2917 = vld [vmem:[#allocation2 + $0xb0] sm:$0xff]
      %v2918 = vld [vmem:[#allocation2 + $0xb8] sm:$0xff]
      %v2919 = vld [vmem:[#allocation2 + $0xc0] sm:$0xff]
      %v2920 = vld [vmem:[#allocation2 + $0xc8] sm:$0xff]
      %v2921 = vld [vmem:[#allocation2 + $0xd0] sm:$0xff]
      %v2922 = vld [vmem:[#allocation2 + $0xd8] sm:$0xff]
      %v2923 = vld [vmem:[#allocation2 + $0xe0] sm:$0xff]
      %v2924 = vld [vmem:[#allocation2 + $0xe8] sm:$0xff]
      %v2925 = vld [vmem:[#allocation2 + $0xf0] sm:$0xff]
      %v2926 = vld [vmem:[#allocation2 + $0xf8] sm:$0xff]
      %v2927 = vld [vmem:[#allocation2 + $0x100] sm:$0xff]
      %v2928 = vld [vmem:[#allocation2 + $0x108] sm:$0xff]
      %v2929 = vld [vmem:[#allocation2 + $0x110] sm:$0xff]
      %v2930 = vld [vmem:[#allocation2 + $0x118] sm:$0xff]
      %s2931 = scalar_lea.vmem %s1, 16
      %v2932 = vld [vmem:[%s2931] sm:$0x3]
      %v2934 = vsel %vm371, %v2877, 0
      %v2937 = vsel %vm371, %v2878, 0
      %v2940 = vsel %vm371, %v2879, 0
      %v2943 = vsel %vm371, %v2880, 0
      %v2946 = vsel %vm371, %v2881, 0
      %v2949 = vsel %vm371, %v2882, 0
      %v2952 = vsel %vm371, %v2883, 0
      %v2955 = vsel %vm371, %v2884, 0
      %v2958 = vsel %vm371, %v2885, 0
      %v2961 = vsel %vm371, %v2886, 0
      %v2964 = vsel %vm371, %v2887, 0
      %v2967 = vsel %vm371, %v2888, 0
      %v2970 = vsel %vm371, %v2889, 0
      %v2973 = vsel %vm371, %v2890, 0
      %v2976 = vsel %vm371, %v2891, 0
      %v2979 = vsel %vm371, %v2892, 0
      %v2982 = vsel %vm371, %v2893, 0
      %v2985 = vsel %vm371, %v2894, 0
      %v2988 = vsel %vm426, %v2932, 0
      %2990 = vmatpush.bf16.msra.mxu0 0
      %2991 = vmatpush.bf16.msra.mxu0 0
      %2992 = vmatpush.bf16.msra.mxu0 0
      %2993 = vmatpush.bf16.msra.mxu0 0
      %2994 = vmatpush.bf16.msra.mxu0 0
      %2995 = vmatpush.bf16.msra.mxu0 0
      %2996 = vmatpush.bf16.msra.mxu0 0
      %2997 = vmatpush.bf16.msra.mxu0 %v2988
      %2998 = vmatmul.bf16.gmra.mxu0 %v2934
      %v2999 = vpop.f32.mrf.mxu0
      %v3000 = vadd.f32 0.0, %v2999
      %v3001 = vpop.f32.mrf.mxu0
      %v3002 = vadd.f32 0.0, %v3001
      %3003 = vmatmul.bf16.gmra.mxu0 %v2937
      %v3004 = vpop.f32.mrf.mxu0
      %v3005 = vadd.f32 0.0, %v3004
      %v3006 = vpop.f32.mrf.mxu0
      %v3007 = vadd.f32 0.0, %v3006
      %3008 = vmatmul.bf16.gmra.mxu0 %v2940
      %v3009 = vpop.f32.mrf.mxu0
      %v3010 = vadd.f32 0.0, %v3009
      %v3011 = vpop.f32.mrf.mxu0
      %v3012 = vadd.f32 0.0, %v3011
      %3013 = vmatmul.bf16.gmra.mxu0 %v2943
      %v3014 = vpop.f32.mrf.mxu0
      %v3015 = vadd.f32 0.0, %v3014
      %v3016 = vpop.f32.mrf.mxu0
      %v3017 = vadd.f32 0.0, %v3016
      %3018 = vmatmul.bf16.gmra.mxu0 %v2946
      %v3019 = vpop.f32.mrf.mxu0
      %v3020 = vadd.f32 0.0, %v3019
      %v3021 = vpop.f32.mrf.mxu0
      %v3022 = vadd.f32 0.0, %v3021
      %3023 = vmatmul.bf16.gmra.mxu0 %v2949
      %v3024 = vpop.f32.mrf.mxu0
      %v3025 = vadd.f32 0.0, %v3024
      %v3026 = vpop.f32.mrf.mxu0
      %v3027 = vadd.f32 0.0, %v3026
      %3028 = vmatmul.bf16.gmra.mxu0 %v2952
      %v3029 = vpop.f32.mrf.mxu0
      %v3030 = vadd.f32 0.0, %v3029
      %v3031 = vpop.f32.mrf.mxu0
      %v3032 = vadd.f32 0.0, %v3031
      %3033 = vmatmul.bf16.gmra.mxu0 %v2955
      %v3034 = vpop.f32.mrf.mxu0
      %v3035 = vadd.f32 0.0, %v3034
      %v3036 = vpop.f32.mrf.mxu0
      %v3037 = vadd.f32 0.0, %v3036
      %3038 = vmatmul.bf16.gmra.mxu0 %v2958
      %v3039 = vpop.f32.mrf.mxu0
      %v3040 = vadd.f32 0.0, %v3039
      %v3041 = vpop.f32.mrf.mxu0
      %v3042 = vadd.f32 0.0, %v3041
      %3043 = vmatmul.bf16.gmra.mxu0 %v2961
      %v3044 = vpop.f32.mrf.mxu0
      %v3045 = vadd.f32 0.0, %v3044
      %v3046 = vpop.f32.mrf.mxu0
      %v3047 = vadd.f32 0.0, %v3046
      %3048 = vmatmul.bf16.gmra.mxu0 %v2964
      %v3049 = vpop.f32.mrf.mxu0
      %v3050 = vadd.f32 0.0, %v3049
      %v3051 = vpop.f32.mrf.mxu0
      %v3052 = vadd.f32 0.0, %v3051
      %3053 = vmatmul.bf16.gmra.mxu0 %v2967
      %v3054 = vpop.f32.mrf.mxu0
      %v3055 = vadd.f32 0.0, %v3054
      %v3056 = vpop.f32.mrf.mxu0
      %v3057 = vadd.f32 0.0, %v3056
      %3058 = vmatmul.bf16.gmra.mxu0 %v2970
      %v3059 = vpop.f32.mrf.mxu0
      %v3060 = vadd.f32 0.0, %v3059
      %v3061 = vpop.f32.mrf.mxu0
      %v3062 = vadd.f32 0.0, %v3061
      %3063 = vmatmul.bf16.gmra.mxu0 %v2973
      %v3064 = vpop.f32.mrf.mxu0
      %v3065 = vadd.f32 0.0, %v3064
      %v3066 = vpop.f32.mrf.mxu0
      %v3067 = vadd.f32 0.0, %v3066
      %3068 = vmatmul.bf16.gmra.mxu0 %v2976
      %v3069 = vpop.f32.mrf.mxu0
      %v3070 = vadd.f32 0.0, %v3069
      %v3071 = vpop.f32.mrf.mxu0
      %v3072 = vadd.f32 0.0, %v3071
      %3073 = vmatmul.bf16.gmra.mxu0 %v2979
      %v3074 = vpop.f32.mrf.mxu0
      %v3075 = vadd.f32 0.0, %v3074
      %v3076 = vpop.f32.mrf.mxu0
      %v3077 = vadd.f32 0.0, %v3076
      %3078 = vmatmul.bf16.gmra.mxu0 %v2982
      %v3079 = vpop.f32.mrf.mxu0
      %v3080 = vadd.f32 0.0, %v3079
      %v3081 = vpop.f32.mrf.mxu0
      %v3082 = vadd.f32 0.0, %v3081
      %3083 = vmatmul.bf16.gmra.mxu0 %v2985
      %v3084 = vpop.f32.mrf.mxu0
      %v3085 = vadd.f32 0.0, %v3084
      %v3086 = vpop.f32.mrf.mxu0
      %v3087 = vadd.f32 0.0, %v3086
      %3088 = vdwg.mxu0
      %v3089 = vadd.f32 %v2895, %v3000
      %v3090 = vadd.f32 %v2896, %v3002
      %v3091 = vadd.f32 %v2897, %v3005
      %v3092 = vadd.f32 %v2898, %v3007
      %v3093 = vadd.f32 %v2899, %v3010
      %v3094 = vadd.f32 %v2900, %v3012
      %v3095 = vadd.f32 %v2901, %v3015
      %v3096 = vadd.f32 %v2902, %v3017
      %v3097 = vadd.f32 %v2903, %v3020
      %v3098 = vadd.f32 %v2904, %v3022
      %v3099 = vadd.f32 %v2905, %v3025
      %v3100 = vadd.f32 %v2906, %v3027
      %v3101 = vadd.f32 %v2907, %v3030
      %v3102 = vadd.f32 %v2908, %v3032
      %v3103 = vadd.f32 %v2909, %v3035
      %v3104 = vadd.f32 %v2910, %v3037
      %v3105 = vadd.f32 %v2911, %v3040
      %v3106 = vadd.f32 %v2912, %v3042
      %v3107 = vadd.f32 %v2913, %v3045
      %v3108 = vadd.f32 %v2914, %v3047
      %v3109 = vadd.f32 %v2915, %v3050
      %v3110 = vadd.f32 %v2916, %v3052
      %v3111 = vadd.f32 %v2917, %v3055
      %v3112 = vadd.f32 %v2918, %v3057
      %v3113 = vadd.f32 %v2919, %v3060
      %v3114 = vadd.f32 %v2920, %v3062
      %v3115 = vadd.f32 %v2921, %v3065
      %v3116 = vadd.f32 %v2922, %v3067
      %v3117 = vadd.f32 %v2923, %v3070
      %v3118 = vadd.f32 %v2924, %v3072
      %v3119 = vadd.f32 %v2925, %v3075
      %v3120 = vadd.f32 %v2926, %v3077
      %v3121 = vadd.f32 %v2927, %v3080
      %v3122 = vadd.f32 %v2928, %v3082
      %v3123 = vadd.f32 %v2929, %v3085
      %v3124 = vadd.f32 %v2930, %v3087
      %3125 = vst.msk [vmem:[#allocation2] sm:$0xff] %vm243, %v3089
      %3126 = vst.msk [vmem:[#allocation2 + $0x8] sm:$0xff] %vm243, %v3090
      %3127 = vst.msk [vmem:[#allocation2 + $0x10] sm:$0xff] %vm243, %v3091
      %3128 = vst.msk [vmem:[#allocation2 + $0x18] sm:$0xff] %vm243, %v3092
      %3129 = vst.msk [vmem:[#allocation2 + $0x20] sm:$0xff] %vm243, %v3093
      %3130 = vst.msk [vmem:[#allocation2 + $0x28] sm:$0xff] %vm243, %v3094
      %3131 = vst.msk [vmem:[#allocation2 + $0x30] sm:$0xff] %vm243, %v3095
      %3132 = vst.msk [vmem:[#allocation2 + $0x38] sm:$0xff] %vm243, %v3096
      %3133 = vst.msk [vmem:[#allocation2 + $0x40] sm:$0xff] %vm243, %v3097
      %3134 = vst.msk [vmem:[#allocation2 + $0x48] sm:$0xff] %vm243, %v3098
      %3135 = vst.msk [vmem:[#allocation2 + $0x50] sm:$0xff] %vm243, %v3099
      %3136 = vst.msk [vmem:[#allocation2 + $0x58] sm:$0xff] %vm243, %v3100
      %3137 = vst.msk [vmem:[#allocation2 + $0x60] sm:$0xff] %vm243, %v3101
      %3138 = vst.msk [vmem:[#allocation2 + $0x68] sm:$0xff] %vm243, %v3102
      %3139 = vst.msk [vmem:[#allocation2 + $0x70] sm:$0xff] %vm243, %v3103
      %3140 = vst.msk [vmem:[#allocation2 + $0x78] sm:$0xff] %vm243, %v3104
      %3141 = vst.msk [vmem:[#allocation2 + $0x80] sm:$0xff] %vm243, %v3105
      %3142 = vst.msk [vmem:[#allocation2 + $0x88] sm:$0xff] %vm243, %v3106
      %3143 = vst.msk [vmem:[#allocation2 + $0x90] sm:$0xff] %vm243, %v3107
      %3144 = vst.msk [vmem:[#allocation2 + $0x98] sm:$0xff] %vm243, %v3108
      %3145 = vst.msk [vmem:[#allocation2 + $0xa0] sm:$0xff] %vm243, %v3109
      %3146 = vst.msk [vmem:[#allocation2 + $0xa8] sm:$0xff] %vm243, %v3110
      %3147 = vst.msk [vmem:[#allocation2 + $0xb0] sm:$0xff] %vm243, %v3111
      %3148 = vst.msk [vmem:[#allocation2 + $0xb8] sm:$0xff] %vm243, %v3112
      %3149 = vst.msk [vmem:[#allocation2 + $0xc0] sm:$0xff] %vm243, %v3113
      %3150 = vst.msk [vmem:[#allocation2 + $0xc8] sm:$0xff] %vm243, %v3114
      %3151 = vst.msk [vmem:[#allocation2 + $0xd0] sm:$0xff] %vm243, %v3115
      %3152 = vst.msk [vmem:[#allocation2 + $0xd8] sm:$0xff] %vm243, %v3116
      %3153 = vst.msk [vmem:[#allocation2 + $0xe0] sm:$0xff] %vm243, %v3117
      %3154 = vst.msk [vmem:[#allocation2 + $0xe8] sm:$0xff] %vm243, %v3118
      %3155 = vst.msk [vmem:[#allocation2 + $0xf0] sm:$0xff] %vm243, %v3119
      %3156 = vst.msk [vmem:[#allocation2 + $0xf8] sm:$0xff] %vm243, %v3120
      %3157 = vst.msk [vmem:[#allocation2 + $0x100] sm:$0xff] %vm243, %v3121
      %3158 = vst.msk [vmem:[#allocation2 + $0x108] sm:$0xff] %vm243, %v3122
      %3159 = vst.msk [vmem:[#allocation2 + $0x110] sm:$0xff] %vm243, %v3123
      %3160 = vst.msk [vmem:[#allocation2 + $0x118] sm:$0xff] %vm243, %v3124
      %v3161 = vld [vmem:[#allocation2] sm:$0xff]
      %v3162 = vld [vmem:[#allocation2 + $0x8] sm:$0xff]
      %v3163 = vld [vmem:[#allocation2 + $0x10] sm:$0xff]
      %v3164 = vld [vmem:[#allocation2 + $0x18] sm:$0xff]
      %v3165 = vld [vmem:[#allocation2 + $0x20] sm:$0xff]
      %v3166 = vld [vmem:[#allocation2 + $0x28] sm:$0xff]
      %v3167 = vld [vmem:[#allocation2 + $0x30] sm:$0xff]
      %v3168 = vld [vmem:[#allocation2 + $0x38] sm:$0xff]
      %v3169 = vld [vmem:[#allocation2 + $0x40] sm:$0xff]
      %v3170 = vld [vmem:[#allocation2 + $0x48] sm:$0xff]
      %v3171 = vld [vmem:[#allocation2 + $0x50] sm:$0xff]
      %v3172 = vld [vmem:[#allocation2 + $0x58] sm:$0xff]
      %v3173 = vld [vmem:[#allocation2 + $0x60] sm:$0xff]
      %v3174 = vld [vmem:[#allocation2 + $0x68] sm:$0xff]
      %v3175 = vld [vmem:[#allocation2 + $0x70] sm:$0xff]
      %v3176 = vld [vmem:[#allocation2 + $0x78] sm:$0xff]
      %v3177 = vld [vmem:[#allocation2 + $0x80] sm:$0xff]
      %v3178 = vld [vmem:[#allocation2 + $0x88] sm:$0xff]
      %v3179 = vld [vmem:[#allocation2 + $0x90] sm:$0xff]
      %v3180 = vld [vmem:[#allocation2 + $0x98] sm:$0xff]
      %v3181 = vld [vmem:[#allocation2 + $0xa0] sm:$0xff]
      %v3182 = vld [vmem:[#allocation2 + $0xa8] sm:$0xff]
      %v3183 = vld [vmem:[#allocation2 + $0xb0] sm:$0xff]
      %v3184 = vld [vmem:[#allocation2 + $0xb8] sm:$0xff]
      %v3185 = vld [vmem:[#allocation2 + $0xc0] sm:$0xff]
      %v3186 = vld [vmem:[#allocation2 + $0xc8] sm:$0xff]
      %v3187 = vld [vmem:[#allocation2 + $0xd0] sm:$0xff]
      %v3188 = vld [vmem:[#allocation2 + $0xd8] sm:$0xff]
      %v3189 = vld [vmem:[#allocation2 + $0xe0] sm:$0xff]
      %v3190 = vld [vmem:[#allocation2 + $0xe8] sm:$0xff]
      %v3191 = vld [vmem:[#allocation2 + $0xf0] sm:$0xff]
      %v3192 = vld [vmem:[#allocation2 + $0xf8] sm:$0xff]
      %v3193 = vld [vmem:[#allocation2 + $0x100] sm:$0xff]
      %v3194 = vld [vmem:[#allocation2 + $0x108] sm:$0xff]
      %v3195 = vld [vmem:[#allocation2 + $0x110] sm:$0xff]
      %v3196 = vld [vmem:[#allocation2 + $0x118] sm:$0xff]
      %3197 = vst.msk [vmem:[%s235] sm:$0xff] %vm243, %v3161
      %3198 = vst.msk [vmem:[%s235 + $0x8] sm:$0xff] %vm243, %v3162
      %3199 = vst.msk [vmem:[%s235 + $0x10] sm:$0xff] %vm243, %v3163
      %3200 = vst.msk [vmem:[%s235 + $0x18] sm:$0xff] %vm243, %v3164
      %3201 = vst.msk [vmem:[%s235 + $0x20] sm:$0xff] %vm243, %v3165
      %3202 = vst.msk [vmem:[%s235 + $0x28] sm:$0xff] %vm243, %v3166
      %3203 = vst.msk [vmem:[%s235 + $0x30] sm:$0xff] %vm243, %v3167
      %3204 = vst.msk [vmem:[%s235 + $0x38] sm:$0xff] %vm243, %v3168
      %3205 = vst.msk [vmem:[%s235 + $0x40] sm:$0xff] %vm243, %v3169
      %3206 = vst.msk [vmem:[%s235 + $0x48] sm:$0xff] %vm243, %v3170
      %3207 = vst.msk [vmem:[%s235 + $0x50] sm:$0xff] %vm243, %v3171
      %3208 = vst.msk [vmem:[%s235 + $0x58] sm:$0xff] %vm243, %v3172
      %3209 = vst.msk [vmem:[%s235 + $0x60] sm:$0xff] %vm243, %v3173
      %3210 = vst.msk [vmem:[%s235 + $0x68] sm:$0xff] %vm243, %v3174
      %3211 = vst.msk [vmem:[%s235 + $0x70] sm:$0xff] %vm243, %v3175
      %3212 = vst.msk [vmem:[%s235 + $0x78] sm:$0xff] %vm243, %v3176
      %3213 = vst.msk [vmem:[%s235 + $0x80] sm:$0xff] %vm243, %v3177
      %3214 = vst.msk [vmem:[%s235 + $0x88] sm:$0xff] %vm243, %v3178
      %3215 = vst.msk [vmem:[%s235 + $0x90] sm:$0xff] %vm243, %v3179
      %3216 = vst.msk [vmem:[%s235 + $0x98] sm:$0xff] %vm243, %v3180
      %3217 = vst.msk [vmem:[%s235 + $0xa0] sm:$0xff] %vm243, %v3181
      %3218 = vst.msk [vmem:[%s235 + $0xa8] sm:$0xff] %vm243, %v3182
      %3219 = vst.msk [vmem:[%s235 + $0xb0] sm:$0xff] %vm243, %v3183
      %3220 = vst.msk [vmem:[%s235 + $0xb8] sm:$0xff] %vm243, %v3184
      %3221 = vst.msk [vmem:[%s235 + $0xc0] sm:$0xff] %vm243, %v3185
      %3222 = vst.msk [vmem:[%s235 + $0xc8] sm:$0xff] %vm243, %v3186
      %3223 = vst.msk [vmem:[%s235 + $0xd0] sm:$0xff] %vm243, %v3187
      %3224 = vst.msk [vmem:[%s235 + $0xd8] sm:$0xff] %vm243, %v3188
      %3225 = vst.msk [vmem:[%s235 + $0xe0] sm:$0xff] %vm243, %v3189
      %3226 = vst.msk [vmem:[%s235 + $0xe8] sm:$0xff] %vm243, %v3190
      %3227 = vst.msk [vmem:[%s235 + $0xf0] sm:$0xff] %vm243, %v3191
      %3228 = vst.msk [vmem:[%s235 + $0xf8] sm:$0xff] %vm243, %v3192
      %3229 = vst.msk [vmem:[%s235 + $0x100] sm:$0xff] %vm243, %v3193
      %3230 = vst.msk [vmem:[%s235 + $0x108] sm:$0xff] %vm243, %v3194
      %3231 = vst.msk [vmem:[%s235 + $0x110] sm:$0xff] %vm243, %v3195
      %3232 = vst.msk [vmem:[%s235 + $0x118] sm:$0xff] %vm243, %v3196
      %v3233 = vld [vmem:[%s2] sm:$0xff]
      %v3234 = vld [vmem:[%s2 + $0x8] sm:$0xff]
      %v3235 = vld [vmem:[%s2 + $0x10] sm:$0xff]
      %v3236 = vld [vmem:[%s2 + $0x18] sm:$0xff]
      %v3237 = vld [vmem:[%s2 + $0x20] sm:$0xff]
      %v3238 = vld [vmem:[%s2 + $0x28] sm:$0xff]
      %v3239 = vld [vmem:[%s2 + $0x30] sm:$0xff]
      %v3240 = vld [vmem:[%s2 + $0x38] sm:$0xff]
      %v3241 = vld [vmem:[%s2 + $0x40] sm:$0xff]
      %v3242 = vld [vmem:[%s2 + $0x48] sm:$0xff]
      %v3243 = vld [vmem:[%s2 + $0x50] sm:$0xff]
      %v3244 = vld [vmem:[%s2 + $0x58] sm:$0xff]
      %v3245 = vld [vmem:[%s2 + $0x60] sm:$0xff]
      %v3246 = vld [vmem:[%s2 + $0x68] sm:$0xff]
      %v3247 = vld [vmem:[%s2 + $0x70] sm:$0xff]
      %v3248 = vld [vmem:[%s2 + $0x78] sm:$0xff]
      %v3249 = vld [vmem:[%s2 + $0x80] sm:$0xff]
      %v3250 = vld [vmem:[%s2 + $0x88] sm:$0xff]
      %v3251 = vld [vmem:[%s2 + $0x90] sm:$0xff]
      %v3252 = vld [vmem:[%s2 + $0x98] sm:$0xff]
      %v3253 = vld [vmem:[%s2 + $0xa0] sm:$0xff]
      %v3254 = vld [vmem:[%s2 + $0xa8] sm:$0xff]
      %v3255 = vld [vmem:[%s2 + $0xb0] sm:$0xff]
      %v3256 = vld [vmem:[%s2 + $0xb8] sm:$0xff]
      %v3257 = vld [vmem:[%s2 + $0xc0] sm:$0xff]
      %v3258 = vld [vmem:[%s2 + $0xc8] sm:$0xff]
      %v3259 = vld [vmem:[%s2 + $0xd0] sm:$0xff]
      %v3260 = vld [vmem:[%s2 + $0xd8] sm:$0xff]
      %v3261 = vld [vmem:[%s2 + $0xe0] sm:$0xff]
      %v3262 = vld [vmem:[%s2 + $0xe8] sm:$0xff]
      %v3263 = vld [vmem:[%s2 + $0xf0] sm:$0xff]
      %v3264 = vld [vmem:[%s2 + $0xf8] sm:$0xff]
      %v3265 = vld [vmem:[%s2 + $0x100] sm:$0xff]
      %v3266 = vld [vmem:[%s2 + $0x108] sm:$0xff]
      %v3267 = vld [vmem:[%s2 + $0x110] sm:$0xff]
      %v3268 = vld [vmem:[%s2 + $0x118] sm:$0xff]
      %3270 = vset.pattern.permute.xlu0 0
      %3271 = vperm.xlu0 %3270, %v3233
      %v3272 = vpop.permute.xlu0 %3271
      %3275 = vset.pattern.permute.xlu0 0
      %3276 = vperm.xlu0 %3275, %v3234
      %v3277 = vpop.permute.xlu0 %3276
      %3280 = vset.pattern.permute.xlu0 0
      %3281 = vperm.xlu0 %3280, %v3235
      %v3282 = vpop.permute.xlu0 %3281
      %3285 = vset.pattern.permute.xlu0 0
      %3286 = vperm.xlu0 %3285, %v3236
      %v3287 = vpop.permute.xlu0 %3286
      %3290 = vset.pattern.permute.xlu0 0
      %3291 = vperm.xlu0 %3290, %v3237
      %v3292 = vpop.permute.xlu0 %3291
      %3295 = vset.pattern.permute.xlu0 0
      %3296 = vperm.xlu0 %3295, %v3238
      %v3297 = vpop.permute.xlu0 %3296
      %3300 = vset.pattern.permute.xlu0 0
      %3301 = vperm.xlu0 %3300, %v3239
      %v3302 = vpop.permute.xlu0 %3301
      %3305 = vset.pattern.permute.xlu0 0
      %3306 = vperm.xlu0 %3305, %v3240
      %v3307 = vpop.permute.xlu0 %3306
      %3310 = vset.pattern.permute.xlu0 0
      %3311 = vperm.xlu0 %3310, %v3241
      %v3312 = vpop.permute.xlu0 %3311
      %3315 = vset.pattern.permute.xlu0 0
      %3316 = vperm.xlu0 %3315, %v3242
      %v3317 = vpop.permute.xlu0 %3316
      %3320 = vset.pattern.permute.xlu0 0
      %3321 = vperm.xlu0 %3320, %v3243
      %v3322 = vpop.permute.xlu0 %3321
      %3325 = vset.pattern.permute.xlu0 0
      %3326 = vperm.xlu0 %3325, %v3244
      %v3327 = vpop.permute.xlu0 %3326
      %3330 = vset.pattern.permute.xlu0 0
      %3331 = vperm.xlu0 %3330, %v3245
      %v3332 = vpop.permute.xlu0 %3331
      %3335 = vset.pattern.permute.xlu0 0
      %3336 = vperm.xlu0 %3335, %v3246
      %v3337 = vpop.permute.xlu0 %3336
      %3340 = vset.pattern.permute.xlu0 0
      %3341 = vperm.xlu0 %3340, %v3247
      %v3342 = vpop.permute.xlu0 %3341
      %3345 = vset.pattern.permute.xlu0 0
      %3346 = vperm.xlu0 %3345, %v3248
      %v3347 = vpop.permute.xlu0 %3346
      %3350 = vset.pattern.permute.xlu0 0
      %3351 = vperm.xlu0 %3350, %v3249
      %v3352 = vpop.permute.xlu0 %3351
      %3355 = vset.pattern.permute.xlu0 0
      %3356 = vperm.xlu0 %3355, %v3250
      %v3357 = vpop.permute.xlu0 %3356
      %3360 = vset.pattern.permute.xlu0 0
      %3361 = vperm.xlu0 %3360, %v3251
      %v3362 = vpop.permute.xlu0 %3361
      %3365 = vset.pattern.permute.xlu0 0
      %3366 = vperm.xlu0 %3365, %v3252
      %v3367 = vpop.permute.xlu0 %3366
      %3370 = vset.pattern.permute.xlu0 0
      %3371 = vperm.xlu0 %3370, %v3253
      %v3372 = vpop.permute.xlu0 %3371
      %3375 = vset.pattern.permute.xlu0 0
      %3376 = vperm.xlu0 %3375, %v3254
      %v3377 = vpop.permute.xlu0 %3376
      %3380 = vset.pattern.permute.xlu0 0
      %3381 = vperm.xlu0 %3380, %v3255
      %v3382 = vpop.permute.xlu0 %3381
      %3385 = vset.pattern.permute.xlu0 0
      %3386 = vperm.xlu0 %3385, %v3256
      %v3387 = vpop.permute.xlu0 %3386
      %3390 = vset.pattern.permute.xlu0 0
      %3391 = vperm.xlu0 %3390, %v3257
      %v3392 = vpop.permute.xlu0 %3391
      %3395 = vset.pattern.permute.xlu0 0
      %3396 = vperm.xlu0 %3395, %v3258
      %v3397 = vpop.permute.xlu0 %3396
      %3400 = vset.pattern.permute.xlu0 0
      %3401 = vperm.xlu0 %3400, %v3259
      %v3402 = vpop.permute.xlu0 %3401
      %3405 = vset.pattern.permute.xlu0 0
      %3406 = vperm.xlu0 %3405, %v3260
      %v3407 = vpop.permute.xlu0 %3406
      %3410 = vset.pattern.permute.xlu0 0
      %3411 = vperm.xlu0 %3410, %v3261
      %v3412 = vpop.permute.xlu0 %3411
      %3415 = vset.pattern.permute.xlu0 0
      %3416 = vperm.xlu0 %3415, %v3262
      %v3417 = vpop.permute.xlu0 %3416
      %3420 = vset.pattern.permute.xlu0 0
      %3421 = vperm.xlu0 %3420, %v3263
      %v3422 = vpop.permute.xlu0 %3421
      %3425 = vset.pattern.permute.xlu0 0
      %3426 = vperm.xlu0 %3425, %v3264
      %v3427 = vpop.permute.xlu0 %3426
      %3430 = vset.pattern.permute.xlu0 0
      %3431 = vperm.xlu0 %3430, %v3265
      %v3432 = vpop.permute.xlu0 %3431
      %3435 = vset.pattern.permute.xlu0 0
      %3436 = vperm.xlu0 %3435, %v3266
      %v3437 = vpop.permute.xlu0 %3436
      %3440 = vset.pattern.permute.xlu0 0
      %3441 = vperm.xlu0 %3440, %v3267
      %v3442 = vpop.permute.xlu0 %3441
      %3445 = vset.pattern.permute.xlu0 0
      %3446 = vperm.xlu0 %3445, %v3268
      %v3447 = vpop.permute.xlu0 %3446
      %v3449 = vmul.f32 %v3161, %v3272
      %v3450 = vmul.f32 %v3162, %v3277
      %v3451 = vmul.f32 %v3163, %v3282
      %v3452 = vmul.f32 %v3164, %v3287
      %v3453 = vmul.f32 %v3165, %v3292
      %v3454 = vmul.f32 %v3166, %v3297
      %v3455 = vmul.f32 %v3167, %v3302
      %v3456 = vmul.f32 %v3168, %v3307
      %v3457 = vmul.f32 %v3169, %v3312
      %v3458 = vmul.f32 %v3170, %v3317
      %v3459 = vmul.f32 %v3171, %v3322
      %v3460 = vmul.f32 %v3172, %v3327
      %v3461 = vmul.f32 %v3173, %v3332
      %v3462 = vmul.f32 %v3174, %v3337
      %v3463 = vmul.f32 %v3175, %v3342
      %v3464 = vmul.f32 %v3176, %v3347
      %v3465 = vmul.f32 %v3177, %v3352
      %v3466 = vmul.f32 %v3178, %v3357
      %v3467 = vmul.f32 %v3179, %v3362
      %v3468 = vmul.f32 %v3180, %v3367
      %v3469 = vmul.f32 %v3181, %v3372
      %v3470 = vmul.f32 %v3182, %v3377
      %v3471 = vmul.f32 %v3183, %v3382
      %v3472 = vmul.f32 %v3184, %v3387
      %v3473 = vmul.f32 %v3185, %v3392
      %v3474 = vmul.f32 %v3186, %v3397
      %v3475 = vmul.f32 %v3187, %v3402
      %v3476 = vmul.f32 %v3188, %v3407
      %v3477 = vmul.f32 %v3189, %v3412
      %v3478 = vmul.f32 %v3190, %v3417
      %v3479 = vmul.f32 %v3191, %v3422
      %v3480 = vmul.f32 %v3192, %v3427
      %v3481 = vmul.f32 %v3193, %v3432
      %v3482 = vmul.f32 %v3194, %v3437
      %v3483 = vmul.f32 %v3195, %v3442
      %v3484 = vmul.f32 %v3196, %v3447
      %v3485 = vsel %vm243, %v3449, 0.0
      %v3486 = vsel %vm243, %v3450, 0.0
      %v3487 = vadd.f32 %v3485, %v3486
      %v3488 = vsel %vm243, %v3451, 0.0
      %v3489 = vadd.f32 %v3487, %v3488
      %v3490 = vsel %vm243, %v3452, 0.0
      %v3491 = vadd.f32 %v3489, %v3490
      %v3492 = vsel %vm243, %v3453, 0.0
      %v3493 = vadd.f32 %v3491, %v3492
      %v3494 = vsel %vm243, %v3454, 0.0
      %v3495 = vadd.f32 %v3493, %v3494
      %v3496 = vsel %vm243, %v3455, 0.0
      %v3497 = vadd.f32 %v3495, %v3496
      %v3498 = vsel %vm243, %v3456, 0.0
      %v3499 = vadd.f32 %v3497, %v3498
      %v3500 = vsel %vm243, %v3457, 0.0
      %v3501 = vadd.f32 %v3499, %v3500
      %v3502 = vsel %vm243, %v3458, 0.0
      %v3503 = vadd.f32 %v3501, %v3502
      %v3504 = vsel %vm243, %v3459, 0.0
      %v3505 = vadd.f32 %v3503, %v3504
      %v3506 = vsel %vm243, %v3460, 0.0
      %v3507 = vadd.f32 %v3505, %v3506
      %v3508 = vsel %vm243, %v3461, 0.0
      %v3509 = vadd.f32 %v3507, %v3508
      %v3510 = vsel %vm243, %v3462, 0.0
      %v3511 = vadd.f32 %v3509, %v3510
      %v3512 = vsel %vm243, %v3463, 0.0
      %v3513 = vadd.f32 %v3511, %v3512
      %v3514 = vsel %vm243, %v3464, 0.0
      %v3515 = vadd.f32 %v3513, %v3514
      %v3516 = vsel %vm243, %v3465, 0.0
      %v3517 = vadd.f32 %v3515, %v3516
      %v3518 = vsel %vm243, %v3466, 0.0
      %v3519 = vadd.f32 %v3517, %v3518
      %v3520 = vsel %vm243, %v3467, 0.0
      %v3521 = vadd.f32 %v3519, %v3520
      %v3522 = vsel %vm243, %v3468, 0.0
      %v3523 = vadd.f32 %v3521, %v3522
      %v3524 = vsel %vm243, %v3469, 0.0
      %v3525 = vadd.f32 %v3523, %v3524
      %v3526 = vsel %vm243, %v3470, 0.0
      %v3527 = vadd.f32 %v3525, %v3526
      %v3528 = vsel %vm243, %v3471, 0.0
      %v3529 = vadd.f32 %v3527, %v3528
      %v3530 = vsel %vm243, %v3472, 0.0
      %v3531 = vadd.f32 %v3529, %v3530
      %v3532 = vsel %vm243, %v3473, 0.0
      %v3533 = vadd.f32 %v3531, %v3532
      %v3534 = vsel %vm243, %v3474, 0.0
      %v3535 = vadd.f32 %v3533, %v3534
      %v3536 = vsel %vm243, %v3475, 0.0
      %v3537 = vadd.f32 %v3535, %v3536
      %v3538 = vsel %vm243, %v3476, 0.0
      %v3539 = vadd.f32 %v3537, %v3538
      %v3540 = vsel %vm243, %v3477, 0.0
      %v3541 = vadd.f32 %v3539, %v3540
      %v3542 = vsel %vm243, %v3478, 0.0
      %v3543 = vadd.f32 %v3541, %v3542
      %v3544 = vsel %vm243, %v3479, 0.0
      %v3545 = vadd.f32 %v3543, %v3544
      %v3546 = vsel %vm243, %v3480, 0.0
      %v3547 = vadd.f32 %v3545, %v3546
      %v3548 = vsel %vm243, %v3481, 0.0
      %v3549 = vadd.f32 %v3547, %v3548
      %v3550 = vsel %vm243, %v3482, 0.0
      %v3551 = vadd.f32 %v3549, %v3550
      %v3552 = vsel %vm243, %v3483, 0.0
      %v3553 = vadd.f32 %v3551, %v3552
      %v3554 = vsel %vm243, %v3484, 0.0
      %v3555 = vadd.f32 %v3553, %v3554
      %v3556 = vrot.slane %v3555, 4
      %v3557 = vadd.f32 %v3555, %v3556
      %v3558 = vrot.slane %v3557, 2
      %v3559 = vadd.f32 %v3557, %v3558
      %v3560 = vrot.slane %v3559, 1
      %v3561 = vadd.f32 %v3559, %v3560
      %vm3562 = vcmask 516096
      %3563 = vst.msk [vmem:[%s238] sm:$0x1] %vm3562, %v3561
      %v3564 = vmul.f32 %v3449, %v3449
      %v3565 = vmul.f32 %v3450, %v3450
      %v3566 = vmul.f32 %v3451, %v3451
      %v3567 = vmul.f32 %v3452, %v3452
      %v3568 = vmul.f32 %v3453, %v3453
      %v3569 = vmul.f32 %v3454, %v3454
      %v3570 = vmul.f32 %v3455, %v3455
      %v3571 = vmul.f32 %v3456, %v3456
      %v3572 = vmul.f32 %v3457, %v3457
      %v3573 = vmul.f32 %v3458, %v3458
      %v3574 = vmul.f32 %v3459, %v3459
      %v3575 = vmul.f32 %v3460, %v3460
      %v3576 = vmul.f32 %v3461, %v3461
      %v3577 = vmul.f32 %v3462, %v3462
      %v3578 = vmul.f32 %v3463, %v3463
      %v3579 = vmul.f32 %v3464, %v3464
      %v3580 = vmul.f32 %v3465, %v3465
      %v3581 = vmul.f32 %v3466, %v3466
      %v3582 = vmul.f32 %v3467, %v3467
      %v3583 = vmul.f32 %v3468, %v3468
      %v3584 = vmul.f32 %v3469, %v3469
      %v3585 = vmul.f32 %v3470, %v3470
      %v3586 = vmul.f32 %v3471, %v3471
      %v3587 = vmul.f32 %v3472, %v3472
      %v3588 = vmul.f32 %v3473, %v3473
      %v3589 = vmul.f32 %v3474, %v3474
      %v3590 = vmul.f32 %v3475, %v3475
      %v3591 = vmul.f32 %v3476, %v3476
      %v3592 = vmul.f32 %v3477, %v3477
      %v3593 = vmul.f32 %v3478, %v3478
      %v3594 = vmul.f32 %v3479, %v3479
      %v3595 = vmul.f32 %v3480, %v3480
      %v3596 = vmul.f32 %v3481, %v3481
      %v3597 = vmul.f32 %v3482, %v3482
      %v3598 = vmul.f32 %v3483, %v3483
      %v3599 = vmul.f32 %v3484, %v3484
      %v3600 = vsel %vm243, %v3564, 0.0
      %v3601 = vsel %vm243, %v3565, 0.0
      %v3602 = vadd.f32 %v3600, %v3601
      %v3603 = vsel %vm243, %v3566, 0.0
      %v3604 = vadd.f32 %v3602, %v3603
      %v3605 = vsel %vm243, %v3567, 0.0
      %v3606 = vadd.f32 %v3604, %v3605
      %v3607 = vsel %vm243, %v3568, 0.0
      %v3608 = vadd.f32 %v3606, %v3607
      %v3609 = vsel %vm243, %v3569, 0.0
      %v3610 = vadd.f32 %v3608, %v3609
      %v3611 = vsel %vm243, %v3570, 0.0
      %v3612 = vadd.f32 %v3610, %v3611
      %v3613 = vsel %vm243, %v3571, 0.0
      %v3614 = vadd.f32 %v3612, %v3613
      %v3615 = vsel %vm243, %v3572, 0.0
      %v3616 = vadd.f32 %v3614, %v3615
      %v3617 = vsel %vm243, %v3573, 0.0
      %v3618 = vadd.f32 %v3616, %v3617
      %v3619 = vsel %vm243, %v3574, 0.0
      %v3620 = vadd.f32 %v3618, %v3619
      %v3621 = vsel %vm243, %v3575, 0.0
      %v3622 = vadd.f32 %v3620, %v3621
      %v3623 = vsel %vm243, %v3576, 0.0
      %v3624 = vadd.f32 %v3622, %v3623
      %v3625 = vsel %vm243, %v3577, 0.0
      %v3626 = vadd.f32 %v3624, %v3625
      %v3627 = vsel %vm243, %v3578, 0.0
      %v3628 = vadd.f32 %v3626, %v3627
      %v3629 = vsel %vm243, %v3579, 0.0
      %v3630 = vadd.f32 %v3628, %v3629
      %v3631 = vsel %vm243, %v3580, 0.0
      %v3632 = vadd.f32 %v3630, %v3631
      %v3633 = vsel %vm243, %v3581, 0.0
      %v3634 = vadd.f32 %v3632, %v3633
      %v3635 = vsel %vm243, %v3582, 0.0
      %v3636 = vadd.f32 %v3634, %v3635
      %v3637 = vsel %vm243, %v3583, 0.0
      %v3638 = vadd.f32 %v3636, %v3637
      %v3639 = vsel %vm243, %v3584, 0.0
      %v3640 = vadd.f32 %v3638, %v3639
      %v3641 = vsel %vm243, %v3585, 0.0
      %v3642 = vadd.f32 %v3640, %v3641
      %v3643 = vsel %vm243, %v3586, 0.0
      %v3644 = vadd.f32 %v3642, %v3643
      %v3645 = vsel %vm243, %v3587, 0.0
      %v3646 = vadd.f32 %v3644, %v3645
      %v3647 = vsel %vm243, %v3588, 0.0
      %v3648 = vadd.f32 %v3646, %v3647
      %v3649 = vsel %vm243, %v3589, 0.0
      %v3650 = vadd.f32 %v3648, %v3649
      %v3651 = vsel %vm243, %v3590, 0.0
      %v3652 = vadd.f32 %v3650, %v3651
      %v3653 = vsel %vm243, %v3591, 0.0
      %v3654 = vadd.f32 %v3652, %v3653
      %v3655 = vsel %vm243, %v3592, 0.0
      %v3656 = vadd.f32 %v3654, %v3655
      %v3657 = vsel %vm243, %v3593, 0.0
      %v3658 = vadd.f32 %v3656, %v3657
      %v3659 = vsel %vm243, %v3594, 0.0
      %v3660 = vadd.f32 %v3658, %v3659
      %v3661 = vsel %vm243, %v3595, 0.0
      %v3662 = vadd.f32 %v3660, %v3661
      %v3663 = vsel %vm243, %v3596, 0.0
      %v3664 = vadd.f32 %v3662, %v3663
      %v3665 = vsel %vm243, %v3597, 0.0
      %v3666 = vadd.f32 %v3664, %v3665
      %v3667 = vsel %vm243, %v3598, 0.0
      %v3668 = vadd.f32 %v3666, %v3667
      %v3669 = vsel %vm243, %v3599, 0.0
      %v3670 = vadd.f32 %v3668, %v3669
      %v3671 = vrot.slane %v3670, 4
      %v3672 = vadd.f32 %v3670, %v3671
      %v3673 = vrot.slane %v3672, 2
      %v3674 = vadd.f32 %v3672, %v3673
      %v3675 = vrot.slane %v3674, 1
      %v3676 = vadd.f32 %v3674, %v3675
      %3677 = vst.msk [vmem:[%s241] sm:$0x1] %vm3562, %v3676
      %p3678 = scmp.lt.s32.totalorder %s17, 1
      %s3679 = scalar_select %p3678, %s17, 1
      %s3680 = smul.addr %s3679, 36
      %s3681 = smul.addr %s3680, 8
      %s3682 = scalar_lea.vmem %s3, %s3681
      %p3683 = scmp.lt.s32.totalorder %s17, 1
      %s3684 = scalar_select %p3683, %s17, 1
      %s3685 = scalar_lea.vmem %s4, %s3684
      %p3686 = scmp.lt.s32.totalorder %s17, 1
      %s3687 = scalar_select %p3686, %s17, 1
      %s3688 = scalar_lea.vmem %s5, %s3687
      // Predicated region
      $region33: #{basenet_forward.5} parent=31 // pred_check
        %p3689 = pneg %p103
      $region34: #{basenet_forward.5} parent=31 // pred_check_branch
        %3691 = sbr.rel (%p3689) target = $region36
      $region35: #{basenet_forward.5} parent=31 // pred_region
        _
      $region36: #{basenet_forward.5} parent=31 // pred_fallthru
        _
      // Predicated region
      $region37: #{basenet_forward.5} parent=31 // pred_check
        %p3692 = pneg %p129
      $region38: #{basenet_forward.5} parent=31 // pred_check_branch
        %3694 = sbr.rel (%p3692) target = $region40
      $region39: #{basenet_forward.5} parent=31 // pred_region
        _
      $region40: #{basenet_forward.5} parent=31 // pred_fallthru
        _
      // Predicated region
      $region41: #{basenet_forward.5} parent=31 // pred_check
        %p3695 = pneg %p155
      $region42: #{basenet_forward.5} parent=31 // pred_check_branch
        %3697 = sbr.rel (%p3695) target = $region44
      $region43: #{basenet_forward.5} parent=31 // pred_region
        _
      $region44: #{basenet_forward.5} parent=31 // pred_fallthru
        _
    $region32: #{basenet_forward.5} parent=5 // pred_fallthru
      _
    %p3698 = scmp.le.s32.totalorder 2, %s12
    // Predicated region
    $region45: #{basenet_forward.5} parent=5 // pred_check
      %p3699 = pneg %p3698
    $region46: #{basenet_forward.5} parent=5 // pred_check_branch
      %3701 = sbr.rel (%p3699) target = $region48
    $region47: #{basenet_forward.5} parent=5 // pred_region
      %s3702 = ssub.s32 %s12, 2
      // Predicated region
      $region49: #{basenet_forward.5} parent=47 // pred_check
        %p3703 = pneg %p109
      $region50: #{basenet_forward.5} parent=47 // pred_check_branch
        %3705 = sbr.rel (%p3703) target = $region52
      $region51: #{basenet_forward.5} parent=47 // pred_region
        %p3706 = scmp.lt.s32.totalorder %s18, 1
        %s3707 = scalar_select %p3706, %s18, 1
        %s3708 = smul.addr %s3707, 36
        %s3709 = smul.addr %s3708, 8
        %s3710 = scalar_lea.vmem %s3, %s3709
      $region52: #{basenet_forward.5} parent=47 // pred_fallthru
        _
      // Predicated region
      $region53: #{basenet_forward.5} parent=47 // pred_check
        %p3711 = pneg %p135
      $region54: #{basenet_forward.5} parent=47 // pred_check_branch
        %3713 = sbr.rel (%p3711) target = $region56
      $region55: #{basenet_forward.5} parent=47 // pred_region
        %p3714 = scmp.lt.s32.totalorder %s18, 1
        %s3715 = scalar_select %p3714, %s18, 1
        %s3716 = scalar_lea.vmem %s4, %s3715
      $region56: #{basenet_forward.5} parent=47 // pred_fallthru
        _
      // Predicated region
      $region57: #{basenet_forward.5} parent=47 // pred_check
        %p3717 = pneg %p161
      $region58: #{basenet_forward.5} parent=47 // pred_check_branch
        %3719 = sbr.rel (%p3717) target = $region60
      $region59: #{basenet_forward.5} parent=47 // pred_region
        %p3720 = scmp.lt.s32.totalorder %s18, 1
        %s3721 = scalar_select %p3720, %s18, 1
        %s3722 = scalar_lea.vmem %s5, %s3721
      $region60: #{basenet_forward.5} parent=47 // pred_fallthru
        _
    $region48: #{basenet_forward.5} parent=5 // pred_fallthru
      _
  $region6: #{basenet_forward.5} parent=0 // loop_footer
    %s16 = sadd.s32 1, %s12
  $region7: #{basenet_forward.5} parent=0 // loop_footer_branch
    %11 = sbr.rel target = $region3
  $region8: #{basenet_forward.5} parent=0 // loop_exit
    _

// kernel: basenet_forward.7
$region0: #{basenet_forward.7}
  #allocation0 [shape = 'u32[]', space=smem, size = 0x4, offset = 0x4, fixed_abs, tag = 'smem constant byte address 0x4 - core index']
  #allocation1 [shape = 'u32[72,128]{1,0:T(1,128)}', space=vmem, size = 0x9000, scoped, tag = 'internal scratch']
  #allocation2 [shape = 'f32[288,64]{1,0:T(8,128)}', space=vmem, size = 0x24000, scoped, tag = 'scratch operand']
  %s0 = inlined_call_operand.vmem [shape: f32[2,328,64], index: 0, kind: input, shape index: {}]
  %s1 = inlined_call_operand.vmem [shape: bf16[9,64,64], index: 1, kind: input, shape index: {}]
  %s2 = inlined_call_operand.vmem [shape: f32[288,1], index: 2, kind: input, shape index: {}]
  %s3 = inlined_call_operand.vmem [shape: f32[2,288,64], index: 3, kind: output, shape index: {0}]
  %s4 = inlined_call_operand.vmem [shape: f32[2,1,64], index: 4, kind: output, shape index: {1}]
  %s5 = inlined_call_operand.vmem [shape: f32[2,1,64], index: 5, kind: output, shape index: {2}]
  %6 = xla_tuple %s3, %s4, %s5
  %s7 = sld [smem:[#allocation0]]
  $region61: #{basenet_forward.7} parent=0
    _
  %s9 = ssub.s32 1, %s7
  %s10 = scalar_select 0, %s9, %s7
  loop: start=0, step=1, limit=4
  $region2: #{basenet_forward.7} parent=0 // loop_pre_header
    _
  $region3: #{basenet_forward.7} parent=0 // loop_header
    %s12 = sphi 0, %s16
    %p13 = scmp.ge.s32.totalorder %s12, 4
    %s22 = sphi 0, %s24
    %s25 = sphi 0, %s22
    %s26 = sphi 0, %s25
    %s42 = sphi 0, %s26
    %s46 = sphi 0, %s46
    %s48 = sphi 0, %s46
    %s49 = sphi 0, %s48
    %s63 = sphi 0, %s49
    %s67 = sphi 0, %s67
    %s69 = sphi 0, %s67
    %s70 = sphi 0, %s69
    %s84 = sphi 0, %s70
    %s90 = sphi 0, %s92
    %s93 = sphi 0, %s90
    %s94 = sphi 0, %s93
    %s110 = sphi 0, %s94
    %s116 = sphi 0, %s118
    %s119 = sphi 0, %s116
    %s120 = sphi 0, %s119
    %s136 = sphi 0, %s120
    %s142 = sphi 0, %s144
    %s145 = sphi 0, %s142
    %s146 = sphi 0, %s145
    %s162 = sphi 0, %s146
  $region4: #{basenet_forward.7} parent=0 // loop_header_branch
    %15 = sbr.rel (%p13) target = $region8
  $region5: #{basenet_forward.7} parent=0 // loop_body
    %s17 = ssub.s32 %s12, 1
    %s18 = ssub.s32 %s12, 2
    %s19 = sadd.s32 %s12, 1
    %s20 = ssub.s32 %s12, %s19
    %p21 = scmp.eq.s32.totalorder %s20, 0
    %s23 = sadd.s32 %s22, 1
    %s24 = scalar_select %p21, %s22, %s23
    %p27 = pneg %p21
    %p28 = scmp.eq.s32.totalorder %s12, 1
    %p29 = por %p27, %p28
    %p30 = scmp.ne.s32.totalorder %s22, %s25
    %p31 = scmp.eq.s32.totalorder %s12, 0
    %p32 = por %p30, %p31
    %p33 = scmp.ne.s32.totalorder %s22, %s25
    %p34 = scmp.eq.s32.totalorder %s17, 1
    %p35 = por %p33, %p34
    %p36 = scmp.ne.s32.totalorder %s25, %s26
    %p37 = scmp.eq.s32.totalorder %s17, 0
    %p38 = por %p36, %p37
    %p39 = scmp.ne.s32.totalorder %s25, %s26
    %p40 = scmp.eq.s32.totalorder %s18, 1
    %p41 = por %p39, %p40
    %p43 = scmp.ne.s32.totalorder %s26, %s42
    %p44 = scmp.eq.s32.totalorder %s18, 0
    %p45 = por %p43, %p44
    %s47 = sadd.s32 %s46, 1
    %p50 = scmp.eq.s32.totalorder %s12, 1
    %p51 = scmp.ne.s32.totalorder %s46, %s48
    %p52 = scmp.eq.s32.totalorder %s12, 0
    %p53 = por %p51, %p52
    %p54 = scmp.ne.s32.totalorder %s46, %s48
    %p55 = scmp.eq.s32.totalorder %s17, 1
    %p56 = por %p54, %p55
    %p57 = scmp.ne.s32.totalorder %s48, %s49
    %p58 = scmp.eq.s32.totalorder %s17, 0
    %p59 = por %p57, %p58
    %p60 = scmp.ne.s32.totalorder %s48, %s49
    %p61 = scmp.eq.s32.totalorder %s18, 1
    %p62 = por %p60, %p61
    %p64 = scmp.ne.s32.totalorder %s49, %s63
    %p65 = scmp.eq.s32.totalorder %s18, 0
    %p66 = por %p64, %p65
    %s68 = sadd.s32 %s67, 1
    %p71 = scmp.eq.s32.totalorder %s12, 1
    %p72 = scmp.ne.s32.totalorder %s67, %s69
    %p73 = scmp.eq.s32.totalorder %s12, 0
    %p74 = por %p72, %p73
    %p75 = scmp.ne.s32.totalorder %s67, %s69
    %p76 = scmp.eq.s32.totalorder %s17, 1
    %p77 = por %p75, %p76
    %p78 = scmp.ne.s32.totalorder %s69, %s70
    %p79 = scmp.eq.s32.totalorder %s17, 0
    %p80 = por %p78, %p79
    %p81 = scmp.ne.s32.totalorder %s69, %s70
    %p82 = scmp.eq.s32.totalorder %s18, 1
    %p83 = por %p81, %p82
    %p85 = scmp.ne.s32.totalorder %s70, %s84
    %p86 = scmp.eq.s32.totalorder %s18, 0
    %p87 = por %p85, %p86
    %s88 = ssub.s32 %s12, %s19
    %p89 = scmp.eq.s32.totalorder %s88, 0
    %s91 = sadd.s32 %s90, 1
    %s92 = scalar_select %p89, %s90, %s91
    %p95 = pneg %p89
    %p96 = scmp.eq.s32.totalorder %s12, 1
    %p97 = por %p95, %p96
    %p98 = scmp.ne.s32.totalorder %s90, %s93
    %p99 = scmp.eq.s32.totalorder %s12, 0
    %p100 = por %p98, %p99
    %p101 = scmp.ne.s32.totalorder %s90, %s93
    %p102 = scmp.eq.s32.totalorder %s17, 1
    %p103 = por %p101, %p102
    %p104 = scmp.ne.s32.totalorder %s93, %s94
    %p105 = scmp.eq.s32.totalorder %s17, 0
    %p106 = por %p104, %p105
    %p107 = scmp.ne.s32.totalorder %s93, %s94
    %p108 = scmp.eq.s32.totalorder %s18, 1
    %p109 = por %p107, %p108
    %p111 = scmp.ne.s32.totalorder %s94, %s110
    %p112 = scmp.eq.s32.totalorder %s18, 0
    %p113 = por %p111, %p112
    %s114 = ssub.s32 %s12, %s19
    %p115 = scmp.eq.s32.totalorder %s114, 0
    %s117 = sadd.s32 %s116, 1
    %s118 = scalar_select %p115, %s116, %s117
    %p121 = pneg %p115
    %p122 = scmp.eq.s32.totalorder %s12, 1
    %p123 = por %p121, %p122
    %p124 = scmp.ne.s32.totalorder %s116, %s119
    %p125 = scmp.eq.s32.totalorder %s12, 0
    %p126 = por %p124, %p125
    %p127 = scmp.ne.s32.totalorder %s116, %s119
    %p128 = scmp.eq.s32.totalorder %s17, 1
    %p129 = por %p127, %p128
    %p130 = scmp.ne.s32.totalorder %s119, %s120
    %p131 = scmp.eq.s32.totalorder %s17, 0
    %p132 = por %p130, %p131
    %p133 = scmp.ne.s32.totalorder %s119, %s120
    %p134 = scmp.eq.s32.totalorder %s18, 1
    %p135 = por %p133, %p134
    %p137 = scmp.ne.s32.totalorder %s120, %s136
    %p138 = scmp.eq.s32.totalorder %s18, 0
    %p139 = por %p137, %p138
    %s140 = ssub.s32 %s12, %s19
    %p141 = scmp.eq.s32.totalorder %s140, 0
    %s143 = sadd.s32 %s142, 1
    %s144 = scalar_select %p141, %s142, %s143
    %p147 = pneg %p141
    %p148 = scmp.eq.s32.totalorder %s12, 1
    %p149 = por %p147, %p148
    %p150 = scmp.ne.s32.totalorder %s142, %s145
    %p151 = scmp.eq.s32.totalorder %s12, 0
    %p152 = por %p150, %p151
    %p153 = scmp.ne.s32.totalorder %s142, %s145
    %p154 = scmp.eq.s32.totalorder %s17, 1
    %p155 = por %p153, %p154
    %p156 = scmp.ne.s32.totalorder %s145, %s146
    %p157 = scmp.eq.s32.totalorder %s17, 0
    %p158 = por %p156, %p157
    %p159 = scmp.ne.s32.totalorder %s145, %s146
    %p160 = scmp.eq.s32.totalorder %s18, 1
    %p161 = por %p159, %p160
    %p163 = scmp.ne.s32.totalorder %s146, %s162
    %p164 = scmp.eq.s32.totalorder %s18, 0
    %p165 = por %p163, %p164
    %p166 = scmp.le.s32.totalorder 1, %s12
    %p167 = scmp.lt.s32.totalorder %s12, 3
    %p168 = pnand %p166, %p167
    %p169 = pneg %p168
    // Predicated region
    $region9: #{basenet_forward.7} parent=5 // pred_check
      _
    $region10: #{basenet_forward.7} parent=5 // pred_check_branch
      %171 = sbr.rel (%p168) target = $region12
    $region11: #{basenet_forward.7} parent=5 // pred_region
      %s172 = ssub.s32 %s12, 1
      // Predicated region
      $region13: #{basenet_forward.7} parent=11 // pred_check
        %p173 = pneg %p59
      $region14: #{basenet_forward.7} parent=11 // pred_check_branch
        %175 = sbr.rel (%p173) target = $region16
      $region15: #{basenet_forward.7} parent=11 // pred_region
        _
      $region16: #{basenet_forward.7} parent=11 // pred_fallthru
        _
      // Predicated region
      $region17: #{basenet_forward.7} parent=11 // pred_check
        %p176 = pneg %p80
      $region18: #{basenet_forward.7} parent=11 // pred_check_branch
        %178 = sbr.rel (%p176) target = $region20
      $region19: #{basenet_forward.7} parent=11 // pred_region
        _
      $region20: #{basenet_forward.7} parent=11 // pred_fallthru
        _
    $region12: #{basenet_forward.7} parent=5 // pred_fallthru
      _
    %p179 = scmp.lt.s32.totalorder %s12, 2
    // Predicated region
    $region21: #{basenet_forward.7} parent=5 // pred_check
      %p180 = pneg %p179
    $region22: #{basenet_forward.7} parent=5 // pred_check_branch
      %182 = sbr.rel (%p180) target = $region24
    $region23: #{basenet_forward.7} parent=5 // pred_region
      // Predicated region
      $region25: #{basenet_forward.7} parent=23 // pred_check
        %p183 = pneg %p32
      $region26: #{basenet_forward.7} parent=23 // pred_check_branch
        %185 = sbr.rel (%p183) target = $region28
      $region27: #{basenet_forward.7} parent=23 // pred_region
        %p186 = scmp.lt.s32.totalorder %s12, 1
        %s187 = scalar_select %p186, %s12, 1
        %s188 = smul.addr %s187, 41
        %s189 = smul.addr %s188, 8
        %s190 = scalar_lea.vmem %s0, %s189
      $region28: #{basenet_forward.7} parent=23 // pred_fallthru
        _
    $region24: #{basenet_forward.7} parent=5 // pred_fallthru
      _
    %p191 = scmp.le.s32.totalorder 1, %s12
    %p192 = scmp.lt.s32.totalorder %s12, 3
    %p193 = pnand %p191, %p192
    %p194 = pneg %p193
    // Predicated region
    $region29: #{basenet_forward.7} parent=5 // pred_check
      _
    $region30: #{basenet_forward.7} parent=5 // pred_check_branch
      %196 = sbr.rel (%p193) target = $region32
    $region31: #{basenet_forward.7} parent=5 // pred_region
      %s197 = ssub.s32 %s12, 1
      %p198 = scmp.lt.s32.totalorder %s17, 1
      %s199 = scalar_select %p198, %s17, 1
      %s200 = smul.addr %s199, 41
      %s201 = smul.addr %s200, 8
      %s202 = scalar_lea.vmem %s0, %s201
      %p203 = pneg %p38
      %p204 = pneg %p35
      %p205 = pneg %p59
      %p206 = pneg %p56
      %p207 = pneg %p80
      %p208 = pneg %p77
      %p209 = pneg %p106
      %p210 = pneg %p103
      %p211 = scmp.lt.s32.totalorder %s17, 1
      %s212 = scalar_select %p211, %s17, 1
      %s213 = smul.addr %s212, 36
      %s214 = smul.addr %s213, 8
      %s215 = scalar_lea.vmem %s3, %s214
      %p216 = pneg %p132
      %p217 = pneg %p129
      %p218 = scmp.lt.s32.totalorder %s17, 1
      %s219 = scalar_select %p218, %s17, 1
      %s220 = scalar_lea.vmem %s4, %s219
      %p221 = pneg %p158
      %p222 = pneg %p155
      %p223 = scmp.lt.s32.totalorder %s17, 1
      %s224 = scalar_select %p223, %s17, 1
      %s225 = scalar_lea.vmem %s5, %s224
      %p226 = scmp.lt.s32.totalorder %s17, 1
      %s227 = scalar_select %p226, %s17, 1
      %s228 = smul.addr %s227, 41
      %s229 = smul.addr %s228, 8
      %s230 = scalar_lea.vmem %s0, %s229
      %p231 = scmp.lt.s32.totalorder %s17, 1
      %s232 = scalar_select %p231, %s17, 1
      %s233 = smul.addr %s232, 36
      %s234 = smul.addr %s233, 8
      %s235 = scalar_lea.vmem %s3, %s234
      %p236 = scmp.lt.s32.totalorder %s17, 1
      %s237 = scalar_select %p236, %s17, 1
      %s238 = scalar_lea.vmem %s4, %s237
      %p239 = scmp.lt.s32.totalorder %s17, 1
      %s240 = scalar_select %p239, %s17, 1
      %s241 = scalar_lea.vmem %s5, %s240
      %vm243 = vcmask 523264
      %244 = vst.msk [vmem:[#allocation2] sm:$0xff] %vm243, 0.0
      %245 = vst.msk [vmem:[#allocation2 + $0x8] sm:$0xff] %vm243, 0.0
      %246 = vst.msk [vmem:[#allocation2 + $0x10] sm:$0xff] %vm243, 0.0
      %247 = vst.msk [vmem:[#allocation2 + $0x18] sm:$0xff] %vm243, 0.0
      %248 = vst.msk [vmem:[#allocation2 + $0x20] sm:$0xff] %vm243, 0.0
      %249 = vst.msk [vmem:[#allocation2 + $0x28] sm:$0xff] %vm243, 0.0
      %250 = vst.msk [vmem:[#allocation2 + $0x30] sm:$0xff] %vm243, 0.0
      %251 = vst.msk [vmem:[#allocation2 + $0x38] sm:$0xff] %vm243, 0.0
      %252 = vst.msk [vmem:[#allocation2 + $0x40] sm:$0xff] %vm243, 0.0
      %253 = vst.msk [vmem:[#allocation2 + $0x48] sm:$0xff] %vm243, 0.0
      %254 = vst.msk [vmem:[#allocation2 + $0x50] sm:$0xff] %vm243, 0.0
      %255 = vst.msk [vmem:[#allocation2 + $0x58] sm:$0xff] %vm243, 0.0
      %256 = vst.msk [vmem:[#allocation2 + $0x60] sm:$0xff] %vm243, 0.0
      %257 = vst.msk [vmem:[#allocation2 + $0x68] sm:$0xff] %vm243, 0.0
      %258 = vst.msk [vmem:[#allocation2 + $0x70] sm:$0xff] %vm243, 0.0
      %259 = vst.msk [vmem:[#allocation2 + $0x78] sm:$0xff] %vm243, 0.0
      %260 = vst.msk [vmem:[#allocation2 + $0x80] sm:$0xff] %vm243, 0.0
      %261 = vst.msk [vmem:[#allocation2 + $0x88] sm:$0xff] %vm243, 0.0
      %262 = vst.msk [vmem:[#allocation2 + $0x90] sm:$0xff] %vm243, 0.0
      %263 = vst.msk [vmem:[#allocation2 + $0x98] sm:$0xff] %vm243, 0.0
      %264 = vst.msk [vmem:[#allocation2 + $0xa0] sm:$0xff] %vm243, 0.0
      %265 = vst.msk [vmem:[#allocation2 + $0xa8] sm:$0xff] %vm243, 0.0
      %266 = vst.msk [vmem:[#allocation2 + $0xb0] sm:$0xff] %vm243, 0.0
      %267 = vst.msk [vmem:[#allocation2 + $0xb8] sm:$0xff] %vm243, 0.0
      %268 = vst.msk [vmem:[#allocation2 + $0xc0] sm:$0xff] %vm243, 0.0
      %269 = vst.msk [vmem:[#allocation2 + $0xc8] sm:$0xff] %vm243, 0.0
      %270 = vst.msk [vmem:[#allocation2 + $0xd0] sm:$0xff] %vm243, 0.0
      %271 = vst.msk [vmem:[#allocation2 + $0xd8] sm:$0xff] %vm243, 0.0
      %272 = vst.msk [vmem:[#allocation2 + $0xe0] sm:$0xff] %vm243, 0.0
      %273 = vst.msk [vmem:[#allocation2 + $0xe8] sm:$0xff] %vm243, 0.0
      %274 = vst.msk [vmem:[#allocation2 + $0xf0] sm:$0xff] %vm243, 0.0
      %275 = vst.msk [vmem:[#allocation2 + $0xf8] sm:$0xff] %vm243, 0.0
      %276 = vst.msk [vmem:[#allocation2 + $0x100] sm:$0xff] %vm243, 0.0
      %277 = vst.msk [vmem:[#allocation2 + $0x108] sm:$0xff] %vm243, 0.0
      %278 = vst.msk [vmem:[#allocation2 + $0x110] sm:$0xff] %vm243, 0.0
      %279 = vst.msk [vmem:[#allocation2 + $0x118] sm:$0xff] %vm243, 0.0
      %v280 = vld [vmem:[%s230] sm:$0xff]
      %v281 = vld [vmem:[%s230 + $0x8] sm:$0xff]
      %v282 = vld [vmem:[%s230 + $0x10] sm:$0xff]
      %v283 = vld [vmem:[%s230 + $0x18] sm:$0xff]
      %v284 = vld [vmem:[%s230 + $0x20] sm:$0xff]
      %v285 = vld [vmem:[%s230 + $0x28] sm:$0xff]
      %v286 = vld [vmem:[%s230 + $0x30] sm:$0xff]
      %v287 = vld [vmem:[%s230 + $0x38] sm:$0xff]
      %v288 = vld [vmem:[%s230 + $0x40] sm:$0xff]
      %v289 = vld [vmem:[%s230 + $0x48] sm:$0xff]
      %v290 = vld [vmem:[%s230 + $0x50] sm:$0xff]
      %v291 = vld [vmem:[%s230 + $0x58] sm:$0xff]
      %v292 = vld [vmem:[%s230 + $0x60] sm:$0xff]
      %v293 = vld [vmem:[%s230 + $0x68] sm:$0xff]
      %v294 = vld [vmem:[%s230 + $0x70] sm:$0xff]
      %v295 = vld [vmem:[%s230 + $0x78] sm:$0xff]
      %v296 = vld [vmem:[%s230 + $0x80] sm:$0xff]
      %v297 = vld [vmem:[%s230 + $0x88] sm:$0xff]
      %v298 = vld [vmem:[%s230 + $0x90] sm:$0xff]
      %v299 = vld [vmem:[%s230 + $0x98] sm:$0xff]
      %v300 = vld [vmem:[%s230 + $0xa0] sm:$0xff]
      %v301 = vld [vmem:[%s230 + $0xa8] sm:$0xff]
      %v302 = vld [vmem:[%s230 + $0xb0] sm:$0xff]
      %v303 = vld [vmem:[%s230 + $0xb8] sm:$0xff]
      %v304 = vld [vmem:[%s230 + $0xc0] sm:$0xff]
      %v305 = vld [vmem:[%s230 + $0xc8] sm:$0xff]
      %v306 = vld [vmem:[%s230 + $0xd0] sm:$0xff]
      %v307 = vld [vmem:[%s230 + $0xd8] sm:$0xff]
      %v308 = vld [vmem:[%s230 + $0xe0] sm:$0xff]
      %v309 = vld [vmem:[%s230 + $0xe8] sm:$0xff]
      %v310 = vld [vmem:[%s230 + $0xf0] sm:$0xff]
      %v311 = vld [vmem:[%s230 + $0xf8] sm:$0xff]
      %v312 = vld [vmem:[%s230 + $0x100] sm:$0xff]
      %v313 = vld [vmem:[%s230 + $0x108] sm:$0xff]
      %v314 = vld [vmem:[%s230 + $0x110] sm:$0xff]
      %v315 = vld [vmem:[%s230 + $0x118] sm:$0xff]
      %v316 = vpack.c.bf16 %v281, %v280
      %v317 = vpack.c.bf16 %v283, %v282
      %v318 = vpack.c.bf16 %v285, %v284
      %v319 = vpack.c.bf16 %v287, %v286
      %v320 = vpack.c.bf16 %v289, %v288
      %v321 = vpack.c.bf16 %v291, %v290
      %v322 = vpack.c.bf16 %v293, %v292
      %v323 = vpack.c.bf16 %v295, %v294
      %v324 = vpack.c.bf16 %v297, %v296
      %v325 = vpack.c.bf16 %v299, %v298
      %v326 = vpack.c.bf16 %v301, %v300
      %v327 = vpack.c.bf16 %v303, %v302
      %v328 = vpack.c.bf16 %v305, %v304
      %v329 = vpack.c.bf16 %v307, %v306
      %v330 = vpack.c.bf16 %v309, %v308
      %v331 = vpack.c.bf16 %v311, %v310
      %v332 = vpack.c.bf16 %v313, %v312
      %v333 = vpack.c.bf16 %v315, %v314
      %v334 = vld [vmem:[#allocation2] sm:$0xff]
      %v335 = vld [vmem:[#allocation2 + $0x8] sm:$0xff]
      %v336 = vld [vmem:[#allocation2 + $0x10] sm:$0xff]
      %v337 = vld [vmem:[#allocation2 + $0x18] sm:$0xff]
      %v338 = vld [vmem:[#allocation2 + $0x20] sm:$0xff]
      %v339 = vld [vmem:[#allocation2 + $0x28] sm:$0xff]
      %v340 = vld [vmem:[#allocation2 + $0x30] sm:$0xff]
      %v341 = vld [vmem:[#allocation2 + $0x38] sm:$0xff]
      %v342 = vld [vmem:[#allocation2 + $0x40] sm:$0xff]
      %v343 = vld [vmem:[#allocation2 + $0x48] sm:$0xff]
      %v344 = vld [vmem:[#allocation2 + $0x50] sm:$0xff]
      %v345 = vld [vmem:[#allocation2 + $0x58] sm:$0xff]
      %v346 = vld [vmem:[#allocation2 + $0x60] sm:$0xff]
      %v347 = vld [vmem:[#allocation2 + $0x68] sm:$0xff]
      %v348 = vld [vmem:[#allocation2 + $0x70] sm:$0xff]
      %v349 = vld [vmem:[#allocation2 + $0x78] sm:$0xff]
      %v350 = vld [vmem:[#allocation2 + $0x80] sm:$0xff]
      %v351 = vld [vmem:[#allocation2 + $0x88] sm:$0xff]
      %v352 = vld [vmem:[#allocation2 + $0x90] sm:$0xff]
      %v353 = vld [vmem:[#allocation2 + $0x98] sm:$0xff]
      %v354 = vld [vmem:[#allocation2 + $0xa0] sm:$0xff]
      %v355 = vld [vmem:[#allocation2 + $0xa8] sm:$0xff]
      %v356 = vld [vmem:[#allocation2 + $0xb0] sm:$0xff]
      %v357 = vld [vmem:[#allocation2 + $0xb8] sm:$0xff]
      %v358 = vld [vmem:[#allocation2 + $0xc0] sm:$0xff]
      %v359 = vld [vmem:[#allocation2 + $0xc8] sm:$0xff]
      %v360 = vld [vmem:[#allocation2 + $0xd0] sm:$0xff]
      %v361 = vld [vmem:[#allocation2 + $0xd8] sm:$0xff]
      %v362 = vld [vmem:[#allocation2 + $0xe0] sm:$0xff]
      %v363 = vld [vmem:[#allocation2 + $0xe8] sm:$0xff]
      %v364 = vld [vmem:[#allocation2 + $0xf0] sm:$0xff]
      %v365 = vld [vmem:[#allocation2 + $0xf8] sm:$0xff]
      %v366 = vld [vmem:[#allocation2 + $0x100] sm:$0xff]
      %v367 = vld [vmem:[#allocation2 + $0x108] sm:$0xff]
      %v368 = vld [vmem:[#allocation2 + $0x110] sm:$0xff]
      %v369 = vld [vmem:[#allocation2 + $0x118] sm:$0xff]
      %v370 = vld [vmem:[%s1] sm:$0xf]
      %v371 = vld [vmem:[%s1 + $0x4] sm:$0xf]
      %v372 = vld [vmem:[%s1 + $0x8] sm:$0xf]
      %v373 = vld [vmem:[%s1 + $0xc] sm:$0xf]
      %v374 = vld [vmem:[%s1 + $0x10] sm:$0xf]
      %v375 = vld [vmem:[%s1 + $0x14] sm:$0xf]
      %v376 = vld [vmem:[%s1 + $0x18] sm:$0xf]
      %v377 = vld [vmem:[%s1 + $0x1c] sm:$0xf]
      %v386 = vunpack.c.l.b16 %v370
      %v387 = vunpack.c.l.b16 %v371
      %v388 = vunpack.c.l.b16 %v372
      %v389 = vunpack.c.l.b16 %v373
      %v390 = vunpack.c.l.b16 %v374
      %v391 = vunpack.c.l.b16 %v375
      %v392 = vunpack.c.l.b16 %v376
      %v393 = vunpack.c.l.b16 %v377
      %v394 = vpack.c.b16 %v387, %v386
      %v395 = vpack.c.b16 %v389, %v388
      %v396 = vpack.c.b16 %v391, %v390
      %v397 = vpack.c.b16 %v393, %v392
      %v403 = vsel %vm243, %v316, 0
      %v406 = vsel %vm243, %v317, 0
      %v409 = vsel %vm243, %v318, 0
      %v412 = vsel %vm243, %v319, 0
      %v415 = vsel %vm243, %v320, 0
      %v418 = vsel %vm243, %v321, 0
      %v421 = vsel %vm243, %v322, 0
      %v424 = vsel %vm243, %v323, 0
      %v427 = vsel %vm243, %v324, 0
      %v430 = vsel %vm243, %v325, 0
      %v433 = vsel %vm243, %v326, 0
      %v436 = vsel %vm243, %v327, 0
      %v439 = vsel %vm243, %v328, 0
      %v442 = vsel %vm243, %v329, 0
      %v445 = vsel %vm243, %v330, 0
      %v448 = vsel %vm243, %v331, 0
      %v451 = vsel %vm243, %v332, 0
      %v454 = vsel %vm243, %v333, 0
      %456 = vmatpush.bf16.msra.mxu0 0
      %457 = vmatpush.bf16.msra.mxu0 0
      %458 = vmatpush.bf16.msra.mxu0 0
      %459 = vmatpush.bf16.msra.mxu0 0
      %460 = vmatpush.bf16.msra.mxu0 %v397
      %461 = vmatpush.bf16.msra.mxu0 %v396
      %462 = vmatpush.bf16.msra.mxu0 %v395
      %463 = vmatpush.bf16.msra.mxu0 %v394
      %464 = vmatmul.bf16.gmra.mxu0 %v403
      %v465 = vpop.f32.mrf.mxu0
      %v466 = vadd.f32 0.0, %v465
      %v467 = vpop.f32.mrf.mxu0
      %v468 = vadd.f32 0.0, %v467
      %469 = vmatmul.bf16.gmra.mxu0 %v406
      %v470 = vpop.f32.mrf.mxu0
      %v471 = vadd.f32 0.0, %v470
      %v472 = vpop.f32.mrf.mxu0
      %v473 = vadd.f32 0.0, %v472
      %474 = vmatmul.bf16.gmra.mxu0 %v409
      %v475 = vpop.f32.mrf.mxu0
      %v476 = vadd.f32 0.0, %v475
      %v477 = vpop.f32.mrf.mxu0
      %v478 = vadd.f32 0.0, %v477
      %479 = vmatmul.bf16.gmra.mxu0 %v412
      %v480 = vpop.f32.mrf.mxu0
      %v481 = vadd.f32 0.0, %v480
      %v482 = vpop.f32.mrf.mxu0
      %v483 = vadd.f32 0.0, %v482
      %484 = vmatmul.bf16.gmra.mxu0 %v415
      %v485 = vpop.f32.mrf.mxu0
      %v486 = vadd.f32 0.0, %v485
      %v487 = vpop.f32.mrf.mxu0
      %v488 = vadd.f32 0.0, %v487
      %489 = vmatmul.bf16.gmra.mxu0 %v418
      %v490 = vpop.f32.mrf.mxu0
      %v491 = vadd.f32 0.0, %v490
      %v492 = vpop.f32.mrf.mxu0
      %v493 = vadd.f32 0.0, %v492
      %494 = vmatmul.bf16.gmra.mxu0 %v421
      %v495 = vpop.f32.mrf.mxu0
      %v496 = vadd.f32 0.0, %v495
      %v497 = vpop.f32.mrf.mxu0
      %v498 = vadd.f32 0.0, %v497
      %499 = vmatmul.bf16.gmra.mxu0 %v424
      %v500 = vpop.f32.mrf.mxu0
      %v501 = vadd.f32 0.0, %v500
      %v502 = vpop.f32.mrf.mxu0
      %v503 = vadd.f32 0.0, %v502
      %504 = vmatmul.bf16.gmra.mxu0 %v427
      %v505 = vpop.f32.mrf.mxu0
      %v506 = vadd.f32 0.0, %v505
      %v507 = vpop.f32.mrf.mxu0
      %v508 = vadd.f32 0.0, %v507
      %509 = vmatmul.bf16.gmra.mxu0 %v430
      %v510 = vpop.f32.mrf.mxu0
      %v511 = vadd.f32 0.0, %v510
      %v512 = vpop.f32.mrf.mxu0
      %v513 = vadd.f32 0.0, %v512
      %514 = vmatmul.bf16.gmra.mxu0 %v433
      %v515 = vpop.f32.mrf.mxu0
      %v516 = vadd.f32 0.0, %v515
      %v517 = vpop.f32.mrf.mxu0
      %v518 = vadd.f32 0.0, %v517
      %519 = vmatmul.bf16.gmra.mxu0 %v436
      %v520 = vpop.f32.mrf.mxu0
      %v521 = vadd.f32 0.0, %v520
      %v522 = vpop.f32.mrf.mxu0
      %v523 = vadd.f32 0.0, %v522
      %524 = vmatmul.bf16.gmra.mxu0 %v439
      %v525 = vpop.f32.mrf.mxu0
      %v526 = vadd.f32 0.0, %v525
      %v527 = vpop.f32.mrf.mxu0
      %v528 = vadd.f32 0.0, %v527
      %529 = vmatmul.bf16.gmra.mxu0 %v442
      %v530 = vpop.f32.mrf.mxu0
      %v531 = vadd.f32 0.0, %v530
      %v532 = vpop.f32.mrf.mxu0
      %v533 = vadd.f32 0.0, %v532
      %534 = vmatmul.bf16.gmra.mxu0 %v445
      %v535 = vpop.f32.mrf.mxu0
      %v536 = vadd.f32 0.0, %v535
      %v537 = vpop.f32.mrf.mxu0
      %v538 = vadd.f32 0.0, %v537
      %539 = vmatmul.bf16.gmra.mxu0 %v448
      %v540 = vpop.f32.mrf.mxu0
      %v541 = vadd.f32 0.0, %v540
      %v542 = vpop.f32.mrf.mxu0
      %v543 = vadd.f32 0.0, %v542
      %544 = vmatmul.bf16.gmra.mxu0 %v451
      %v545 = vpop.f32.mrf.mxu0
      %v546 = vadd.f32 0.0, %v545
      %v547 = vpop.f32.mrf.mxu0
      %v548 = vadd.f32 0.0, %v547
      %549 = vmatmul.bf16.gmra.mxu0 %v454
      %v550 = vpop.f32.mrf.mxu0
      %v551 = vadd.f32 0.0, %v550
      %v552 = vpop.f32.mrf.mxu0
      %v553 = vadd.f32 0.0, %v552
      %554 = vdwg.mxu0
      %v555 = vadd.f32 %v334, %v466
      %v556 = vadd.f32 %v335, %v468
      %v557 = vadd.f32 %v336, %v471
      %v558 = vadd.f32 %v337, %v473
      %v559 = vadd.f32 %v338, %v476
      %v560 = vadd.f32 %v339, %v478
      %v561 = vadd.f32 %v340, %v481
      %v562 = vadd.f32 %v341, %v483
      %v563 = vadd.f32 %v342, %v486
      %v564 = vadd.f32 %v343, %v488
      %v565 = vadd.f32 %v344, %v491
      %v566 = vadd.f32 %v345, %v493
      %v567 = vadd.f32 %v346, %v496
      %v568 = vadd.f32 %v347, %v498
      %v569 = vadd.f32 %v348, %v501
      %v570 = vadd.f32 %v349, %v503
      %v571 = vadd.f32 %v350, %v506
      %v572 = vadd.f32 %v351, %v508
      %v573 = vadd.f32 %v352, %v511
      %v574 = vadd.f32 %v353, %v513
      %v575 = vadd.f32 %v354, %v516
      %v576 = vadd.f32 %v355, %v518
      %v577 = vadd.f32 %v356, %v521
      %v578 = vadd.f32 %v357, %v523
      %v579 = vadd.f32 %v358, %v526
      %v580 = vadd.f32 %v359, %v528
      %v581 = vadd.f32 %v360, %v531
      %v582 = vadd.f32 %v361, %v533
      %v583 = vadd.f32 %v362, %v536
      %v584 = vadd.f32 %v363, %v538
      %v585 = vadd.f32 %v364, %v541
      %v586 = vadd.f32 %v365, %v543
      %v587 = vadd.f32 %v366, %v546
      %v588 = vadd.f32 %v367, %v548
      %v589 = vadd.f32 %v368, %v551
      %v590 = vadd.f32 %v369, %v553
      %591 = vst.msk [vmem:[#allocation2] sm:$0xff] %vm243, %v555
      %592 = vst.msk [vmem:[#allocation2 + $0x8] sm:$0xff] %vm243, %v556
      %593 = vst.msk [vmem:[#allocation2 + $0x10] sm:$0xff] %vm243, %v557
      %594 = vst.msk [vmem:[#allocation2 + $0x18] sm:$0xff] %vm243, %v558
      %595 = vst.msk [vmem:[#allocation2 + $0x20] sm:$0xff] %vm243, %v559
      %596 = vst.msk [vmem:[#allocation2 + $0x28] sm:$0xff] %vm243, %v560
      %597 = vst.msk [vmem:[#allocation2 + $0x30] sm:$0xff] %vm243, %v561
      %598 = vst.msk [vmem:[#allocation2 + $0x38] sm:$0xff] %vm243, %v562
      %599 = vst.msk [vmem:[#allocation2 + $0x40] sm:$0xff] %vm243, %v563
      %600 = vst.msk [vmem:[#allocation2 + $0x48] sm:$0xff] %vm243, %v564
      %601 = vst.msk [vmem:[#allocation2 + $0x50] sm:$0xff] %vm243, %v565
      %602 = vst.msk [vmem:[#allocation2 + $0x58] sm:$0xff] %vm243, %v566
      %603 = vst.msk [vmem:[#allocation2 + $0x60] sm:$0xff] %vm243, %v567
      %604 = vst.msk [vmem:[#allocation2 + $0x68] sm:$0xff] %vm243, %v568
      %605 = vst.msk [vmem:[#allocation2 + $0x70] sm:$0xff] %vm243, %v569
      %606 = vst.msk [vmem:[#allocation2 + $0x78] sm:$0xff] %vm243, %v570
      %607 = vst.msk [vmem:[#allocation2 + $0x80] sm:$0xff] %vm243, %v571
      %608 = vst.msk [vmem:[#allocation2 + $0x88] sm:$0xff] %vm243, %v572
      %609 = vst.msk [vmem:[#allocation2 + $0x90] sm:$0xff] %vm243, %v573
      %610 = vst.msk [vmem:[#allocation2 + $0x98] sm:$0xff] %vm243, %v574
      %611 = vst.msk [vmem:[#allocation2 + $0xa0] sm:$0xff] %vm243, %v575
      %612 = vst.msk [vmem:[#allocation2 + $0xa8] sm:$0xff] %vm243, %v576
      %613 = vst.msk [vmem:[#allocation2 + $0xb0] sm:$0xff] %vm243, %v577
      %614 = vst.msk [vmem:[#allocation2 + $0xb8] sm:$0xff] %vm243, %v578
      %615 = vst.msk [vmem:[#allocation2 + $0xc0] sm:$0xff] %vm243, %v579
      %616 = vst.msk [vmem:[#allocation2 + $0xc8] sm:$0xff] %vm243, %v580
      %617 = vst.msk [vmem:[#allocation2 + $0xd0] sm:$0xff] %vm243, %v581
      %618 = vst.msk [vmem:[#allocation2 + $0xd8] sm:$0xff] %vm243, %v582
      %619 = vst.msk [vmem:[#allocation2 + $0xe0] sm:$0xff] %vm243, %v583
      %620 = vst.msk [vmem:[#allocation2 + $0xe8] sm:$0xff] %vm243, %v584
      %621 = vst.msk [vmem:[#allocation2 + $0xf0] sm:$0xff] %vm243, %v585
      %622 = vst.msk [vmem:[#allocation2 + $0xf8] sm:$0xff] %vm243, %v586
      %623 = vst.msk [vmem:[#allocation2 + $0x100] sm:$0xff] %vm243, %v587
      %624 = vst.msk [vmem:[#allocation2 + $0x108] sm:$0xff] %vm243, %v588
      %625 = vst.msk [vmem:[#allocation2 + $0x110] sm:$0xff] %vm243, %v589
      %626 = vst.msk [vmem:[#allocation2 + $0x118] sm:$0xff] %vm243, %v590
      %v627 = vld [vmem:[%s230 + $0x1] sm:$0xff]
      %v628 = vld [vmem:[%s230 + $0x9] sm:$0xff]
      %v629 = vld [vmem:[%s230 + $0x11] sm:$0xff]
      %v630 = vld [vmem:[%s230 + $0x19] sm:$0xff]
      %v631 = vld [vmem:[%s230 + $0x21] sm:$0xff]
      %v632 = vld [vmem:[%s230 + $0x29] sm:$0xff]
      %v633 = vld [vmem:[%s230 + $0x31] sm:$0xff]
      %v634 = vld [vmem:[%s230 + $0x39] sm:$0xff]
      %v635 = vld [vmem:[%s230 + $0x41] sm:$0xff]
      %v636 = vld [vmem:[%s230 + $0x49] sm:$0xff]
      %v637 = vld [vmem:[%s230 + $0x51] sm:$0xff]
      %v638 = vld [vmem:[%s230 + $0x59] sm:$0xff]
      %v639 = vld [vmem:[%s230 + $0x61] sm:$0xff]
      %v640 = vld [vmem:[%s230 + $0x69] sm:$0xff]
      %v641 = vld [vmem:[%s230 + $0x71] sm:$0xff]
      %v642 = vld [vmem:[%s230 + $0x79] sm:$0xff]
      %v643 = vld [vmem:[%s230 + $0x81] sm:$0xff]
      %v644 = vld [vmem:[%s230 + $0x89] sm:$0xff]
      %v645 = vld [vmem:[%s230 + $0x91] sm:$0xff]
      %v646 = vld [vmem:[%s230 + $0x99] sm:$0xff]
      %v647 = vld [vmem:[%s230 + $0xa1] sm:$0xff]
      %v648 = vld [vmem:[%s230 + $0xa9] sm:$0xff]
      %v649 = vld [vmem:[%s230 + $0xb1] sm:$0xff]
      %v650 = vld [vmem:[%s230 + $0xb9] sm:$0xff]
      %v651 = vld [vmem:[%s230 + $0xc1] sm:$0xff]
      %v652 = vld [vmem:[%s230 + $0xc9] sm:$0xff]
      %v653 = vld [vmem:[%s230 + $0xd1] sm:$0xff]
      %v654 = vld [vmem:[%s230 + $0xd9] sm:$0xff]
      %v655 = vld [vmem:[%s230 + $0xe1] sm:$0xff]
      %v656 = vld [vmem:[%s230 + $0xe9] sm:$0xff]
      %v657 = vld [vmem:[%s230 + $0xf1] sm:$0xff]
      %v658 = vld [vmem:[%s230 + $0xf9] sm:$0xff]
      %v659 = vld [vmem:[%s230 + $0x101] sm:$0xff]
      %v660 = vld [vmem:[%s230 + $0x109] sm:$0xff]
      %v661 = vld [vmem:[%s230 + $0x111] sm:$0xff]
      %v662 = vld [vmem:[%s230 + $0x119] sm:$0xff]
      %v663 = vpack.c.bf16 %v628, %v627
      %v664 = vpack.c.bf16 %v630, %v629
      %v665 = vpack.c.bf16 %v632, %v631
      %v666 = vpack.c.bf16 %v634, %v633
      %v667 = vpack.c.bf16 %v636, %v635
      %v668 = vpack.c.bf16 %v638, %v637
      %v669 = vpack.c.bf16 %v640, %v639
      %v670 = vpack.c.bf16 %v642, %v641
      %v671 = vpack.c.bf16 %v644, %v643
      %v672 = vpack.c.bf16 %v646, %v645
      %v673 = vpack.c.bf16 %v648, %v647
      %v674 = vpack.c.bf16 %v650, %v649
      %v675 = vpack.c.bf16 %v652, %v651
      %v676 = vpack.c.bf16 %v654, %v653
      %v677 = vpack.c.bf16 %v656, %v655
      %v678 = vpack.c.bf16 %v658, %v657
      %v679 = vpack.c.bf16 %v660, %v659
      %v680 = vpack.c.bf16 %v662, %v661
      %v681 = vld [vmem:[#allocation2] sm:$0xff]
      %v682 = vld [vmem:[#allocation2 + $0x8] sm:$0xff]
      %v683 = vld [vmem:[#allocation2 + $0x10] sm:$0xff]
      %v684 = vld [vmem:[#allocation2 + $0x18] sm:$0xff]
      %v685 = vld [vmem:[#allocation2 + $0x20] sm:$0xff]
      %v686 = vld [vmem:[#allocation2 + $0x28] sm:$0xff]
      %v687 = vld [vmem:[#allocation2 + $0x30] sm:$0xff]
      %v688 = vld [vmem:[#allocation2 + $0x38] sm:$0xff]
      %v689 = vld [vmem:[#allocation2 + $0x40] sm:$0xff]
      %v690 = vld [vmem:[#allocation2 + $0x48] sm:$0xff]
      %v691 = vld [vmem:[#allocation2 + $0x50] sm:$0xff]
      %v692 = vld [vmem:[#allocation2 + $0x58] sm:$0xff]
      %v693 = vld [vmem:[#allocation2 + $0x60] sm:$0xff]
      %v694 = vld [vmem:[#allocation2 + $0x68] sm:$0xff]
      %v695 = vld [vmem:[#allocation2 + $0x70] sm:$0xff]
      %v696 = vld [vmem:[#allocation2 + $0x78] sm:$0xff]
      %v697 = vld [vmem:[#allocation2 + $0x80] sm:$0xff]
      %v698 = vld [vmem:[#allocation2 + $0x88] sm:$0xff]
      %v699 = vld [vmem:[#allocation2 + $0x90] sm:$0xff]
      %v700 = vld [vmem:[#allocation2 + $0x98] sm:$0xff]
      %v701 = vld [vmem:[#allocation2 + $0xa0] sm:$0xff]
      %v702 = vld [vmem:[#allocation2 + $0xa8] sm:$0xff]
      %v703 = vld [vmem:[#allocation2 + $0xb0] sm:$0xff]
      %v704 = vld [vmem:[#allocation2 + $0xb8] sm:$0xff]
      %v705 = vld [vmem:[#allocation2 + $0xc0] sm:$0xff]
      %v706 = vld [vmem:[#allocation2 + $0xc8] sm:$0xff]
      %v707 = vld [vmem:[#allocation2 + $0xd0] sm:$0xff]
      %v708 = vld [vmem:[#allocation2 + $0xd8] sm:$0xff]
      %v709 = vld [vmem:[#allocation2 + $0xe0] sm:$0xff]
      %v710 = vld [vmem:[#allocation2 + $0xe8] sm:$0xff]
      %v711 = vld [vmem:[#allocation2 + $0xf0] sm:$0xff]
      %v712 = vld [vmem:[#allocation2 + $0xf8] sm:$0xff]
      %v713 = vld [vmem:[#allocation2 + $0x100] sm:$0xff]
      %v714 = vld [vmem:[#allocation2 + $0x108] sm:$0xff]
      %v715 = vld [vmem:[#allocation2 + $0x110] sm:$0xff]
      %v716 = vld [vmem:[#allocation2 + $0x118] sm:$0xff]
      %s717 = scalar_lea.vmem %s1, 32
      %v718 = vld [vmem:[%s717] sm:$0xf]
      %v719 = vld [vmem:[%s717 + $0x4] sm:$0xf]
      %v720 = vld [vmem:[%s717 + $0x8] sm:$0xf]
      %v721 = vld [vmem:[%s717 + $0xc] sm:$0xf]
      %v722 = vld [vmem:[%s717 + $0x10] sm:$0xf]
      %v723 = vld [vmem:[%s717 + $0x14] sm:$0xf]
      %v724 = vld [vmem:[%s717 + $0x18] sm:$0xf]
      %v725 = vld [vmem:[%s717 + $0x1c] sm:$0xf]
      %v734 = vunpack.c.l.b16 %v718
      %v735 = vunpack.c.l.b16 %v719
      %v736 = vunpack.c.l.b16 %v720
      %v737 = vunpack.c.l.b16 %v721
      %v738 = vunpack.c.l.b16 %v722
      %v739 = vunpack.c.l.b16 %v723
      %v740 = vunpack.c.l.b16 %v724
      %v741 = vunpack.c.l.b16 %v725
      %v742 = vpack.c.b16 %v735, %v734
      %v743 = vpack.c.b16 %v737, %v736
      %v744 = vpack.c.b16 %v739, %v738
      %v745 = vpack.c.b16 %v741, %v740
      %v751 = vsel %vm243, %v663, 0
      %v754 = vsel %vm243, %v664, 0
      %v757 = vsel %vm243, %v665, 0
      %v760 = vsel %vm243, %v666, 0
      %v763 = vsel %vm243, %v667, 0
      %v766 = vsel %vm243, %v668, 0
      %v769 = vsel %vm243, %v669, 0
      %v772 = vsel %vm243, %v670, 0
      %v775 = vsel %vm243, %v671, 0
      %v778 = vsel %vm243, %v672, 0
      %v781 = vsel %vm243, %v673, 0
      %v784 = vsel %vm243, %v674, 0
      %v787 = vsel %vm243, %v675, 0
      %v790 = vsel %vm243, %v676, 0
      %v793 = vsel %vm243, %v677, 0
      %v796 = vsel %vm243, %v678, 0
      %v799 = vsel %vm243, %v679, 0
      %v802 = vsel %vm243, %v680, 0
      %804 = vmatpush.bf16.msra.mxu0 0
      %805 = vmatpush.bf16.msra.mxu0 0
      %806 = vmatpush.bf16.msra.mxu0 0
      %807 = vmatpush.bf16.msra.mxu0 0
      %808 = vmatpush.bf16.msra.mxu0 %v745
      %809 = vmatpush.bf16.msra.mxu0 %v744
      %810 = vmatpush.bf16.msra.mxu0 %v743
      %811 = vmatpush.bf16.msra.mxu0 %v742
      %812 = vmatmul.bf16.gmra.mxu0 %v751
      %v813 = vpop.f32.mrf.mxu0
      %v814 = vadd.f32 0.0, %v813
      %v815 = vpop.f32.mrf.mxu0
      %v816 = vadd.f32 0.0, %v815
      %817 = vmatmul.bf16.gmra.mxu0 %v754
      %v818 = vpop.f32.mrf.mxu0
      %v819 = vadd.f32 0.0, %v818
      %v820 = vpop.f32.mrf.mxu0
      %v821 = vadd.f32 0.0, %v820
      %822 = vmatmul.bf16.gmra.mxu0 %v757
      %v823 = vpop.f32.mrf.mxu0
      %v824 = vadd.f32 0.0, %v823
      %v825 = vpop.f32.mrf.mxu0
      %v826 = vadd.f32 0.0, %v825
      %827 = vmatmul.bf16.gmra.mxu0 %v760
      %v828 = vpop.f32.mrf.mxu0
      %v829 = vadd.f32 0.0, %v828
      %v830 = vpop.f32.mrf.mxu0
      %v831 = vadd.f32 0.0, %v830
      %832 = vmatmul.bf16.gmra.mxu0 %v763
      %v833 = vpop.f32.mrf.mxu0
      %v834 = vadd.f32 0.0, %v833
      %v835 = vpop.f32.mrf.mxu0
      %v836 = vadd.f32 0.0, %v835
      %837 = vmatmul.bf16.gmra.mxu0 %v766
      %v838 = vpop.f32.mrf.mxu0
      %v839 = vadd.f32 0.0, %v838
      %v840 = vpop.f32.mrf.mxu0
      %v841 = vadd.f32 0.0, %v840
      %842 = vmatmul.bf16.gmra.mxu0 %v769
      %v843 = vpop.f32.mrf.mxu0
      %v844 = vadd.f32 0.0, %v843
      %v845 = vpop.f32.mrf.mxu0
      %v846 = vadd.f32 0.0, %v845
      %847 = vmatmul.bf16.gmra.mxu0 %v772
      %v848 = vpop.f32.mrf.mxu0
      %v849 = vadd.f32 0.0, %v848
      %v850 = vpop.f32.mrf.mxu0
      %v851 = vadd.f32 0.0, %v850
      %852 = vmatmul.bf16.gmra.mxu0 %v775
      %v853 = vpop.f32.mrf.mxu0
      %v854 = vadd.f32 0.0, %v853
      %v855 = vpop.f32.mrf.mxu0
      %v856 = vadd.f32 0.0, %v855
      %857 = vmatmul.bf16.gmra.mxu0 %v778
      %v858 = vpop.f32.mrf.mxu0
      %v859 = vadd.f32 0.0, %v858
      %v860 = vpop.f32.mrf.mxu0
      %v861 = vadd.f32 0.0, %v860
      %862 = vmatmul.bf16.gmra.mxu0 %v781
      %v863 = vpop.f32.mrf.mxu0
      %v864 = vadd.f32 0.0, %v863
      %v865 = vpop.f32.mrf.mxu0
      %v866 = vadd.f32 0.0, %v865
      %867 = vmatmul.bf16.gmra.mxu0 %v784
      %v868 = vpop.f32.mrf.mxu0
      %v869 = vadd.f32 0.0, %v868
      %v870 = vpop.f32.mrf.mxu0
      %v871 = vadd.f32 0.0, %v870
      %872 = vmatmul.bf16.gmra.mxu0 %v787
      %v873 = vpop.f32.mrf.mxu0
      %v874 = vadd.f32 0.0, %v873
      %v875 = vpop.f32.mrf.mxu0
      %v876 = vadd.f32 0.0, %v875
      %877 = vmatmul.bf16.gmra.mxu0 %v790
      %v878 = vpop.f32.mrf.mxu0
      %v879 = vadd.f32 0.0, %v878
      %v880 = vpop.f32.mrf.mxu0
      %v881 = vadd.f32 0.0, %v880
      %882 = vmatmul.bf16.gmra.mxu0 %v793
      %v883 = vpop.f32.mrf.mxu0
      %v884 = vadd.f32 0.0, %v883
      %v885 = vpop.f32.mrf.mxu0
      %v886 = vadd.f32 0.0, %v885
      %887 = vmatmul.bf16.gmra.mxu0 %v796
      %v888 = vpop.f32.mrf.mxu0
      %v889 = vadd.f32 0.0, %v888
      %v890 = vpop.f32.mrf.mxu0
      %v891 = vadd.f32 0.0, %v890
      %892 = vmatmul.bf16.gmra.mxu0 %v799
      %v893 = vpop.f32.mrf.mxu0
      %v894 = vadd.f32 0.0, %v893
      %v895 = vpop.f32.mrf.mxu0
      %v896 = vadd.f32 0.0, %v895
      %897 = vmatmul.bf16.gmra.mxu0 %v802
      %v898 = vpop.f32.mrf.mxu0
      %v899 = vadd.f32 0.0, %v898
      %v900 = vpop.f32.mrf.mxu0
      %v901 = vadd.f32 0.0, %v900
      %902 = vdwg.mxu0
      %v903 = vadd.f32 %v681, %v814
      %v904 = vadd.f32 %v682, %v816
      %v905 = vadd.f32 %v683, %v819
      %v906 = vadd.f32 %v684, %v821
      %v907 = vadd.f32 %v685, %v824
      %v908 = vadd.f32 %v686, %v826
      %v909 = vadd.f32 %v687, %v829
      %v910 = vadd.f32 %v688, %v831
      %v911 = vadd.f32 %v689, %v834
      %v912 = vadd.f32 %v690, %v836
      %v913 = vadd.f32 %v691, %v839
      %v914 = vadd.f32 %v692, %v841
      %v915 = vadd.f32 %v693, %v844
      %v916 = vadd.f32 %v694, %v846
      %v917 = vadd.f32 %v695, %v849
      %v918 = vadd.f32 %v696, %v851
      %v919 = vadd.f32 %v697, %v854
      %v920 = vadd.f32 %v698, %v856
      %v921 = vadd.f32 %v699, %v859
      %v922 = vadd.f32 %v700, %v861
      %v923 = vadd.f32 %v701, %v864
      %v924 = vadd.f32 %v702, %v866
      %v925 = vadd.f32 %v703, %v869
      %v926 = vadd.f32 %v704, %v871
      %v927 = vadd.f32 %v705, %v874
      %v928 = vadd.f32 %v706, %v876
      %v929 = vadd.f32 %v707, %v879
      %v930 = vadd.f32 %v708, %v881
      %v931 = vadd.f32 %v709, %v884
      %v932 = vadd.f32 %v710, %v886
      %v933 = vadd.f32 %v711, %v889
      %v934 = vadd.f32 %v712, %v891
      %v935 = vadd.f32 %v713, %v894
      %v936 = vadd.f32 %v714, %v896
      %v937 = vadd.f32 %v715, %v899
      %v938 = vadd.f32 %v716, %v901
      %939 = vst.msk [vmem:[#allocation2] sm:$0xff] %vm243, %v903
      %940 = vst.msk [vmem:[#allocation2 + $0x8] sm:$0xff] %vm243, %v904
      %941 = vst.msk [vmem:[#allocation2 + $0x10] sm:$0xff] %vm243, %v905
      %942 = vst.msk [vmem:[#allocation2 + $0x18] sm:$0xff] %vm243, %v906
      %943 = vst.msk [vmem:[#allocation2 + $0x20] sm:$0xff] %vm243, %v907
      %944 = vst.msk [vmem:[#allocation2 + $0x28] sm:$0xff] %vm243, %v908
      %945 = vst.msk [vmem:[#allocation2 + $0x30] sm:$0xff] %vm243, %v909
      %946 = vst.msk [vmem:[#allocation2 + $0x38] sm:$0xff] %vm243, %v910
      %947 = vst.msk [vmem:[#allocation2 + $0x40] sm:$0xff] %vm243, %v911
      %948 = vst.msk [vmem:[#allocation2 + $0x48] sm:$0xff] %vm243, %v912
      %949 = vst.msk [vmem:[#allocation2 + $0x50] sm:$0xff] %vm243, %v913
      %950 = vst.msk [vmem:[#allocation2 + $0x58] sm:$0xff] %vm243, %v914
      %951 = vst.msk [vmem:[#allocation2 + $0x60] sm:$0xff] %vm243, %v915
      %952 = vst.msk [vmem:[#allocation2 + $0x68] sm:$0xff] %vm243, %v916
      %953 = vst.msk [vmem:[#allocation2 + $0x70] sm:$0xff] %vm243, %v917
      %954 = vst.msk [vmem:[#allocation2 + $0x78] sm:$0xff] %vm243, %v918
      %955 = vst.msk [vmem:[#allocation2 + $0x80] sm:$0xff] %vm243, %v919
      %956 = vst.msk [vmem:[#allocation2 + $0x88] sm:$0xff] %vm243, %v920
      %957 = vst.msk [vmem:[#allocation2 + $0x90] sm:$0xff] %vm243, %v921
      %958 = vst.msk [vmem:[#allocation2 + $0x98] sm:$0xff] %vm243, %v922
      %959 = vst.msk [vmem:[#allocation2 + $0xa0] sm:$0xff] %vm243, %v923
      %960 = vst.msk [vmem:[#allocation2 + $0xa8] sm:$0xff] %vm243, %v924
      %961 = vst.msk [vmem:[#allocation2 + $0xb0] sm:$0xff] %vm243, %v925
      %962 = vst.msk [vmem:[#allocation2 + $0xb8] sm:$0xff] %vm243, %v926
      %963 = vst.msk [vmem:[#allocation2 + $0xc0] sm:$0xff] %vm243, %v927
      %964 = vst.msk [vmem:[#allocation2 + $0xc8] sm:$0xff] %vm243, %v928
      %965 = vst.msk [vmem:[#allocation2 + $0xd0] sm:$0xff] %vm243, %v929
      %966 = vst.msk [vmem:[#allocation2 + $0xd8] sm:$0xff] %vm243, %v930
      %967 = vst.msk [vmem:[#allocation2 + $0xe0] sm:$0xff] %vm243, %v931
      %968 = vst.msk [vmem:[#allocation2 + $0xe8] sm:$0xff] %vm243, %v932
      %969 = vst.msk [vmem:[#allocation2 + $0xf0] sm:$0xff] %vm243, %v933
      %970 = vst.msk [vmem:[#allocation2 + $0xf8] sm:$0xff] %vm243, %v934
      %971 = vst.msk [vmem:[#allocation2 + $0x100] sm:$0xff] %vm243, %v935
      %972 = vst.msk [vmem:[#allocation2 + $0x108] sm:$0xff] %vm243, %v936
      %973 = vst.msk [vmem:[#allocation2 + $0x110] sm:$0xff] %vm243, %v937
      %974 = vst.msk [vmem:[#allocation2 + $0x118] sm:$0xff] %vm243, %v938
      %v975 = vld [vmem:[%s230 + $0x2] sm:$0xff]
      %v976 = vld [vmem:[%s230 + $0xa] sm:$0xff]
      %v977 = vld [vmem:[%s230 + $0x12] sm:$0xff]
      %v978 = vld [vmem:[%s230 + $0x1a] sm:$0xff]
      %v979 = vld [vmem:[%s230 + $0x22] sm:$0xff]
      %v980 = vld [vmem:[%s230 + $0x2a] sm:$0xff]
      %v981 = vld [vmem:[%s230 + $0x32] sm:$0xff]
      %v982 = vld [vmem:[%s230 + $0x3a] sm:$0xff]
      %v983 = vld [vmem:[%s230 + $0x42] sm:$0xff]
      %v984 = vld [vmem:[%s230 + $0x4a] sm:$0xff]
      %v985 = vld [vmem:[%s230 + $0x52] sm:$0xff]
      %v986 = vld [vmem:[%s230 + $0x5a] sm:$0xff]
      %v987 = vld [vmem:[%s230 + $0x62] sm:$0xff]
      %v988 = vld [vmem:[%s230 + $0x6a] sm:$0xff]
      %v989 = vld [vmem:[%s230 + $0x72] sm:$0xff]
      %v990 = vld [vmem:[%s230 + $0x7a] sm:$0xff]
      %v991 = vld [vmem:[%s230 + $0x82] sm:$0xff]
      %v992 = vld [vmem:[%s230 + $0x8a] sm:$0xff]
      %v993 = vld [vmem:[%s230 + $0x92] sm:$0xff]
      %v994 = vld [vmem:[%s230 + $0x9a] sm:$0xff]
      %v995 = vld [vmem:[%s230 + $0xa2] sm:$0xff]
      %v996 = vld [vmem:[%s230 + $0xaa] sm:$0xff]
      %v997 = vld [vmem:[%s230 + $0xb2] sm:$0xff]
      %v998 = vld [vmem:[%s230 + $0xba] sm:$0xff]
      %v999 = vld [vmem:[%s230 + $0xc2] sm:$0xff]
      %v1000 = vld [vmem:[%s230 + $0xca] sm:$0xff]
      %v1001 = vld [vmem:[%s230 + $0xd2] sm:$0xff]
      %v1002 = vld [vmem:[%s230 + $0xda] sm:$0xff]
      %v1003 = vld [vmem:[%s230 + $0xe2] sm:$0xff]
      %v1004 = vld [vmem:[%s230 + $0xea] sm:$0xff]
      %v1005 = vld [vmem:[%s230 + $0xf2] sm:$0xff]
      %v1006 = vld [vmem:[%s230 + $0xfa] sm:$0xff]
      %v1007 = vld [vmem:[%s230 + $0x102] sm:$0xff]
      %v1008 = vld [vmem:[%s230 + $0x10a] sm:$0xff]
      %v1009 = vld [vmem:[%s230 + $0x112] sm:$0xff]
      %v1010 = vld [vmem:[%s230 + $0x11a] sm:$0xff]
      %v1011 = vpack.c.bf16 %v976, %v975
      %v1012 = vpack.c.bf16 %v978, %v977
      %v1013 = vpack.c.bf16 %v980, %v979
      %v1014 = vpack.c.bf16 %v982, %v981
      %v1015 = vpack.c.bf16 %v984, %v983
      %v1016 = vpack.c.bf16 %v986, %v985
      %v1017 = vpack.c.bf16 %v988, %v987
      %v1018 = vpack.c.bf16 %v990, %v989
      %v1019 = vpack.c.bf16 %v992, %v991
      %v1020 = vpack.c.bf16 %v994, %v993
      %v1021 = vpack.c.bf16 %v996, %v995
      %v1022 = vpack.c.bf16 %v998, %v997
      %v1023 = vpack.c.bf16 %v1000, %v999
      %v1024 = vpack.c.bf16 %v1002, %v1001
      %v1025 = vpack.c.bf16 %v1004, %v1003
      %v1026 = vpack.c.bf16 %v1006, %v1005
      %v1027 = vpack.c.bf16 %v1008, %v1007
      %v1028 = vpack.c.bf16 %v1010, %v1009
      %v1029 = vld [vmem:[#allocation2] sm:$0xff]
      %v1030 = vld [vmem:[#allocation2 + $0x8] sm:$0xff]
      %v1031 = vld [vmem:[#allocation2 + $0x10] sm:$0xff]
      %v1032 = vld [vmem:[#allocation2 + $0x18] sm:$0xff]
      %v1033 = vld [vmem:[#allocation2 + $0x20] sm:$0xff]
      %v1034 = vld [vmem:[#allocation2 + $0x28] sm:$0xff]
      %v1035 = vld [vmem:[#allocation2 + $0x30] sm:$0xff]
      %v1036 = vld [vmem:[#allocation2 + $0x38] sm:$0xff]
      %v1037 = vld [vmem:[#allocation2 + $0x40] sm:$0xff]
      %v1038 = vld [vmem:[#allocation2 + $0x48] sm:$0xff]
      %v1039 = vld [vmem:[#allocation2 + $0x50] sm:$0xff]
      %v1040 = vld [vmem:[#allocation2 + $0x58] sm:$0xff]
      %v1041 = vld [vmem:[#allocation2 + $0x60] sm:$0xff]
      %v1042 = vld [vmem:[#allocation2 + $0x68] sm:$0xff]
      %v1043 = vld [vmem:[#allocation2 + $0x70] sm:$0xff]
      %v1044 = vld [vmem:[#allocation2 + $0x78] sm:$0xff]
      %v1045 = vld [vmem:[#allocation2 + $0x80] sm:$0xff]
      %v1046 = vld [vmem:[#allocation2 + $0x88] sm:$0xff]
      %v1047 = vld [vmem:[#allocation2 + $0x90] sm:$0xff]
      %v1048 = vld [vmem:[#allocation2 + $0x98] sm:$0xff]
      %v1049 = vld [vmem:[#allocation2 + $0xa0] sm:$0xff]
      %v1050 = vld [vmem:[#allocation2 + $0xa8] sm:$0xff]
      %v1051 = vld [vmem:[#allocation2 + $0xb0] sm:$0xff]
      %v1052 = vld [vmem:[#allocation2 + $0xb8] sm:$0xff]
      %v1053 = vld [vmem:[#allocation2 + $0xc0] sm:$0xff]
      %v1054 = vld [vmem:[#allocation2 + $0xc8] sm:$0xff]
      %v1055 = vld [vmem:[#allocation2 + $0xd0] sm:$0xff]
      %v1056 = vld [vmem:[#allocation2 + $0xd8] sm:$0xff]
      %v1057 = vld [vmem:[#allocation2 + $0xe0] sm:$0xff]
      %v1058 = vld [vmem:[#allocation2 + $0xe8] sm:$0xff]
      %v1059 = vld [vmem:[#allocation2 + $0xf0] sm:$0xff]
      %v1060 = vld [vmem:[#allocation2 + $0xf8] sm:$0xff]
      %v1061 = vld [vmem:[#allocation2 + $0x100] sm:$0xff]
      %v1062 = vld [vmem:[#allocation2 + $0x108] sm:$0xff]
      %v1063 = vld [vmem:[#allocation2 + $0x110] sm:$0xff]
      %v1064 = vld [vmem:[#allocation2 + $0x118] sm:$0xff]
      %s1065 = scalar_lea.vmem %s1, 64
      %v1066 = vld [vmem:[%s1065] sm:$0xf]
      %v1067 = vld [vmem:[%s1065 + $0x4] sm:$0xf]
      %v1068 = vld [vmem:[%s1065 + $0x8] sm:$0xf]
      %v1069 = vld [vmem:[%s1065 + $0xc] sm:$0xf]
      %v1070 = vld [vmem:[%s1065 + $0x10] sm:$0xf]
      %v1071 = vld [vmem:[%s1065 + $0x14] sm:$0xf]
      %v1072 = vld [vmem:[%s1065 + $0x18] sm:$0xf]
      %v1073 = vld [vmem:[%s1065 + $0x1c] sm:$0xf]
      %v1082 = vunpack.c.l.b16 %v1066
      %v1083 = vunpack.c.l.b16 %v1067
      %v1084 = vunpack.c.l.b16 %v1068
      %v1085 = vunpack.c.l.b16 %v1069
      %v1086 = vunpack.c.l.b16 %v1070
      %v1087 = vunpack.c.l.b16 %v1071
      %v1088 = vunpack.c.l.b16 %v1072
      %v1089 = vunpack.c.l.b16 %v1073
      %v1090 = vpack.c.b16 %v1083, %v1082
      %v1091 = vpack.c.b16 %v1085, %v1084
      %v1092 = vpack.c.b16 %v1087, %v1086
      %v1093 = vpack.c.b16 %v1089, %v1088
      %v1099 = vsel %vm243, %v1011, 0
      %v1102 = vsel %vm243, %v1012, 0
      %v1105 = vsel %vm243, %v1013, 0
      %v1108 = vsel %vm243, %v1014, 0
      %v1111 = vsel %vm243, %v1015, 0
      %v1114 = vsel %vm243, %v1016, 0
      %v1117 = vsel %vm243, %v1017, 0
      %v1120 = vsel %vm243, %v1018, 0
      %v1123 = vsel %vm243, %v1019, 0
      %v1126 = vsel %vm243, %v1020, 0
      %v1129 = vsel %vm243, %v1021, 0
      %v1132 = vsel %vm243, %v1022, 0
      %v1135 = vsel %vm243, %v1023, 0
      %v1138 = vsel %vm243, %v1024, 0
      %v1141 = vsel %vm243, %v1025, 0
      %v1144 = vsel %vm243, %v1026, 0
      %v1147 = vsel %vm243, %v1027, 0
      %v1150 = vsel %vm243, %v1028, 0
      %1152 = vmatpush.bf16.msra.mxu0 0
      %1153 = vmatpush.bf16.msra.mxu0 0
      %1154 = vmatpush.bf16.msra.mxu0 0
      %1155 = vmatpush.bf16.msra.mxu0 0
      %1156 = vmatpush.bf16.msra.mxu0 %v1093
      %1157 = vmatpush.bf16.msra.mxu0 %v1092
      %1158 = vmatpush.bf16.msra.mxu0 %v1091
      %1159 = vmatpush.bf16.msra.mxu0 %v1090
      %1160 = vmatmul.bf16.gmra.mxu0 %v1099
      %v1161 = vpop.f32.mrf.mxu0
      %v1162 = vadd.f32 0.0, %v1161
      %v1163 = vpop.f32.mrf.mxu0
      %v1164 = vadd.f32 0.0, %v1163
      %1165 = vmatmul.bf16.gmra.mxu0 %v1102
      %v1166 = vpop.f32.mrf.mxu0
      %v1167 = vadd.f32 0.0, %v1166
      %v1168 = vpop.f32.mrf.mxu0
      %v1169 = vadd.f32 0.0, %v1168
      %1170 = vmatmul.bf16.gmra.mxu0 %v1105
      %v1171 = vpop.f32.mrf.mxu0
      %v1172 = vadd.f32 0.0, %v1171
      %v1173 = vpop.f32.mrf.mxu0
      %v1174 = vadd.f32 0.0, %v1173
      %1175 = vmatmul.bf16.gmra.mxu0 %v1108
      %v1176 = vpop.f32.mrf.mxu0
      %v1177 = vadd.f32 0.0, %v1176
      %v1178 = vpop.f32.mrf.mxu0
      %v1179 = vadd.f32 0.0, %v1178
      %1180 = vmatmul.bf16.gmra.mxu0 %v1111
      %v1181 = vpop.f32.mrf.mxu0
      %v1182 = vadd.f32 0.0, %v1181
      %v1183 = vpop.f32.mrf.mxu0
      %v1184 = vadd.f32 0.0, %v1183
      %1185 = vmatmul.bf16.gmra.mxu0 %v1114
      %v1186 = vpop.f32.mrf.mxu0
      %v1187 = vadd.f32 0.0, %v1186
      %v1188 = vpop.f32.mrf.mxu0
      %v1189 = vadd.f32 0.0, %v1188
      %1190 = vmatmul.bf16.gmra.mxu0 %v1117
      %v1191 = vpop.f32.mrf.mxu0
      %v1192 = vadd.f32 0.0, %v1191
      %v1193 = vpop.f32.mrf.mxu0
      %v1194 = vadd.f32 0.0, %v1193
      %1195 = vmatmul.bf16.gmra.mxu0 %v1120
      %v1196 = vpop.f32.mrf.mxu0
      %v1197 = vadd.f32 0.0, %v1196
      %v1198 = vpop.f32.mrf.mxu0
      %v1199 = vadd.f32 0.0, %v1198
      %1200 = vmatmul.bf16.gmra.mxu0 %v1123
      %v1201 = vpop.f32.mrf.mxu0
      %v1202 = vadd.f32 0.0, %v1201
      %v1203 = vpop.f32.mrf.mxu0
      %v1204 = vadd.f32 0.0, %v1203
      %1205 = vmatmul.bf16.gmra.mxu0 %v1126
      %v1206 = vpop.f32.mrf.mxu0
      %v1207 = vadd.f32 0.0, %v1206
      %v1208 = vpop.f32.mrf.mxu0
      %v1209 = vadd.f32 0.0, %v1208
      %1210 = vmatmul.bf16.gmra.mxu0 %v1129
      %v1211 = vpop.f32.mrf.mxu0
      %v1212 = vadd.f32 0.0, %v1211
      %v1213 = vpop.f32.mrf.mxu0
      %v1214 = vadd.f32 0.0, %v1213
      %1215 = vmatmul.bf16.gmra.mxu0 %v1132
      %v1216 = vpop.f32.mrf.mxu0
      %v1217 = vadd.f32 0.0, %v1216
      %v1218 = vpop.f32.mrf.mxu0
      %v1219 = vadd.f32 0.0, %v1218
      %1220 = vmatmul.bf16.gmra.mxu0 %v1135
      %v1221 = vpop.f32.mrf.mxu0
      %v1222 = vadd.f32 0.0, %v1221
      %v1223 = vpop.f32.mrf.mxu0
      %v1224 = vadd.f32 0.0, %v1223
      %1225 = vmatmul.bf16.gmra.mxu0 %v1138
      %v1226 = vpop.f32.mrf.mxu0
      %v1227 = vadd.f32 0.0, %v1226
      %v1228 = vpop.f32.mrf.mxu0
      %v1229 = vadd.f32 0.0, %v1228
      %1230 = vmatmul.bf16.gmra.mxu0 %v1141
      %v1231 = vpop.f32.mrf.mxu0
      %v1232 = vadd.f32 0.0, %v1231
      %v1233 = vpop.f32.mrf.mxu0
      %v1234 = vadd.f32 0.0, %v1233
      %1235 = vmatmul.bf16.gmra.mxu0 %v1144
      %v1236 = vpop.f32.mrf.mxu0
      %v1237 = vadd.f32 0.0, %v1236
      %v1238 = vpop.f32.mrf.mxu0
      %v1239 = vadd.f32 0.0, %v1238
      %1240 = vmatmul.bf16.gmra.mxu0 %v1147
      %v1241 = vpop.f32.mrf.mxu0
      %v1242 = vadd.f32 0.0, %v1241
      %v1243 = vpop.f32.mrf.mxu0
      %v1244 = vadd.f32 0.0, %v1243
      %1245 = vmatmul.bf16.gmra.mxu0 %v1150
      %v1246 = vpop.f32.mrf.mxu0
      %v1247 = vadd.f32 0.0, %v1246
      %v1248 = vpop.f32.mrf.mxu0
      %v1249 = vadd.f32 0.0, %v1248
      %1250 = vdwg.mxu0
      %v1251 = vadd.f32 %v1029, %v1162
      %v1252 = vadd.f32 %v1030, %v1164
      %v1253 = vadd.f32 %v1031, %v1167
      %v1254 = vadd.f32 %v1032, %v1169
      %v1255 = vadd.f32 %v1033, %v1172
      %v1256 = vadd.f32 %v1034, %v1174
      %v1257 = vadd.f32 %v1035, %v1177
      %v1258 = vadd.f32 %v1036, %v1179
      %v1259 = vadd.f32 %v1037, %v1182
      %v1260 = vadd.f32 %v1038, %v1184
      %v1261 = vadd.f32 %v1039, %v1187
      %v1262 = vadd.f32 %v1040, %v1189
      %v1263 = vadd.f32 %v1041, %v1192
      %v1264 = vadd.f32 %v1042, %v1194
      %v1265 = vadd.f32 %v1043, %v1197
      %v1266 = vadd.f32 %v1044, %v1199
      %v1267 = vadd.f32 %v1045, %v1202
      %v1268 = vadd.f32 %v1046, %v1204
      %v1269 = vadd.f32 %v1047, %v1207
      %v1270 = vadd.f32 %v1048, %v1209
      %v1271 = vadd.f32 %v1049, %v1212
      %v1272 = vadd.f32 %v1050, %v1214
      %v1273 = vadd.f32 %v1051, %v1217
      %v1274 = vadd.f32 %v1052, %v1219
      %v1275 = vadd.f32 %v1053, %v1222
      %v1276 = vadd.f32 %v1054, %v1224
      %v1277 = vadd.f32 %v1055, %v1227
      %v1278 = vadd.f32 %v1056, %v1229
      %v1279 = vadd.f32 %v1057, %v1232
      %v1280 = vadd.f32 %v1058, %v1234
      %v1281 = vadd.f32 %v1059, %v1237
      %v1282 = vadd.f32 %v1060, %v1239
      %v1283 = vadd.f32 %v1061, %v1242
      %v1284 = vadd.f32 %v1062, %v1244
      %v1285 = vadd.f32 %v1063, %v1247
      %v1286 = vadd.f32 %v1064, %v1249
      %1287 = vst.msk [vmem:[#allocation2] sm:$0xff] %vm243, %v1251
      %1288 = vst.msk [vmem:[#allocation2 + $0x8] sm:$0xff] %vm243, %v1252
      %1289 = vst.msk [vmem:[#allocation2 + $0x10] sm:$0xff] %vm243, %v1253
      %1290 = vst.msk [vmem:[#allocation2 + $0x18] sm:$0xff] %vm243, %v1254
      %1291 = vst.msk [vmem:[#allocation2 + $0x20] sm:$0xff] %vm243, %v1255
      %1292 = vst.msk [vmem:[#allocation2 + $0x28] sm:$0xff] %vm243, %v1256
      %1293 = vst.msk [vmem:[#allocation2 + $0x30] sm:$0xff] %vm243, %v1257
      %1294 = vst.msk [vmem:[#allocation2 + $0x38] sm:$0xff] %vm243, %v1258
      %1295 = vst.msk [vmem:[#allocation2 + $0x40] sm:$0xff] %vm243, %v1259
      %1296 = vst.msk [vmem:[#allocation2 + $0x48] sm:$0xff] %vm243, %v1260
      %1297 = vst.msk [vmem:[#allocation2 + $0x50] sm:$0xff] %vm243, %v1261
      %1298 = vst.msk [vmem:[#allocation2 + $0x58] sm:$0xff] %vm243, %v1262
      %1299 = vst.msk [vmem:[#allocation2 + $0x60] sm:$0xff] %vm243, %v1263
      %1300 = vst.msk [vmem:[#allocation2 + $0x68] sm:$0xff] %vm243, %v1264
      %1301 = vst.msk [vmem:[#allocation2 + $0x70] sm:$0xff] %vm243, %v1265
      %1302 = vst.msk [vmem:[#allocation2 + $0x78] sm:$0xff] %vm243, %v1266
      %1303 = vst.msk [vmem:[#allocation2 + $0x80] sm:$0xff] %vm243, %v1267
      %1304 = vst.msk [vmem:[#allocation2 + $0x88] sm:$0xff] %vm243, %v1268
      %1305 = vst.msk [vmem:[#allocation2 + $0x90] sm:$0xff] %vm243, %v1269
      %1306 = vst.msk [vmem:[#allocation2 + $0x98] sm:$0xff] %vm243, %v1270
      %1307 = vst.msk [vmem:[#allocation2 + $0xa0] sm:$0xff] %vm243, %v1271
      %1308 = vst.msk [vmem:[#allocation2 + $0xa8] sm:$0xff] %vm243, %v1272
      %1309 = vst.msk [vmem:[#allocation2 + $0xb0] sm:$0xff] %vm243, %v1273
      %1310 = vst.msk [vmem:[#allocation2 + $0xb8] sm:$0xff] %vm243, %v1274
      %1311 = vst.msk [vmem:[#allocation2 + $0xc0] sm:$0xff] %vm243, %v1275
      %1312 = vst.msk [vmem:[#allocation2 + $0xc8] sm:$0xff] %vm243, %v1276
      %1313 = vst.msk [vmem:[#allocation2 + $0xd0] sm:$0xff] %vm243, %v1277
      %1314 = vst.msk [vmem:[#allocation2 + $0xd8] sm:$0xff] %vm243, %v1278
      %1315 = vst.msk [vmem:[#allocation2 + $0xe0] sm:$0xff] %vm243, %v1279
      %1316 = vst.msk [vmem:[#allocation2 + $0xe8] sm:$0xff] %vm243, %v1280
      %1317 = vst.msk [vmem:[#allocation2 + $0xf0] sm:$0xff] %vm243, %v1281
      %1318 = vst.msk [vmem:[#allocation2 + $0xf8] sm:$0xff] %vm243, %v1282
      %1319 = vst.msk [vmem:[#allocation2 + $0x100] sm:$0xff] %vm243, %v1283
      %1320 = vst.msk [vmem:[#allocation2 + $0x108] sm:$0xff] %vm243, %v1284
      %1321 = vst.msk [vmem:[#allocation2 + $0x110] sm:$0xff] %vm243, %v1285
      %1322 = vst.msk [vmem:[#allocation2 + $0x118] sm:$0xff] %vm243, %v1286
      %v1323 = vld [vmem:[%s230 + $0x12] sm:$0xff]
      %v1324 = vld [vmem:[%s230 + $0x1a] sm:$0xff]
      %v1325 = vld [vmem:[%s230 + $0x22] sm:$0xff]
      %v1326 = vld [vmem:[%s230 + $0x2a] sm:$0xff]
      %v1327 = vld [vmem:[%s230 + $0x32] sm:$0xff]
      %v1328 = vld [vmem:[%s230 + $0x3a] sm:$0xff]
      %v1329 = vld [vmem:[%s230 + $0x42] sm:$0xff]
      %v1330 = vld [vmem:[%s230 + $0x4a] sm:$0xff]
      %v1331 = vld [vmem:[%s230 + $0x52] sm:$0xff]
      %v1332 = vld [vmem:[%s230 + $0x5a] sm:$0xff]
      %v1333 = vld [vmem:[%s230 + $0x62] sm:$0xff]
      %v1334 = vld [vmem:[%s230 + $0x6a] sm:$0xff]
      %v1335 = vld [vmem:[%s230 + $0x72] sm:$0xff]
      %v1336 = vld [vmem:[%s230 + $0x7a] sm:$0xff]
      %v1337 = vld [vmem:[%s230 + $0x82] sm:$0xff]
      %v1338 = vld [vmem:[%s230 + $0x8a] sm:$0xff]
      %v1339 = vld [vmem:[%s230 + $0x92] sm:$0xff]
      %v1340 = vld [vmem:[%s230 + $0x9a] sm:$0xff]
      %v1341 = vld [vmem:[%s230 + $0xa2] sm:$0xff]
      %v1342 = vld [vmem:[%s230 + $0xaa] sm:$0xff]
      %v1343 = vld [vmem:[%s230 + $0xb2] sm:$0xff]
      %v1344 = vld [vmem:[%s230 + $0xba] sm:$0xff]
      %v1345 = vld [vmem:[%s230 + $0xc2] sm:$0xff]
      %v1346 = vld [vmem:[%s230 + $0xca] sm:$0xff]
      %v1347 = vld [vmem:[%s230 + $0xd2] sm:$0xff]
      %v1348 = vld [vmem:[%s230 + $0xda] sm:$0xff]
      %v1349 = vld [vmem:[%s230 + $0xe2] sm:$0xff]
      %v1350 = vld [vmem:[%s230 + $0xea] sm:$0xff]
      %v1351 = vld [vmem:[%s230 + $0xf2] sm:$0xff]
      %v1352 = vld [vmem:[%s230 + $0xfa] sm:$0xff]
      %v1353 = vld [vmem:[%s230 + $0x102] sm:$0xff]
      %v1354 = vld [vmem:[%s230 + $0x10a] sm:$0xff]
      %v1355 = vld [vmem:[%s230 + $0x112] sm:$0xff]
      %v1356 = vld [vmem:[%s230 + $0x11a] sm:$0xff]
      %v1357 = vld [vmem:[%s230 + $0x122] sm:$0xff]
      %v1358 = vld [vmem:[%s230 + $0x12a] sm:$0xff]
      %v1359 = vpack.c.bf16 %v1324, %v1323
      %v1360 = vpack.c.bf16 %v1326, %v1325
      %v1361 = vpack.c.bf16 %v1328, %v1327
      %v1362 = vpack.c.bf16 %v1330, %v1329
      %v1363 = vpack.c.bf16 %v1332, %v1331
      %v1364 = vpack.c.bf16 %v1334, %v1333
      %v1365 = vpack.c.bf16 %v1336, %v1335
      %v1366 = vpack.c.bf16 %v1338, %v1337
      %v1367 = vpack.c.bf16 %v1340, %v1339
      %v1368 = vpack.c.bf16 %v1342, %v1341
      %v1369 = vpack.c.bf16 %v1344, %v1343
      %v1370 = vpack.c.bf16 %v1346, %v1345
      %v1371 = vpack.c.bf16 %v1348, %v1347
      %v1372 = vpack.c.bf16 %v1350, %v1349
      %v1373 = vpack.c.bf16 %v1352, %v1351
      %v1374 = vpack.c.bf16 %v1354, %v1353
      %v1375 = vpack.c.bf16 %v1356, %v1355
      %v1376 = vpack.c.bf16 %v1358, %v1357
      %v1377 = vld [vmem:[#allocation2] sm:$0xff]
      %v1378 = vld [vmem:[#allocation2 + $0x8] sm:$0xff]
      %v1379 = vld [vmem:[#allocation2 + $0x10] sm:$0xff]
      %v1380 = vld [vmem:[#allocation2 + $0x18] sm:$0xff]
      %v1381 = vld [vmem:[#allocation2 + $0x20] sm:$0xff]
      %v1382 = vld [vmem:[#allocation2 + $0x28] sm:$0xff]
      %v1383 = vld [vmem:[#allocation2 + $0x30] sm:$0xff]
      %v1384 = vld [vmem:[#allocation2 + $0x38] sm:$0xff]
      %v1385 = vld [vmem:[#allocation2 + $0x40] sm:$0xff]
      %v1386 = vld [vmem:[#allocation2 + $0x48] sm:$0xff]
      %v1387 = vld [vmem:[#allocation2 + $0x50] sm:$0xff]
      %v1388 = vld [vmem:[#allocation2 + $0x58] sm:$0xff]
      %v1389 = vld [vmem:[#allocation2 + $0x60] sm:$0xff]
      %v1390 = vld [vmem:[#allocation2 + $0x68] sm:$0xff]
      %v1391 = vld [vmem:[#allocation2 + $0x70] sm:$0xff]
      %v1392 = vld [vmem:[#allocation2 + $0x78] sm:$0xff]
      %v1393 = vld [vmem:[#allocation2 + $0x80] sm:$0xff]
      %v1394 = vld [vmem:[#allocation2 + $0x88] sm:$0xff]
      %v1395 = vld [vmem:[#allocation2 + $0x90] sm:$0xff]
      %v1396 = vld [vmem:[#allocation2 + $0x98] sm:$0xff]
      %v1397 = vld [vmem:[#allocation2 + $0xa0] sm:$0xff]
      %v1398 = vld [vmem:[#allocation2 + $0xa8] sm:$0xff]
      %v1399 = vld [vmem:[#allocation2 + $0xb0] sm:$0xff]
      %v1400 = vld [vmem:[#allocation2 + $0xb8] sm:$0xff]
      %v1401 = vld [vmem:[#allocation2 + $0xc0] sm:$0xff]
      %v1402 = vld [vmem:[#allocation2 + $0xc8] sm:$0xff]
      %v1403 = vld [vmem:[#allocation2 + $0xd0] sm:$0xff]
      %v1404 = vld [vmem:[#allocation2 + $0xd8] sm:$0xff]
      %v1405 = vld [vmem:[#allocation2 + $0xe0] sm:$0xff]
      %v1406 = vld [vmem:[#allocation2 + $0xe8] sm:$0xff]
      %v1407 = vld [vmem:[#allocation2 + $0xf0] sm:$0xff]
      %v1408 = vld [vmem:[#allocation2 + $0xf8] sm:$0xff]
      %v1409 = vld [vmem:[#allocation2 + $0x100] sm:$0xff]
      %v1410 = vld [vmem:[#allocation2 + $0x108] sm:$0xff]
      %v1411 = vld [vmem:[#allocation2 + $0x110] sm:$0xff]
      %v1412 = vld [vmem:[#allocation2 + $0x118] sm:$0xff]
      %s1413 = scalar_lea.vmem %s1, 96
      %v1414 = vld [vmem:[%s1413] sm:$0xf]
      %v1415 = vld [vmem:[%s1413 + $0x4] sm:$0xf]
      %v1416 = vld [vmem:[%s1413 + $0x8] sm:$0xf]
      %v1417 = vld [vmem:[%s1413 + $0xc] sm:$0xf]
      %v1418 = vld [vmem:[%s1413 + $0x10] sm:$0xf]
      %v1419 = vld [vmem:[%s1413 + $0x14] sm:$0xf]
      %v1420 = vld [vmem:[%s1413 + $0x18] sm:$0xf]
      %v1421 = vld [vmem:[%s1413 + $0x1c] sm:$0xf]
      %v1430 = vunpack.c.l.b16 %v1414
      %v1431 = vunpack.c.l.b16 %v1415
      %v1432 = vunpack.c.l.b16 %v1416
      %v1433 = vunpack.c.l.b16 %v1417
      %v1434 = vunpack.c.l.b16 %v1418
      %v1435 = vunpack.c.l.b16 %v1419
      %v1436 = vunpack.c.l.b16 %v1420
      %v1437 = vunpack.c.l.b16 %v1421
      %v1438 = vpack.c.b16 %v1431, %v1430
      %v1439 = vpack.c.b16 %v1433, %v1432
      %v1440 = vpack.c.b16 %v1435, %v1434
      %v1441 = vpack.c.b16 %v1437, %v1436
      %v1447 = vsel %vm243, %v1359, 0
      %v1450 = vsel %vm243, %v1360, 0
      %v1453 = vsel %vm243, %v1361, 0
      %v1456 = vsel %vm243, %v1362, 0
      %v1459 = vsel %vm243, %v1363, 0
      %v1462 = vsel %vm243, %v1364, 0
      %v1465 = vsel %vm243, %v1365, 0
      %v1468 = vsel %vm243, %v1366, 0
      %v1471 = vsel %vm243, %v1367, 0
      %v1474 = vsel %vm243, %v1368, 0
      %v1477 = vsel %vm243, %v1369, 0
      %v1480 = vsel %vm243, %v1370, 0
      %v1483 = vsel %vm243, %v1371, 0
      %v1486 = vsel %vm243, %v1372, 0
      %v1489 = vsel %vm243, %v1373, 0
      %v1492 = vsel %vm243, %v1374, 0
      %v1495 = vsel %vm243, %v1375, 0
      %v1498 = vsel %vm243, %v1376, 0
      %1500 = vmatpush.bf16.msra.mxu0 0
      %1501 = vmatpush.bf16.msra.mxu0 0
      %1502 = vmatpush.bf16.msra.mxu0 0
      %1503 = vmatpush.bf16.msra.mxu0 0
      %1504 = vmatpush.bf16.msra.mxu0 %v1441
      %1505 = vmatpush.bf16.msra.mxu0 %v1440
      %1506 = vmatpush.bf16.msra.mxu0 %v1439
      %1507 = vmatpush.bf16.msra.mxu0 %v1438
      %1508 = vmatmul.bf16.gmra.mxu0 %v1447
      %v1509 = vpop.f32.mrf.mxu0
      %v1510 = vadd.f32 0.0, %v1509
      %v1511 = vpop.f32.mrf.mxu0
      %v1512 = vadd.f32 0.0, %v1511
      %1513 = vmatmul.bf16.gmra.mxu0 %v1450
      %v1514 = vpop.f32.mrf.mxu0
      %v1515 = vadd.f32 0.0, %v1514
      %v1516 = vpop.f32.mrf.mxu0
      %v1517 = vadd.f32 0.0, %v1516
      %1518 = vmatmul.bf16.gmra.mxu0 %v1453
      %v1519 = vpop.f32.mrf.mxu0
      %v1520 = vadd.f32 0.0, %v1519
      %v1521 = vpop.f32.mrf.mxu0
      %v1522 = vadd.f32 0.0, %v1521
      %1523 = vmatmul.bf16.gmra.mxu0 %v1456
      %v1524 = vpop.f32.mrf.mxu0
      %v1525 = vadd.f32 0.0, %v1524
      %v1526 = vpop.f32.mrf.mxu0
      %v1527 = vadd.f32 0.0, %v1526
      %1528 = vmatmul.bf16.gmra.mxu0 %v1459
      %v1529 = vpop.f32.mrf.mxu0
      %v1530 = vadd.f32 0.0, %v1529
      %v1531 = vpop.f32.mrf.mxu0
      %v1532 = vadd.f32 0.0, %v1531
      %1533 = vmatmul.bf16.gmra.mxu0 %v1462
      %v1534 = vpop.f32.mrf.mxu0
      %v1535 = vadd.f32 0.0, %v1534
      %v1536 = vpop.f32.mrf.mxu0
      %v1537 = vadd.f32 0.0, %v1536
      %1538 = vmatmul.bf16.gmra.mxu0 %v1465
      %v1539 = vpop.f32.mrf.mxu0
      %v1540 = vadd.f32 0.0, %v1539
      %v1541 = vpop.f32.mrf.mxu0
      %v1542 = vadd.f32 0.0, %v1541
      %1543 = vmatmul.bf16.gmra.mxu0 %v1468
      %v1544 = vpop.f32.mrf.mxu0
      %v1545 = vadd.f32 0.0, %v1544
      %v1546 = vpop.f32.mrf.mxu0
      %v1547 = vadd.f32 0.0, %v1546
      %1548 = vmatmul.bf16.gmra.mxu0 %v1471
      %v1549 = vpop.f32.mrf.mxu0
      %v1550 = vadd.f32 0.0, %v1549
      %v1551 = vpop.f32.mrf.mxu0
      %v1552 = vadd.f32 0.0, %v1551
      %1553 = vmatmul.bf16.gmra.mxu0 %v1474
      %v1554 = vpop.f32.mrf.mxu0
      %v1555 = vadd.f32 0.0, %v1554
      %v1556 = vpop.f32.mrf.mxu0
      %v1557 = vadd.f32 0.0, %v1556
      %1558 = vmatmul.bf16.gmra.mxu0 %v1477
      %v1559 = vpop.f32.mrf.mxu0
      %v1560 = vadd.f32 0.0, %v1559
      %v1561 = vpop.f32.mrf.mxu0
      %v1562 = vadd.f32 0.0, %v1561
      %1563 = vmatmul.bf16.gmra.mxu0 %v1480
      %v1564 = vpop.f32.mrf.mxu0
      %v1565 = vadd.f32 0.0, %v1564
      %v1566 = vpop.f32.mrf.mxu0
      %v1567 = vadd.f32 0.0, %v1566
      %1568 = vmatmul.bf16.gmra.mxu0 %v1483
      %v1569 = vpop.f32.mrf.mxu0
      %v1570 = vadd.f32 0.0, %v1569
      %v1571 = vpop.f32.mrf.mxu0
      %v1572 = vadd.f32 0.0, %v1571
      %1573 = vmatmul.bf16.gmra.mxu0 %v1486
      %v1574 = vpop.f32.mrf.mxu0
      %v1575 = vadd.f32 0.0, %v1574
      %v1576 = vpop.f32.mrf.mxu0
      %v1577 = vadd.f32 0.0, %v1576
      %1578 = vmatmul.bf16.gmra.mxu0 %v1489
      %v1579 = vpop.f32.mrf.mxu0
      %v1580 = vadd.f32 0.0, %v1579
      %v1581 = vpop.f32.mrf.mxu0
      %v1582 = vadd.f32 0.0, %v1581
      %1583 = vmatmul.bf16.gmra.mxu0 %v1492
      %v1584 = vpop.f32.mrf.mxu0
      %v1585 = vadd.f32 0.0, %v1584
      %v1586 = vpop.f32.mrf.mxu0
      %v1587 = vadd.f32 0.0, %v1586
      %1588 = vmatmul.bf16.gmra.mxu0 %v1495
      %v1589 = vpop.f32.mrf.mxu0
      %v1590 = vadd.f32 0.0, %v1589
      %v1591 = vpop.f32.mrf.mxu0
      %v1592 = vadd.f32 0.0, %v1591
      %1593 = vmatmul.bf16.gmra.mxu0 %v1498
      %v1594 = vpop.f32.mrf.mxu0
      %v1595 = vadd.f32 0.0, %v1594
      %v1596 = vpop.f32.mrf.mxu0
      %v1597 = vadd.f32 0.0, %v1596
      %1598 = vdwg.mxu0
      %v1599 = vadd.f32 %v1377, %v1510
      %v1600 = vadd.f32 %v1378, %v1512
      %v1601 = vadd.f32 %v1379, %v1515
      %v1602 = vadd.f32 %v1380, %v1517
      %v1603 = vadd.f32 %v1381, %v1520
      %v1604 = vadd.f32 %v1382, %v1522
      %v1605 = vadd.f32 %v1383, %v1525
      %v1606 = vadd.f32 %v1384, %v1527
      %v1607 = vadd.f32 %v1385, %v1530
      %v1608 = vadd.f32 %v1386, %v1532
      %v1609 = vadd.f32 %v1387, %v1535
      %v1610 = vadd.f32 %v1388, %v1537
      %v1611 = vadd.f32 %v1389, %v1540
      %v1612 = vadd.f32 %v1390, %v1542
      %v1613 = vadd.f32 %v1391, %v1545
      %v1614 = vadd.f32 %v1392, %v1547
      %v1615 = vadd.f32 %v1393, %v1550
      %v1616 = vadd.f32 %v1394, %v1552
      %v1617 = vadd.f32 %v1395, %v1555
      %v1618 = vadd.f32 %v1396, %v1557
      %v1619 = vadd.f32 %v1397, %v1560
      %v1620 = vadd.f32 %v1398, %v1562
      %v1621 = vadd.f32 %v1399, %v1565
      %v1622 = vadd.f32 %v1400, %v1567
      %v1623 = vadd.f32 %v1401, %v1570
      %v1624 = vadd.f32 %v1402, %v1572
      %v1625 = vadd.f32 %v1403, %v1575
      %v1626 = vadd.f32 %v1404, %v1577
      %v1627 = vadd.f32 %v1405, %v1580
      %v1628 = vadd.f32 %v1406, %v1582
      %v1629 = vadd.f32 %v1407, %v1585
      %v1630 = vadd.f32 %v1408, %v1587
      %v1631 = vadd.f32 %v1409, %v1590
      %v1632 = vadd.f32 %v1410, %v1592
      %v1633 = vadd.f32 %v1411, %v1595
      %v1634 = vadd.f32 %v1412, %v1597
      %1635 = vst.msk [vmem:[#allocation2] sm:$0xff] %vm243, %v1599
      %1636 = vst.msk [vmem:[#allocation2 + $0x8] sm:$0xff] %vm243, %v1600
      %1637 = vst.msk [vmem:[#allocation2 + $0x10] sm:$0xff] %vm243, %v1601
      %1638 = vst.msk [vmem:[#allocation2 + $0x18] sm:$0xff] %vm243, %v1602
      %1639 = vst.msk [vmem:[#allocation2 + $0x20] sm:$0xff] %vm243, %v1603
      %1640 = vst.msk [vmem:[#allocation2 + $0x28] sm:$0xff] %vm243, %v1604
      %1641 = vst.msk [vmem:[#allocation2 + $0x30] sm:$0xff] %vm243, %v1605
      %1642 = vst.msk [vmem:[#allocation2 + $0x38] sm:$0xff] %vm243, %v1606
      %1643 = vst.msk [vmem:[#allocation2 + $0x40] sm:$0xff] %vm243, %v1607
      %1644 = vst.msk [vmem:[#allocation2 + $0x48] sm:$0xff] %vm243, %v1608
      %1645 = vst.msk [vmem:[#allocation2 + $0x50] sm:$0xff] %vm243, %v1609
      %1646 = vst.msk [vmem:[#allocation2 + $0x58] sm:$0xff] %vm243, %v1610
      %1647 = vst.msk [vmem:[#allocation2 + $0x60] sm:$0xff] %vm243, %v1611
      %1648 = vst.msk [vmem:[#allocation2 + $0x68] sm:$0xff] %vm243, %v1612
      %1649 = vst.msk [vmem:[#allocation2 + $0x70] sm:$0xff] %vm243, %v1613
      %1650 = vst.msk [vmem:[#allocation2 + $0x78] sm:$0xff] %vm243, %v1614
      %1651 = vst.msk [vmem:[#allocation2 + $0x80] sm:$0xff] %vm243, %v1615
      %1652 = vst.msk [vmem:[#allocation2 + $0x88] sm:$0xff] %vm243, %v1616
      %1653 = vst.msk [vmem:[#allocation2 + $0x90] sm:$0xff] %vm243, %v1617
      %1654 = vst.msk [vmem:[#allocation2 + $0x98] sm:$0xff] %vm243, %v1618
      %1655 = vst.msk [vmem:[#allocation2 + $0xa0] sm:$0xff] %vm243, %v1619
      %1656 = vst.msk [vmem:[#allocation2 + $0xa8] sm:$0xff] %vm243, %v1620
      %1657 = vst.msk [vmem:[#allocation2 + $0xb0] sm:$0xff] %vm243, %v1621
      %1658 = vst.msk [vmem:[#allocation2 + $0xb8] sm:$0xff] %vm243, %v1622
      %1659 = vst.msk [vmem:[#allocation2 + $0xc0] sm:$0xff] %vm243, %v1623
      %1660 = vst.msk [vmem:[#allocation2 + $0xc8] sm:$0xff] %vm243, %v1624
      %1661 = vst.msk [vmem:[#allocation2 + $0xd0] sm:$0xff] %vm243, %v1625
      %1662 = vst.msk [vmem:[#allocation2 + $0xd8] sm:$0xff] %vm243, %v1626
      %1663 = vst.msk [vmem:[#allocation2 + $0xe0] sm:$0xff] %vm243, %v1627
      %1664 = vst.msk [vmem:[#allocation2 + $0xe8] sm:$0xff] %vm243, %v1628
      %1665 = vst.msk [vmem:[#allocation2 + $0xf0] sm:$0xff] %vm243, %v1629
      %1666 = vst.msk [vmem:[#allocation2 + $0xf8] sm:$0xff] %vm243, %v1630
      %1667 = vst.msk [vmem:[#allocation2 + $0x100] sm:$0xff] %vm243, %v1631
      %1668 = vst.msk [vmem:[#allocation2 + $0x108] sm:$0xff] %vm243, %v1632
      %1669 = vst.msk [vmem:[#allocation2 + $0x110] sm:$0xff] %vm243, %v1633
      %1670 = vst.msk [vmem:[#allocation2 + $0x118] sm:$0xff] %vm243, %v1634
      %v1671 = vld [vmem:[%s230 + $0x13] sm:$0xff]
      %v1672 = vld [vmem:[%s230 + $0x1b] sm:$0xff]
      %v1673 = vld [vmem:[%s230 + $0x23] sm:$0xff]
      %v1674 = vld [vmem:[%s230 + $0x2b] sm:$0xff]
      %v1675 = vld [vmem:[%s230 + $0x33] sm:$0xff]
      %v1676 = vld [vmem:[%s230 + $0x3b] sm:$0xff]
      %v1677 = vld [vmem:[%s230 + $0x43] sm:$0xff]
      %v1678 = vld [vmem:[%s230 + $0x4b] sm:$0xff]
      %v1679 = vld [vmem:[%s230 + $0x53] sm:$0xff]
      %v1680 = vld [vmem:[%s230 + $0x5b] sm:$0xff]
      %v1681 = vld [vmem:[%s230 + $0x63] sm:$0xff]
      %v1682 = vld [vmem:[%s230 + $0x6b] sm:$0xff]
      %v1683 = vld [vmem:[%s230 + $0x73] sm:$0xff]
      %v1684 = vld [vmem:[%s230 + $0x7b] sm:$0xff]
      %v1685 = vld [vmem:[%s230 + $0x83] sm:$0xff]
      %v1686 = vld [vmem:[%s230 + $0x8b] sm:$0xff]
      %v1687 = vld [vmem:[%s230 + $0x93] sm:$0xff]
      %v1688 = vld [vmem:[%s230 + $0x9b] sm:$0xff]
      %v1689 = vld [vmem:[%s230 + $0xa3] sm:$0xff]
      %v1690 = vld [vmem:[%s230 + $0xab] sm:$0xff]
      %v1691 = vld [vmem:[%s230 + $0xb3] sm:$0xff]
      %v1692 = vld [vmem:[%s230 + $0xbb] sm:$0xff]
      %v1693 = vld [vmem:[%s230 + $0xc3] sm:$0xff]
      %v1694 = vld [vmem:[%s230 + $0xcb] sm:$0xff]
      %v1695 = vld [vmem:[%s230 + $0xd3] sm:$0xff]
      %v1696 = vld [vmem:[%s230 + $0xdb] sm:$0xff]
      %v1697 = vld [vmem:[%s230 + $0xe3] sm:$0xff]
      %v1698 = vld [vmem:[%s230 + $0xeb] sm:$0xff]
      %v1699 = vld [vmem:[%s230 + $0xf3] sm:$0xff]
      %v1700 = vld [vmem:[%s230 + $0xfb] sm:$0xff]
      %v1701 = vld [vmem:[%s230 + $0x103] sm:$0xff]
      %v1702 = vld [vmem:[%s230 + $0x10b] sm:$0xff]
      %v1703 = vld [vmem:[%s230 + $0x113] sm:$0xff]
      %v1704 = vld [vmem:[%s230 + $0x11b] sm:$0xff]
      %v1705 = vld [vmem:[%s230 + $0x123] sm:$0xff]
      %v1706 = vld [vmem:[%s230 + $0x12b] sm:$0xff]
      %v1707 = vpack.c.bf16 %v1672, %v1671
      %v1708 = vpack.c.bf16 %v1674, %v1673
      %v1709 = vpack.c.bf16 %v1676, %v1675
      %v1710 = vpack.c.bf16 %v1678, %v1677
      %v1711 = vpack.c.bf16 %v1680, %v1679
      %v1712 = vpack.c.bf16 %v1682, %v1681
      %v1713 = vpack.c.bf16 %v1684, %v1683
      %v1714 = vpack.c.bf16 %v1686, %v1685
      %v1715 = vpack.c.bf16 %v1688, %v1687
      %v1716 = vpack.c.bf16 %v1690, %v1689
      %v1717 = vpack.c.bf16 %v1692, %v1691
      %v1718 = vpack.c.bf16 %v1694, %v1693
      %v1719 = vpack.c.bf16 %v1696, %v1695
      %v1720 = vpack.c.bf16 %v1698, %v1697
      %v1721 = vpack.c.bf16 %v1700, %v1699
      %v1722 = vpack.c.bf16 %v1702, %v1701
      %v1723 = vpack.c.bf16 %v1704, %v1703
      %v1724 = vpack.c.bf16 %v1706, %v1705
      %v1725 = vld [vmem:[#allocation2] sm:$0xff]
      %v1726 = vld [vmem:[#allocation2 + $0x8] sm:$0xff]
      %v1727 = vld [vmem:[#allocation2 + $0x10] sm:$0xff]
      %v1728 = vld [vmem:[#allocation2 + $0x18] sm:$0xff]
      %v1729 = vld [vmem:[#allocation2 + $0x20] sm:$0xff]
      %v1730 = vld [vmem:[#allocation2 + $0x28] sm:$0xff]
      %v1731 = vld [vmem:[#allocation2 + $0x30] sm:$0xff]
      %v1732 = vld [vmem:[#allocation2 + $0x38] sm:$0xff]
      %v1733 = vld [vmem:[#allocation2 + $0x40] sm:$0xff]
      %v1734 = vld [vmem:[#allocation2 + $0x48] sm:$0xff]
      %v1735 = vld [vmem:[#allocation2 + $0x50] sm:$0xff]
      %v1736 = vld [vmem:[#allocation2 + $0x58] sm:$0xff]
      %v1737 = vld [vmem:[#allocation2 + $0x60] sm:$0xff]
      %v1738 = vld [vmem:[#allocation2 + $0x68] sm:$0xff]
      %v1739 = vld [vmem:[#allocation2 + $0x70] sm:$0xff]
      %v1740 = vld [vmem:[#allocation2 + $0x78] sm:$0xff]
      %v1741 = vld [vmem:[#allocation2 + $0x80] sm:$0xff]
      %v1742 = vld [vmem:[#allocation2 + $0x88] sm:$0xff]
      %v1743 = vld [vmem:[#allocation2 + $0x90] sm:$0xff]
      %v1744 = vld [vmem:[#allocation2 + $0x98] sm:$0xff]
      %v1745 = vld [vmem:[#allocation2 + $0xa0] sm:$0xff]
      %v1746 = vld [vmem:[#allocation2 + $0xa8] sm:$0xff]
      %v1747 = vld [vmem:[#allocation2 + $0xb0] sm:$0xff]
      %v1748 = vld [vmem:[#allocation2 + $0xb8] sm:$0xff]
      %v1749 = vld [vmem:[#allocation2 + $0xc0] sm:$0xff]
      %v1750 = vld [vmem:[#allocation2 + $0xc8] sm:$0xff]
      %v1751 = vld [vmem:[#allocation2 + $0xd0] sm:$0xff]
      %v1752 = vld [vmem:[#allocation2 + $0xd8] sm:$0xff]
      %v1753 = vld [vmem:[#allocation2 + $0xe0] sm:$0xff]
      %v1754 = vld [vmem:[#allocation2 + $0xe8] sm:$0xff]
      %v1755 = vld [vmem:[#allocation2 + $0xf0] sm:$0xff]
      %v1756 = vld [vmem:[#allocation2 + $0xf8] sm:$0xff]
      %v1757 = vld [vmem:[#allocation2 + $0x100] sm:$0xff]
      %v1758 = vld [vmem:[#allocation2 + $0x108] sm:$0xff]
      %v1759 = vld [vmem:[#allocation2 + $0x110] sm:$0xff]
      %v1760 = vld [vmem:[#allocation2 + $0x118] sm:$0xff]
      %s1761 = scalar_lea.vmem %s1, 128
      %v1762 = vld [vmem:[%s1761] sm:$0xf]
      %v1763 = vld [vmem:[%s1761 + $0x4] sm:$0xf]
      %v1764 = vld [vmem:[%s1761 + $0x8] sm:$0xf]
      %v1765 = vld [vmem:[%s1761 + $0xc] sm:$0xf]
      %v1766 = vld [vmem:[%s1761 + $0x10] sm:$0xf]
      %v1767 = vld [vmem:[%s1761 + $0x14] sm:$0xf]
      %v1768 = vld [vmem:[%s1761 + $0x18] sm:$0xf]
      %v1769 = vld [vmem:[%s1761 + $0x1c] sm:$0xf]
      %v1778 = vunpack.c.l.b16 %v1762
      %v1779 = vunpack.c.l.b16 %v1763
      %v1780 = vunpack.c.l.b16 %v1764
      %v1781 = vunpack.c.l.b16 %v1765
      %v1782 = vunpack.c.l.b16 %v1766
      %v1783 = vunpack.c.l.b16 %v1767
      %v1784 = vunpack.c.l.b16 %v1768
      %v1785 = vunpack.c.l.b16 %v1769
      %v1786 = vpack.c.b16 %v1779, %v1778
      %v1787 = vpack.c.b16 %v1781, %v1780
      %v1788 = vpack.c.b16 %v1783, %v1782
      %v1789 = vpack.c.b16 %v1785, %v1784
      %v1795 = vsel %vm243, %v1707, 0
      %v1798 = vsel %vm243, %v1708, 0
      %v1801 = vsel %vm243, %v1709, 0
      %v1804 = vsel %vm243, %v1710, 0
      %v1807 = vsel %vm243, %v1711, 0
      %v1810 = vsel %vm243, %v1712, 0
      %v1813 = vsel %vm243, %v1713, 0
      %v1816 = vsel %vm243, %v1714, 0
      %v1819 = vsel %vm243, %v1715, 0
      %v1822 = vsel %vm243, %v1716, 0
      %v1825 = vsel %vm243, %v1717, 0
      %v1828 = vsel %vm243, %v1718, 0
      %v1831 = vsel %vm243, %v1719, 0
      %v1834 = vsel %vm243, %v1720, 0
      %v1837 = vsel %vm243, %v1721, 0
      %v1840 = vsel %vm243, %v1722, 0
      %v1843 = vsel %vm243, %v1723, 0
      %v1846 = vsel %vm243, %v1724, 0
      %1848 = vmatpush.bf16.msra.mxu0 0
      %1849 = vmatpush.bf16.msra.mxu0 0
      %1850 = vmatpush.bf16.msra.mxu0 0
      %1851 = vmatpush.bf16.msra.mxu0 0
      %1852 = vmatpush.bf16.msra.mxu0 %v1789
      %1853 = vmatpush.bf16.msra.mxu0 %v1788
      %1854 = vmatpush.bf16.msra.mxu0 %v1787
      %1855 = vmatpush.bf16.msra.mxu0 %v1786
      %1856 = vmatmul.bf16.gmra.mxu0 %v1795
      %v1857 = vpop.f32.mrf.mxu0
      %v1858 = vadd.f32 0.0, %v1857
      %v1859 = vpop.f32.mrf.mxu0
      %v1860 = vadd.f32 0.0, %v1859
      %1861 = vmatmul.bf16.gmra.mxu0 %v1798
      %v1862 = vpop.f32.mrf.mxu0
      %v1863 = vadd.f32 0.0, %v1862
      %v1864 = vpop.f32.mrf.mxu0
      %v1865 = vadd.f32 0.0, %v1864
      %1866 = vmatmul.bf16.gmra.mxu0 %v1801
      %v1867 = vpop.f32.mrf.mxu0
      %v1868 = vadd.f32 0.0, %v1867
      %v1869 = vpop.f32.mrf.mxu0
      %v1870 = vadd.f32 0.0, %v1869
      %1871 = vmatmul.bf16.gmra.mxu0 %v1804
      %v1872 = vpop.f32.mrf.mxu0
      %v1873 = vadd.f32 0.0, %v1872
      %v1874 = vpop.f32.mrf.mxu0
      %v1875 = vadd.f32 0.0, %v1874
      %1876 = vmatmul.bf16.gmra.mxu0 %v1807
      %v1877 = vpop.f32.mrf.mxu0
      %v1878 = vadd.f32 0.0, %v1877
      %v1879 = vpop.f32.mrf.mxu0
      %v1880 = vadd.f32 0.0, %v1879
      %1881 = vmatmul.bf16.gmra.mxu0 %v1810
      %v1882 = vpop.f32.mrf.mxu0
      %v1883 = vadd.f32 0.0, %v1882
      %v1884 = vpop.f32.mrf.mxu0
      %v1885 = vadd.f32 0.0, %v1884
      %1886 = vmatmul.bf16.gmra.mxu0 %v1813
      %v1887 = vpop.f32.mrf.mxu0
      %v1888 = vadd.f32 0.0, %v1887
      %v1889 = vpop.f32.mrf.mxu0
      %v1890 = vadd.f32 0.0, %v1889
      %1891 = vmatmul.bf16.gmra.mxu0 %v1816
      %v1892 = vpop.f32.mrf.mxu0
      %v1893 = vadd.f32 0.0, %v1892
      %v1894 = vpop.f32.mrf.mxu0
      %v1895 = vadd.f32 0.0, %v1894
      %1896 = vmatmul.bf16.gmra.mxu0 %v1819
      %v1897 = vpop.f32.mrf.mxu0
      %v1898 = vadd.f32 0.0, %v1897
      %v1899 = vpop.f32.mrf.mxu0
      %v1900 = vadd.f32 0.0, %v1899
      %1901 = vmatmul.bf16.gmra.mxu0 %v1822
      %v1902 = vpop.f32.mrf.mxu0
      %v1903 = vadd.f32 0.0, %v1902
      %v1904 = vpop.f32.mrf.mxu0
      %v1905 = vadd.f32 0.0, %v1904
      %1906 = vmatmul.bf16.gmra.mxu0 %v1825
      %v1907 = vpop.f32.mrf.mxu0
      %v1908 = vadd.f32 0.0, %v1907
      %v1909 = vpop.f32.mrf.mxu0
      %v1910 = vadd.f32 0.0, %v1909
      %1911 = vmatmul.bf16.gmra.mxu0 %v1828
      %v1912 = vpop.f32.mrf.mxu0
      %v1913 = vadd.f32 0.0, %v1912
      %v1914 = vpop.f32.mrf.mxu0
      %v1915 = vadd.f32 0.0, %v1914
      %1916 = vmatmul.bf16.gmra.mxu0 %v1831
      %v1917 = vpop.f32.mrf.mxu0
      %v1918 = vadd.f32 0.0, %v1917
      %v1919 = vpop.f32.mrf.mxu0
      %v1920 = vadd.f32 0.0, %v1919
      %1921 = vmatmul.bf16.gmra.mxu0 %v1834
      %v1922 = vpop.f32.mrf.mxu0
      %v1923 = vadd.f32 0.0, %v1922
      %v1924 = vpop.f32.mrf.mxu0
      %v1925 = vadd.f32 0.0, %v1924
      %1926 = vmatmul.bf16.gmra.mxu0 %v1837
      %v1927 = vpop.f32.mrf.mxu0
      %v1928 = vadd.f32 0.0, %v1927
      %v1929 = vpop.f32.mrf.mxu0
      %v1930 = vadd.f32 0.0, %v1929
      %1931 = vmatmul.bf16.gmra.mxu0 %v1840
      %v1932 = vpop.f32.mrf.mxu0
      %v1933 = vadd.f32 0.0, %v1932
      %v1934 = vpop.f32.mrf.mxu0
      %v1935 = vadd.f32 0.0, %v1934
      %1936 = vmatmul.bf16.gmra.mxu0 %v1843
      %v1937 = vpop.f32.mrf.mxu0
      %v1938 = vadd.f32 0.0, %v1937
      %v1939 = vpop.f32.mrf.mxu0
      %v1940 = vadd.f32 0.0, %v1939
      %1941 = vmatmul.bf16.gmra.mxu0 %v1846
      %v1942 = vpop.f32.mrf.mxu0
      %v1943 = vadd.f32 0.0, %v1942
      %v1944 = vpop.f32.mrf.mxu0
      %v1945 = vadd.f32 0.0, %v1944
      %1946 = vdwg.mxu0
      %v1947 = vadd.f32 %v1725, %v1858
      %v1948 = vadd.f32 %v1726, %v1860
      %v1949 = vadd.f32 %v1727, %v1863
      %v1950 = vadd.f32 %v1728, %v1865
      %v1951 = vadd.f32 %v1729, %v1868
      %v1952 = vadd.f32 %v1730, %v1870
      %v1953 = vadd.f32 %v1731, %v1873
      %v1954 = vadd.f32 %v1732, %v1875
      %v1955 = vadd.f32 %v1733, %v1878
      %v1956 = vadd.f32 %v1734, %v1880
      %v1957 = vadd.f32 %v1735, %v1883
      %v1958 = vadd.f32 %v1736, %v1885
      %v1959 = vadd.f32 %v1737, %v1888
      %v1960 = vadd.f32 %v1738, %v1890
      %v1961 = vadd.f32 %v1739, %v1893
      %v1962 = vadd.f32 %v1740, %v1895
      %v1963 = vadd.f32 %v1741, %v1898
      %v1964 = vadd.f32 %v1742, %v1900
      %v1965 = vadd.f32 %v1743, %v1903
      %v1966 = vadd.f32 %v1744, %v1905
      %v1967 = vadd.f32 %v1745, %v1908
      %v1968 = vadd.f32 %v1746, %v1910
      %v1969 = vadd.f32 %v1747, %v1913
      %v1970 = vadd.f32 %v1748, %v1915
      %v1971 = vadd.f32 %v1749, %v1918
      %v1972 = vadd.f32 %v1750, %v1920
      %v1973 = vadd.f32 %v1751, %v1923
      %v1974 = vadd.f32 %v1752, %v1925
      %v1975 = vadd.f32 %v1753, %v1928
      %v1976 = vadd.f32 %v1754, %v1930
      %v1977 = vadd.f32 %v1755, %v1933
      %v1978 = vadd.f32 %v1756, %v1935
      %v1979 = vadd.f32 %v1757, %v1938
      %v1980 = vadd.f32 %v1758, %v1940
      %v1981 = vadd.f32 %v1759, %v1943
      %v1982 = vadd.f32 %v1760, %v1945
      %1983 = vst.msk [vmem:[#allocation2] sm:$0xff] %vm243, %v1947
      %1984 = vst.msk [vmem:[#allocation2 + $0x8] sm:$0xff] %vm243, %v1948
      %1985 = vst.msk [vmem:[#allocation2 + $0x10] sm:$0xff] %vm243, %v1949
      %1986 = vst.msk [vmem:[#allocation2 + $0x18] sm:$0xff] %vm243, %v1950
      %1987 = vst.msk [vmem:[#allocation2 + $0x20] sm:$0xff] %vm243, %v1951
      %1988 = vst.msk [vmem:[#allocation2 + $0x28] sm:$0xff] %vm243, %v1952
      %1989 = vst.msk [vmem:[#allocation2 + $0x30] sm:$0xff] %vm243, %v1953
      %1990 = vst.msk [vmem:[#allocation2 + $0x38] sm:$0xff] %vm243, %v1954
      %1991 = vst.msk [vmem:[#allocation2 + $0x40] sm:$0xff] %vm243, %v1955
      %1992 = vst.msk [vmem:[#allocation2 + $0x48] sm:$0xff] %vm243, %v1956
      %1993 = vst.msk [vmem:[#allocation2 + $0x50] sm:$0xff] %vm243, %v1957
      %1994 = vst.msk [vmem:[#allocation2 + $0x58] sm:$0xff] %vm243, %v1958
      %1995 = vst.msk [vmem:[#allocation2 + $0x60] sm:$0xff] %vm243, %v1959
      %1996 = vst.msk [vmem:[#allocation2 + $0x68] sm:$0xff] %vm243, %v1960
      %1997 = vst.msk [vmem:[#allocation2 + $0x70] sm:$0xff] %vm243, %v1961
      %1998 = vst.msk [vmem:[#allocation2 + $0x78] sm:$0xff] %vm243, %v1962
      %1999 = vst.msk [vmem:[#allocation2 + $0x80] sm:$0xff] %vm243, %v1963
      %2000 = vst.msk [vmem:[#allocation2 + $0x88] sm:$0xff] %vm243, %v1964
      %2001 = vst.msk [vmem:[#allocation2 + $0x90] sm:$0xff] %vm243, %v1965
      %2002 = vst.msk [vmem:[#allocation2 + $0x98] sm:$0xff] %vm243, %v1966
      %2003 = vst.msk [vmem:[#allocation2 + $0xa0] sm:$0xff] %vm243, %v1967
      %2004 = vst.msk [vmem:[#allocation2 + $0xa8] sm:$0xff] %vm243, %v1968
      %2005 = vst.msk [vmem:[#allocation2 + $0xb0] sm:$0xff] %vm243, %v1969
      %2006 = vst.msk [vmem:[#allocation2 + $0xb8] sm:$0xff] %vm243, %v1970
      %2007 = vst.msk [vmem:[#allocation2 + $0xc0] sm:$0xff] %vm243, %v1971
      %2008 = vst.msk [vmem:[#allocation2 + $0xc8] sm:$0xff] %vm243, %v1972
      %2009 = vst.msk [vmem:[#allocation2 + $0xd0] sm:$0xff] %vm243, %v1973
      %2010 = vst.msk [vmem:[#allocation2 + $0xd8] sm:$0xff] %vm243, %v1974
      %2011 = vst.msk [vmem:[#allocation2 + $0xe0] sm:$0xff] %vm243, %v1975
      %2012 = vst.msk [vmem:[#allocation2 + $0xe8] sm:$0xff] %vm243, %v1976
      %2013 = vst.msk [vmem:[#allocation2 + $0xf0] sm:$0xff] %vm243, %v1977
      %2014 = vst.msk [vmem:[#allocation2 + $0xf8] sm:$0xff] %vm243, %v1978
      %2015 = vst.msk [vmem:[#allocation2 + $0x100] sm:$0xff] %vm243, %v1979
      %2016 = vst.msk [vmem:[#allocation2 + $0x108] sm:$0xff] %vm243, %v1980
      %2017 = vst.msk [vmem:[#allocation2 + $0x110] sm:$0xff] %vm243, %v1981
      %2018 = vst.msk [vmem:[#allocation2 + $0x118] sm:$0xff] %vm243, %v1982
      %v2019 = vld [vmem:[%s230 + $0x14] sm:$0xff]
      %v2020 = vld [vmem:[%s230 + $0x1c] sm:$0xff]
      %v2021 = vld [vmem:[%s230 + $0x24] sm:$0xff]
      %v2022 = vld [vmem:[%s230 + $0x2c] sm:$0xff]
      %v2023 = vld [vmem:[%s230 + $0x34] sm:$0xff]
      %v2024 = vld [vmem:[%s230 + $0x3c] sm:$0xff]
      %v2025 = vld [vmem:[%s230 + $0x44] sm:$0xff]
      %v2026 = vld [vmem:[%s230 + $0x4c] sm:$0xff]
      %v2027 = vld [vmem:[%s230 + $0x54] sm:$0xff]
      %v2028 = vld [vmem:[%s230 + $0x5c] sm:$0xff]
      %v2029 = vld [vmem:[%s230 + $0x64] sm:$0xff]
      %v2030 = vld [vmem:[%s230 + $0x6c] sm:$0xff]
      %v2031 = vld [vmem:[%s230 + $0x74] sm:$0xff]
      %v2032 = vld [vmem:[%s230 + $0x7c] sm:$0xff]
      %v2033 = vld [vmem:[%s230 + $0x84] sm:$0xff]
      %v2034 = vld [vmem:[%s230 + $0x8c] sm:$0xff]
      %v2035 = vld [vmem:[%s230 + $0x94] sm:$0xff]
      %v2036 = vld [vmem:[%s230 + $0x9c] sm:$0xff]
      %v2037 = vld [vmem:[%s230 + $0xa4] sm:$0xff]
      %v2038 = vld [vmem:[%s230 + $0xac] sm:$0xff]
      %v2039 = vld [vmem:[%s230 + $0xb4] sm:$0xff]
      %v2040 = vld [vmem:[%s230 + $0xbc] sm:$0xff]
      %v2041 = vld [vmem:[%s230 + $0xc4] sm:$0xff]
      %v2042 = vld [vmem:[%s230 + $0xcc] sm:$0xff]
      %v2043 = vld [vmem:[%s230 + $0xd4] sm:$0xff]
      %v2044 = vld [vmem:[%s230 + $0xdc] sm:$0xff]
      %v2045 = vld [vmem:[%s230 + $0xe4] sm:$0xff]
      %v2046 = vld [vmem:[%s230 + $0xec] sm:$0xff]
      %v2047 = vld [vmem:[%s230 + $0xf4] sm:$0xff]
      %v2048 = vld [vmem:[%s230 + $0xfc] sm:$0xff]
      %v2049 = vld [vmem:[%s230 + $0x104] sm:$0xff]
      %v2050 = vld [vmem:[%s230 + $0x10c] sm:$0xff]
      %v2051 = vld [vmem:[%s230 + $0x114] sm:$0xff]
      %v2052 = vld [vmem:[%s230 + $0x11c] sm:$0xff]
      %v2053 = vld [vmem:[%s230 + $0x124] sm:$0xff]
      %v2054 = vld [vmem:[%s230 + $0x12c] sm:$0xff]
      %v2055 = vpack.c.bf16 %v2020, %v2019
      %v2056 = vpack.c.bf16 %v2022, %v2021
      %v2057 = vpack.c.bf16 %v2024, %v2023
      %v2058 = vpack.c.bf16 %v2026, %v2025
      %v2059 = vpack.c.bf16 %v2028, %v2027
      %v2060 = vpack.c.bf16 %v2030, %v2029
      %v2061 = vpack.c.bf16 %v2032, %v2031
      %v2062 = vpack.c.bf16 %v2034, %v2033
      %v2063 = vpack.c.bf16 %v2036, %v2035
      %v2064 = vpack.c.bf16 %v2038, %v2037
      %v2065 = vpack.c.bf16 %v2040, %v2039
      %v2066 = vpack.c.bf16 %v2042, %v2041
      %v2067 = vpack.c.bf16 %v2044, %v2043
      %v2068 = vpack.c.bf16 %v2046, %v2045
      %v2069 = vpack.c.bf16 %v2048, %v2047
      %v2070 = vpack.c.bf16 %v2050, %v2049
      %v2071 = vpack.c.bf16 %v2052, %v2051
      %v2072 = vpack.c.bf16 %v2054, %v2053
      %v2073 = vld [vmem:[#allocation2] sm:$0xff]
      %v2074 = vld [vmem:[#allocation2 + $0x8] sm:$0xff]
      %v2075 = vld [vmem:[#allocation2 + $0x10] sm:$0xff]
      %v2076 = vld [vmem:[#allocation2 + $0x18] sm:$0xff]
      %v2077 = vld [vmem:[#allocation2 + $0x20] sm:$0xff]
      %v2078 = vld [vmem:[#allocation2 + $0x28] sm:$0xff]
      %v2079 = vld [vmem:[#allocation2 + $0x30] sm:$0xff]
      %v2080 = vld [vmem:[#allocation2 + $0x38] sm:$0xff]
      %v2081 = vld [vmem:[#allocation2 + $0x40] sm:$0xff]
      %v2082 = vld [vmem:[#allocation2 + $0x48] sm:$0xff]
      %v2083 = vld [vmem:[#allocation2 + $0x50] sm:$0xff]
      %v2084 = vld [vmem:[#allocation2 + $0x58] sm:$0xff]
      %v2085 = vld [vmem:[#allocation2 + $0x60] sm:$0xff]
      %v2086 = vld [vmem:[#allocation2 + $0x68] sm:$0xff]
      %v2087 = vld [vmem:[#allocation2 + $0x70] sm:$0xff]
      %v2088 = vld [vmem:[#allocation2 + $0x78] sm:$0xff]
      %v2089 = vld [vmem:[#allocation2 + $0x80] sm:$0xff]
      %v2090 = vld [vmem:[#allocation2 + $0x88] sm:$0xff]
      %v2091 = vld [vmem:[#allocation2 + $0x90] sm:$0xff]
      %v2092 = vld [vmem:[#allocation2 + $0x98] sm:$0xff]
      %v2093 = vld [vmem:[#allocation2 + $0xa0] sm:$0xff]
      %v2094 = vld [vmem:[#allocation2 + $0xa8] sm:$0xff]
      %v2095 = vld [vmem:[#allocation2 + $0xb0] sm:$0xff]
      %v2096 = vld [vmem:[#allocation2 + $0xb8] sm:$0xff]
      %v2097 = vld [vmem:[#allocation2 + $0xc0] sm:$0xff]
      %v2098 = vld [vmem:[#allocation2 + $0xc8] sm:$0xff]
      %v2099 = vld [vmem:[#allocation2 + $0xd0] sm:$0xff]
      %v2100 = vld [vmem:[#allocation2 + $0xd8] sm:$0xff]
      %v2101 = vld [vmem:[#allocation2 + $0xe0] sm:$0xff]
      %v2102 = vld [vmem:[#allocation2 + $0xe8] sm:$0xff]
      %v2103 = vld [vmem:[#allocation2 + $0xf0] sm:$0xff]
      %v2104 = vld [vmem:[#allocation2 + $0xf8] sm:$0xff]
      %v2105 = vld [vmem:[#allocation2 + $0x100] sm:$0xff]
      %v2106 = vld [vmem:[#allocation2 + $0x108] sm:$0xff]
      %v2107 = vld [vmem:[#allocation2 + $0x110] sm:$0xff]
      %v2108 = vld [vmem:[#allocation2 + $0x118] sm:$0xff]
      %s2109 = scalar_lea.vmem %s1, 160
      %v2110 = vld [vmem:[%s2109] sm:$0xf]
      %v2111 = vld [vmem:[%s2109 + $0x4] sm:$0xf]
      %v2112 = vld [vmem:[%s2109 + $0x8] sm:$0xf]
      %v2113 = vld [vmem:[%s2109 + $0xc] sm:$0xf]
      %v2114 = vld [vmem:[%s2109 + $0x10] sm:$0xf]
      %v2115 = vld [vmem:[%s2109 + $0x14] sm:$0xf]
      %v2116 = vld [vmem:[%s2109 + $0x18] sm:$0xf]
      %v2117 = vld [vmem:[%s2109 + $0x1c] sm:$0xf]
      %v2126 = vunpack.c.l.b16 %v2110
      %v2127 = vunpack.c.l.b16 %v2111
      %v2128 = vunpack.c.l.b16 %v2112
      %v2129 = vunpack.c.l.b16 %v2113
      %v2130 = vunpack.c.l.b16 %v2114
      %v2131 = vunpack.c.l.b16 %v2115
      %v2132 = vunpack.c.l.b16 %v2116
      %v2133 = vunpack.c.l.b16 %v2117
      %v2134 = vpack.c.b16 %v2127, %v2126
      %v2135 = vpack.c.b16 %v2129, %v2128
      %v2136 = vpack.c.b16 %v2131, %v2130
      %v2137 = vpack.c.b16 %v2133, %v2132
      %v2143 = vsel %vm243, %v2055, 0
      %v2146 = vsel %vm243, %v2056, 0
      %v2149 = vsel %vm243, %v2057, 0
      %v2152 = vsel %vm243, %v2058, 0
      %v2155 = vsel %vm243, %v2059, 0
      %v2158 = vsel %vm243, %v2060, 0
      %v2161 = vsel %vm243, %v2061, 0
      %v2164 = vsel %vm243, %v2062, 0
      %v2167 = vsel %vm243, %v2063, 0
      %v2170 = vsel %vm243, %v2064, 0
      %v2173 = vsel %vm243, %v2065, 0
      %v2176 = vsel %vm243, %v2066, 0
      %v2179 = vsel %vm243, %v2067, 0
      %v2182 = vsel %vm243, %v2068, 0
      %v2185 = vsel %vm243, %v2069, 0
      %v2188 = vsel %vm243, %v2070, 0
      %v2191 = vsel %vm243, %v2071, 0
      %v2194 = vsel %vm243, %v2072, 0
      %2196 = vmatpush.bf16.msra.mxu0 0
      %2197 = vmatpush.bf16.msra.mxu0 0
      %2198 = vmatpush.bf16.msra.mxu0 0
      %2199 = vmatpush.bf16.msra.mxu0 0
      %2200 = vmatpush.bf16.msra.mxu0 %v2137
      %2201 = vmatpush.bf16.msra.mxu0 %v2136
      %2202 = vmatpush.bf16.msra.mxu0 %v2135
      %2203 = vmatpush.bf16.msra.mxu0 %v2134
      %2204 = vmatmul.bf16.gmra.mxu0 %v2143
      %v2205 = vpop.f32.mrf.mxu0
      %v2206 = vadd.f32 0.0, %v2205
      %v2207 = vpop.f32.mrf.mxu0
      %v2208 = vadd.f32 0.0, %v2207
      %2209 = vmatmul.bf16.gmra.mxu0 %v2146
      %v2210 = vpop.f32.mrf.mxu0
      %v2211 = vadd.f32 0.0, %v2210
      %v2212 = vpop.f32.mrf.mxu0
      %v2213 = vadd.f32 0.0, %v2212
      %2214 = vmatmul.bf16.gmra.mxu0 %v2149
      %v2215 = vpop.f32.mrf.mxu0
      %v2216 = vadd.f32 0.0, %v2215
      %v2217 = vpop.f32.mrf.mxu0
      %v2218 = vadd.f32 0.0, %v2217
      %2219 = vmatmul.bf16.gmra.mxu0 %v2152
      %v2220 = vpop.f32.mrf.mxu0
      %v2221 = vadd.f32 0.0, %v2220
      %v2222 = vpop.f32.mrf.mxu0
      %v2223 = vadd.f32 0.0, %v2222
      %2224 = vmatmul.bf16.gmra.mxu0 %v2155
      %v2225 = vpop.f32.mrf.mxu0
      %v2226 = vadd.f32 0.0, %v2225
      %v2227 = vpop.f32.mrf.mxu0
      %v2228 = vadd.f32 0.0, %v2227
      %2229 = vmatmul.bf16.gmra.mxu0 %v2158
      %v2230 = vpop.f32.mrf.mxu0
      %v2231 = vadd.f32 0.0, %v2230
      %v2232 = vpop.f32.mrf.mxu0
      %v2233 = vadd.f32 0.0, %v2232
      %2234 = vmatmul.bf16.gmra.mxu0 %v2161
      %v2235 = vpop.f32.mrf.mxu0
      %v2236 = vadd.f32 0.0, %v2235
      %v2237 = vpop.f32.mrf.mxu0
      %v2238 = vadd.f32 0.0, %v2237
      %2239 = vmatmul.bf16.gmra.mxu0 %v2164
      %v2240 = vpop.f32.mrf.mxu0
      %v2241 = vadd.f32 0.0, %v2240
      %v2242 = vpop.f32.mrf.mxu0
      %v2243 = vadd.f32 0.0, %v2242
      %2244 = vmatmul.bf16.gmra.mxu0 %v2167
      %v2245 = vpop.f32.mrf.mxu0
      %v2246 = vadd.f32 0.0, %v2245
      %v2247 = vpop.f32.mrf.mxu0
      %v2248 = vadd.f32 0.0, %v2247
      %2249 = vmatmul.bf16.gmra.mxu0 %v2170
      %v2250 = vpop.f32.mrf.mxu0
      %v2251 = vadd.f32 0.0, %v2250
      %v2252 = vpop.f32.mrf.mxu0
      %v2253 = vadd.f32 0.0, %v2252
      %2254 = vmatmul.bf16.gmra.mxu0 %v2173
      %v2255 = vpop.f32.mrf.mxu0
      %v2256 = vadd.f32 0.0, %v2255
      %v2257 = vpop.f32.mrf.mxu0
      %v2258 = vadd.f32 0.0, %v2257
      %2259 = vmatmul.bf16.gmra.mxu0 %v2176
      %v2260 = vpop.f32.mrf.mxu0
      %v2261 = vadd.f32 0.0, %v2260
      %v2262 = vpop.f32.mrf.mxu0
      %v2263 = vadd.f32 0.0, %v2262
      %2264 = vmatmul.bf16.gmra.mxu0 %v2179
      %v2265 = vpop.f32.mrf.mxu0
      %v2266 = vadd.f32 0.0, %v2265
      %v2267 = vpop.f32.mrf.mxu0
      %v2268 = vadd.f32 0.0, %v2267
      %2269 = vmatmul.bf16.gmra.mxu0 %v2182
      %v2270 = vpop.f32.mrf.mxu0
      %v2271 = vadd.f32 0.0, %v2270
      %v2272 = vpop.f32.mrf.mxu0
      %v2273 = vadd.f32 0.0, %v2272
      %2274 = vmatmul.bf16.gmra.mxu0 %v2185
      %v2275 = vpop.f32.mrf.mxu0
      %v2276 = vadd.f32 0.0, %v2275
      %v2277 = vpop.f32.mrf.mxu0
      %v2278 = vadd.f32 0.0, %v2277
      %2279 = vmatmul.bf16.gmra.mxu0 %v2188
      %v2280 = vpop.f32.mrf.mxu0
      %v2281 = vadd.f32 0.0, %v2280
      %v2282 = vpop.f32.mrf.mxu0
      %v2283 = vadd.f32 0.0, %v2282
      %2284 = vmatmul.bf16.gmra.mxu0 %v2191
      %v2285 = vpop.f32.mrf.mxu0
      %v2286 = vadd.f32 0.0, %v2285
      %v2287 = vpop.f32.mrf.mxu0
      %v2288 = vadd.f32 0.0, %v2287
      %2289 = vmatmul.bf16.gmra.mxu0 %v2194
      %v2290 = vpop.f32.mrf.mxu0
      %v2291 = vadd.f32 0.0, %v2290
      %v2292 = vpop.f32.mrf.mxu0
      %v2293 = vadd.f32 0.0, %v2292
      %2294 = vdwg.mxu0
      %v2295 = vadd.f32 %v2073, %v2206
      %v2296 = vadd.f32 %v2074, %v2208
      %v2297 = vadd.f32 %v2075, %v2211
      %v2298 = vadd.f32 %v2076, %v2213
      %v2299 = vadd.f32 %v2077, %v2216
      %v2300 = vadd.f32 %v2078, %v2218
      %v2301 = vadd.f32 %v2079, %v2221
      %v2302 = vadd.f32 %v2080, %v2223
      %v2303 = vadd.f32 %v2081, %v2226
      %v2304 = vadd.f32 %v2082, %v2228
      %v2305 = vadd.f32 %v2083, %v2231
      %v2306 = vadd.f32 %v2084, %v2233
      %v2307 = vadd.f32 %v2085, %v2236
      %v2308 = vadd.f32 %v2086, %v2238
      %v2309 = vadd.f32 %v2087, %v2241
      %v2310 = vadd.f32 %v2088, %v2243
      %v2311 = vadd.f32 %v2089, %v2246
      %v2312 = vadd.f32 %v2090, %v2248
      %v2313 = vadd.f32 %v2091, %v2251
      %v2314 = vadd.f32 %v2092, %v2253
      %v2315 = vadd.f32 %v2093, %v2256
      %v2316 = vadd.f32 %v2094, %v2258
      %v2317 = vadd.f32 %v2095, %v2261
      %v2318 = vadd.f32 %v2096, %v2263
      %v2319 = vadd.f32 %v2097, %v2266
      %v2320 = vadd.f32 %v2098, %v2268
      %v2321 = vadd.f32 %v2099, %v2271
      %v2322 = vadd.f32 %v2100, %v2273
      %v2323 = vadd.f32 %v2101, %v2276
      %v2324 = vadd.f32 %v2102, %v2278
      %v2325 = vadd.f32 %v2103, %v2281
      %v2326 = vadd.f32 %v2104, %v2283
      %v2327 = vadd.f32 %v2105, %v2286
      %v2328 = vadd.f32 %v2106, %v2288
      %v2329 = vadd.f32 %v2107, %v2291
      %v2330 = vadd.f32 %v2108, %v2293
      %2331 = vst.msk [vmem:[#allocation2] sm:$0xff] %vm243, %v2295
      %2332 = vst.msk [vmem:[#allocation2 + $0x8] sm:$0xff] %vm243, %v2296
      %2333 = vst.msk [vmem:[#allocation2 + $0x10] sm:$0xff] %vm243, %v2297
      %2334 = vst.msk [vmem:[#allocation2 + $0x18] sm:$0xff] %vm243, %v2298
      %2335 = vst.msk [vmem:[#allocation2 + $0x20] sm:$0xff] %vm243, %v2299
      %2336 = vst.msk [vmem:[#allocation2 + $0x28] sm:$0xff] %vm243, %v2300
      %2337 = vst.msk [vmem:[#allocation2 + $0x30] sm:$0xff] %vm243, %v2301
      %2338 = vst.msk [vmem:[#allocation2 + $0x38] sm:$0xff] %vm243, %v2302
      %2339 = vst.msk [vmem:[#allocation2 + $0x40] sm:$0xff] %vm243, %v2303
      %2340 = vst.msk [vmem:[#allocation2 + $0x48] sm:$0xff] %vm243, %v2304
      %2341 = vst.msk [vmem:[#allocation2 + $0x50] sm:$0xff] %vm243, %v2305
      %2342 = vst.msk [vmem:[#allocation2 + $0x58] sm:$0xff] %vm243, %v2306
      %2343 = vst.msk [vmem:[#allocation2 + $0x60] sm:$0xff] %vm243, %v2307
      %2344 = vst.msk [vmem:[#allocation2 + $0x68] sm:$0xff] %vm243, %v2308
      %2345 = vst.msk [vmem:[#allocation2 + $0x70] sm:$0xff] %vm243, %v2309
      %2346 = vst.msk [vmem:[#allocation2 + $0x78] sm:$0xff] %vm243, %v2310
      %2347 = vst.msk [vmem:[#allocation2 + $0x80] sm:$0xff] %vm243, %v2311
      %2348 = vst.msk [vmem:[#allocation2 + $0x88] sm:$0xff] %vm243, %v2312
      %2349 = vst.msk [vmem:[#allocation2 + $0x90] sm:$0xff] %vm243, %v2313
      %2350 = vst.msk [vmem:[#allocation2 + $0x98] sm:$0xff] %vm243, %v2314
      %2351 = vst.msk [vmem:[#allocation2 + $0xa0] sm:$0xff] %vm243, %v2315
      %2352 = vst.msk [vmem:[#allocation2 + $0xa8] sm:$0xff] %vm243, %v2316
      %2353 = vst.msk [vmem:[#allocation2 + $0xb0] sm:$0xff] %vm243, %v2317
      %2354 = vst.msk [vmem:[#allocation2 + $0xb8] sm:$0xff] %vm243, %v2318
      %2355 = vst.msk [vmem:[#allocation2 + $0xc0] sm:$0xff] %vm243, %v2319
      %2356 = vst.msk [vmem:[#allocation2 + $0xc8] sm:$0xff] %vm243, %v2320
      %2357 = vst.msk [vmem:[#allocation2 + $0xd0] sm:$0xff] %vm243, %v2321
      %2358 = vst.msk [vmem:[#allocation2 + $0xd8] sm:$0xff] %vm243, %v2322
      %2359 = vst.msk [vmem:[#allocation2 + $0xe0] sm:$0xff] %vm243, %v2323
      %2360 = vst.msk [vmem:[#allocation2 + $0xe8] sm:$0xff] %vm243, %v2324
      %2361 = vst.msk [vmem:[#allocation2 + $0xf0] sm:$0xff] %vm243, %v2325
      %2362 = vst.msk [vmem:[#allocation2 + $0xf8] sm:$0xff] %vm243, %v2326
      %2363 = vst.msk [vmem:[#allocation2 + $0x100] sm:$0xff] %vm243, %v2327
      %2364 = vst.msk [vmem:[#allocation2 + $0x108] sm:$0xff] %vm243, %v2328
      %2365 = vst.msk [vmem:[#allocation2 + $0x110] sm:$0xff] %vm243, %v2329
      %2366 = vst.msk [vmem:[#allocation2 + $0x118] sm:$0xff] %vm243, %v2330
      %v2367 = vld [vmem:[%s230 + $0x24] sm:$0xff]
      %v2368 = vld [vmem:[%s230 + $0x2c] sm:$0xff]
      %v2369 = vld [vmem:[%s230 + $0x34] sm:$0xff]
      %v2370 = vld [vmem:[%s230 + $0x3c] sm:$0xff]
      %v2371 = vld [vmem:[%s230 + $0x44] sm:$0xff]
      %v2372 = vld [vmem:[%s230 + $0x4c] sm:$0xff]
      %v2373 = vld [vmem:[%s230 + $0x54] sm:$0xff]
      %v2374 = vld [vmem:[%s230 + $0x5c] sm:$0xff]
      %v2375 = vld [vmem:[%s230 + $0x64] sm:$0xff]
      %v2376 = vld [vmem:[%s230 + $0x6c] sm:$0xff]
      %v2377 = vld [vmem:[%s230 + $0x74] sm:$0xff]
      %v2378 = vld [vmem:[%s230 + $0x7c] sm:$0xff]
      %v2379 = vld [vmem:[%s230 + $0x84] sm:$0xff]
      %v2380 = vld [vmem:[%s230 + $0x8c] sm:$0xff]
      %v2381 = vld [vmem:[%s230 + $0x94] sm:$0xff]
      %v2382 = vld [vmem:[%s230 + $0x9c] sm:$0xff]
      %v2383 = vld [vmem:[%s230 + $0xa4] sm:$0xff]
      %v2384 = vld [vmem:[%s230 + $0xac] sm:$0xff]
      %v2385 = vld [vmem:[%s230 + $0xb4] sm:$0xff]
      %v2386 = vld [vmem:[%s230 + $0xbc] sm:$0xff]
      %v2387 = vld [vmem:[%s230 + $0xc4] sm:$0xff]
      %v2388 = vld [vmem:[%s230 + $0xcc] sm:$0xff]
      %v2389 = vld [vmem:[%s230 + $0xd4] sm:$0xff]
      %v2390 = vld [vmem:[%s230 + $0xdc] sm:$0xff]
      %v2391 = vld [vmem:[%s230 + $0xe4] sm:$0xff]
      %v2392 = vld [vmem:[%s230 + $0xec] sm:$0xff]
      %v2393 = vld [vmem:[%s230 + $0xf4] sm:$0xff]
      %v2394 = vld [vmem:[%s230 + $0xfc] sm:$0xff]
      %v2395 = vld [vmem:[%s230 + $0x104] sm:$0xff]
      %v2396 = vld [vmem:[%s230 + $0x10c] sm:$0xff]
      %v2397 = vld [vmem:[%s230 + $0x114] sm:$0xff]
      %v2398 = vld [vmem:[%s230 + $0x11c] sm:$0xff]
      %v2399 = vld [vmem:[%s230 + $0x124] sm:$0xff]
      %v2400 = vld [vmem:[%s230 + $0x12c] sm:$0xff]
      %v2401 = vld [vmem:[%s230 + $0x134] sm:$0xff]
      %v2402 = vld [vmem:[%s230 + $0x13c] sm:$0xff]
      %v2403 = vpack.c.bf16 %v2368, %v2367
      %v2404 = vpack.c.bf16 %v2370, %v2369
      %v2405 = vpack.c.bf16 %v2372, %v2371
      %v2406 = vpack.c.bf16 %v2374, %v2373
      %v2407 = vpack.c.bf16 %v2376, %v2375
      %v2408 = vpack.c.bf16 %v2378, %v2377
      %v2409 = vpack.c.bf16 %v2380, %v2379
      %v2410 = vpack.c.bf16 %v2382, %v2381
      %v2411 = vpack.c.bf16 %v2384, %v2383
      %v2412 = vpack.c.bf16 %v2386, %v2385
      %v2413 = vpack.c.bf16 %v2388, %v2387
      %v2414 = vpack.c.bf16 %v2390, %v2389
      %v2415 = vpack.c.bf16 %v2392, %v2391
      %v2416 = vpack.c.bf16 %v2394, %v2393
      %v2417 = vpack.c.bf16 %v2396, %v2395
      %v2418 = vpack.c.bf16 %v2398, %v2397
      %v2419 = vpack.c.bf16 %v2400, %v2399
      %v2420 = vpack.c.bf16 %v2402, %v2401
      %v2421 = vld [vmem:[#allocation2] sm:$0xff]
      %v2422 = vld [vmem:[#allocation2 + $0x8] sm:$0xff]
      %v2423 = vld [vmem:[#allocation2 + $0x10] sm:$0xff]
      %v2424 = vld [vmem:[#allocation2 + $0x18] sm:$0xff]
      %v2425 = vld [vmem:[#allocation2 + $0x20] sm:$0xff]
      %v2426 = vld [vmem:[#allocation2 + $0x28] sm:$0xff]
      %v2427 = vld [vmem:[#allocation2 + $0x30] sm:$0xff]
      %v2428 = vld [vmem:[#allocation2 + $0x38] sm:$0xff]
      %v2429 = vld [vmem:[#allocation2 + $0x40] sm:$0xff]
      %v2430 = vld [vmem:[#allocation2 + $0x48] sm:$0xff]
      %v2431 = vld [vmem:[#allocation2 + $0x50] sm:$0xff]
      %v2432 = vld [vmem:[#allocation2 + $0x58] sm:$0xff]
      %v2433 = vld [vmem:[#allocation2 + $0x60] sm:$0xff]
      %v2434 = vld [vmem:[#allocation2 + $0x68] sm:$0xff]
      %v2435 = vld [vmem:[#allocation2 + $0x70] sm:$0xff]
      %v2436 = vld [vmem:[#allocation2 + $0x78] sm:$0xff]
      %v2437 = vld [vmem:[#allocation2 + $0x80] sm:$0xff]
      %v2438 = vld [vmem:[#allocation2 + $0x88] sm:$0xff]
      %v2439 = vld [vmem:[#allocation2 + $0x90] sm:$0xff]
      %v2440 = vld [vmem:[#allocation2 + $0x98] sm:$0xff]
      %v2441 = vld [vmem:[#allocation2 + $0xa0] sm:$0xff]
      %v2442 = vld [vmem:[#allocation2 + $0xa8] sm:$0xff]
      %v2443 = vld [vmem:[#allocation2 + $0xb0] sm:$0xff]
      %v2444 = vld [vmem:[#allocation2 + $0xb8] sm:$0xff]
      %v2445 = vld [vmem:[#allocation2 + $0xc0] sm:$0xff]
      %v2446 = vld [vmem:[#allocation2 + $0xc8] sm:$0xff]
      %v2447 = vld [vmem:[#allocation2 + $0xd0] sm:$0xff]
      %v2448 = vld [vmem:[#allocation2 + $0xd8] sm:$0xff]
      %v2449 = vld [vmem:[#allocation2 + $0xe0] sm:$0xff]
      %v2450 = vld [vmem:[#allocation2 + $0xe8] sm:$0xff]
      %v2451 = vld [vmem:[#allocation2 + $0xf0] sm:$0xff]
      %v2452 = vld [vmem:[#allocation2 + $0xf8] sm:$0xff]
      %v2453 = vld [vmem:[#allocation2 + $0x100] sm:$0xff]
      %v2454 = vld [vmem:[#allocation2 + $0x108] sm:$0xff]
      %v2455 = vld [vmem:[#allocation2 + $0x110] sm:$0xff]
      %v2456 = vld [vmem:[#allocation2 + $0x118] sm:$0xff]
      %s2457 = scalar_lea.vmem %s1, 192
      %v2458 = vld [vmem:[%s2457] sm:$0xf]
      %v2459 = vld [vmem:[%s2457 + $0x4] sm:$0xf]
      %v2460 = vld [vmem:[%s2457 + $0x8] sm:$0xf]
      %v2461 = vld [vmem:[%s2457 + $0xc] sm:$0xf]
      %v2462 = vld [vmem:[%s2457 + $0x10] sm:$0xf]
      %v2463 = vld [vmem:[%s2457 + $0x14] sm:$0xf]
      %v2464 = vld [vmem:[%s2457 + $0x18] sm:$0xf]
      %v2465 = vld [vmem:[%s2457 + $0x1c] sm:$0xf]
      %v2474 = vunpack.c.l.b16 %v2458
      %v2475 = vunpack.c.l.b16 %v2459
      %v2476 = vunpack.c.l.b16 %v2460
      %v2477 = vunpack.c.l.b16 %v2461
      %v2478 = vunpack.c.l.b16 %v2462
      %v2479 = vunpack.c.l.b16 %v2463
      %v2480 = vunpack.c.l.b16 %v2464
      %v2481 = vunpack.c.l.b16 %v2465
      %v2482 = vpack.c.b16 %v2475, %v2474
      %v2483 = vpack.c.b16 %v2477, %v2476
      %v2484 = vpack.c.b16 %v2479, %v2478
      %v2485 = vpack.c.b16 %v2481, %v2480
      %v2491 = vsel %vm243, %v2403, 0
      %v2494 = vsel %vm243, %v2404, 0
      %v2497 = vsel %vm243, %v2405, 0
      %v2500 = vsel %vm243, %v2406, 0
      %v2503 = vsel %vm243, %v2407, 0
      %v2506 = vsel %vm243, %v2408, 0
      %v2509 = vsel %vm243, %v2409, 0
      %v2512 = vsel %vm243, %v2410, 0
      %v2515 = vsel %vm243, %v2411, 0
      %v2518 = vsel %vm243, %v2412, 0
      %v2521 = vsel %vm243, %v2413, 0
      %v2524 = vsel %vm243, %v2414, 0
      %v2527 = vsel %vm243, %v2415, 0
      %v2530 = vsel %vm243, %v2416, 0
      %v2533 = vsel %vm243, %v2417, 0
      %v2536 = vsel %vm243, %v2418, 0
      %v2539 = vsel %vm243, %v2419, 0
      %v2542 = vsel %vm243, %v2420, 0
      %2544 = vmatpush.bf16.msra.mxu0 0
      %2545 = vmatpush.bf16.msra.mxu0 0
      %2546 = vmatpush.bf16.msra.mxu0 0
      %2547 = vmatpush.bf16.msra.mxu0 0
      %2548 = vmatpush.bf16.msra.mxu0 %v2485
      %2549 = vmatpush.bf16.msra.mxu0 %v2484
      %2550 = vmatpush.bf16.msra.mxu0 %v2483
      %2551 = vmatpush.bf16.msra.mxu0 %v2482
      %2552 = vmatmul.bf16.gmra.mxu0 %v2491
      %v2553 = vpop.f32.mrf.mxu0
      %v2554 = vadd.f32 0.0, %v2553
      %v2555 = vpop.f32.mrf.mxu0
      %v2556 = vadd.f32 0.0, %v2555
      %2557 = vmatmul.bf16.gmra.mxu0 %v2494
      %v2558 = vpop.f32.mrf.mxu0
      %v2559 = vadd.f32 0.0, %v2558
      %v2560 = vpop.f32.mrf.mxu0
      %v2561 = vadd.f32 0.0, %v2560
      %2562 = vmatmul.bf16.gmra.mxu0 %v2497
      %v2563 = vpop.f32.mrf.mxu0
      %v2564 = vadd.f32 0.0, %v2563
      %v2565 = vpop.f32.mrf.mxu0
      %v2566 = vadd.f32 0.0, %v2565
      %2567 = vmatmul.bf16.gmra.mxu0 %v2500
      %v2568 = vpop.f32.mrf.mxu0
      %v2569 = vadd.f32 0.0, %v2568
      %v2570 = vpop.f32.mrf.mxu0
      %v2571 = vadd.f32 0.0, %v2570
      %2572 = vmatmul.bf16.gmra.mxu0 %v2503
      %v2573 = vpop.f32.mrf.mxu0
      %v2574 = vadd.f32 0.0, %v2573
      %v2575 = vpop.f32.mrf.mxu0
      %v2576 = vadd.f32 0.0, %v2575
      %2577 = vmatmul.bf16.gmra.mxu0 %v2506
      %v2578 = vpop.f32.mrf.mxu0
      %v2579 = vadd.f32 0.0, %v2578
      %v2580 = vpop.f32.mrf.mxu0
      %v2581 = vadd.f32 0.0, %v2580
      %2582 = vmatmul.bf16.gmra.mxu0 %v2509
      %v2583 = vpop.f32.mrf.mxu0
      %v2584 = vadd.f32 0.0, %v2583
      %v2585 = vpop.f32.mrf.mxu0
      %v2586 = vadd.f32 0.0, %v2585
      %2587 = vmatmul.bf16.gmra.mxu0 %v2512
      %v2588 = vpop.f32.mrf.mxu0
      %v2589 = vadd.f32 0.0, %v2588
      %v2590 = vpop.f32.mrf.mxu0
      %v2591 = vadd.f32 0.0, %v2590
      %2592 = vmatmul.bf16.gmra.mxu0 %v2515
      %v2593 = vpop.f32.mrf.mxu0
      %v2594 = vadd.f32 0.0, %v2593
      %v2595 = vpop.f32.mrf.mxu0
      %v2596 = vadd.f32 0.0, %v2595
      %2597 = vmatmul.bf16.gmra.mxu0 %v2518
      %v2598 = vpop.f32.mrf.mxu0
      %v2599 = vadd.f32 0.0, %v2598
      %v2600 = vpop.f32.mrf.mxu0
      %v2601 = vadd.f32 0.0, %v2600
      %2602 = vmatmul.bf16.gmra.mxu0 %v2521
      %v2603 = vpop.f32.mrf.mxu0
      %v2604 = vadd.f32 0.0, %v2603
      %v2605 = vpop.f32.mrf.mxu0
      %v2606 = vadd.f32 0.0, %v2605
      %2607 = vmatmul.bf16.gmra.mxu0 %v2524
      %v2608 = vpop.f32.mrf.mxu0
      %v2609 = vadd.f32 0.0, %v2608
      %v2610 = vpop.f32.mrf.mxu0
      %v2611 = vadd.f32 0.0, %v2610
      %2612 = vmatmul.bf16.gmra.mxu0 %v2527
      %v2613 = vpop.f32.mrf.mxu0
      %v2614 = vadd.f32 0.0, %v2613
      %v2615 = vpop.f32.mrf.mxu0
      %v2616 = vadd.f32 0.0, %v2615
      %2617 = vmatmul.bf16.gmra.mxu0 %v2530
      %v2618 = vpop.f32.mrf.mxu0
      %v2619 = vadd.f32 0.0, %v2618
      %v2620 = vpop.f32.mrf.mxu0
      %v2621 = vadd.f32 0.0, %v2620
      %2622 = vmatmul.bf16.gmra.mxu0 %v2533
      %v2623 = vpop.f32.mrf.mxu0
      %v2624 = vadd.f32 0.0, %v2623
      %v2625 = vpop.f32.mrf.mxu0
      %v2626 = vadd.f32 0.0, %v2625
      %2627 = vmatmul.bf16.gmra.mxu0 %v2536
      %v2628 = vpop.f32.mrf.mxu0
      %v2629 = vadd.f32 0.0, %v2628
      %v2630 = vpop.f32.mrf.mxu0
      %v2631 = vadd.f32 0.0, %v2630
      %2632 = vmatmul.bf16.gmra.mxu0 %v2539
      %v2633 = vpop.f32.mrf.mxu0
      %v2634 = vadd.f32 0.0, %v2633
      %v2635 = vpop.f32.mrf.mxu0
      %v2636 = vadd.f32 0.0, %v2635
      %2637 = vmatmul.bf16.gmra.mxu0 %v2542
      %v2638 = vpop.f32.mrf.mxu0
      %v2639 = vadd.f32 0.0, %v2638
      %v2640 = vpop.f32.mrf.mxu0
      %v2641 = vadd.f32 0.0, %v2640
      %2642 = vdwg.mxu0
      %v2643 = vadd.f32 %v2421, %v2554
      %v2644 = vadd.f32 %v2422, %v2556
      %v2645 = vadd.f32 %v2423, %v2559
      %v2646 = vadd.f32 %v2424, %v2561
      %v2647 = vadd.f32 %v2425, %v2564
      %v2648 = vadd.f32 %v2426, %v2566
      %v2649 = vadd.f32 %v2427, %v2569
      %v2650 = vadd.f32 %v2428, %v2571
      %v2651 = vadd.f32 %v2429, %v2574
      %v2652 = vadd.f32 %v2430, %v2576
      %v2653 = vadd.f32 %v2431, %v2579
      %v2654 = vadd.f32 %v2432, %v2581
      %v2655 = vadd.f32 %v2433, %v2584
      %v2656 = vadd.f32 %v2434, %v2586
      %v2657 = vadd.f32 %v2435, %v2589
      %v2658 = vadd.f32 %v2436, %v2591
      %v2659 = vadd.f32 %v2437, %v2594
      %v2660 = vadd.f32 %v2438, %v2596
      %v2661 = vadd.f32 %v2439, %v2599
      %v2662 = vadd.f32 %v2440, %v2601
      %v2663 = vadd.f32 %v2441, %v2604
      %v2664 = vadd.f32 %v2442, %v2606
      %v2665 = vadd.f32 %v2443, %v2609
      %v2666 = vadd.f32 %v2444, %v2611
      %v2667 = vadd.f32 %v2445, %v2614
      %v2668 = vadd.f32 %v2446, %v2616
      %v2669 = vadd.f32 %v2447, %v2619
      %v2670 = vadd.f32 %v2448, %v2621
      %v2671 = vadd.f32 %v2449, %v2624
      %v2672 = vadd.f32 %v2450, %v2626
      %v2673 = vadd.f32 %v2451, %v2629
      %v2674 = vadd.f32 %v2452, %v2631
      %v2675 = vadd.f32 %v2453, %v2634
      %v2676 = vadd.f32 %v2454, %v2636
      %v2677 = vadd.f32 %v2455, %v2639
      %v2678 = vadd.f32 %v2456, %v2641
      %2679 = vst.msk [vmem:[#allocation2] sm:$0xff] %vm243, %v2643
      %2680 = vst.msk [vmem:[#allocation2 + $0x8] sm:$0xff] %vm243, %v2644
      %2681 = vst.msk [vmem:[#allocation2 + $0x10] sm:$0xff] %vm243, %v2645
      %2682 = vst.msk [vmem:[#allocation2 + $0x18] sm:$0xff] %vm243, %v2646
      %2683 = vst.msk [vmem:[#allocation2 + $0x20] sm:$0xff] %vm243, %v2647
      %2684 = vst.msk [vmem:[#allocation2 + $0x28] sm:$0xff] %vm243, %v2648
      %2685 = vst.msk [vmem:[#allocation2 + $0x30] sm:$0xff] %vm243, %v2649
      %2686 = vst.msk [vmem:[#allocation2 + $0x38] sm:$0xff] %vm243, %v2650
      %2687 = vst.msk [vmem:[#allocation2 + $0x40] sm:$0xff] %vm243, %v2651
      %2688 = vst.msk [vmem:[#allocation2 + $0x48] sm:$0xff] %vm243, %v2652
      %2689 = vst.msk [vmem:[#allocation2 + $0x50] sm:$0xff] %vm243, %v2653
      %2690 = vst.msk [vmem:[#allocation2 + $0x58] sm:$0xff] %vm243, %v2654
      %2691 = vst.msk [vmem:[#allocation2 + $0x60] sm:$0xff] %vm243, %v2655
      %2692 = vst.msk [vmem:[#allocation2 + $0x68] sm:$0xff] %vm243, %v2656
      %2693 = vst.msk [vmem:[#allocation2 + $0x70] sm:$0xff] %vm243, %v2657
      %2694 = vst.msk [vmem:[#allocation2 + $0x78] sm:$0xff] %vm243, %v2658
      %2695 = vst.msk [vmem:[#allocation2 + $0x80] sm:$0xff] %vm243, %v2659
      %2696 = vst.msk [vmem:[#allocation2 + $0x88] sm:$0xff] %vm243, %v2660
      %2697 = vst.msk [vmem:[#allocation2 + $0x90] sm:$0xff] %vm243, %v2661
      %2698 = vst.msk [vmem:[#allocation2 + $0x98] sm:$0xff] %vm243, %v2662
      %2699 = vst.msk [vmem:[#allocation2 + $0xa0] sm:$0xff] %vm243, %v2663
      %2700 = vst.msk [vmem:[#allocation2 + $0xa8] sm:$0xff] %vm243, %v2664
      %2701 = vst.msk [vmem:[#allocation2 + $0xb0] sm:$0xff] %vm243, %v2665
      %2702 = vst.msk [vmem:[#allocation2 + $0xb8] sm:$0xff] %vm243, %v2666
      %2703 = vst.msk [vmem:[#allocation2 + $0xc0] sm:$0xff] %vm243, %v2667
      %2704 = vst.msk [vmem:[#allocation2 + $0xc8] sm:$0xff] %vm243, %v2668
      %2705 = vst.msk [vmem:[#allocation2 + $0xd0] sm:$0xff] %vm243, %v2669
      %2706 = vst.msk [vmem:[#allocation2 + $0xd8] sm:$0xff] %vm243, %v2670
      %2707 = vst.msk [vmem:[#allocation2 + $0xe0] sm:$0xff] %vm243, %v2671
      %2708 = vst.msk [vmem:[#allocation2 + $0xe8] sm:$0xff] %vm243, %v2672
      %2709 = vst.msk [vmem:[#allocation2 + $0xf0] sm:$0xff] %vm243, %v2673
      %2710 = vst.msk [vmem:[#allocation2 + $0xf8] sm:$0xff] %vm243, %v2674
      %2711 = vst.msk [vmem:[#allocation2 + $0x100] sm:$0xff] %vm243, %v2675
      %2712 = vst.msk [vmem:[#allocation2 + $0x108] sm:$0xff] %vm243, %v2676
      %2713 = vst.msk [vmem:[#allocation2 + $0x110] sm:$0xff] %vm243, %v2677
      %2714 = vst.msk [vmem:[#allocation2 + $0x118] sm:$0xff] %vm243, %v2678
      %v2715 = vld [vmem:[%s230 + $0x25] sm:$0xff]
      %v2716 = vld [vmem:[%s230 + $0x2d] sm:$0xff]
      %v2717 = vld [vmem:[%s230 + $0x35] sm:$0xff]
      %v2718 = vld [vmem:[%s230 + $0x3d] sm:$0xff]
      %v2719 = vld [vmem:[%s230 + $0x45] sm:$0xff]
      %v2720 = vld [vmem:[%s230 + $0x4d] sm:$0xff]
      %v2721 = vld [vmem:[%s230 + $0x55] sm:$0xff]
      %v2722 = vld [vmem:[%s230 + $0x5d] sm:$0xff]
      %v2723 = vld [vmem:[%s230 + $0x65] sm:$0xff]
      %v2724 = vld [vmem:[%s230 + $0x6d] sm:$0xff]
      %v2725 = vld [vmem:[%s230 + $0x75] sm:$0xff]
      %v2726 = vld [vmem:[%s230 + $0x7d] sm:$0xff]
      %v2727 = vld [vmem:[%s230 + $0x85] sm:$0xff]
      %v2728 = vld [vmem:[%s230 + $0x8d] sm:$0xff]
      %v2729 = vld [vmem:[%s230 + $0x95] sm:$0xff]
      %v2730 = vld [vmem:[%s230 + $0x9d] sm:$0xff]
      %v2731 = vld [vmem:[%s230 + $0xa5] sm:$0xff]
      %v2732 = vld [vmem:[%s230 + $0xad] sm:$0xff]
      %v2733 = vld [vmem:[%s230 + $0xb5] sm:$0xff]
      %v2734 = vld [vmem:[%s230 + $0xbd] sm:$0xff]
      %v2735 = vld [vmem:[%s230 + $0xc5] sm:$0xff]
      %v2736 = vld [vmem:[%s230 + $0xcd] sm:$0xff]
      %v2737 = vld [vmem:[%s230 + $0xd5] sm:$0xff]
      %v2738 = vld [vmem:[%s230 + $0xdd] sm:$0xff]
      %v2739 = vld [vmem:[%s230 + $0xe5] sm:$0xff]
      %v2740 = vld [vmem:[%s230 + $0xed] sm:$0xff]
      %v2741 = vld [vmem:[%s230 + $0xf5] sm:$0xff]
      %v2742 = vld [vmem:[%s230 + $0xfd] sm:$0xff]
      %v2743 = vld [vmem:[%s230 + $0x105] sm:$0xff]
      %v2744 = vld [vmem:[%s230 + $0x10d] sm:$0xff]
      %v2745 = vld [vmem:[%s230 + $0x115] sm:$0xff]
      %v2746 = vld [vmem:[%s230 + $0x11d] sm:$0xff]
      %v2747 = vld [vmem:[%s230 + $0x125] sm:$0xff]
      %v2748 = vld [vmem:[%s230 + $0x12d] sm:$0xff]
      %v2749 = vld [vmem:[%s230 + $0x135] sm:$0xff]
      %v2750 = vld [vmem:[%s230 + $0x13d] sm:$0xff]
      %v2751 = vpack.c.bf16 %v2716, %v2715
      %v2752 = vpack.c.bf16 %v2718, %v2717
      %v2753 = vpack.c.bf16 %v2720, %v2719
      %v2754 = vpack.c.bf16 %v2722, %v2721
      %v2755 = vpack.c.bf16 %v2724, %v2723
      %v2756 = vpack.c.bf16 %v2726, %v2725
      %v2757 = vpack.c.bf16 %v2728, %v2727
      %v2758 = vpack.c.bf16 %v2730, %v2729
      %v2759 = vpack.c.bf16 %v2732, %v2731
      %v2760 = vpack.c.bf16 %v2734, %v2733
      %v2761 = vpack.c.bf16 %v2736, %v2735
      %v2762 = vpack.c.bf16 %v2738, %v2737
      %v2763 = vpack.c.bf16 %v2740, %v2739
      %v2764 = vpack.c.bf16 %v2742, %v2741
      %v2765 = vpack.c.bf16 %v2744, %v2743
      %v2766 = vpack.c.bf16 %v2746, %v2745
      %v2767 = vpack.c.bf16 %v2748, %v2747
      %v2768 = vpack.c.bf16 %v2750, %v2749
      %v2769 = vld [vmem:[#allocation2] sm:$0xff]
      %v2770 = vld [vmem:[#allocation2 + $0x8] sm:$0xff]
      %v2771 = vld [vmem:[#allocation2 + $0x10] sm:$0xff]
      %v2772 = vld [vmem:[#allocation2 + $0x18] sm:$0xff]
      %v2773 = vld [vmem:[#allocation2 + $0x20] sm:$0xff]
      %v2774 = vld [vmem:[#allocation2 + $0x28] sm:$0xff]
      %v2775 = vld [vmem:[#allocation2 + $0x30] sm:$0xff]
      %v2776 = vld [vmem:[#allocation2 + $0x38] sm:$0xff]
      %v2777 = vld [vmem:[#allocation2 + $0x40] sm:$0xff]
      %v2778 = vld [vmem:[#allocation2 + $0x48] sm:$0xff]
      %v2779 = vld [vmem:[#allocation2 + $0x50] sm:$0xff]
      %v2780 = vld [vmem:[#allocation2 + $0x58] sm:$0xff]
      %v2781 = vld [vmem:[#allocation2 + $0x60] sm:$0xff]
      %v2782 = vld [vmem:[#allocation2 + $0x68] sm:$0xff]
      %v2783 = vld [vmem:[#allocation2 + $0x70] sm:$0xff]
      %v2784 = vld [vmem:[#allocation2 + $0x78] sm:$0xff]
      %v2785 = vld [vmem:[#allocation2 + $0x80] sm:$0xff]
      %v2786 = vld [vmem:[#allocation2 + $0x88] sm:$0xff]
      %v2787 = vld [vmem:[#allocation2 + $0x90] sm:$0xff]
      %v2788 = vld [vmem:[#allocation2 + $0x98] sm:$0xff]
      %v2789 = vld [vmem:[#allocation2 + $0xa0] sm:$0xff]
      %v2790 = vld [vmem:[#allocation2 + $0xa8] sm:$0xff]
      %v2791 = vld [vmem:[#allocation2 + $0xb0] sm:$0xff]
      %v2792 = vld [vmem:[#allocation2 + $0xb8] sm:$0xff]
      %v2793 = vld [vmem:[#allocation2 + $0xc0] sm:$0xff]
      %v2794 = vld [vmem:[#allocation2 + $0xc8] sm:$0xff]
      %v2795 = vld [vmem:[#allocation2 + $0xd0] sm:$0xff]
      %v2796 = vld [vmem:[#allocation2 + $0xd8] sm:$0xff]
      %v2797 = vld [vmem:[#allocation2 + $0xe0] sm:$0xff]
      %v2798 = vld [vmem:[#allocation2 + $0xe8] sm:$0xff]
      %v2799 = vld [vmem:[#allocation2 + $0xf0] sm:$0xff]
      %v2800 = vld [vmem:[#allocation2 + $0xf8] sm:$0xff]
      %v2801 = vld [vmem:[#allocation2 + $0x100] sm:$0xff]
      %v2802 = vld [vmem:[#allocation2 + $0x108] sm:$0xff]
      %v2803 = vld [vmem:[#allocation2 + $0x110] sm:$0xff]
      %v2804 = vld [vmem:[#allocation2 + $0x118] sm:$0xff]
      %s2805 = scalar_lea.vmem %s1, 224
      %v2806 = vld [vmem:[%s2805] sm:$0xf]
      %v2807 = vld [vmem:[%s2805 + $0x4] sm:$0xf]
      %v2808 = vld [vmem:[%s2805 + $0x8] sm:$0xf]
      %v2809 = vld [vmem:[%s2805 + $0xc] sm:$0xf]
      %v2810 = vld [vmem:[%s2805 + $0x10] sm:$0xf]
      %v2811 = vld [vmem:[%s2805 + $0x14] sm:$0xf]
      %v2812 = vld [vmem:[%s2805 + $0x18] sm:$0xf]
      %v2813 = vld [vmem:[%s2805 + $0x1c] sm:$0xf]
      %v2822 = vunpack.c.l.b16 %v2806
      %v2823 = vunpack.c.l.b16 %v2807
      %v2824 = vunpack.c.l.b16 %v2808
      %v2825 = vunpack.c.l.b16 %v2809
      %v2826 = vunpack.c.l.b16 %v2810
      %v2827 = vunpack.c.l.b16 %v2811
      %v2828 = vunpack.c.l.b16 %v2812
      %v2829 = vunpack.c.l.b16 %v2813
      %v2830 = vpack.c.b16 %v2823, %v2822
      %v2831 = vpack.c.b16 %v2825, %v2824
      %v2832 = vpack.c.b16 %v2827, %v2826
      %v2833 = vpack.c.b16 %v2829, %v2828
      %v2839 = vsel %vm243, %v2751, 0
      %v2842 = vsel %vm243, %v2752, 0
      %v2845 = vsel %vm243, %v2753, 0
      %v2848 = vsel %vm243, %v2754, 0
      %v2851 = vsel %vm243, %v2755, 0
      %v2854 = vsel %vm243, %v2756, 0
      %v2857 = vsel %vm243, %v2757, 0
      %v2860 = vsel %vm243, %v2758, 0
      %v2863 = vsel %vm243, %v2759, 0
      %v2866 = vsel %vm243, %v2760, 0
      %v2869 = vsel %vm243, %v2761, 0
      %v2872 = vsel %vm243, %v2762, 0
      %v2875 = vsel %vm243, %v2763, 0
      %v2878 = vsel %vm243, %v2764, 0
      %v2881 = vsel %vm243, %v2765, 0
      %v2884 = vsel %vm243, %v2766, 0
      %v2887 = vsel %vm243, %v2767, 0
      %v2890 = vsel %vm243, %v2768, 0
      %2892 = vmatpush.bf16.msra.mxu0 0
      %2893 = vmatpush.bf16.msra.mxu0 0
      %2894 = vmatpush.bf16.msra.mxu0 0
      %2895 = vmatpush.bf16.msra.mxu0 0
      %2896 = vmatpush.bf16.msra.mxu0 %v2833
      %2897 = vmatpush.bf16.msra.mxu0 %v2832
      %2898 = vmatpush.bf16.msra.mxu0 %v2831
      %2899 = vmatpush.bf16.msra.mxu0 %v2830
      %2900 = vmatmul.bf16.gmra.mxu0 %v2839
      %v2901 = vpop.f32.mrf.mxu0
      %v2902 = vadd.f32 0.0, %v2901
      %v2903 = vpop.f32.mrf.mxu0
      %v2904 = vadd.f32 0.0, %v2903
      %2905 = vmatmul.bf16.gmra.mxu0 %v2842
      %v2906 = vpop.f32.mrf.mxu0
      %v2907 = vadd.f32 0.0, %v2906
      %v2908 = vpop.f32.mrf.mxu0
      %v2909 = vadd.f32 0.0, %v2908
      %2910 = vmatmul.bf16.gmra.mxu0 %v2845
      %v2911 = vpop.f32.mrf.mxu0
      %v2912 = vadd.f32 0.0, %v2911
      %v2913 = vpop.f32.mrf.mxu0
      %v2914 = vadd.f32 0.0, %v2913
      %2915 = vmatmul.bf16.gmra.mxu0 %v2848
      %v2916 = vpop.f32.mrf.mxu0
      %v2917 = vadd.f32 0.0, %v2916
      %v2918 = vpop.f32.mrf.mxu0
      %v2919 = vadd.f32 0.0, %v2918
      %2920 = vmatmul.bf16.gmra.mxu0 %v2851
      %v2921 = vpop.f32.mrf.mxu0
      %v2922 = vadd.f32 0.0, %v2921
      %v2923 = vpop.f32.mrf.mxu0
      %v2924 = vadd.f32 0.0, %v2923
      %2925 = vmatmul.bf16.gmra.mxu0 %v2854
      %v2926 = vpop.f32.mrf.mxu0
      %v2927 = vadd.f32 0.0, %v2926
      %v2928 = vpop.f32.mrf.mxu0
      %v2929 = vadd.f32 0.0, %v2928
      %2930 = vmatmul.bf16.gmra.mxu0 %v2857
      %v2931 = vpop.f32.mrf.mxu0
      %v2932 = vadd.f32 0.0, %v2931
      %v2933 = vpop.f32.mrf.mxu0
      %v2934 = vadd.f32 0.0, %v2933
      %2935 = vmatmul.bf16.gmra.mxu0 %v2860
      %v2936 = vpop.f32.mrf.mxu0
      %v2937 = vadd.f32 0.0, %v2936
      %v2938 = vpop.f32.mrf.mxu0
      %v2939 = vadd.f32 0.0, %v2938
      %2940 = vmatmul.bf16.gmra.mxu0 %v2863
      %v2941 = vpop.f32.mrf.mxu0
      %v2942 = vadd.f32 0.0, %v2941
      %v2943 = vpop.f32.mrf.mxu0
      %v2944 = vadd.f32 0.0, %v2943
      %2945 = vmatmul.bf16.gmra.mxu0 %v2866
      %v2946 = vpop.f32.mrf.mxu0
      %v2947 = vadd.f32 0.0, %v2946
      %v2948 = vpop.f32.mrf.mxu0
      %v2949 = vadd.f32 0.0, %v2948
      %2950 = vmatmul.bf16.gmra.mxu0 %v2869
      %v2951 = vpop.f32.mrf.mxu0
      %v2952 = vadd.f32 0.0, %v2951
      %v2953 = vpop.f32.mrf.mxu0
      %v2954 = vadd.f32 0.0, %v2953
      %2955 = vmatmul.bf16.gmra.mxu0 %v2872
      %v2956 = vpop.f32.mrf.mxu0
      %v2957 = vadd.f32 0.0, %v2956
      %v2958 = vpop.f32.mrf.mxu0
      %v2959 = vadd.f32 0.0, %v2958
      %2960 = vmatmul.bf16.gmra.mxu0 %v2875
      %v2961 = vpop.f32.mrf.mxu0
      %v2962 = vadd.f32 0.0, %v2961
      %v2963 = vpop.f32.mrf.mxu0
      %v2964 = vadd.f32 0.0, %v2963
      %2965 = vmatmul.bf16.gmra.mxu0 %v2878
      %v2966 = vpop.f32.mrf.mxu0
      %v2967 = vadd.f32 0.0, %v2966
      %v2968 = vpop.f32.mrf.mxu0
      %v2969 = vadd.f32 0.0, %v2968
      %2970 = vmatmul.bf16.gmra.mxu0 %v2881
      %v2971 = vpop.f32.mrf.mxu0
      %v2972 = vadd.f32 0.0, %v2971
      %v2973 = vpop.f32.mrf.mxu0
      %v2974 = vadd.f32 0.0, %v2973
      %2975 = vmatmul.bf16.gmra.mxu0 %v2884
      %v2976 = vpop.f32.mrf.mxu0
      %v2977 = vadd.f32 0.0, %v2976
      %v2978 = vpop.f32.mrf.mxu0
      %v2979 = vadd.f32 0.0, %v2978
      %2980 = vmatmul.bf16.gmra.mxu0 %v2887
      %v2981 = vpop.f32.mrf.mxu0
      %v2982 = vadd.f32 0.0, %v2981
      %v2983 = vpop.f32.mrf.mxu0
      %v2984 = vadd.f32 0.0, %v2983
      %2985 = vmatmul.bf16.gmra.mxu0 %v2890
      %v2986 = vpop.f32.mrf.mxu0
      %v2987 = vadd.f32 0.0, %v2986
      %v2988 = vpop.f32.mrf.mxu0
      %v2989 = vadd.f32 0.0, %v2988
      %2990 = vdwg.mxu0
      %v2991 = vadd.f32 %v2769, %v2902
      %v2992 = vadd.f32 %v2770, %v2904
      %v2993 = vadd.f32 %v2771, %v2907
      %v2994 = vadd.f32 %v2772, %v2909
      %v2995 = vadd.f32 %v2773, %v2912
      %v2996 = vadd.f32 %v2774, %v2914
      %v2997 = vadd.f32 %v2775, %v2917
      %v2998 = vadd.f32 %v2776, %v2919
      %v2999 = vadd.f32 %v2777, %v2922
      %v3000 = vadd.f32 %v2778, %v2924
      %v3001 = vadd.f32 %v2779, %v2927
      %v3002 = vadd.f32 %v2780, %v2929
      %v3003 = vadd.f32 %v2781, %v2932
      %v3004 = vadd.f32 %v2782, %v2934
      %v3005 = vadd.f32 %v2783, %v2937
      %v3006 = vadd.f32 %v2784, %v2939
      %v3007 = vadd.f32 %v2785, %v2942
      %v3008 = vadd.f32 %v2786, %v2944
      %v3009 = vadd.f32 %v2787, %v2947
      %v3010 = vadd.f32 %v2788, %v2949
      %v3011 = vadd.f32 %v2789, %v2952
      %v3012 = vadd.f32 %v2790, %v2954
      %v3013 = vadd.f32 %v2791, %v2957
      %v3014 = vadd.f32 %v2792, %v2959
      %v3015 = vadd.f32 %v2793, %v2962
      %v3016 = vadd.f32 %v2794, %v2964
      %v3017 = vadd.f32 %v2795, %v2967
      %v3018 = vadd.f32 %v2796, %v2969
      %v3019 = vadd.f32 %v2797, %v2972
      %v3020 = vadd.f32 %v2798, %v2974
      %v3021 = vadd.f32 %v2799, %v2977
      %v3022 = vadd.f32 %v2800, %v2979
      %v3023 = vadd.f32 %v2801, %v2982
      %v3024 = vadd.f32 %v2802, %v2984
      %v3025 = vadd.f32 %v2803, %v2987
      %v3026 = vadd.f32 %v2804, %v2989
      %3027 = vst.msk [vmem:[#allocation2] sm:$0xff] %vm243, %v2991
      %3028 = vst.msk [vmem:[#allocation2 + $0x8] sm:$0xff] %vm243, %v2992
      %3029 = vst.msk [vmem:[#allocation2 + $0x10] sm:$0xff] %vm243, %v2993
      %3030 = vst.msk [vmem:[#allocation2 + $0x18] sm:$0xff] %vm243, %v2994
      %3031 = vst.msk [vmem:[#allocation2 + $0x20] sm:$0xff] %vm243, %v2995
      %3032 = vst.msk [vmem:[#allocation2 + $0x28] sm:$0xff] %vm243, %v2996
      %3033 = vst.msk [vmem:[#allocation2 + $0x30] sm:$0xff] %vm243, %v2997
      %3034 = vst.msk [vmem:[#allocation2 + $0x38] sm:$0xff] %vm243, %v2998
      %3035 = vst.msk [vmem:[#allocation2 + $0x40] sm:$0xff] %vm243, %v2999
      %3036 = vst.msk [vmem:[#allocation2 + $0x48] sm:$0xff] %vm243, %v3000
      %3037 = vst.msk [vmem:[#allocation2 + $0x50] sm:$0xff] %vm243, %v3001
      %3038 = vst.msk [vmem:[#allocation2 + $0x58] sm:$0xff] %vm243, %v3002
      %3039 = vst.msk [vmem:[#allocation2 + $0x60] sm:$0xff] %vm243, %v3003
      %3040 = vst.msk [vmem:[#allocation2 + $0x68] sm:$0xff] %vm243, %v3004
      %3041 = vst.msk [vmem:[#allocation2 + $0x70] sm:$0xff] %vm243, %v3005
      %3042 = vst.msk [vmem:[#allocation2 + $0x78] sm:$0xff] %vm243, %v3006
      %3043 = vst.msk [vmem:[#allocation2 + $0x80] sm:$0xff] %vm243, %v3007
      %3044 = vst.msk [vmem:[#allocation2 + $0x88] sm:$0xff] %vm243, %v3008
      %3045 = vst.msk [vmem:[#allocation2 + $0x90] sm:$0xff] %vm243, %v3009
      %3046 = vst.msk [vmem:[#allocation2 + $0x98] sm:$0xff] %vm243, %v3010
      %3047 = vst.msk [vmem:[#allocation2 + $0xa0] sm:$0xff] %vm243, %v3011
      %3048 = vst.msk [vmem:[#allocation2 + $0xa8] sm:$0xff] %vm243, %v3012
      %3049 = vst.msk [vmem:[#allocation2 + $0xb0] sm:$0xff] %vm243, %v3013
      %3050 = vst.msk [vmem:[#allocation2 + $0xb8] sm:$0xff] %vm243, %v3014
      %3051 = vst.msk [vmem:[#allocation2 + $0xc0] sm:$0xff] %vm243, %v3015
      %3052 = vst.msk [vmem:[#allocation2 + $0xc8] sm:$0xff] %vm243, %v3016
      %3053 = vst.msk [vmem:[#allocation2 + $0xd0] sm:$0xff] %vm243, %v3017
      %3054 = vst.msk [vmem:[#allocation2 + $0xd8] sm:$0xff] %vm243, %v3018
      %3055 = vst.msk [vmem:[#allocation2 + $0xe0] sm:$0xff] %vm243, %v3019
      %3056 = vst.msk [vmem:[#allocation2 + $0xe8] sm:$0xff] %vm243, %v3020
      %3057 = vst.msk [vmem:[#allocation2 + $0xf0] sm:$0xff] %vm243, %v3021
      %3058 = vst.msk [vmem:[#allocation2 + $0xf8] sm:$0xff] %vm243, %v3022
      %3059 = vst.msk [vmem:[#allocation2 + $0x100] sm:$0xff] %vm243, %v3023
      %3060 = vst.msk [vmem:[#allocation2 + $0x108] sm:$0xff] %vm243, %v3024
      %3061 = vst.msk [vmem:[#allocation2 + $0x110] sm:$0xff] %vm243, %v3025
      %3062 = vst.msk [vmem:[#allocation2 + $0x118] sm:$0xff] %vm243, %v3026
      %v3063 = vld [vmem:[%s230 + $0x26] sm:$0xff]
      %v3064 = vld [vmem:[%s230 + $0x2e] sm:$0xff]
      %v3065 = vld [vmem:[%s230 + $0x36] sm:$0xff]
      %v3066 = vld [vmem:[%s230 + $0x3e] sm:$0xff]
      %v3067 = vld [vmem:[%s230 + $0x46] sm:$0xff]
      %v3068 = vld [vmem:[%s230 + $0x4e] sm:$0xff]
      %v3069 = vld [vmem:[%s230 + $0x56] sm:$0xff]
      %v3070 = vld [vmem:[%s230 + $0x5e] sm:$0xff]
      %v3071 = vld [vmem:[%s230 + $0x66] sm:$0xff]
      %v3072 = vld [vmem:[%s230 + $0x6e] sm:$0xff]
      %v3073 = vld [vmem:[%s230 + $0x76] sm:$0xff]
      %v3074 = vld [vmem:[%s230 + $0x7e] sm:$0xff]
      %v3075 = vld [vmem:[%s230 + $0x86] sm:$0xff]
      %v3076 = vld [vmem:[%s230 + $0x8e] sm:$0xff]
      %v3077 = vld [vmem:[%s230 + $0x96] sm:$0xff]
      %v3078 = vld [vmem:[%s230 + $0x9e] sm:$0xff]
      %v3079 = vld [vmem:[%s230 + $0xa6] sm:$0xff]
      %v3080 = vld [vmem:[%s230 + $0xae] sm:$0xff]
      %v3081 = vld [vmem:[%s230 + $0xb6] sm:$0xff]
      %v3082 = vld [vmem:[%s230 + $0xbe] sm:$0xff]
      %v3083 = vld [vmem:[%s230 + $0xc6] sm:$0xff]
      %v3084 = vld [vmem:[%s230 + $0xce] sm:$0xff]
      %v3085 = vld [vmem:[%s230 + $0xd6] sm:$0xff]
      %v3086 = vld [vmem:[%s230 + $0xde] sm:$0xff]
      %v3087 = vld [vmem:[%s230 + $0xe6] sm:$0xff]
      %v3088 = vld [vmem:[%s230 + $0xee] sm:$0xff]
      %v3089 = vld [vmem:[%s230 + $0xf6] sm:$0xff]
      %v3090 = vld [vmem:[%s230 + $0xfe] sm:$0xff]
      %v3091 = vld [vmem:[%s230 + $0x106] sm:$0xff]
      %v3092 = vld [vmem:[%s230 + $0x10e] sm:$0xff]
      %v3093 = vld [vmem:[%s230 + $0x116] sm:$0xff]
      %v3094 = vld [vmem:[%s230 + $0x11e] sm:$0xff]
      %v3095 = vld [vmem:[%s230 + $0x126] sm:$0xff]
      %v3096 = vld [vmem:[%s230 + $0x12e] sm:$0xff]
      %v3097 = vld [vmem:[%s230 + $0x136] sm:$0xff]
      %v3098 = vld [vmem:[%s230 + $0x13e] sm:$0xff]
      %v3099 = vpack.c.bf16 %v3064, %v3063
      %v3100 = vpack.c.bf16 %v3066, %v3065
      %v3101 = vpack.c.bf16 %v3068, %v3067
      %v3102 = vpack.c.bf16 %v3070, %v3069
      %v3103 = vpack.c.bf16 %v3072, %v3071
      %v3104 = vpack.c.bf16 %v3074, %v3073
      %v3105 = vpack.c.bf16 %v3076, %v3075
      %v3106 = vpack.c.bf16 %v3078, %v3077
      %v3107 = vpack.c.bf16 %v3080, %v3079
      %v3108 = vpack.c.bf16 %v3082, %v3081
      %v3109 = vpack.c.bf16 %v3084, %v3083
      %v3110 = vpack.c.bf16 %v3086, %v3085
      %v3111 = vpack.c.bf16 %v3088, %v3087
      %v3112 = vpack.c.bf16 %v3090, %v3089
      %v3113 = vpack.c.bf16 %v3092, %v3091
      %v3114 = vpack.c.bf16 %v3094, %v3093
      %v3115 = vpack.c.bf16 %v3096, %v3095
      %v3116 = vpack.c.bf16 %v3098, %v3097
      %v3117 = vld [vmem:[#allocation2] sm:$0xff]
      %v3118 = vld [vmem:[#allocation2 + $0x8] sm:$0xff]
      %v3119 = vld [vmem:[#allocation2 + $0x10] sm:$0xff]
      %v3120 = vld [vmem:[#allocation2 + $0x18] sm:$0xff]
      %v3121 = vld [vmem:[#allocation2 + $0x20] sm:$0xff]
      %v3122 = vld [vmem:[#allocation2 + $0x28] sm:$0xff]
      %v3123 = vld [vmem:[#allocation2 + $0x30] sm:$0xff]
      %v3124 = vld [vmem:[#allocation2 + $0x38] sm:$0xff]
      %v3125 = vld [vmem:[#allocation2 + $0x40] sm:$0xff]
      %v3126 = vld [vmem:[#allocation2 + $0x48] sm:$0xff]
      %v3127 = vld [vmem:[#allocation2 + $0x50] sm:$0xff]
      %v3128 = vld [vmem:[#allocation2 + $0x58] sm:$0xff]
      %v3129 = vld [vmem:[#allocation2 + $0x60] sm:$0xff]
      %v3130 = vld [vmem:[#allocation2 + $0x68] sm:$0xff]
      %v3131 = vld [vmem:[#allocation2 + $0x70] sm:$0xff]
      %v3132 = vld [vmem:[#allocation2 + $0x78] sm:$0xff]
      %v3133 = vld [vmem:[#allocation2 + $0x80] sm:$0xff]
      %v3134 = vld [vmem:[#allocation2 + $0x88] sm:$0xff]
      %v3135 = vld [vmem:[#allocation2 + $0x90] sm:$0xff]
      %v3136 = vld [vmem:[#allocation2 + $0x98] sm:$0xff]
      %v3137 = vld [vmem:[#allocation2 + $0xa0] sm:$0xff]
      %v3138 = vld [vmem:[#allocation2 + $0xa8] sm:$0xff]
      %v3139 = vld [vmem:[#allocation2 + $0xb0] sm:$0xff]
      %v3140 = vld [vmem:[#allocation2 + $0xb8] sm:$0xff]
      %v3141 = vld [vmem:[#allocation2 + $0xc0] sm:$0xff]
      %v3142 = vld [vmem:[#allocation2 + $0xc8] sm:$0xff]
      %v3143 = vld [vmem:[#allocation2 + $0xd0] sm:$0xff]
      %v3144 = vld [vmem:[#allocation2 + $0xd8] sm:$0xff]
      %v3145 = vld [vmem:[#allocation2 + $0xe0] sm:$0xff]
      %v3146 = vld [vmem:[#allocation2 + $0xe8] sm:$0xff]
      %v3147 = vld [vmem:[#allocation2 + $0xf0] sm:$0xff]
      %v3148 = vld [vmem:[#allocation2 + $0xf8] sm:$0xff]
      %v3149 = vld [vmem:[#allocation2 + $0x100] sm:$0xff]
      %v3150 = vld [vmem:[#allocation2 + $0x108] sm:$0xff]
      %v3151 = vld [vmem:[#allocation2 + $0x110] sm:$0xff]
      %v3152 = vld [vmem:[#allocation2 + $0x118] sm:$0xff]
      %s3153 = scalar_lea.vmem %s1, 256
      %v3154 = vld [vmem:[%s3153] sm:$0xf]
      %v3155 = vld [vmem:[%s3153 + $0x4] sm:$0xf]
      %v3156 = vld [vmem:[%s3153 + $0x8] sm:$0xf]
      %v3157 = vld [vmem:[%s3153 + $0xc] sm:$0xf]
      %v3158 = vld [vmem:[%s3153 + $0x10] sm:$0xf]
      %v3159 = vld [vmem:[%s3153 + $0x14] sm:$0xf]
      %v3160 = vld [vmem:[%s3153 + $0x18] sm:$0xf]
      %v3161 = vld [vmem:[%s3153 + $0x1c] sm:$0xf]
      %v3170 = vunpack.c.l.b16 %v3154
      %v3171 = vunpack.c.l.b16 %v3155
      %v3172 = vunpack.c.l.b16 %v3156
      %v3173 = vunpack.c.l.b16 %v3157
      %v3174 = vunpack.c.l.b16 %v3158
      %v3175 = vunpack.c.l.b16 %v3159
      %v3176 = vunpack.c.l.b16 %v3160
      %v3177 = vunpack.c.l.b16 %v3161
      %v3178 = vpack.c.b16 %v3171, %v3170
      %v3179 = vpack.c.b16 %v3173, %v3172
      %v3180 = vpack.c.b16 %v3175, %v3174
      %v3181 = vpack.c.b16 %v3177, %v3176
      %v3187 = vsel %vm243, %v3099, 0
      %v3190 = vsel %vm243, %v3100, 0
      %v3193 = vsel %vm243, %v3101, 0
      %v3196 = vsel %vm243, %v3102, 0
      %v3199 = vsel %vm243, %v3103, 0
      %v3202 = vsel %vm243, %v3104, 0
      %v3205 = vsel %vm243, %v3105, 0
      %v3208 = vsel %vm243, %v3106, 0
      %v3211 = vsel %vm243, %v3107, 0
      %v3214 = vsel %vm243, %v3108, 0
      %v3217 = vsel %vm243, %v3109, 0
      %v3220 = vsel %vm243, %v3110, 0
      %v3223 = vsel %vm243, %v3111, 0
      %v3226 = vsel %vm243, %v3112, 0
      %v3229 = vsel %vm243, %v3113, 0
      %v3232 = vsel %vm243, %v3114, 0
      %v3235 = vsel %vm243, %v3115, 0
      %v3238 = vsel %vm243, %v3116, 0
      %3240 = vmatpush.bf16.msra.mxu0 0
      %3241 = vmatpush.bf16.msra.mxu0 0
      %3242 = vmatpush.bf16.msra.mxu0 0
      %3243 = vmatpush.bf16.msra.mxu0 0
      %3244 = vmatpush.bf16.msra.mxu0 %v3181
      %3245 = vmatpush.bf16.msra.mxu0 %v3180
      %3246 = vmatpush.bf16.msra.mxu0 %v3179
      %3247 = vmatpush.bf16.msra.mxu0 %v3178
      %3248 = vmatmul.bf16.gmra.mxu0 %v3187
      %v3249 = vpop.f32.mrf.mxu0
      %v3250 = vadd.f32 0.0, %v3249
      %v3251 = vpop.f32.mrf.mxu0
      %v3252 = vadd.f32 0.0, %v3251
      %3253 = vmatmul.bf16.gmra.mxu0 %v3190
      %v3254 = vpop.f32.mrf.mxu0
      %v3255 = vadd.f32 0.0, %v3254
      %v3256 = vpop.f32.mrf.mxu0
      %v3257 = vadd.f32 0.0, %v3256
      %3258 = vmatmul.bf16.gmra.mxu0 %v3193
      %v3259 = vpop.f32.mrf.mxu0
      %v3260 = vadd.f32 0.0, %v3259
      %v3261 = vpop.f32.mrf.mxu0
      %v3262 = vadd.f32 0.0, %v3261
      %3263 = vmatmul.bf16.gmra.mxu0 %v3196
      %v3264 = vpop.f32.mrf.mxu0
      %v3265 = vadd.f32 0.0, %v3264
      %v3266 = vpop.f32.mrf.mxu0
      %v3267 = vadd.f32 0.0, %v3266
      %3268 = vmatmul.bf16.gmra.mxu0 %v3199
      %v3269 = vpop.f32.mrf.mxu0
      %v3270 = vadd.f32 0.0, %v3269
      %v3271 = vpop.f32.mrf.mxu0
      %v3272 = vadd.f32 0.0, %v3271
      %3273 = vmatmul.bf16.gmra.mxu0 %v3202
      %v3274 = vpop.f32.mrf.mxu0
      %v3275 = vadd.f32 0.0, %v3274
      %v3276 = vpop.f32.mrf.mxu0
      %v3277 = vadd.f32 0.0, %v3276
      %3278 = vmatmul.bf16.gmra.mxu0 %v3205
      %v3279 = vpop.f32.mrf.mxu0
      %v3280 = vadd.f32 0.0, %v3279
      %v3281 = vpop.f32.mrf.mxu0
      %v3282 = vadd.f32 0.0, %v3281
      %3283 = vmatmul.bf16.gmra.mxu0 %v3208
      %v3284 = vpop.f32.mrf.mxu0
      %v3285 = vadd.f32 0.0, %v3284
      %v3286 = vpop.f32.mrf.mxu0
      %v3287 = vadd.f32 0.0, %v3286
      %3288 = vmatmul.bf16.gmra.mxu0 %v3211
      %v3289 = vpop.f32.mrf.mxu0
      %v3290 = vadd.f32 0.0, %v3289
      %v3291 = vpop.f32.mrf.mxu0
      %v3292 = vadd.f32 0.0, %v3291
      %3293 = vmatmul.bf16.gmra.mxu0 %v3214
      %v3294 = vpop.f32.mrf.mxu0
      %v3295 = vadd.f32 0.0, %v3294
      %v3296 = vpop.f32.mrf.mxu0
      %v3297 = vadd.f32 0.0, %v3296
      %3298 = vmatmul.bf16.gmra.mxu0 %v3217
      %v3299 = vpop.f32.mrf.mxu0
      %v3300 = vadd.f32 0.0, %v3299
      %v3301 = vpop.f32.mrf.mxu0
      %v3302 = vadd.f32 0.0, %v3301
      %3303 = vmatmul.bf16.gmra.mxu0 %v3220
      %v3304 = vpop.f32.mrf.mxu0
      %v3305 = vadd.f32 0.0, %v3304
      %v3306 = vpop.f32.mrf.mxu0
      %v3307 = vadd.f32 0.0, %v3306
      %3308 = vmatmul.bf16.gmra.mxu0 %v3223
      %v3309 = vpop.f32.mrf.mxu0
      %v3310 = vadd.f32 0.0, %v3309
      %v3311 = vpop.f32.mrf.mxu0
      %v3312 = vadd.f32 0.0, %v3311
      %3313 = vmatmul.bf16.gmra.mxu0 %v3226
      %v3314 = vpop.f32.mrf.mxu0
      %v3315 = vadd.f32 0.0, %v3314
      %v3316 = vpop.f32.mrf.mxu0
      %v3317 = vadd.f32 0.0, %v3316
      %3318 = vmatmul.bf16.gmra.mxu0 %v3229
      %v3319 = vpop.f32.mrf.mxu0
      %v3320 = vadd.f32 0.0, %v3319
      %v3321 = vpop.f32.mrf.mxu0
      %v3322 = vadd.f32 0.0, %v3321
      %3323 = vmatmul.bf16.gmra.mxu0 %v3232
      %v3324 = vpop.f32.mrf.mxu0
      %v3325 = vadd.f32 0.0, %v3324
      %v3326 = vpop.f32.mrf.mxu0
      %v3327 = vadd.f32 0.0, %v3326
      %3328 = vmatmul.bf16.gmra.mxu0 %v3235
      %v3329 = vpop.f32.mrf.mxu0
      %v3330 = vadd.f32 0.0, %v3329
      %v3331 = vpop.f32.mrf.mxu0
      %v3332 = vadd.f32 0.0, %v3331
      %3333 = vmatmul.bf16.gmra.mxu0 %v3238
      %v3334 = vpop.f32.mrf.mxu0
      %v3335 = vadd.f32 0.0, %v3334
      %v3336 = vpop.f32.mrf.mxu0
      %v3337 = vadd.f32 0.0, %v3336
      %3338 = vdwg.mxu0
      %v3339 = vadd.f32 %v3117, %v3250
      %v3340 = vadd.f32 %v3118, %v3252
      %v3341 = vadd.f32 %v3119, %v3255
      %v3342 = vadd.f32 %v3120, %v3257
      %v3343 = vadd.f32 %v3121, %v3260
      %v3344 = vadd.f32 %v3122, %v3262
      %v3345 = vadd.f32 %v3123, %v3265
      %v3346 = vadd.f32 %v3124, %v3267
      %v3347 = vadd.f32 %v3125, %v3270
      %v3348 = vadd.f32 %v3126, %v3272
      %v3349 = vadd.f32 %v3127, %v3275
      %v3350 = vadd.f32 %v3128, %v3277
      %v3351 = vadd.f32 %v3129, %v3280
      %v3352 = vadd.f32 %v3130, %v3282
      %v3353 = vadd.f32 %v3131, %v3285
      %v3354 = vadd.f32 %v3132, %v3287
      %v3355 = vadd.f32 %v3133, %v3290
      %v3356 = vadd.f32 %v3134, %v3292
      %v3357 = vadd.f32 %v3135, %v3295
      %v3358 = vadd.f32 %v3136, %v3297
      %v3359 = vadd.f32 %v3137, %v3300
      %v3360 = vadd.f32 %v3138, %v3302
      %v3361 = vadd.f32 %v3139, %v3305
      %v3362 = vadd.f32 %v3140, %v3307
      %v3363 = vadd.f32 %v3141, %v3310
      %v3364 = vadd.f32 %v3142, %v3312
      %v3365 = vadd.f32 %v3143, %v3315
      %v3366 = vadd.f32 %v3144, %v3317
      %v3367 = vadd.f32 %v3145, %v3320
      %v3368 = vadd.f32 %v3146, %v3322
      %v3369 = vadd.f32 %v3147, %v3325
      %v3370 = vadd.f32 %v3148, %v3327
      %v3371 = vadd.f32 %v3149, %v3330
      %v3372 = vadd.f32 %v3150, %v3332
      %v3373 = vadd.f32 %v3151, %v3335
      %v3374 = vadd.f32 %v3152, %v3337
      %3375 = vst.msk [vmem:[#allocation2] sm:$0xff] %vm243, %v3339
      %3376 = vst.msk [vmem:[#allocation2 + $0x8] sm:$0xff] %vm243, %v3340
      %3377 = vst.msk [vmem:[#allocation2 + $0x10] sm:$0xff] %vm243, %v3341
      %3378 = vst.msk [vmem:[#allocation2 + $0x18] sm:$0xff] %vm243, %v3342
      %3379 = vst.msk [vmem:[#allocation2 + $0x20] sm:$0xff] %vm243, %v3343
      %3380 = vst.msk [vmem:[#allocation2 + $0x28] sm:$0xff] %vm243, %v3344
      %3381 = vst.msk [vmem:[#allocation2 + $0x30] sm:$0xff] %vm243, %v3345
      %3382 = vst.msk [vmem:[#allocation2 + $0x38] sm:$0xff] %vm243, %v3346
      %3383 = vst.msk [vmem:[#allocation2 + $0x40] sm:$0xff] %vm243, %v3347
      %3384 = vst.msk [vmem:[#allocation2 + $0x48] sm:$0xff] %vm243, %v3348
      %3385 = vst.msk [vmem:[#allocation2 + $0x50] sm:$0xff] %vm243, %v3349
      %3386 = vst.msk [vmem:[#allocation2 + $0x58] sm:$0xff] %vm243, %v3350
      %3387 = vst.msk [vmem:[#allocation2 + $0x60] sm:$0xff] %vm243, %v3351
      %3388 = vst.msk [vmem:[#allocation2 + $0x68] sm:$0xff] %vm243, %v3352
      %3389 = vst.msk [vmem:[#allocation2 + $0x70] sm:$0xff] %vm243, %v3353
      %3390 = vst.msk [vmem:[#allocation2 + $0x78] sm:$0xff] %vm243, %v3354
      %3391 = vst.msk [vmem:[#allocation2 + $0x80] sm:$0xff] %vm243, %v3355
      %3392 = vst.msk [vmem:[#allocation2 + $0x88] sm:$0xff] %vm243, %v3356
      %3393 = vst.msk [vmem:[#allocation2 + $0x90] sm:$0xff] %vm243, %v3357
      %3394 = vst.msk [vmem:[#allocation2 + $0x98] sm:$0xff] %vm243, %v3358
      %3395 = vst.msk [vmem:[#allocation2 + $0xa0] sm:$0xff] %vm243, %v3359
      %3396 = vst.msk [vmem:[#allocation2 + $0xa8] sm:$0xff] %vm243, %v3360
      %3397 = vst.msk [vmem:[#allocation2 + $0xb0] sm:$0xff] %vm243, %v3361
      %3398 = vst.msk [vmem:[#allocation2 + $0xb8] sm:$0xff] %vm243, %v3362
      %3399 = vst.msk [vmem:[#allocation2 + $0xc0] sm:$0xff] %vm243, %v3363
      %3400 = vst.msk [vmem:[#allocation2 + $0xc8] sm:$0xff] %vm243, %v3364
      %3401 = vst.msk [vmem:[#allocation2 + $0xd0] sm:$0xff] %vm243, %v3365
      %3402 = vst.msk [vmem:[#allocation2 + $0xd8] sm:$0xff] %vm243, %v3366
      %3403 = vst.msk [vmem:[#allocation2 + $0xe0] sm:$0xff] %vm243, %v3367
      %3404 = vst.msk [vmem:[#allocation2 + $0xe8] sm:$0xff] %vm243, %v3368
      %3405 = vst.msk [vmem:[#allocation2 + $0xf0] sm:$0xff] %vm243, %v3369
      %3406 = vst.msk [vmem:[#allocation2 + $0xf8] sm:$0xff] %vm243, %v3370
      %3407 = vst.msk [vmem:[#allocation2 + $0x100] sm:$0xff] %vm243, %v3371
      %3408 = vst.msk [vmem:[#allocation2 + $0x108] sm:$0xff] %vm243, %v3372
      %3409 = vst.msk [vmem:[#allocation2 + $0x110] sm:$0xff] %vm243, %v3373
      %3410 = vst.msk [vmem:[#allocation2 + $0x118] sm:$0xff] %vm243, %v3374
      %v3411 = vld [vmem:[#allocation2] sm:$0xff]
      %v3412 = vld [vmem:[#allocation2 + $0x8] sm:$0xff]
      %v3413 = vld [vmem:[#allocation2 + $0x10] sm:$0xff]
      %v3414 = vld [vmem:[#allocation2 + $0x18] sm:$0xff]
      %v3415 = vld [vmem:[#allocation2 + $0x20] sm:$0xff]
      %v3416 = vld [vmem:[#allocation2 + $0x28] sm:$0xff]
      %v3417 = vld [vmem:[#allocation2 + $0x30] sm:$0xff]
      %v3418 = vld [vmem:[#allocation2 + $0x38] sm:$0xff]
      %v3419 = vld [vmem:[#allocation2 + $0x40] sm:$0xff]
      %v3420 = vld [vmem:[#allocation2 + $0x48] sm:$0xff]
      %v3421 = vld [vmem:[#allocation2 + $0x50] sm:$0xff]
      %v3422 = vld [vmem:[#allocation2 + $0x58] sm:$0xff]
      %v3423 = vld [vmem:[#allocation2 + $0x60] sm:$0xff]
      %v3424 = vld [vmem:[#allocation2 + $0x68] sm:$0xff]
      %v3425 = vld [vmem:[#allocation2 + $0x70] sm:$0xff]
      %v3426 = vld [vmem:[#allocation2 + $0x78] sm:$0xff]
      %v3427 = vld [vmem:[#allocation2 + $0x80] sm:$0xff]
      %v3428 = vld [vmem:[#allocation2 + $0x88] sm:$0xff]
      %v3429 = vld [vmem:[#allocation2 + $0x90] sm:$0xff]
      %v3430 = vld [vmem:[#allocation2 + $0x98] sm:$0xff]
      %v3431 = vld [vmem:[#allocation2 + $0xa0] sm:$0xff]
      %v3432 = vld [vmem:[#allocation2 + $0xa8] sm:$0xff]
      %v3433 = vld [vmem:[#allocation2 + $0xb0] sm:$0xff]
      %v3434 = vld [vmem:[#allocation2 + $0xb8] sm:$0xff]
      %v3435 = vld [vmem:[#allocation2 + $0xc0] sm:$0xff]
      %v3436 = vld [vmem:[#allocation2 + $0xc8] sm:$0xff]
      %v3437 = vld [vmem:[#allocation2 + $0xd0] sm:$0xff]
      %v3438 = vld [vmem:[#allocation2 + $0xd8] sm:$0xff]
      %v3439 = vld [vmem:[#allocation2 + $0xe0] sm:$0xff]
      %v3440 = vld [vmem:[#allocation2 + $0xe8] sm:$0xff]
      %v3441 = vld [vmem:[#allocation2 + $0xf0] sm:$0xff]
      %v3442 = vld [vmem:[#allocation2 + $0xf8] sm:$0xff]
      %v3443 = vld [vmem:[#allocation2 + $0x100] sm:$0xff]
      %v3444 = vld [vmem:[#allocation2 + $0x108] sm:$0xff]
      %v3445 = vld [vmem:[#allocation2 + $0x110] sm:$0xff]
      %v3446 = vld [vmem:[#allocation2 + $0x118] sm:$0xff]
      %3447 = vst.msk [vmem:[%s235] sm:$0xff] %vm243, %v3411
      %3448 = vst.msk [vmem:[%s235 + $0x8] sm:$0xff] %vm243, %v3412
      %3449 = vst.msk [vmem:[%s235 + $0x10] sm:$0xff] %vm243, %v3413
      %3450 = vst.msk [vmem:[%s235 + $0x18] sm:$0xff] %vm243, %v3414
      %3451 = vst.msk [vmem:[%s235 + $0x20] sm:$0xff] %vm243, %v3415
      %3452 = vst.msk [vmem:[%s235 + $0x28] sm:$0xff] %vm243, %v3416
      %3453 = vst.msk [vmem:[%s235 + $0x30] sm:$0xff] %vm243, %v3417
      %3454 = vst.msk [vmem:[%s235 + $0x38] sm:$0xff] %vm243, %v3418
      %3455 = vst.msk [vmem:[%s235 + $0x40] sm:$0xff] %vm243, %v3419
      %3456 = vst.msk [vmem:[%s235 + $0x48] sm:$0xff] %vm243, %v3420
      %3457 = vst.msk [vmem:[%s235 + $0x50] sm:$0xff] %vm243, %v3421
      %3458 = vst.msk [vmem:[%s235 + $0x58] sm:$0xff] %vm243, %v3422
      %3459 = vst.msk [vmem:[%s235 + $0x60] sm:$0xff] %vm243, %v3423
      %3460 = vst.msk [vmem:[%s235 + $0x68] sm:$0xff] %vm243, %v3424
      %3461 = vst.msk [vmem:[%s235 + $0x70] sm:$0xff] %vm243, %v3425
      %3462 = vst.msk [vmem:[%s235 + $0x78] sm:$0xff] %vm243, %v3426
      %3463 = vst.msk [vmem:[%s235 + $0x80] sm:$0xff] %vm243, %v3427
      %3464 = vst.msk [vmem:[%s235 + $0x88] sm:$0xff] %vm243, %v3428
      %3465 = vst.msk [vmem:[%s235 + $0x90] sm:$0xff] %vm243, %v3429
      %3466 = vst.msk [vmem:[%s235 + $0x98] sm:$0xff] %vm243, %v3430
      %3467 = vst.msk [vmem:[%s235 + $0xa0] sm:$0xff] %vm243, %v3431
      %3468 = vst.msk [vmem:[%s235 + $0xa8] sm:$0xff] %vm243, %v3432
      %3469 = vst.msk [vmem:[%s235 + $0xb0] sm:$0xff] %vm243, %v3433
      %3470 = vst.msk [vmem:[%s235 + $0xb8] sm:$0xff] %vm243, %v3434
      %3471 = vst.msk [vmem:[%s235 + $0xc0] sm:$0xff] %vm243, %v3435
      %3472 = vst.msk [vmem:[%s235 + $0xc8] sm:$0xff] %vm243, %v3436
      %3473 = vst.msk [vmem:[%s235 + $0xd0] sm:$0xff] %vm243, %v3437
      %3474 = vst.msk [vmem:[%s235 + $0xd8] sm:$0xff] %vm243, %v3438
      %3475 = vst.msk [vmem:[%s235 + $0xe0] sm:$0xff] %vm243, %v3439
      %3476 = vst.msk [vmem:[%s235 + $0xe8] sm:$0xff] %vm243, %v3440
      %3477 = vst.msk [vmem:[%s235 + $0xf0] sm:$0xff] %vm243, %v3441
      %3478 = vst.msk [vmem:[%s235 + $0xf8] sm:$0xff] %vm243, %v3442
      %3479 = vst.msk [vmem:[%s235 + $0x100] sm:$0xff] %vm243, %v3443
      %3480 = vst.msk [vmem:[%s235 + $0x108] sm:$0xff] %vm243, %v3444
      %3481 = vst.msk [vmem:[%s235 + $0x110] sm:$0xff] %vm243, %v3445
      %3482 = vst.msk [vmem:[%s235 + $0x118] sm:$0xff] %vm243, %v3446
      %v3483 = vld [vmem:[%s2] sm:$0xff]
      %v3484 = vld [vmem:[%s2 + $0x8] sm:$0xff]
      %v3485 = vld [vmem:[%s2 + $0x10] sm:$0xff]
      %v3486 = vld [vmem:[%s2 + $0x18] sm:$0xff]
      %v3487 = vld [vmem:[%s2 + $0x20] sm:$0xff]
      %v3488 = vld [vmem:[%s2 + $0x28] sm:$0xff]
      %v3489 = vld [vmem:[%s2 + $0x30] sm:$0xff]
      %v3490 = vld [vmem:[%s2 + $0x38] sm:$0xff]
      %v3491 = vld [vmem:[%s2 + $0x40] sm:$0xff]
      %v3492 = vld [vmem:[%s2 + $0x48] sm:$0xff]
      %v3493 = vld [vmem:[%s2 + $0x50] sm:$0xff]
      %v3494 = vld [vmem:[%s2 + $0x58] sm:$0xff]
      %v3495 = vld [vmem:[%s2 + $0x60] sm:$0xff]
      %v3496 = vld [vmem:[%s2 + $0x68] sm:$0xff]
      %v3497 = vld [vmem:[%s2 + $0x70] sm:$0xff]
      %v3498 = vld [vmem:[%s2 + $0x78] sm:$0xff]
      %v3499 = vld [vmem:[%s2 + $0x80] sm:$0xff]
      %v3500 = vld [vmem:[%s2 + $0x88] sm:$0xff]
      %v3501 = vld [vmem:[%s2 + $0x90] sm:$0xff]
      %v3502 = vld [vmem:[%s2 + $0x98] sm:$0xff]
      %v3503 = vld [vmem:[%s2 + $0xa0] sm:$0xff]
      %v3504 = vld [vmem:[%s2 + $0xa8] sm:$0xff]
      %v3505 = vld [vmem:[%s2 + $0xb0] sm:$0xff]
      %v3506 = vld [vmem:[%s2 + $0xb8] sm:$0xff]
      %v3507 = vld [vmem:[%s2 + $0xc0] sm:$0xff]
      %v3508 = vld [vmem:[%s2 + $0xc8] sm:$0xff]
      %v3509 = vld [vmem:[%s2 + $0xd0] sm:$0xff]
      %v3510 = vld [vmem:[%s2 + $0xd8] sm:$0xff]
      %v3511 = vld [vmem:[%s2 + $0xe0] sm:$0xff]
      %v3512 = vld [vmem:[%s2 + $0xe8] sm:$0xff]
      %v3513 = vld [vmem:[%s2 + $0xf0] sm:$0xff]
      %v3514 = vld [vmem:[%s2 + $0xf8] sm:$0xff]
      %v3515 = vld [vmem:[%s2 + $0x100] sm:$0xff]
      %v3516 = vld [vmem:[%s2 + $0x108] sm:$0xff]
      %v3517 = vld [vmem:[%s2 + $0x110] sm:$0xff]
      %v3518 = vld [vmem:[%s2 + $0x118] sm:$0xff]
      %3520 = vset.pattern.permute.xlu0 0
      %3521 = vperm.xlu0 %3520, %v3483
      %v3522 = vpop.permute.xlu0 %3521
      %3525 = vset.pattern.permute.xlu0 0
      %3526 = vperm.xlu0 %3525, %v3484
      %v3527 = vpop.permute.xlu0 %3526
      %3530 = vset.pattern.permute.xlu0 0
      %3531 = vperm.xlu0 %3530, %v3485
      %v3532 = vpop.permute.xlu0 %3531
      %3535 = vset.pattern.permute.xlu0 0
      %3536 = vperm.xlu0 %3535, %v3486
      %v3537 = vpop.permute.xlu0 %3536
      %3540 = vset.pattern.permute.xlu0 0
      %3541 = vperm.xlu0 %3540, %v3487
      %v3542 = vpop.permute.xlu0 %3541
      %3545 = vset.pattern.permute.xlu0 0
      %3546 = vperm.xlu0 %3545, %v3488
      %v3547 = vpop.permute.xlu0 %3546
      %3550 = vset.pattern.permute.xlu0 0
      %3551 = vperm.xlu0 %3550, %v3489
      %v3552 = vpop.permute.xlu0 %3551
      %3555 = vset.pattern.permute.xlu0 0
      %3556 = vperm.xlu0 %3555, %v3490
      %v3557 = vpop.permute.xlu0 %3556
      %3560 = vset.pattern.permute.xlu0 0
      %3561 = vperm.xlu0 %3560, %v3491
      %v3562 = vpop.permute.xlu0 %3561
      %3565 = vset.pattern.permute.xlu0 0
      %3566 = vperm.xlu0 %3565, %v3492
      %v3567 = vpop.permute.xlu0 %3566
      %3570 = vset.pattern.permute.xlu0 0
      %3571 = vperm.xlu0 %3570, %v3493
      %v3572 = vpop.permute.xlu0 %3571
      %3575 = vset.pattern.permute.xlu0 0
      %3576 = vperm.xlu0 %3575, %v3494
      %v3577 = vpop.permute.xlu0 %3576
      %3580 = vset.pattern.permute.xlu0 0
      %3581 = vperm.xlu0 %3580, %v3495
      %v3582 = vpop.permute.xlu0 %3581
      %3585 = vset.pattern.permute.xlu0 0
      %3586 = vperm.xlu0 %3585, %v3496
      %v3587 = vpop.permute.xlu0 %3586
      %3590 = vset.pattern.permute.xlu0 0
      %3591 = vperm.xlu0 %3590, %v3497
      %v3592 = vpop.permute.xlu0 %3591
      %3595 = vset.pattern.permute.xlu0 0
      %3596 = vperm.xlu0 %3595, %v3498
      %v3597 = vpop.permute.xlu0 %3596
      %3600 = vset.pattern.permute.xlu0 0
      %3601 = vperm.xlu0 %3600, %v3499
      %v3602 = vpop.permute.xlu0 %3601
      %3605 = vset.pattern.permute.xlu0 0
      %3606 = vperm.xlu0 %3605, %v3500
      %v3607 = vpop.permute.xlu0 %3606
      %3610 = vset.pattern.permute.xlu0 0
      %3611 = vperm.xlu0 %3610, %v3501
      %v3612 = vpop.permute.xlu0 %3611
      %3615 = vset.pattern.permute.xlu0 0
      %3616 = vperm.xlu0 %3615, %v3502
      %v3617 = vpop.permute.xlu0 %3616
      %3620 = vset.pattern.permute.xlu0 0
      %3621 = vperm.xlu0 %3620, %v3503
      %v3622 = vpop.permute.xlu0 %3621
      %3625 = vset.pattern.permute.xlu0 0
      %3626 = vperm.xlu0 %3625, %v3504
      %v3627 = vpop.permute.xlu0 %3626
      %3630 = vset.pattern.permute.xlu0 0
      %3631 = vperm.xlu0 %3630, %v3505
      %v3632 = vpop.permute.xlu0 %3631
      %3635 = vset.pattern.permute.xlu0 0
      %3636 = vperm.xlu0 %3635, %v3506
      %v3637 = vpop.permute.xlu0 %3636
      %3640 = vset.pattern.permute.xlu0 0
      %3641 = vperm.xlu0 %3640, %v3507
      %v3642 = vpop.permute.xlu0 %3641
      %3645 = vset.pattern.permute.xlu0 0
      %3646 = vperm.xlu0 %3645, %v3508
      %v3647 = vpop.permute.xlu0 %3646
      %3650 = vset.pattern.permute.xlu0 0
      %3651 = vperm.xlu0 %3650, %v3509
      %v3652 = vpop.permute.xlu0 %3651
      %3655 = vset.pattern.permute.xlu0 0
      %3656 = vperm.xlu0 %3655, %v3510
      %v3657 = vpop.permute.xlu0 %3656
      %3660 = vset.pattern.permute.xlu0 0
      %3661 = vperm.xlu0 %3660, %v3511
      %v3662 = vpop.permute.xlu0 %3661
      %3665 = vset.pattern.permute.xlu0 0
      %3666 = vperm.xlu0 %3665, %v3512
      %v3667 = vpop.permute.xlu0 %3666
      %3670 = vset.pattern.permute.xlu0 0
      %3671 = vperm.xlu0 %3670, %v3513
      %v3672 = vpop.permute.xlu0 %3671
      %3675 = vset.pattern.permute.xlu0 0
      %3676 = vperm.xlu0 %3675, %v3514
      %v3677 = vpop.permute.xlu0 %3676
      %3680 = vset.pattern.permute.xlu0 0
      %3681 = vperm.xlu0 %3680, %v3515
      %v3682 = vpop.permute.xlu0 %3681
      %3685 = vset.pattern.permute.xlu0 0
      %3686 = vperm.xlu0 %3685, %v3516
      %v3687 = vpop.permute.xlu0 %3686
      %3690 = vset.pattern.permute.xlu0 0
      %3691 = vperm.xlu0 %3690, %v3517
      %v3692 = vpop.permute.xlu0 %3691
      %3695 = vset.pattern.permute.xlu0 0
      %3696 = vperm.xlu0 %3695, %v3518
      %v3697 = vpop.permute.xlu0 %3696
      %v3699 = vmul.f32 %v3411, %v3522
      %v3700 = vmul.f32 %v3412, %v3527
      %v3701 = vmul.f32 %v3413, %v3532
      %v3702 = vmul.f32 %v3414, %v3537
      %v3703 = vmul.f32 %v3415, %v3542
      %v3704 = vmul.f32 %v3416, %v3547
      %v3705 = vmul.f32 %v3417, %v3552
      %v3706 = vmul.f32 %v3418, %v3557
      %v3707 = vmul.f32 %v3419, %v3562
      %v3708 = vmul.f32 %v3420, %v3567
      %v3709 = vmul.f32 %v3421, %v3572
      %v3710 = vmul.f32 %v3422, %v3577
      %v3711 = vmul.f32 %v3423, %v3582
      %v3712 = vmul.f32 %v3424, %v3587
      %v3713 = vmul.f32 %v3425, %v3592
      %v3714 = vmul.f32 %v3426, %v3597
      %v3715 = vmul.f32 %v3427, %v3602
      %v3716 = vmul.f32 %v3428, %v3607
      %v3717 = vmul.f32 %v3429, %v3612
      %v3718 = vmul.f32 %v3430, %v3617
      %v3719 = vmul.f32 %v3431, %v3622
      %v3720 = vmul.f32 %v3432, %v3627
      %v3721 = vmul.f32 %v3433, %v3632
      %v3722 = vmul.f32 %v3434, %v3637
      %v3723 = vmul.f32 %v3435, %v3642
      %v3724 = vmul.f32 %v3436, %v3647
      %v3725 = vmul.f32 %v3437, %v3652
      %v3726 = vmul.f32 %v3438, %v3657
      %v3727 = vmul.f32 %v3439, %v3662
      %v3728 = vmul.f32 %v3440, %v3667
      %v3729 = vmul.f32 %v3441, %v3672
      %v3730 = vmul.f32 %v3442, %v3677
      %v3731 = vmul.f32 %v3443, %v3682
      %v3732 = vmul.f32 %v3444, %v3687
      %v3733 = vmul.f32 %v3445, %v3692
      %v3734 = vmul.f32 %v3446, %v3697
      %v3735 = vsel %vm243, %v3699, 0.0
      %v3736 = vsel %vm243, %v3700, 0.0
      %v3737 = vadd.f32 %v3735, %v3736
      %v3738 = vsel %vm243, %v3701, 0.0
      %v3739 = vadd.f32 %v3737, %v3738
      %v3740 = vsel %vm243, %v3702, 0.0
      %v3741 = vadd.f32 %v3739, %v3740
      %v3742 = vsel %vm243, %v3703, 0.0
      %v3743 = vadd.f32 %v3741, %v3742
      %v3744 = vsel %vm243, %v3704, 0.0
      %v3745 = vadd.f32 %v3743, %v3744
      %v3746 = vsel %vm243, %v3705, 0.0
      %v3747 = vadd.f32 %v3745, %v3746
      %v3748 = vsel %vm243, %v3706, 0.0
      %v3749 = vadd.f32 %v3747, %v3748
      %v3750 = vsel %vm243, %v3707, 0.0
      %v3751 = vadd.f32 %v3749, %v3750
      %v3752 = vsel %vm243, %v3708, 0.0
      %v3753 = vadd.f32 %v3751, %v3752
      %v3754 = vsel %vm243, %v3709, 0.0
      %v3755 = vadd.f32 %v3753, %v3754
      %v3756 = vsel %vm243, %v3710, 0.0
      %v3757 = vadd.f32 %v3755, %v3756
      %v3758 = vsel %vm243, %v3711, 0.0
      %v3759 = vadd.f32 %v3757, %v3758
      %v3760 = vsel %vm243, %v3712, 0.0
      %v3761 = vadd.f32 %v3759, %v3760
      %v3762 = vsel %vm243, %v3713, 0.0
      %v3763 = vadd.f32 %v3761, %v3762
      %v3764 = vsel %vm243, %v3714, 0.0
      %v3765 = vadd.f32 %v3763, %v3764
      %v3766 = vsel %vm243, %v3715, 0.0
      %v3767 = vadd.f32 %v3765, %v3766
      %v3768 = vsel %vm243, %v3716, 0.0
      %v3769 = vadd.f32 %v3767, %v3768
      %v3770 = vsel %vm243, %v3717, 0.0
      %v3771 = vadd.f32 %v3769, %v3770
      %v3772 = vsel %vm243, %v3718, 0.0
      %v3773 = vadd.f32 %v3771, %v3772
      %v3774 = vsel %vm243, %v3719, 0.0
      %v3775 = vadd.f32 %v3773, %v3774
      %v3776 = vsel %vm243, %v3720, 0.0
      %v3777 = vadd.f32 %v3775, %v3776
      %v3778 = vsel %vm243, %v3721, 0.0
      %v3779 = vadd.f32 %v3777, %v3778
      %v3780 = vsel %vm243, %v3722, 0.0
      %v3781 = vadd.f32 %v3779, %v3780
      %v3782 = vsel %vm243, %v3723, 0.0
      %v3783 = vadd.f32 %v3781, %v3782
      %v3784 = vsel %vm243, %v3724, 0.0
      %v3785 = vadd.f32 %v3783, %v3784
      %v3786 = vsel %vm243, %v3725, 0.0
      %v3787 = vadd.f32 %v3785, %v3786
      %v3788 = vsel %vm243, %v3726, 0.0
      %v3789 = vadd.f32 %v3787, %v3788
      %v3790 = vsel %vm243, %v3727, 0.0
      %v3791 = vadd.f32 %v3789, %v3790
      %v3792 = vsel %vm243, %v3728, 0.0
      %v3793 = vadd.f32 %v3791, %v3792
      %v3794 = vsel %vm243, %v3729, 0.0
      %v3795 = vadd.f32 %v3793, %v3794
      %v3796 = vsel %vm243, %v3730, 0.0
      %v3797 = vadd.f32 %v3795, %v3796
      %v3798 = vsel %vm243, %v3731, 0.0
      %v3799 = vadd.f32 %v3797, %v3798
      %v3800 = vsel %vm243, %v3732, 0.0
      %v3801 = vadd.f32 %v3799, %v3800
      %v3802 = vsel %vm243, %v3733, 0.0
      %v3803 = vadd.f32 %v3801, %v3802
      %v3804 = vsel %vm243, %v3734, 0.0
      %v3805 = vadd.f32 %v3803, %v3804
      %v3806 = vrot.slane %v3805, 4
      %v3807 = vadd.f32 %v3805, %v3806
      %v3808 = vrot.slane %v3807, 2
      %v3809 = vadd.f32 %v3807, %v3808
      %v3810 = vrot.slane %v3809, 1
      %v3811 = vadd.f32 %v3809, %v3810
      %vm3812 = vcmask 516096
      %3813 = vst.msk [vmem:[%s238] sm:$0x1] %vm3812, %v3811
      %v3814 = vmul.f32 %v3699, %v3699
      %v3815 = vmul.f32 %v3700, %v3700
      %v3816 = vmul.f32 %v3701, %v3701
      %v3817 = vmul.f32 %v3702, %v3702
      %v3818 = vmul.f32 %v3703, %v3703
      %v3819 = vmul.f32 %v3704, %v3704
      %v3820 = vmul.f32 %v3705, %v3705
      %v3821 = vmul.f32 %v3706, %v3706
      %v3822 = vmul.f32 %v3707, %v3707
      %v3823 = vmul.f32 %v3708, %v3708
      %v3824 = vmul.f32 %v3709, %v3709
      %v3825 = vmul.f32 %v3710, %v3710
      %v3826 = vmul.f32 %v3711, %v3711
      %v3827 = vmul.f32 %v3712, %v3712
      %v3828 = vmul.f32 %v3713, %v3713
      %v3829 = vmul.f32 %v3714, %v3714
      %v3830 = vmul.f32 %v3715, %v3715
      %v3831 = vmul.f32 %v3716, %v3716
      %v3832 = vmul.f32 %v3717, %v3717
      %v3833 = vmul.f32 %v3718, %v3718
      %v3834 = vmul.f32 %v3719, %v3719
      %v3835 = vmul.f32 %v3720, %v3720
      %v3836 = vmul.f32 %v3721, %v3721
      %v3837 = vmul.f32 %v3722, %v3722
      %v3838 = vmul.f32 %v3723, %v3723
      %v3839 = vmul.f32 %v3724, %v3724
      %v3840 = vmul.f32 %v3725, %v3725
      %v3841 = vmul.f32 %v3726, %v3726
      %v3842 = vmul.f32 %v3727, %v3727
      %v3843 = vmul.f32 %v3728, %v3728
      %v3844 = vmul.f32 %v3729, %v3729
      %v3845 = vmul.f32 %v3730, %v3730
      %v3846 = vmul.f32 %v3731, %v3731
      %v3847 = vmul.f32 %v3732, %v3732
      %v3848 = vmul.f32 %v3733, %v3733
      %v3849 = vmul.f32 %v3734, %v3734
      %v3850 = vsel %vm243, %v3814, 0.0
      %v3851 = vsel %vm243, %v3815, 0.0
      %v3852 = vadd.f32 %v3850, %v3851
      %v3853 = vsel %vm243, %v3816, 0.0
      %v3854 = vadd.f32 %v3852, %v3853
      %v3855 = vsel %vm243, %v3817, 0.0
      %v3856 = vadd.f32 %v3854, %v3855
      %v3857 = vsel %vm243, %v3818, 0.0
      %v3858 = vadd.f32 %v3856, %v3857
      %v3859 = vsel %vm243, %v3819, 0.0
      %v3860 = vadd.f32 %v3858, %v3859
      %v3861 = vsel %vm243, %v3820, 0.0
      %v3862 = vadd.f32 %v3860, %v3861
      %v3863 = vsel %vm243, %v3821, 0.0
      %v3864 = vadd.f32 %v3862, %v3863
      %v3865 = vsel %vm243, %v3822, 0.0
      %v3866 = vadd.f32 %v3864, %v3865
      %v3867 = vsel %vm243, %v3823, 0.0
      %v3868 = vadd.f32 %v3866, %v3867
      %v3869 = vsel %vm243, %v3824, 0.0
      %v3870 = vadd.f32 %v3868, %v3869
      %v3871 = vsel %vm243, %v3825, 0.0
      %v3872 = vadd.f32 %v3870, %v3871
      %v3873 = vsel %vm243, %v3826, 0.0
      %v3874 = vadd.f32 %v3872, %v3873
      %v3875 = vsel %vm243, %v3827, 0.0
      %v3876 = vadd.f32 %v3874, %v3875
      %v3877 = vsel %vm243, %v3828, 0.0
      %v3878 = vadd.f32 %v3876, %v3877
      %v3879 = vsel %vm243, %v3829, 0.0
      %v3880 = vadd.f32 %v3878, %v3879
      %v3881 = vsel %vm243, %v3830, 0.0
      %v3882 = vadd.f32 %v3880, %v3881
      %v3883 = vsel %vm243, %v3831, 0.0
      %v3884 = vadd.f32 %v3882, %v3883
      %v3885 = vsel %vm243, %v3832, 0.0
      %v3886 = vadd.f32 %v3884, %v3885
      %v3887 = vsel %vm243, %v3833, 0.0
      %v3888 = vadd.f32 %v3886, %v3887
      %v3889 = vsel %vm243, %v3834, 0.0
      %v3890 = vadd.f32 %v3888, %v3889
      %v3891 = vsel %vm243, %v3835, 0.0
      %v3892 = vadd.f32 %v3890, %v3891
      %v3893 = vsel %vm243, %v3836, 0.0
      %v3894 = vadd.f32 %v3892, %v3893
      %v3895 = vsel %vm243, %v3837, 0.0
      %v3896 = vadd.f32 %v3894, %v3895
      %v3897 = vsel %vm243, %v3838, 0.0
      %v3898 = vadd.f32 %v3896, %v3897
      %v3899 = vsel %vm243, %v3839, 0.0
      %v3900 = vadd.f32 %v3898, %v3899
      %v3901 = vsel %vm243, %v3840, 0.0
      %v3902 = vadd.f32 %v3900, %v3901
      %v3903 = vsel %vm243, %v3841, 0.0
      %v3904 = vadd.f32 %v3902, %v3903
      %v3905 = vsel %vm243, %v3842, 0.0
      %v3906 = vadd.f32 %v3904, %v3905
      %v3907 = vsel %vm243, %v3843, 0.0
      %v3908 = vadd.f32 %v3906, %v3907
      %v3909 = vsel %vm243, %v3844, 0.0
      %v3910 = vadd.f32 %v3908, %v3909
      %v3911 = vsel %vm243, %v3845, 0.0
      %v3912 = vadd.f32 %v3910, %v3911
      %v3913 = vsel %vm243, %v3846, 0.0
      %v3914 = vadd.f32 %v3912, %v3913
      %v3915 = vsel %vm243, %v3847, 0.0
      %v3916 = vadd.f32 %v3914, %v3915
      %v3917 = vsel %vm243, %v3848, 0.0
      %v3918 = vadd.f32 %v3916, %v3917
      %v3919 = vsel %vm243, %v3849, 0.0
      %v3920 = vadd.f32 %v3918, %v3919
      %v3921 = vrot.slane %v3920, 4
      %v3922 = vadd.f32 %v3920, %v3921
      %v3923 = vrot.slane %v3922, 2
      %v3924 = vadd.f32 %v3922, %v3923
      %v3925 = vrot.slane %v3924, 1
      %v3926 = vadd.f32 %v3924, %v3925
      %3927 = vst.msk [vmem:[%s241] sm:$0x1] %vm3812, %v3926
      %p3928 = scmp.lt.s32.totalorder %s17, 1
      %s3929 = scalar_select %p3928, %s17, 1
      %s3930 = smul.addr %s3929, 36
      %s3931 = smul.addr %s3930, 8
      %s3932 = scalar_lea.vmem %s3, %s3931
      %p3933 = scmp.lt.s32.totalorder %s17, 1
      %s3934 = scalar_select %p3933, %s17, 1
      %s3935 = scalar_lea.vmem %s4, %s3934
      %p3936 = scmp.lt.s32.totalorder %s17, 1
      %s3937 = scalar_select %p3936, %s17, 1
      %s3938 = scalar_lea.vmem %s5, %s3937
      // Predicated region
      $region33: #{basenet_forward.7} parent=31 // pred_check
        %p3939 = pneg %p103
      $region34: #{basenet_forward.7} parent=31 // pred_check_branch
        %3941 = sbr.rel (%p3939) target = $region36
      $region35: #{basenet_forward.7} parent=31 // pred_region
        _
      $region36: #{basenet_forward.7} parent=31 // pred_fallthru
        _
      // Predicated region
      $region37: #{basenet_forward.7} parent=31 // pred_check
        %p3942 = pneg %p129
      $region38: #{basenet_forward.7} parent=31 // pred_check_branch
        %3944 = sbr.rel (%p3942) target = $region40
      $region39: #{basenet_forward.7} parent=31 // pred_region
        _
      $region40: #{basenet_forward.7} parent=31 // pred_fallthru
        _
      // Predicated region
      $region41: #{basenet_forward.7} parent=31 // pred_check
        %p3945 = pneg %p155
      $region42: #{basenet_forward.7} parent=31 // pred_check_branch
        %3947 = sbr.rel (%p3945) target = $region44
      $region43: #{basenet_forward.7} parent=31 // pred_region
        _
      $region44: #{basenet_forward.7} parent=31 // pred_fallthru
        _
    $region32: #{basenet_forward.7} parent=5 // pred_fallthru
      _
    %p3948 = scmp.le.s32.totalorder 2, %s12
    // Predicated region
    $region45: #{basenet_forward.7} parent=5 // pred_check
      %p3949 = pneg %p3948
    $region46: #{basenet_forward.7} parent=5 // pred_check_branch
      %3951 = sbr.rel (%p3949) target = $region48
    $region47: #{basenet_forward.7} parent=5 // pred_region
      %s3952 = ssub.s32 %s12, 2
      // Predicated region
      $region49: #{basenet_forward.7} parent=47 // pred_check
        %p3953 = pneg %p109
      $region50: #{basenet_forward.7} parent=47 // pred_check_branch
        %3955 = sbr.rel (%p3953) target = $region52
      $region51: #{basenet_forward.7} parent=47 // pred_region
        %p3956 = scmp.lt.s32.totalorder %s18, 1
        %s3957 = scalar_select %p3956, %s18, 1
        %s3958 = smul.addr %s3957, 36
        %s3959 = smul.addr %s3958, 8
        %s3960 = scalar_lea.vmem %s3, %s3959
      $region52: #{basenet_forward.7} parent=47 // pred_fallthru
        _
      // Predicated region
      $region53: #{basenet_forward.7} parent=47 // pred_check
        %p3961 = pneg %p135
      $region54: #{basenet_forward.7} parent=47 // pred_check_branch
        %3963 = sbr.rel (%p3961) target = $region56
      $region55: #{basenet_forward.7} parent=47 // pred_region
        %p3964 = scmp.lt.s32.totalorder %s18, 1
        %s3965 = scalar_select %p3964, %s18, 1
        %s3966 = scalar_lea.vmem %s4, %s3965
      $region56: #{basenet_forward.7} parent=47 // pred_fallthru
        _
      // Predicated region
      $region57: #{basenet_forward.7} parent=47 // pred_check
        %p3967 = pneg %p161
      $region58: #{basenet_forward.7} parent=47 // pred_check_branch
        %3969 = sbr.rel (%p3967) target = $region60
      $region59: #{basenet_forward.7} parent=47 // pred_region
        %p3970 = scmp.lt.s32.totalorder %s18, 1
        %s3971 = scalar_select %p3970, %s18, 1
        %s3972 = scalar_lea.vmem %s5, %s3971
      $region60: #{basenet_forward.7} parent=47 // pred_fallthru
        _
    $region48: #{basenet_forward.7} parent=5 // pred_fallthru
      _
  $region6: #{basenet_forward.7} parent=0 // loop_footer
    %s16 = sadd.s32 1, %s12
  $region7: #{basenet_forward.7} parent=0 // loop_footer_branch
    %11 = sbr.rel target = $region3
  $region8: #{basenet_forward.7} parent=0 // loop_exit
    _

</llo_original>
